<compile_context>
chip_gen: v7x
topology: tpu7x:2x2x1
jax: 0.10.0
libtpu: 0.0.40
codegen_flags: <defaults>
</compile_context>

<pallas_src>
import math
from functools import partial

import jax
import jax.numpy as jnp
from jax import lax
from jax.experimental import pallas as pl
from jax.experimental.pallas import tpu as pltpu

BN_EPS = 1e-5
_INV_SQRT2 = 1.0 / math.sqrt(2.0)
_LANE = 128


def _round_up(n, m=_LANE):
    return ((n + m - 1) // m) * m


def _generator_kernel(x_ref, w0_ref, w1_ref, w2_ref, w3_ref, wf_ref, aff_ref, o_ref):
    """Fully fused LinearGenerator forward.

    x_ref        : (B, 896)  bf16   padded latent input
    w*_ref       : (Kp, Np)  bf16   padded block weights (PyTorch weight.T), biases omitted
    wf_ref       : (256,896) bf16   padded final Linear weight
    aff_ref      : (3, 896)  f32    row 0 = concat(gammas), row 1 = concat(betas), row 2 = final bias
    o_ref        : (B, 896)  f32    sigmoid output (padded lanes = 0.5, sliced off in wrapper)
    """
    w_refs = (w0_ref, w1_ref, w2_ref, w3_ref)
    inv_n = jnp.float32(1.0 / x_ref.shape[0])

    h = x_ref[...]  # bf16 MXU operand
    col = 0
    for w_ref in w_refs:
        pout = w_ref.shape[1]

        # Linear (bias omitted: exactly cancelled by training-mode BN mean subtraction).
        y = jnp.dot(h, w_ref[...], preferred_element_type=jnp.float32)

        # BatchNorm1d (training mode, biased variance), single-pass stats, folded to scale+shift.
        gamma = aff_ref[0:1, col:col + pout]
        beta = aff_ref[1:2, col:col + pout]
        col += pout
        mean = jnp.sum(y, axis=0, keepdims=True) * inv_n
        ex2 = jnp.sum(y * y, axis=0, keepdims=True) * inv_n
        var = jnp.maximum(ex2 - mean * mean, 0.0)
        scale = gamma * lax.rsqrt(var + BN_EPS)
        shift = beta - mean * scale
        z = y * scale + shift

        # Exact GELU: 0.5 * z * (1 + erf(z / sqrt(2)))  (nn.GELU() default). f32 elementwise.
        g = 0.5 * z * (1.0 + lax.erf(z * _INV_SQRT2))
        h = g.astype(jnp.bfloat16)

    # Final Linear + Sigmoid.
    bf = aff_ref[2:3, :wf_ref.shape[1]]
    y = jnp.dot(h, wf_ref[...], preferred_element_type=jnp.float32) + bf
    o_ref[...] = jax.nn.sigmoid(y).astype(o_ref.dtype)


def _vmem():
    return pl.BlockSpec(memory_space=pltpu.MemorySpace.VMEM)


def init_params(key, z_dim=784, i_dim=784, h_dim=32):
    """PyTorch-style init on the true layer shapes, then zero-pad every feature dim to a 128-lane multiple.

    Blocks: z_dim->h, h->2h, 2h->4h, 4h->8h ; final: 8h->i_dim.
    Linear weights stored as (in, out) = PyTorch weight.T, bf16 for the MXU.
    gamma=1 / beta=0 (PyTorch BatchNorm1d default); padded gamma/beta/bias lanes and padded weight
    rows/columns are 0, so padded activations stay exactly 0 through Linear+BN+GELU.
    All per-layer affines are packed into a single (3, out_pad_final) f32 buffer.
    """
    dims = [z_dim, h_dim, h_dim * 2, h_dim * 4, h_dim * 8]
    block_w = []
    gammas, betas = [], []
    for idx in range(4):
        inp, oup = dims[idx], dims[idx + 1]
        pin, pout = _round_up(inp), _round_up(oup)
        key, kw = jax.random.split(key)
        bound = 1.0 / math.sqrt(inp)
        w = jax.random.uniform(kw, (inp, oup), jnp.float32, -bound, bound)
        # NOTE: the block's Linear bias (present in the PyTorch module) is cancelled exactly by
        # training-mode BatchNorm's mean subtraction, so it is not materialized.
        w = jnp.pad(w, ((0, pin - inp), (0, pout - oup))).astype(jnp.bfloat16)
        block_w.append(w)
        gammas.append(jnp.pad(jnp.ones((oup,), jnp.float32), (0, pout - oup)))
        betas.append(jnp.zeros((pout,), jnp.float32))

    inp, oup = dims[-1], i_dim
    pin, pout_f = _round_up(inp), _round_up(oup)
    key, kw, kb = jax.random.split(key, 3)
    bound = 1.0 / math.sqrt(inp)
    wf = jax.random.uniform(kw, (inp, oup), jnp.float32, -bound, bound)
    bf = jax.random.uniform(kb, (oup,), jnp.float32, -bound, bound)
    wf = jnp.pad(wf, ((0, pin - inp), (0, pout_f - oup))).astype(jnp.bfloat16)
    bf = jnp.pad(bf, (0, pout_f - oup))

    # Pack all tiny affine vectors into one lane-dense f32 buffer -> single parameter DMA.
    gamma_cat = jnp.concatenate(gammas)           # width 640
    beta_cat = jnp.concatenate(betas)             # width 640
    width = pout_f                                # 896 >= 640
    aff = jnp.stack([
        jnp.pad(gamma_cat, (0, width - gamma_cat.shape[0])),
        jnp.pad(beta_cat, (0, width - beta_cat.shape[0])),
        bf,
    ])                                            # (3, 896) f32

    return {"block_w": tuple(block_w), "final_w": wf, "affine": aff}


@partial(jax.jit, static_argnames=("out_dim",))
def linear_generator_forward(x, params, out_dim):
    w0, w1, w2, w3 = params["block_w"]
    wf = params["final_w"]
    aff = params["affine"]

    batch, zin = x.shape
    k_pad = w0.shape[0]      # 896: layer-0 K padded to a lane multiple
    out_pad = wf.shape[1]    # 896: lane-dense padded output width

    # Pad latent to the padded K and upload as bf16 (halves x DMA, unmasked LHS loads).
    x_p = jnp.pad(x, ((0, 0), (0, k_pad - zin))).astype(jnp.bfloat16)

    out = pl.pallas_call(
        _generator_kernel,
        out_shape=jax.ShapeDtypeStruct((batch, out_pad), jnp.float32),
        in_specs=[_vmem()] * 7,
        out_specs=_vmem(),
    )(x_p, w0, w1, w2, w3, wf, aff)
    # Slice padded lanes back off (padded final columns are sigmoid(0)=0.5, discarded here).
    return out[:, :out_dim]


if __name__ == "__main__":
    Z_DIM, I_DIM, H_DIM = 784, 784, 32
    BATCH = 256  # fills the MXU M-dim and amortizes the per-call weight DMA (multiple of 8 sublanes)

    key = jax.random.PRNGKey(0)
    key, kx = jax.random.split(key)
    x = jax.random.normal(kx, (BATCH, Z_DIM), jnp.float32)

    params = init_params(key, z_dim=Z_DIM, i_dim=I_DIM, h_dim=H_DIM)

    out = linear_generator_forward(x, params, out_dim=I_DIM)
    out = jax.block_until_ready(out)

    assert out.shape == (BATCH, I_DIM), out.shape
    assert bool(jnp.all(jnp.isfinite(out)))
    assert bool(jnp.all((out >= 0.0) & (out <= 1.0)))  # sigmoid output range
    print("KERNEL_OK")
</pallas_src>

<mosaic_0001>
module attributes {stable_mosaic.version = 11 : i64} {
  func.func @_generator_kernel(%arg0: memref<256x896xbf16, #tpu.memory_space<vmem>>, %arg1: memref<896x128xbf16, #tpu.memory_space<vmem>>, %arg2: memref<128x128xbf16, #tpu.memory_space<vmem>>, %arg3: memref<128x128xbf16, #tpu.memory_space<vmem>>, %arg4: memref<128x256xbf16, #tpu.memory_space<vmem>>, %arg5: memref<256x896xbf16, #tpu.memory_space<vmem>>, %arg6: memref<3x896xf32, #tpu.memory_space<vmem>>, %arg7: memref<256x896xf32, #tpu.memory_space<vmem>>) attributes {dimension_semantics = [], scalar_prefetch = 0 : i64, scratch_operands = 0 : i64, tpu.core_type = #tpu.core_type<tc>} {
    %c0 = arith.constant 0 : index
    %c0_0 = arith.constant 0 : index
    %0 = vector.load %arg0[%c0, %c0_0] : memref<256x896xbf16, #tpu.memory_space<vmem>>, vector<256x896xbf16>
    %c0_1 = arith.constant 0 : index
    %c0_2 = arith.constant 0 : index
    %1 = vector.load %arg1[%c0_1, %c0_2] : memref<896x128xbf16, #tpu.memory_space<vmem>>, vector<896x128xbf16>
    %cst = arith.constant dense<0.000000e+00> : vector<256x128xf32>
    %2 = tpu.matmul %0, %1, %cst {dimension_numbers = #tpu.dot_dimension_numbers<[1], [0], [0], [1], [0, 0, 1, 1], [], []>} : vector<256x896xbf16>, vector<896x128xbf16>, vector<256x128xf32> -> vector<256x128xf32>
    %c0_3 = arith.constant 0 : index
    %c0_4 = arith.constant 0 : index
    %3 = vector.load %arg6[%c0_3, %c0_4] : memref<3x896xf32, #tpu.memory_space<vmem>>, vector<1x128xf32>
    %c1 = arith.constant 1 : index
    %c0_5 = arith.constant 0 : index
    %4 = vector.load %arg6[%c1, %c0_5] : memref<3x896xf32, #tpu.memory_space<vmem>>, vector<1x128xf32>
    %cst_6 = arith.constant dense<0.000000e+00> : vector<128xf32>
    %5 = vector.multi_reduction <add>, %2, %cst_6 [0] : vector<256x128xf32> to vector<128xf32>
    %6 = vector.shape_cast %5 : vector<128xf32> to vector<1x128xf32>
    %cst_7 = arith.constant 3.906250e-03 : f32
    %7 = vector.broadcast %cst_7 : f32 to vector<1x128xf32>
    %8 = arith.mulf %6, %7 : vector<1x128xf32>
    %9 = arith.mulf %2, %2 : vector<256x128xf32>
    %cst_8 = arith.constant dense<0.000000e+00> : vector<128xf32>
    %10 = vector.multi_reduction <add>, %9, %cst_8 [0] : vector<256x128xf32> to vector<128xf32>
    %11 = vector.shape_cast %10 : vector<128xf32> to vector<1x128xf32>
    %cst_9 = arith.constant 3.906250e-03 : f32
    %12 = vector.broadcast %cst_9 : f32 to vector<1x128xf32>
    %13 = arith.mulf %11, %12 : vector<1x128xf32>
    %14 = arith.mulf %8, %8 : vector<1x128xf32>
    %15 = arith.subf %13, %14 : vector<1x128xf32>
    %cst_10 = arith.constant 0.000000e+00 : f32
    %16 = vector.broadcast %cst_10 : f32 to vector<1x128xf32>
    %17 = arith.maximumf %15, %16 : vector<1x128xf32>
    %cst_11 = arith.constant 9.99999974E-6 : f32
    %18 = vector.broadcast %cst_11 : f32 to vector<1x128xf32>
    %19 = arith.addf %17, %18 : vector<1x128xf32>
    %20 = math.rsqrt %19 : vector<1x128xf32>
    %21 = arith.mulf %3, %20 : vector<1x128xf32>
    %22 = arith.mulf %8, %21 : vector<1x128xf32>
    %23 = arith.subf %4, %22 : vector<1x128xf32>
    %24 = vector.broadcast %21 : vector<1x128xf32> to vector<256x128xf32>
    %25 = arith.mulf %2, %24 : vector<256x128xf32>
    %26 = vector.broadcast %23 : vector<1x128xf32> to vector<256x128xf32>
    %27 = arith.addf %25, %26 : vector<256x128xf32>
    %cst_12 = arith.constant 5.000000e-01 : f32
    %28 = vector.broadcast %cst_12 : f32 to vector<256x128xf32>
    %29 = arith.mulf %28, %27 : vector<256x128xf32>
    %cst_13 = arith.constant 0.707106769 : f32
    %30 = vector.broadcast %cst_13 : f32 to vector<256x128xf32>
    %31 = arith.mulf %27, %30 : vector<256x128xf32>
    %32 = math.erf %31 : vector<256x128xf32>
    %cst_14 = arith.constant 1.000000e+00 : f32
    %33 = vector.broadcast %cst_14 : f32 to vector<256x128xf32>
    %34 = arith.addf %33, %32 : vector<256x128xf32>
    %35 = arith.mulf %29, %34 : vector<256x128xf32>
    %36 = arith.truncf %35 : vector<256x128xf32> to vector<256x128xbf16>
    %c0_15 = arith.constant 0 : index
    %c0_16 = arith.constant 0 : index
    %37 = vector.load %arg2[%c0_15, %c0_16] : memref<128x128xbf16, #tpu.memory_space<vmem>>, vector<128x128xbf16>
    %cst_17 = arith.constant dense<0.000000e+00> : vector<256x128xf32>
    %38 = tpu.matmul %36, %37, %cst_17 {dimension_numbers = #tpu.dot_dimension_numbers<[1], [0], [0], [1], [0, 0, 1, 1], [], []>} : vector<256x128xbf16>, vector<128x128xbf16>, vector<256x128xf32> -> vector<256x128xf32>
    %c0_18 = arith.constant 0 : index
    %c128 = arith.constant 128 : index
    %39 = vector.load %arg6[%c0_18, %c128] : memref<3x896xf32, #tpu.memory_space<vmem>>, vector<1x128xf32>
    %c1_19 = arith.constant 1 : index
    %c128_20 = arith.constant 128 : index
    %40 = vector.load %arg6[%c1_19, %c128_20] : memref<3x896xf32, #tpu.memory_space<vmem>>, vector<1x128xf32>
    %cst_21 = arith.constant dense<0.000000e+00> : vector<128xf32>
    %41 = vector.multi_reduction <add>, %38, %cst_21 [0] : vector<256x128xf32> to vector<128xf32>
    %42 = vector.shape_cast %41 : vector<128xf32> to vector<1x128xf32>
    %cst_22 = arith.constant 3.906250e-03 : f32
    %43 = vector.broadcast %cst_22 : f32 to vector<1x128xf32>
    %44 = arith.mulf %42, %43 : vector<1x128xf32>
    %45 = arith.mulf %38, %38 : vector<256x128xf32>
    %cst_23 = arith.constant dense<0.000000e+00> : vector<128xf32>
    %46 = vector.multi_reduction <add>, %45, %cst_23 [0] : vector<256x128xf32> to vector<128xf32>
    %47 = vector.shape_cast %46 : vector<128xf32> to vector<1x128xf32>
    %cst_24 = arith.constant 3.906250e-03 : f32
    %48 = vector.broadcast %cst_24 : f32 to vector<1x128xf32>
    %49 = arith.mulf %47, %48 : vector<1x128xf32>
    %50 = arith.mulf %44, %44 : vector<1x128xf32>
    %51 = arith.subf %49, %50 : vector<1x128xf32>
    %cst_25 = arith.constant 0.000000e+00 : f32
    %52 = vector.broadcast %cst_25 : f32 to vector<1x128xf32>
    %53 = arith.maximumf %51, %52 : vector<1x128xf32>
    %cst_26 = arith.constant 9.99999974E-6 : f32
    %54 = vector.broadcast %cst_26 : f32 to vector<1x128xf32>
    %55 = arith.addf %53, %54 : vector<1x128xf32>
    %56 = math.rsqrt %55 : vector<1x128xf32>
    %57 = arith.mulf %39, %56 : vector<1x128xf32>
    %58 = arith.mulf %44, %57 : vector<1x128xf32>
    %59 = arith.subf %40, %58 : vector<1x128xf32>
    %60 = vector.broadcast %57 : vector<1x128xf32> to vector<256x128xf32>
    %61 = arith.mulf %38, %60 : vector<256x128xf32>
    %62 = vector.broadcast %59 : vector<1x128xf32> to vector<256x128xf32>
    %63 = arith.addf %61, %62 : vector<256x128xf32>
    %cst_27 = arith.constant 5.000000e-01 : f32
    %64 = vector.broadcast %cst_27 : f32 to vector<256x128xf32>
    %65 = arith.mulf %64, %63 : vector<256x128xf32>
    %cst_28 = arith.constant 0.707106769 : f32
    %66 = vector.broadcast %cst_28 : f32 to vector<256x128xf32>
    %67 = arith.mulf %63, %66 : vector<256x128xf32>
    %68 = math.erf %67 : vector<256x128xf32>
    %cst_29 = arith.constant 1.000000e+00 : f32
    %69 = vector.broadcast %cst_29 : f32 to vector<256x128xf32>
    %70 = arith.addf %69, %68 : vector<256x128xf32>
    %71 = arith.mulf %65, %70 : vector<256x128xf32>
    %72 = arith.truncf %71 : vector<256x128xf32> to vector<256x128xbf16>
    %c0_30 = arith.constant 0 : index
    %c0_31 = arith.constant 0 : index
    %73 = vector.load %arg3[%c0_30, %c0_31] : memref<128x128xbf16, #tpu.memory_space<vmem>>, vector<128x128xbf16>
    %cst_32 = arith.constant dense<0.000000e+00> : vector<256x128xf32>
    %74 = tpu.matmul %72, %73, %cst_32 {dimension_numbers = #tpu.dot_dimension_numbers<[1], [0], [0], [1], [0, 0, 1, 1], [], []>} : vector<256x128xbf16>, vector<128x128xbf16>, vector<256x128xf32> -> vector<256x128xf32>
    %c0_33 = arith.constant 0 : index
    %c256 = arith.constant 256 : index
    %75 = vector.load %arg6[%c0_33, %c256] : memref<3x896xf32, #tpu.memory_space<vmem>>, vector<1x128xf32>
    %c1_34 = arith.constant 1 : index
    %c256_35 = arith.constant 256 : index
    %76 = vector.load %arg6[%c1_34, %c256_35] : memref<3x896xf32, #tpu.memory_space<vmem>>, vector<1x128xf32>
    %cst_36 = arith.constant dense<0.000000e+00> : vector<128xf32>
    %77 = vector.multi_reduction <add>, %74, %cst_36 [0] : vector<256x128xf32> to vector<128xf32>
    %78 = vector.shape_cast %77 : vector<128xf32> to vector<1x128xf32>
    %cst_37 = arith.constant 3.906250e-03 : f32
    %79 = vector.broadcast %cst_37 : f32 to vector<1x128xf32>
    %80 = arith.mulf %78, %79 : vector<1x128xf32>
    %81 = arith.mulf %74, %74 : vector<256x128xf32>
    %cst_38 = arith.constant dense<0.000000e+00> : vector<128xf32>
    %82 = vector.multi_reduction <add>, %81, %cst_38 [0] : vector<256x128xf32> to vector<128xf32>
    %83 = vector.shape_cast %82 : vector<128xf32> to vector<1x128xf32>
    %cst_39 = arith.constant 3.906250e-03 : f32
    %84 = vector.broadcast %cst_39 : f32 to vector<1x128xf32>
    %85 = arith.mulf %83, %84 : vector<1x128xf32>
    %86 = arith.mulf %80, %80 : vector<1x128xf32>
    %87 = arith.subf %85, %86 : vector<1x128xf32>
    %cst_40 = arith.constant 0.000000e+00 : f32
    %88 = vector.broadcast %cst_40 : f32 to vector<1x128xf32>
    %89 = arith.maximumf %87, %88 : vector<1x128xf32>
    %cst_41 = arith.constant 9.99999974E-6 : f32
    %90 = vector.broadcast %cst_41 : f32 to vector<1x128xf32>
    %91 = arith.addf %89, %90 : vector<1x128xf32>
    %92 = math.rsqrt %91 : vector<1x128xf32>
    %93 = arith.mulf %75, %92 : vector<1x128xf32>
    %94 = arith.mulf %80, %93 : vector<1x128xf32>
    %95 = arith.subf %76, %94 : vector<1x128xf32>
    %96 = vector.broadcast %93 : vector<1x128xf32> to vector<256x128xf32>
    %97 = arith.mulf %74, %96 : vector<256x128xf32>
    %98 = vector.broadcast %95 : vector<1x128xf32> to vector<256x128xf32>
    %99 = arith.addf %97, %98 : vector<256x128xf32>
    %cst_42 = arith.constant 5.000000e-01 : f32
    %100 = vector.broadcast %cst_42 : f32 to vector<256x128xf32>
    %101 = arith.mulf %100, %99 : vector<256x128xf32>
    %cst_43 = arith.constant 0.707106769 : f32
    %102 = vector.broadcast %cst_43 : f32 to vector<256x128xf32>
    %103 = arith.mulf %99, %102 : vector<256x128xf32>
    %104 = math.erf %103 : vector<256x128xf32>
    %cst_44 = arith.constant 1.000000e+00 : f32
    %105 = vector.broadcast %cst_44 : f32 to vector<256x128xf32>
    %106 = arith.addf %105, %104 : vector<256x128xf32>
    %107 = arith.mulf %101, %106 : vector<256x128xf32>
    %108 = arith.truncf %107 : vector<256x128xf32> to vector<256x128xbf16>
    %c0_45 = arith.constant 0 : index
    %c0_46 = arith.constant 0 : index
    %109 = vector.load %arg4[%c0_45, %c0_46] : memref<128x256xbf16, #tpu.memory_space<vmem>>, vector<128x256xbf16>
    %cst_47 = arith.constant dense<0.000000e+00> : vector<256x256xf32>
    %110 = tpu.matmul %108, %109, %cst_47 {dimension_numbers = #tpu.dot_dimension_numbers<[1], [0], [0], [1], [0, 0, 1, 1], [], []>} : vector<256x128xbf16>, vector<128x256xbf16>, vector<256x256xf32> -> vector<256x256xf32>
    %c0_48 = arith.constant 0 : index
    %c384 = arith.constant 384 : index
    %111 = vector.load %arg6[%c0_48, %c384] : memref<3x896xf32, #tpu.memory_space<vmem>>, vector<1x256xf32>
    %c1_49 = arith.constant 1 : index
    %c384_50 = arith.constant 384 : index
    %112 = vector.load %arg6[%c1_49, %c384_50] : memref<3x896xf32, #tpu.memory_space<vmem>>, vector<1x256xf32>
    %cst_51 = arith.constant dense<0.000000e+00> : vector<256xf32>
    %113 = vector.multi_reduction <add>, %110, %cst_51 [0] : vector<256x256xf32> to vector<256xf32>
    %114 = vector.shape_cast %113 : vector<256xf32> to vector<1x256xf32>
    %cst_52 = arith.constant 3.906250e-03 : f32
    %115 = vector.broadcast %cst_52 : f32 to vector<1x256xf32>
    %116 = arith.mulf %114, %115 : vector<1x256xf32>
    %117 = arith.mulf %110, %110 : vector<256x256xf32>
    %cst_53 = arith.constant dense<0.000000e+00> : vector<256xf32>
    %118 = vector.multi_reduction <add>, %117, %cst_53 [0] : vector<256x256xf32> to vector<256xf32>
    %119 = vector.shape_cast %118 : vector<256xf32> to vector<1x256xf32>
    %cst_54 = arith.constant 3.906250e-03 : f32
    %120 = vector.broadcast %cst_54 : f32 to vector<1x256xf32>
    %121 = arith.mulf %119, %120 : vector<1x256xf32>
    %122 = arith.mulf %116, %116 : vector<1x256xf32>
    %123 = arith.subf %121, %122 : vector<1x256xf32>
    %cst_55 = arith.constant 0.000000e+00 : f32
    %124 = vector.broadcast %cst_55 : f32 to vector<1x256xf32>
    %125 = arith.maximumf %123, %124 : vector<1x256xf32>
    %cst_56 = arith.constant 9.99999974E-6 : f32
    %126 = vector.broadcast %cst_56 : f32 to vector<1x256xf32>
    %127 = arith.addf %125, %126 : vector<1x256xf32>
    %128 = math.rsqrt %127 : vector<1x256xf32>
    %129 = arith.mulf %111, %128 : vector<1x256xf32>
    %130 = arith.mulf %116, %129 : vector<1x256xf32>
    %131 = arith.subf %112, %130 : vector<1x256xf32>
    %132 = vector.broadcast %129 : vector<1x256xf32> to vector<256x256xf32>
    %133 = arith.mulf %110, %132 : vector<256x256xf32>
    %134 = vector.broadcast %131 : vector<1x256xf32> to vector<256x256xf32>
    %135 = arith.addf %133, %134 : vector<256x256xf32>
    %cst_57 = arith.constant 5.000000e-01 : f32
    %136 = vector.broadcast %cst_57 : f32 to vector<256x256xf32>
    %137 = arith.mulf %136, %135 : vector<256x256xf32>
    %cst_58 = arith.constant 0.707106769 : f32
    %138 = vector.broadcast %cst_58 : f32 to vector<256x256xf32>
    %139 = arith.mulf %135, %138 : vector<256x256xf32>
    %140 = math.erf %139 : vector<256x256xf32>
    %cst_59 = arith.constant 1.000000e+00 : f32
    %141 = vector.broadcast %cst_59 : f32 to vector<256x256xf32>
    %142 = arith.addf %141, %140 : vector<256x256xf32>
    %143 = arith.mulf %137, %142 : vector<256x256xf32>
    %144 = arith.truncf %143 : vector<256x256xf32> to vector<256x256xbf16>
    %c2 = arith.constant 2 : index
    %c0_60 = arith.constant 0 : index
    %145 = vector.load %arg6[%c2, %c0_60] : memref<3x896xf32, #tpu.memory_space<vmem>>, vector<1x896xf32>
    %c0_61 = arith.constant 0 : index
    %c0_62 = arith.constant 0 : index
    %146 = vector.load %arg5[%c0_61, %c0_62] : memref<256x896xbf16, #tpu.memory_space<vmem>>, vector<256x896xbf16>
    %cst_63 = arith.constant dense<0.000000e+00> : vector<256x896xf32>
    %147 = tpu.matmul %144, %146, %cst_63 {dimension_numbers = #tpu.dot_dimension_numbers<[1], [0], [0], [1], [0, 0, 1, 1], [], []>} : vector<256x256xbf16>, vector<256x896xbf16>, vector<256x896xf32> -> vector<256x896xf32>
    %148 = vector.broadcast %145 : vector<1x896xf32> to vector<256x896xf32>
    %149 = arith.addf %147, %148 : vector<256x896xf32>
    %150 = arith.negf %149 : vector<256x896xf32>
    %151 = math.exp %150 : vector<256x896xf32>
    %cst_64 = arith.constant 1.000000e+00 : f32
    %152 = vector.broadcast %cst_64 : f32 to vector<256x896xf32>
    %153 = arith.addf %152, %151 : vector<256x896xf32>
    %154 = arith.divf %152, %153 : vector<256x896xf32>
    %c0_65 = arith.constant 0 : index
    %c0_66 = arith.constant 0 : index
    %155 = vector.load %arg7[%c0_65, %c0_66] : memref<256x896xf32, #tpu.memory_space<vmem>>, vector<256x896xf32>
    tpu.vector_store %arg7[%c0_65, %c0_66], %154 {strides = array<i32>} : memref<256x896xf32, #tpu.memory_space<vmem>>, vector<256x896xf32>,
    return
  }
}

</mosaic_0001>

<llo_original>
// kernel: linear_generator_forward.1
$region0: #{linear_generator_forward.1}
  #allocation0 [shape = 'u32[]', space=smem, size = 0x4, offset = 0x4, fixed_abs, tag = 'smem constant byte address 0x4 - core index']
  #allocation1 [shape = 'u32[144,128]{1,0:T(1,128)}', space=vmem, size = 0x12000, scoped, tag = 'internal scratch']
  %s0 = inlined_call_operand.vmem [shape: bf16[256,896], index: 0, kind: input, shape index: {}]
  %s1 = inlined_call_operand.vmem [shape: bf16[896,128], index: 1, kind: input, shape index: {}]
  %s2 = inlined_call_operand.vmem [shape: bf16[128,128], index: 2, kind: input, shape index: {}]
  %s3 = inlined_call_operand.vmem [shape: bf16[128,128], index: 3, kind: input, shape index: {}]
  %s4 = inlined_call_operand.vmem [shape: bf16[128,256], index: 4, kind: input, shape index: {}]
  %s5 = inlined_call_operand.vmem [shape: bf16[256,896], index: 5, kind: input, shape index: {}]
  %s6 = inlined_call_operand.vmem [shape: f32[3,896], index: 6, kind: input, shape index: {}]
  %s7 = inlined_call_operand.vmem [shape: f32[256,896], index: 7, kind: output, shape index: {}]
  %s8 = sld [smem:[#allocation0]]
  $region38: #{linear_generator_forward.1} parent=0
    _
  %s10 = ssub.s32 1, %s8
  %s11 = scalar_select 0, %s10, %s8
  // Predicated region
  $region2: #{linear_generator_forward.1} parent=0 // pred_check
    _
  $region3: #{linear_generator_forward.1} parent=0 // pred_check_branch
    %13 = sbr.rel (0) target = $region5
  $region4: #{linear_generator_forward.1} parent=0 // pred_region
    _
  $region5: #{linear_generator_forward.1} parent=0 // pred_fallthru
    _
  // Predicated region
  $region6: #{linear_generator_forward.1} parent=0 // pred_check
    _
  $region7: #{linear_generator_forward.1} parent=0 // pred_check_branch
    %15 = sbr.rel (0) target = $region9
  $region8: #{linear_generator_forward.1} parent=0 // pred_region
    _
  $region9: #{linear_generator_forward.1} parent=0 // pred_fallthru
    _
  // Predicated region
  $region10: #{linear_generator_forward.1} parent=0 // pred_check
    _
  $region11: #{linear_generator_forward.1} parent=0 // pred_check_branch
    %17 = sbr.rel (0) target = $region13
  $region12: #{linear_generator_forward.1} parent=0 // pred_region
    _
  $region13: #{linear_generator_forward.1} parent=0 // pred_fallthru
    _
  // Predicated region
  $region14: #{linear_generator_forward.1} parent=0 // pred_check
    _
  $region15: #{linear_generator_forward.1} parent=0 // pred_check_branch
    %19 = sbr.rel (0) target = $region17
  $region16: #{linear_generator_forward.1} parent=0 // pred_region
    _
  $region17: #{linear_generator_forward.1} parent=0 // pred_fallthru
    _
  // Predicated region
  $region18: #{linear_generator_forward.1} parent=0 // pred_check
    _
  $region19: #{linear_generator_forward.1} parent=0 // pred_check_branch
    %21 = sbr.rel (0) target = $region21
  $region20: #{linear_generator_forward.1} parent=0 // pred_region
    _
  $region21: #{linear_generator_forward.1} parent=0 // pred_fallthru
    _
  // Predicated region
  $region22: #{linear_generator_forward.1} parent=0 // pred_check
    _
  $region23: #{linear_generator_forward.1} parent=0 // pred_check_branch
    %23 = sbr.rel (0) target = $region25
  $region24: #{linear_generator_forward.1} parent=0 // pred_region
    _
  $region25: #{linear_generator_forward.1} parent=0 // pred_fallthru
    _
  // Predicated region
  $region26: #{linear_generator_forward.1} parent=0 // pred_check
    _
  $region27: #{linear_generator_forward.1} parent=0 // pred_check_branch
    %25 = sbr.rel (0) target = $region29
  $region28: #{linear_generator_forward.1} parent=0 // pred_region
    _
  $region29: #{linear_generator_forward.1} parent=0 // pred_fallthru
    _
  %v27 = vld [vmem:[%s0] sm:$0xff]
  %v28 = vld [vmem:[%s0 + $0x8] sm:$0xff]
  %v29 = vld [vmem:[%s0 + $0x10] sm:$0xff]
  %v30 = vld [vmem:[%s0 + $0x18] sm:$0xf]
  %v31 = vld [vmem:[%s0 + $0x1c] sm:$0xff]
  %v32 = vld [vmem:[%s0 + $0x24] sm:$0xff]
  %v33 = vld [vmem:[%s0 + $0x2c] sm:$0xff]
  %v34 = vld [vmem:[%s0 + $0x34] sm:$0xf]
  %v35 = vld [vmem:[%s0 + $0x38] sm:$0xff]
  %v36 = vld [vmem:[%s0 + $0x40] sm:$0xff]
  %v37 = vld [vmem:[%s0 + $0x48] sm:$0xff]
  %v38 = vld [vmem:[%s0 + $0x50] sm:$0xf]
  %v39 = vld [vmem:[%s0 + $0x54] sm:$0xff]
  %v40 = vld [vmem:[%s0 + $0x5c] sm:$0xff]
  %v41 = vld [vmem:[%s0 + $0x64] sm:$0xff]
  %v42 = vld [vmem:[%s0 + $0x6c] sm:$0xf]
  %v43 = vld [vmem:[%s0 + $0x70] sm:$0xff]
  %v44 = vld [vmem:[%s0 + $0x78] sm:$0xff]
  %v45 = vld [vmem:[%s0 + $0x80] sm:$0xff]
  %v46 = vld [vmem:[%s0 + $0x88] sm:$0xf]
  %v47 = vld [vmem:[%s0 + $0x8c] sm:$0xff]
  %v48 = vld [vmem:[%s0 + $0x94] sm:$0xff]
  %v49 = vld [vmem:[%s0 + $0x9c] sm:$0xff]
  %v50 = vld [vmem:[%s0 + $0xa4] sm:$0xf]
  %v51 = vld [vmem:[%s0 + $0xa8] sm:$0xff]
  %v52 = vld [vmem:[%s0 + $0xb0] sm:$0xff]
  %v53 = vld [vmem:[%s0 + $0xb8] sm:$0xff]
  %v54 = vld [vmem:[%s0 + $0xc0] sm:$0xf]
  %v55 = vld [vmem:[%s0 + $0xc4] sm:$0xff]
  %v56 = vld [vmem:[%s0 + $0xcc] sm:$0xff]
  %v57 = vld [vmem:[%s0 + $0xd4] sm:$0xff]
  %v58 = vld [vmem:[%s0 + $0xdc] sm:$0xf]
  %v59 = vld [vmem:[%s0 + $0xe0] sm:$0xff]
  %v60 = vld [vmem:[%s0 + $0xe8] sm:$0xff]
  %v61 = vld [vmem:[%s0 + $0xf0] sm:$0xff]
  %v62 = vld [vmem:[%s0 + $0xf8] sm:$0xf]
  %v63 = vld [vmem:[%s0 + $0xfc] sm:$0xff]
  %v64 = vld [vmem:[%s0 + $0x104] sm:$0xff]
  %v65 = vld [vmem:[%s0 + $0x10c] sm:$0xff]
  %v66 = vld [vmem:[%s0 + $0x114] sm:$0xf]
  %v67 = vld [vmem:[%s0 + $0x118] sm:$0xff]
  %v68 = vld [vmem:[%s0 + $0x120] sm:$0xff]
  %v69 = vld [vmem:[%s0 + $0x128] sm:$0xff]
  %v70 = vld [vmem:[%s0 + $0x130] sm:$0xf]
  %v71 = vld [vmem:[%s0 + $0x134] sm:$0xff]
  %v72 = vld [vmem:[%s0 + $0x13c] sm:$0xff]
  %v73 = vld [vmem:[%s0 + $0x144] sm:$0xff]
  %v74 = vld [vmem:[%s0 + $0x14c] sm:$0xf]
  %v75 = vld [vmem:[%s0 + $0x150] sm:$0xff]
  %v76 = vld [vmem:[%s0 + $0x158] sm:$0xff]
  %v77 = vld [vmem:[%s0 + $0x160] sm:$0xff]
  %v78 = vld [vmem:[%s0 + $0x168] sm:$0xf]
  %v79 = vld [vmem:[%s0 + $0x16c] sm:$0xff]
  %v80 = vld [vmem:[%s0 + $0x174] sm:$0xff]
  %v81 = vld [vmem:[%s0 + $0x17c] sm:$0xff]
  %v82 = vld [vmem:[%s0 + $0x184] sm:$0xf]
  %v83 = vld [vmem:[%s0 + $0x188] sm:$0xff]
  %v84 = vld [vmem:[%s0 + $0x190] sm:$0xff]
  %v85 = vld [vmem:[%s0 + $0x198] sm:$0xff]
  %v86 = vld [vmem:[%s0 + $0x1a0] sm:$0xf]
  %v87 = vld [vmem:[%s0 + $0x1a4] sm:$0xff]
  %v88 = vld [vmem:[%s0 + $0x1ac] sm:$0xff]
  %v89 = vld [vmem:[%s0 + $0x1b4] sm:$0xff]
  %v90 = vld [vmem:[%s0 + $0x1bc] sm:$0xf]
  %v91 = vld [vmem:[%s0 + $0x1c0] sm:$0xff]
  %v92 = vld [vmem:[%s0 + $0x1c8] sm:$0xff]
  %v93 = vld [vmem:[%s0 + $0x1d0] sm:$0xff]
  %v94 = vld [vmem:[%s0 + $0x1d8] sm:$0xf]
  %v95 = vld [vmem:[%s0 + $0x1dc] sm:$0xff]
  %v96 = vld [vmem:[%s0 + $0x1e4] sm:$0xff]
  %v97 = vld [vmem:[%s0 + $0x1ec] sm:$0xff]
  %v98 = vld [vmem:[%s0 + $0x1f4] sm:$0xf]
  %v99 = vld [vmem:[%s0 + $0x1f8] sm:$0xff]
  %v100 = vld [vmem:[%s0 + $0x200] sm:$0xff]
  %v101 = vld [vmem:[%s0 + $0x208] sm:$0xff]
  %v102 = vld [vmem:[%s0 + $0x210] sm:$0xf]
  %v103 = vld [vmem:[%s0 + $0x214] sm:$0xff]
  %v104 = vld [vmem:[%s0 + $0x21c] sm:$0xff]
  %v105 = vld [vmem:[%s0 + $0x224] sm:$0xff]
  %v106 = vld [vmem:[%s0 + $0x22c] sm:$0xf]
  %v107 = vld [vmem:[%s0 + $0x230] sm:$0xff]
  %v108 = vld [vmem:[%s0 + $0x238] sm:$0xff]
  %v109 = vld [vmem:[%s0 + $0x240] sm:$0xff]
  %v110 = vld [vmem:[%s0 + $0x248] sm:$0xf]
  %v111 = vld [vmem:[%s0 + $0x24c] sm:$0xff]
  %v112 = vld [vmem:[%s0 + $0x254] sm:$0xff]
  %v113 = vld [vmem:[%s0 + $0x25c] sm:$0xff]
  %v114 = vld [vmem:[%s0 + $0x264] sm:$0xf]
  %v115 = vld [vmem:[%s0 + $0x268] sm:$0xff]
  %v116 = vld [vmem:[%s0 + $0x270] sm:$0xff]
  %v117 = vld [vmem:[%s0 + $0x278] sm:$0xff]
  %v118 = vld [vmem:[%s0 + $0x280] sm:$0xf]
  %v119 = vld [vmem:[%s0 + $0x284] sm:$0xff]
  %v120 = vld [vmem:[%s0 + $0x28c] sm:$0xff]
  %v121 = vld [vmem:[%s0 + $0x294] sm:$0xff]
  %v122 = vld [vmem:[%s0 + $0x29c] sm:$0xf]
  %v123 = vld [vmem:[%s0 + $0x2a0] sm:$0xff]
  %v124 = vld [vmem:[%s0 + $0x2a8] sm:$0xff]
  %v125 = vld [vmem:[%s0 + $0x2b0] sm:$0xff]
  %v126 = vld [vmem:[%s0 + $0x2b8] sm:$0xf]
  %v127 = vld [vmem:[%s0 + $0x2bc] sm:$0xff]
  %v128 = vld [vmem:[%s0 + $0x2c4] sm:$0xff]
  %v129 = vld [vmem:[%s0 + $0x2cc] sm:$0xff]
  %v130 = vld [vmem:[%s0 + $0x2d4] sm:$0xf]
  %v131 = vld [vmem:[%s0 + $0x2d8] sm:$0xff]
  %v132 = vld [vmem:[%s0 + $0x2e0] sm:$0xff]
  %v133 = vld [vmem:[%s0 + $0x2e8] sm:$0xff]
  %v134 = vld [vmem:[%s0 + $0x2f0] sm:$0xf]
  %v135 = vld [vmem:[%s0 + $0x2f4] sm:$0xff]
  %v136 = vld [vmem:[%s0 + $0x2fc] sm:$0xff]
  %v137 = vld [vmem:[%s0 + $0x304] sm:$0xff]
  %v138 = vld [vmem:[%s0 + $0x30c] sm:$0xf]
  %v139 = vld [vmem:[%s0 + $0x310] sm:$0xff]
  %v140 = vld [vmem:[%s0 + $0x318] sm:$0xff]
  %v141 = vld [vmem:[%s0 + $0x320] sm:$0xff]
  %v142 = vld [vmem:[%s0 + $0x328] sm:$0xf]
  %v143 = vld [vmem:[%s0 + $0x32c] sm:$0xff]
  %v144 = vld [vmem:[%s0 + $0x334] sm:$0xff]
  %v145 = vld [vmem:[%s0 + $0x33c] sm:$0xff]
  %v146 = vld [vmem:[%s0 + $0x344] sm:$0xf]
  %v147 = vld [vmem:[%s0 + $0x348] sm:$0xff]
  %v148 = vld [vmem:[%s0 + $0x350] sm:$0xff]
  %v149 = vld [vmem:[%s0 + $0x358] sm:$0xff]
  %v150 = vld [vmem:[%s0 + $0x360] sm:$0xf]
  %v151 = vld [vmem:[%s0 + $0x364] sm:$0xff]
  %v152 = vld [vmem:[%s0 + $0x36c] sm:$0xff]
  %v153 = vld [vmem:[%s0 + $0x374] sm:$0xff]
  %v154 = vld [vmem:[%s0 + $0x37c] sm:$0xf]
  %v155 = vld [vmem:[%s1] sm:$0xf]
  %v156 = vld [vmem:[%s1 + $0x4] sm:$0xf]
  %v157 = vld [vmem:[%s1 + $0x8] sm:$0xf]
  %v158 = vld [vmem:[%s1 + $0xc] sm:$0xf]
  %v159 = vld [vmem:[%s1 + $0x10] sm:$0xf]
  %v160 = vld [vmem:[%s1 + $0x14] sm:$0xf]
  %v161 = vld [vmem:[%s1 + $0x18] sm:$0xf]
  %v162 = vld [vmem:[%s1 + $0x1c] sm:$0xf]
  %v163 = vld [vmem:[%s1 + $0x20] sm:$0xf]
  %v164 = vld [vmem:[%s1 + $0x24] sm:$0xf]
  %v165 = vld [vmem:[%s1 + $0x28] sm:$0xf]
  %v166 = vld [vmem:[%s1 + $0x2c] sm:$0xf]
  %v167 = vld [vmem:[%s1 + $0x30] sm:$0xf]
  %v168 = vld [vmem:[%s1 + $0x34] sm:$0xf]
  %v169 = vld [vmem:[%s1 + $0x38] sm:$0xf]
  %v170 = vld [vmem:[%s1 + $0x3c] sm:$0xf]
  %v171 = vld [vmem:[%s1 + $0x40] sm:$0xf]
  %v172 = vld [vmem:[%s1 + $0x44] sm:$0xf]
  %v173 = vld [vmem:[%s1 + $0x48] sm:$0xf]
  %v174 = vld [vmem:[%s1 + $0x4c] sm:$0xf]
  %v175 = vld [vmem:[%s1 + $0x50] sm:$0xf]
  %v176 = vld [vmem:[%s1 + $0x54] sm:$0xf]
  %v177 = vld [vmem:[%s1 + $0x58] sm:$0xf]
  %v178 = vld [vmem:[%s1 + $0x5c] sm:$0xf]
  %v179 = vld [vmem:[%s1 + $0x60] sm:$0xf]
  %v180 = vld [vmem:[%s1 + $0x64] sm:$0xf]
  %v181 = vld [vmem:[%s1 + $0x68] sm:$0xf]
  %v182 = vld [vmem:[%s1 + $0x6c] sm:$0xf]
  %v183 = vld [vmem:[%s1 + $0x70] sm:$0xf]
  %v184 = vld [vmem:[%s1 + $0x74] sm:$0xf]
  %v185 = vld [vmem:[%s1 + $0x78] sm:$0xf]
  %v186 = vld [vmem:[%s1 + $0x7c] sm:$0xf]
  %v187 = vld [vmem:[%s1 + $0x80] sm:$0xf]
  %v188 = vld [vmem:[%s1 + $0x84] sm:$0xf]
  %v189 = vld [vmem:[%s1 + $0x88] sm:$0xf]
  %v190 = vld [vmem:[%s1 + $0x8c] sm:$0xf]
  %v191 = vld [vmem:[%s1 + $0x90] sm:$0xf]
  %v192 = vld [vmem:[%s1 + $0x94] sm:$0xf]
  %v193 = vld [vmem:[%s1 + $0x98] sm:$0xf]
  %v194 = vld [vmem:[%s1 + $0x9c] sm:$0xf]
  %v195 = vld [vmem:[%s1 + $0xa0] sm:$0xf]
  %v196 = vld [vmem:[%s1 + $0xa4] sm:$0xf]
  %v197 = vld [vmem:[%s1 + $0xa8] sm:$0xf]
  %v198 = vld [vmem:[%s1 + $0xac] sm:$0xf]
  %v199 = vld [vmem:[%s1 + $0xb0] sm:$0xf]
  %v200 = vld [vmem:[%s1 + $0xb4] sm:$0xf]
  %v201 = vld [vmem:[%s1 + $0xb8] sm:$0xf]
  %v202 = vld [vmem:[%s1 + $0xbc] sm:$0xf]
  %v203 = vld [vmem:[%s1 + $0xc0] sm:$0xf]
  %v204 = vld [vmem:[%s1 + $0xc4] sm:$0xf]
  %v205 = vld [vmem:[%s1 + $0xc8] sm:$0xf]
  %v206 = vld [vmem:[%s1 + $0xcc] sm:$0xf]
  %v207 = vld [vmem:[%s1 + $0xd0] sm:$0xf]
  %v208 = vld [vmem:[%s1 + $0xd4] sm:$0xf]
  %v209 = vld [vmem:[%s1 + $0xd8] sm:$0xf]
  %v210 = vld [vmem:[%s1 + $0xdc] sm:$0xf]
  %v211 = vld [vmem:[%s1 + $0xe0] sm:$0xf]
  %v212 = vld [vmem:[%s1 + $0xe4] sm:$0xf]
  %v213 = vld [vmem:[%s1 + $0xe8] sm:$0xf]
  %v214 = vld [vmem:[%s1 + $0xec] sm:$0xf]
  %v215 = vld [vmem:[%s1 + $0xf0] sm:$0xf]
  %v216 = vld [vmem:[%s1 + $0xf4] sm:$0xf]
  %v217 = vld [vmem:[%s1 + $0xf8] sm:$0xf]
  %v218 = vld [vmem:[%s1 + $0xfc] sm:$0xf]
  %v219 = vld [vmem:[%s1 + $0x100] sm:$0xf]
  %v220 = vld [vmem:[%s1 + $0x104] sm:$0xf]
  %v221 = vld [vmem:[%s1 + $0x108] sm:$0xf]
  %v222 = vld [vmem:[%s1 + $0x10c] sm:$0xf]
  %v223 = vld [vmem:[%s1 + $0x110] sm:$0xf]
  %v224 = vld [vmem:[%s1 + $0x114] sm:$0xf]
  %v225 = vld [vmem:[%s1 + $0x118] sm:$0xf]
  %v226 = vld [vmem:[%s1 + $0x11c] sm:$0xf]
  %v227 = vld [vmem:[%s1 + $0x120] sm:$0xf]
  %v228 = vld [vmem:[%s1 + $0x124] sm:$0xf]
  %v229 = vld [vmem:[%s1 + $0x128] sm:$0xf]
  %v230 = vld [vmem:[%s1 + $0x12c] sm:$0xf]
  %v231 = vld [vmem:[%s1 + $0x130] sm:$0xf]
  %v232 = vld [vmem:[%s1 + $0x134] sm:$0xf]
  %v233 = vld [vmem:[%s1 + $0x138] sm:$0xf]
  %v234 = vld [vmem:[%s1 + $0x13c] sm:$0xf]
  %v235 = vld [vmem:[%s1 + $0x140] sm:$0xf]
  %v236 = vld [vmem:[%s1 + $0x144] sm:$0xf]
  %v237 = vld [vmem:[%s1 + $0x148] sm:$0xf]
  %v238 = vld [vmem:[%s1 + $0x14c] sm:$0xf]
  %v239 = vld [vmem:[%s1 + $0x150] sm:$0xf]
  %v240 = vld [vmem:[%s1 + $0x154] sm:$0xf]
  %v241 = vld [vmem:[%s1 + $0x158] sm:$0xf]
  %v242 = vld [vmem:[%s1 + $0x15c] sm:$0xf]
  %v243 = vld [vmem:[%s1 + $0x160] sm:$0xf]
  %v244 = vld [vmem:[%s1 + $0x164] sm:$0xf]
  %v245 = vld [vmem:[%s1 + $0x168] sm:$0xf]
  %v246 = vld [vmem:[%s1 + $0x16c] sm:$0xf]
  %v247 = vld [vmem:[%s1 + $0x170] sm:$0xf]
  %v248 = vld [vmem:[%s1 + $0x174] sm:$0xf]
  %v249 = vld [vmem:[%s1 + $0x178] sm:$0xf]
  %v250 = vld [vmem:[%s1 + $0x17c] sm:$0xf]
  %v251 = vld [vmem:[%s1 + $0x180] sm:$0xf]
  %v252 = vld [vmem:[%s1 + $0x184] sm:$0xf]
  %v253 = vld [vmem:[%s1 + $0x188] sm:$0xf]
  %v254 = vld [vmem:[%s1 + $0x18c] sm:$0xf]
  %v255 = vld [vmem:[%s1 + $0x190] sm:$0xf]
  %v256 = vld [vmem:[%s1 + $0x194] sm:$0xf]
  %v257 = vld [vmem:[%s1 + $0x198] sm:$0xf]
  %v258 = vld [vmem:[%s1 + $0x19c] sm:$0xf]
  %v259 = vld [vmem:[%s1 + $0x1a0] sm:$0xf]
  %v260 = vld [vmem:[%s1 + $0x1a4] sm:$0xf]
  %v261 = vld [vmem:[%s1 + $0x1a8] sm:$0xf]
  %v262 = vld [vmem:[%s1 + $0x1ac] sm:$0xf]
  %v263 = vld [vmem:[%s1 + $0x1b0] sm:$0xf]
  %v264 = vld [vmem:[%s1 + $0x1b4] sm:$0xf]
  %v265 = vld [vmem:[%s1 + $0x1b8] sm:$0xf]
  %v266 = vld [vmem:[%s1 + $0x1bc] sm:$0xf]
  %v395 = vunpack.c.l.b16 %v27
  %v396 = vunpack.c.h.b16 %v27
  %v397 = vunpack.c.l.b16 %v28
  %v398 = vunpack.c.h.b16 %v28
  %v399 = vunpack.c.l.b16 %v29
  %v400 = vunpack.c.h.b16 %v29
  %v401 = vunpack.c.l.b16 %v30
  %v402 = vunpack.c.l.b16 %v31
  %v403 = vunpack.c.h.b16 %v31
  %v404 = vunpack.c.l.b16 %v32
  %v405 = vunpack.c.h.b16 %v32
  %v406 = vunpack.c.l.b16 %v33
  %v407 = vunpack.c.h.b16 %v33
  %v408 = vunpack.c.l.b16 %v34
  %v409 = vunpack.c.l.b16 %v35
  %v410 = vunpack.c.h.b16 %v35
  %v411 = vunpack.c.l.b16 %v36
  %v412 = vunpack.c.h.b16 %v36
  %v413 = vunpack.c.l.b16 %v37
  %v414 = vunpack.c.h.b16 %v37
  %v415 = vunpack.c.l.b16 %v38
  %v416 = vunpack.c.l.b16 %v39
  %v417 = vunpack.c.h.b16 %v39
  %v418 = vunpack.c.l.b16 %v40
  %v419 = vunpack.c.h.b16 %v40
  %v420 = vunpack.c.l.b16 %v41
  %v421 = vunpack.c.h.b16 %v41
  %v422 = vunpack.c.l.b16 %v42
  %v423 = vunpack.c.l.b16 %v43
  %v424 = vunpack.c.h.b16 %v43
  %v425 = vunpack.c.l.b16 %v44
  %v426 = vunpack.c.h.b16 %v44
  %v427 = vunpack.c.l.b16 %v45
  %v428 = vunpack.c.h.b16 %v45
  %v429 = vunpack.c.l.b16 %v46
  %v430 = vunpack.c.l.b16 %v47
  %v431 = vunpack.c.h.b16 %v47
  %v432 = vunpack.c.l.b16 %v48
  %v433 = vunpack.c.h.b16 %v48
  %v434 = vunpack.c.l.b16 %v49
  %v435 = vunpack.c.h.b16 %v49
  %v436 = vunpack.c.l.b16 %v50
  %v437 = vunpack.c.l.b16 %v51
  %v438 = vunpack.c.h.b16 %v51
  %v439 = vunpack.c.l.b16 %v52
  %v440 = vunpack.c.h.b16 %v52
  %v441 = vunpack.c.l.b16 %v53
  %v442 = vunpack.c.h.b16 %v53
  %v443 = vunpack.c.l.b16 %v54
  %v444 = vunpack.c.l.b16 %v55
  %v445 = vunpack.c.h.b16 %v55
  %v446 = vunpack.c.l.b16 %v56
  %v447 = vunpack.c.h.b16 %v56
  %v448 = vunpack.c.l.b16 %v57
  %v449 = vunpack.c.h.b16 %v57
  %v450 = vunpack.c.l.b16 %v58
  %v451 = vunpack.c.l.b16 %v59
  %v452 = vunpack.c.h.b16 %v59
  %v453 = vunpack.c.l.b16 %v60
  %v454 = vunpack.c.h.b16 %v60
  %v455 = vunpack.c.l.b16 %v61
  %v456 = vunpack.c.h.b16 %v61
  %v457 = vunpack.c.l.b16 %v62
  %v458 = vunpack.c.l.b16 %v63
  %v459 = vunpack.c.h.b16 %v63
  %v460 = vunpack.c.l.b16 %v64
  %v461 = vunpack.c.h.b16 %v64
  %v462 = vunpack.c.l.b16 %v65
  %v463 = vunpack.c.h.b16 %v65
  %v464 = vunpack.c.l.b16 %v66
  %v465 = vunpack.c.l.b16 %v67
  %v466 = vunpack.c.h.b16 %v67
  %v467 = vunpack.c.l.b16 %v68
  %v468 = vunpack.c.h.b16 %v68
  %v469 = vunpack.c.l.b16 %v69
  %v470 = vunpack.c.h.b16 %v69
  %v471 = vunpack.c.l.b16 %v70
  %v472 = vunpack.c.l.b16 %v71
  %v473 = vunpack.c.h.b16 %v71
  %v474 = vunpack.c.l.b16 %v72
  %v475 = vunpack.c.h.b16 %v72
  %v476 = vunpack.c.l.b16 %v73
  %v477 = vunpack.c.h.b16 %v73
  %v478 = vunpack.c.l.b16 %v74
  %v479 = vunpack.c.l.b16 %v75
  %v480 = vunpack.c.h.b16 %v75
  %v481 = vunpack.c.l.b16 %v76
  %v482 = vunpack.c.h.b16 %v76
  %v483 = vunpack.c.l.b16 %v77
  %v484 = vunpack.c.h.b16 %v77
  %v485 = vunpack.c.l.b16 %v78
  %v486 = vunpack.c.l.b16 %v79
  %v487 = vunpack.c.h.b16 %v79
  %v488 = vunpack.c.l.b16 %v80
  %v489 = vunpack.c.h.b16 %v80
  %v490 = vunpack.c.l.b16 %v81
  %v491 = vunpack.c.h.b16 %v81
  %v492 = vunpack.c.l.b16 %v82
  %v493 = vunpack.c.l.b16 %v83
  %v494 = vunpack.c.h.b16 %v83
  %v495 = vunpack.c.l.b16 %v84
  %v496 = vunpack.c.h.b16 %v84
  %v497 = vunpack.c.l.b16 %v85
  %v498 = vunpack.c.h.b16 %v85
  %v499 = vunpack.c.l.b16 %v86
  %v500 = vunpack.c.l.b16 %v87
  %v501 = vunpack.c.h.b16 %v87
  %v502 = vunpack.c.l.b16 %v88
  %v503 = vunpack.c.h.b16 %v88
  %v504 = vunpack.c.l.b16 %v89
  %v505 = vunpack.c.h.b16 %v89
  %v506 = vunpack.c.l.b16 %v90
  %v507 = vunpack.c.l.b16 %v91
  %v508 = vunpack.c.h.b16 %v91
  %v509 = vunpack.c.l.b16 %v92
  %v510 = vunpack.c.h.b16 %v92
  %v511 = vunpack.c.l.b16 %v93
  %v512 = vunpack.c.h.b16 %v93
  %v513 = vunpack.c.l.b16 %v94
  %v514 = vunpack.c.l.b16 %v95
  %v515 = vunpack.c.h.b16 %v95
  %v516 = vunpack.c.l.b16 %v96
  %v517 = vunpack.c.h.b16 %v96
  %v518 = vunpack.c.l.b16 %v97
  %v519 = vunpack.c.h.b16 %v97
  %v520 = vunpack.c.l.b16 %v98
  %v521 = vunpack.c.l.b16 %v99
  %v522 = vunpack.c.h.b16 %v99
  %v523 = vunpack.c.l.b16 %v100
  %v524 = vunpack.c.h.b16 %v100
  %v525 = vunpack.c.l.b16 %v101
  %v526 = vunpack.c.h.b16 %v101
  %v527 = vunpack.c.l.b16 %v102
  %v528 = vunpack.c.l.b16 %v103
  %v529 = vunpack.c.h.b16 %v103
  %v530 = vunpack.c.l.b16 %v104
  %v531 = vunpack.c.h.b16 %v104
  %v532 = vunpack.c.l.b16 %v105
  %v533 = vunpack.c.h.b16 %v105
  %v534 = vunpack.c.l.b16 %v106
  %v535 = vunpack.c.l.b16 %v107
  %v536 = vunpack.c.h.b16 %v107
  %v537 = vunpack.c.l.b16 %v108
  %v538 = vunpack.c.h.b16 %v108
  %v539 = vunpack.c.l.b16 %v109
  %v540 = vunpack.c.h.b16 %v109
  %v541 = vunpack.c.l.b16 %v110
  %v542 = vunpack.c.l.b16 %v111
  %v543 = vunpack.c.h.b16 %v111
  %v544 = vunpack.c.l.b16 %v112
  %v545 = vunpack.c.h.b16 %v112
  %v546 = vunpack.c.l.b16 %v113
  %v547 = vunpack.c.h.b16 %v113
  %v548 = vunpack.c.l.b16 %v114
  %v549 = vunpack.c.l.b16 %v115
  %v550 = vunpack.c.h.b16 %v115
  %v551 = vunpack.c.l.b16 %v116
  %v552 = vunpack.c.h.b16 %v116
  %v553 = vunpack.c.l.b16 %v117
  %v554 = vunpack.c.h.b16 %v117
  %v555 = vunpack.c.l.b16 %v118
  %v556 = vunpack.c.l.b16 %v119
  %v557 = vunpack.c.h.b16 %v119
  %v558 = vunpack.c.l.b16 %v120
  %v559 = vunpack.c.h.b16 %v120
  %v560 = vunpack.c.l.b16 %v121
  %v561 = vunpack.c.h.b16 %v121
  %v562 = vunpack.c.l.b16 %v122
  %v563 = vunpack.c.l.b16 %v123
  %v564 = vunpack.c.h.b16 %v123
  %v565 = vunpack.c.l.b16 %v124
  %v566 = vunpack.c.h.b16 %v124
  %v567 = vunpack.c.l.b16 %v125
  %v568 = vunpack.c.h.b16 %v125
  %v569 = vunpack.c.l.b16 %v126
  %v570 = vunpack.c.l.b16 %v127
  %v571 = vunpack.c.h.b16 %v127
  %v572 = vunpack.c.l.b16 %v128
  %v573 = vunpack.c.h.b16 %v128
  %v574 = vunpack.c.l.b16 %v129
  %v575 = vunpack.c.h.b16 %v129
  %v576 = vunpack.c.l.b16 %v130
  %v577 = vunpack.c.l.b16 %v131
  %v578 = vunpack.c.h.b16 %v131
  %v579 = vunpack.c.l.b16 %v132
  %v580 = vunpack.c.h.b16 %v132
  %v581 = vunpack.c.l.b16 %v133
  %v582 = vunpack.c.h.b16 %v133
  %v583 = vunpack.c.l.b16 %v134
  %v584 = vunpack.c.l.b16 %v135
  %v585 = vunpack.c.h.b16 %v135
  %v586 = vunpack.c.l.b16 %v136
  %v587 = vunpack.c.h.b16 %v136
  %v588 = vunpack.c.l.b16 %v137
  %v589 = vunpack.c.h.b16 %v137
  %v590 = vunpack.c.l.b16 %v138
  %v591 = vunpack.c.l.b16 %v139
  %v592 = vunpack.c.h.b16 %v139
  %v593 = vunpack.c.l.b16 %v140
  %v594 = vunpack.c.h.b16 %v140
  %v595 = vunpack.c.l.b16 %v141
  %v596 = vunpack.c.h.b16 %v141
  %v597 = vunpack.c.l.b16 %v142
  %v598 = vunpack.c.l.b16 %v143
  %v599 = vunpack.c.h.b16 %v143
  %v600 = vunpack.c.l.b16 %v144
  %v601 = vunpack.c.h.b16 %v144
  %v602 = vunpack.c.l.b16 %v145
  %v603 = vunpack.c.h.b16 %v145
  %v604 = vunpack.c.l.b16 %v146
  %v605 = vunpack.c.l.b16 %v147
  %v606 = vunpack.c.h.b16 %v147
  %v607 = vunpack.c.l.b16 %v148
  %v608 = vunpack.c.h.b16 %v148
  %v609 = vunpack.c.l.b16 %v149
  %v610 = vunpack.c.h.b16 %v149
  %v611 = vunpack.c.l.b16 %v150
  %v612 = vunpack.c.l.b16 %v151
  %v613 = vunpack.c.h.b16 %v151
  %v614 = vunpack.c.l.b16 %v152
  %v615 = vunpack.c.h.b16 %v152
  %v616 = vunpack.c.l.b16 %v153
  %v617 = vunpack.c.h.b16 %v153
  %v618 = vunpack.c.l.b16 %v154
  %v619 = vpack.c.b16 %v402, %v395
  %v620 = vpack.c.b16 %v403, %v396
  %v621 = vpack.c.b16 %v404, %v397
  %v622 = vpack.c.b16 %v405, %v398
  %v623 = vpack.c.b16 %v406, %v399
  %v624 = vpack.c.b16 %v407, %v400
  %v625 = vpack.c.b16 %v408, %v401
  %v626 = vpack.c.b16 %v416, %v409
  %v627 = vpack.c.b16 %v417, %v410
  %v628 = vpack.c.b16 %v418, %v411
  %v629 = vpack.c.b16 %v419, %v412
  %v630 = vpack.c.b16 %v420, %v413
  %v631 = vpack.c.b16 %v421, %v414
  %v632 = vpack.c.b16 %v422, %v415
  %v633 = vpack.c.b16 %v430, %v423
  %v634 = vpack.c.b16 %v431, %v424
  %v635 = vpack.c.b16 %v432, %v425
  %v636 = vpack.c.b16 %v433, %v426
  %v637 = vpack.c.b16 %v434, %v427
  %v638 = vpack.c.b16 %v435, %v428
  %v639 = vpack.c.b16 %v436, %v429
  %v640 = vpack.c.b16 %v444, %v437
  %v641 = vpack.c.b16 %v445, %v438
  %v642 = vpack.c.b16 %v446, %v439
  %v643 = vpack.c.b16 %v447, %v440
  %v644 = vpack.c.b16 %v448, %v441
  %v645 = vpack.c.b16 %v449, %v442
  %v646 = vpack.c.b16 %v450, %v443
  %v647 = vpack.c.b16 %v458, %v451
  %v648 = vpack.c.b16 %v459, %v452
  %v649 = vpack.c.b16 %v460, %v453
  %v650 = vpack.c.b16 %v461, %v454
  %v651 = vpack.c.b16 %v462, %v455
  %v652 = vpack.c.b16 %v463, %v456
  %v653 = vpack.c.b16 %v464, %v457
  %v654 = vpack.c.b16 %v472, %v465
  %v655 = vpack.c.b16 %v473, %v466
  %v656 = vpack.c.b16 %v474, %v467
  %v657 = vpack.c.b16 %v475, %v468
  %v658 = vpack.c.b16 %v476, %v469
  %v659 = vpack.c.b16 %v477, %v470
  %v660 = vpack.c.b16 %v478, %v471
  %v661 = vpack.c.b16 %v486, %v479
  %v662 = vpack.c.b16 %v487, %v480
  %v663 = vpack.c.b16 %v488, %v481
  %v664 = vpack.c.b16 %v489, %v482
  %v665 = vpack.c.b16 %v490, %v483
  %v666 = vpack.c.b16 %v491, %v484
  %v667 = vpack.c.b16 %v492, %v485
  %v668 = vpack.c.b16 %v500, %v493
  %v669 = vpack.c.b16 %v501, %v494
  %v670 = vpack.c.b16 %v502, %v495
  %v671 = vpack.c.b16 %v503, %v496
  %v672 = vpack.c.b16 %v504, %v497
  %v673 = vpack.c.b16 %v505, %v498
  %v674 = vpack.c.b16 %v506, %v499
  %v675 = vpack.c.b16 %v514, %v507
  %v676 = vpack.c.b16 %v515, %v508
  %v677 = vpack.c.b16 %v516, %v509
  %v678 = vpack.c.b16 %v517, %v510
  %v679 = vpack.c.b16 %v518, %v511
  %v680 = vpack.c.b16 %v519, %v512
  %v681 = vpack.c.b16 %v520, %v513
  %v682 = vpack.c.b16 %v528, %v521
  %v683 = vpack.c.b16 %v529, %v522
  %v684 = vpack.c.b16 %v530, %v523
  %v685 = vpack.c.b16 %v531, %v524
  %v686 = vpack.c.b16 %v532, %v525
  %v687 = vpack.c.b16 %v533, %v526
  %v688 = vpack.c.b16 %v534, %v527
  %v689 = vpack.c.b16 %v542, %v535
  %v690 = vpack.c.b16 %v543, %v536
  %v691 = vpack.c.b16 %v544, %v537
  %v692 = vpack.c.b16 %v545, %v538
  %v693 = vpack.c.b16 %v546, %v539
  %v694 = vpack.c.b16 %v547, %v540
  %v695 = vpack.c.b16 %v548, %v541
  %v696 = vpack.c.b16 %v556, %v549
  %v697 = vpack.c.b16 %v557, %v550
  %v698 = vpack.c.b16 %v558, %v551
  %v699 = vpack.c.b16 %v559, %v552
  %v700 = vpack.c.b16 %v560, %v553
  %v701 = vpack.c.b16 %v561, %v554
  %v702 = vpack.c.b16 %v562, %v555
  %v703 = vpack.c.b16 %v570, %v563
  %v704 = vpack.c.b16 %v571, %v564
  %v705 = vpack.c.b16 %v572, %v565
  %v706 = vpack.c.b16 %v573, %v566
  %v707 = vpack.c.b16 %v574, %v567
  %v708 = vpack.c.b16 %v575, %v568
  %v709 = vpack.c.b16 %v576, %v569
  %v710 = vpack.c.b16 %v584, %v577
  %v711 = vpack.c.b16 %v585, %v578
  %v712 = vpack.c.b16 %v586, %v579
  %v713 = vpack.c.b16 %v587, %v580
  %v714 = vpack.c.b16 %v588, %v581
  %v715 = vpack.c.b16 %v589, %v582
  %v716 = vpack.c.b16 %v590, %v583
  %v717 = vpack.c.b16 %v598, %v591
  %v718 = vpack.c.b16 %v599, %v592
  %v719 = vpack.c.b16 %v600, %v593
  %v720 = vpack.c.b16 %v601, %v594
  %v721 = vpack.c.b16 %v602, %v595
  %v722 = vpack.c.b16 %v603, %v596
  %v723 = vpack.c.b16 %v604, %v597
  %v724 = vpack.c.b16 %v612, %v605
  %v725 = vpack.c.b16 %v613, %v606
  %v726 = vpack.c.b16 %v614, %v607
  %v727 = vpack.c.b16 %v615, %v608
  %v728 = vpack.c.b16 %v616, %v609
  %v729 = vpack.c.b16 %v617, %v610
  %v730 = vpack.c.b16 %v618, %v611
  %v955 = vunpack.c.l.b16 %v155
  %v956 = vunpack.c.l.b16 %v156
  %v957 = vunpack.c.l.b16 %v157
  %v958 = vunpack.c.l.b16 %v158
  %v959 = vunpack.c.l.b16 %v159
  %v960 = vunpack.c.l.b16 %v160
  %v961 = vunpack.c.l.b16 %v161
  %v962 = vunpack.c.l.b16 %v162
  %v963 = vunpack.c.l.b16 %v163
  %v964 = vunpack.c.l.b16 %v164
  %v965 = vunpack.c.l.b16 %v165
  %v966 = vunpack.c.l.b16 %v166
  %v967 = vunpack.c.l.b16 %v167
  %v968 = vunpack.c.l.b16 %v168
  %v969 = vunpack.c.l.b16 %v169
  %v970 = vunpack.c.l.b16 %v170
  %v971 = vunpack.c.l.b16 %v171
  %v972 = vunpack.c.l.b16 %v172
  %v973 = vunpack.c.l.b16 %v173
  %v974 = vunpack.c.l.b16 %v174
  %v975 = vunpack.c.l.b16 %v175
  %v976 = vunpack.c.l.b16 %v176
  %v977 = vunpack.c.l.b16 %v177
  %v978 = vunpack.c.l.b16 %v178
  %v979 = vunpack.c.l.b16 %v179
  %v980 = vunpack.c.l.b16 %v180
  %v981 = vunpack.c.l.b16 %v181
  %v982 = vunpack.c.l.b16 %v182
  %v983 = vunpack.c.l.b16 %v183
  %v984 = vunpack.c.l.b16 %v184
  %v985 = vunpack.c.l.b16 %v185
  %v986 = vunpack.c.l.b16 %v186
  %v987 = vunpack.c.l.b16 %v187
  %v988 = vunpack.c.l.b16 %v188
  %v989 = vunpack.c.l.b16 %v189
  %v990 = vunpack.c.l.b16 %v190
  %v991 = vunpack.c.l.b16 %v191
  %v992 = vunpack.c.l.b16 %v192
  %v993 = vunpack.c.l.b16 %v193
  %v994 = vunpack.c.l.b16 %v194
  %v995 = vunpack.c.l.b16 %v195
  %v996 = vunpack.c.l.b16 %v196
  %v997 = vunpack.c.l.b16 %v197
  %v998 = vunpack.c.l.b16 %v198
  %v999 = vunpack.c.l.b16 %v199
  %v1000 = vunpack.c.l.b16 %v200
  %v1001 = vunpack.c.l.b16 %v201
  %v1002 = vunpack.c.l.b16 %v202
  %v1003 = vunpack.c.l.b16 %v203
  %v1004 = vunpack.c.l.b16 %v204
  %v1005 = vunpack.c.l.b16 %v205
  %v1006 = vunpack.c.l.b16 %v206
  %v1007 = vunpack.c.l.b16 %v207
  %v1008 = vunpack.c.l.b16 %v208
  %v1009 = vunpack.c.l.b16 %v209
  %v1010 = vunpack.c.l.b16 %v210
  %v1011 = vunpack.c.l.b16 %v211
  %v1012 = vunpack.c.l.b16 %v212
  %v1013 = vunpack.c.l.b16 %v213
  %v1014 = vunpack.c.l.b16 %v214
  %v1015 = vunpack.c.l.b16 %v215
  %v1016 = vunpack.c.l.b16 %v216
  %v1017 = vunpack.c.l.b16 %v217
  %v1018 = vunpack.c.l.b16 %v218
  %v1019 = vunpack.c.l.b16 %v219
  %v1020 = vunpack.c.l.b16 %v220
  %v1021 = vunpack.c.l.b16 %v221
  %v1022 = vunpack.c.l.b16 %v222
  %v1023 = vunpack.c.l.b16 %v223
  %v1024 = vunpack.c.l.b16 %v224
  %v1025 = vunpack.c.l.b16 %v225
  %v1026 = vunpack.c.l.b16 %v226
  %v1027 = vunpack.c.l.b16 %v227
  %v1028 = vunpack.c.l.b16 %v228
  %v1029 = vunpack.c.l.b16 %v229
  %v1030 = vunpack.c.l.b16 %v230
  %v1031 = vunpack.c.l.b16 %v231
  %v1032 = vunpack.c.l.b16 %v232
  %v1033 = vunpack.c.l.b16 %v233
  %v1034 = vunpack.c.l.b16 %v234
  %v1035 = vunpack.c.l.b16 %v235
  %v1036 = vunpack.c.l.b16 %v236
  %v1037 = vunpack.c.l.b16 %v237
  %v1038 = vunpack.c.l.b16 %v238
  %v1039 = vunpack.c.l.b16 %v239
  %v1040 = vunpack.c.l.b16 %v240
  %v1041 = vunpack.c.l.b16 %v241
  %v1042 = vunpack.c.l.b16 %v242
  %v1043 = vunpack.c.l.b16 %v243
  %v1044 = vunpack.c.l.b16 %v244
  %v1045 = vunpack.c.l.b16 %v245
  %v1046 = vunpack.c.l.b16 %v246
  %v1047 = vunpack.c.l.b16 %v247
  %v1048 = vunpack.c.l.b16 %v248
  %v1049 = vunpack.c.l.b16 %v249
  %v1050 = vunpack.c.l.b16 %v250
  %v1051 = vunpack.c.l.b16 %v251
  %v1052 = vunpack.c.l.b16 %v252
  %v1053 = vunpack.c.l.b16 %v253
  %v1054 = vunpack.c.l.b16 %v254
  %v1055 = vunpack.c.l.b16 %v255
  %v1056 = vunpack.c.l.b16 %v256
  %v1057 = vunpack.c.l.b16 %v257
  %v1058 = vunpack.c.l.b16 %v258
  %v1059 = vunpack.c.l.b16 %v259
  %v1060 = vunpack.c.l.b16 %v260
  %v1061 = vunpack.c.l.b16 %v261
  %v1062 = vunpack.c.l.b16 %v262
  %v1063 = vunpack.c.l.b16 %v263
  %v1064 = vunpack.c.l.b16 %v264
  %v1065 = vunpack.c.l.b16 %v265
  %v1066 = vunpack.c.l.b16 %v266
  %v1067 = vpack.c.b16 %v956, %v955
  %v1068 = vpack.c.b16 %v958, %v957
  %v1069 = vpack.c.b16 %v960, %v959
  %v1070 = vpack.c.b16 %v962, %v961
  %v1071 = vpack.c.b16 %v964, %v963
  %v1072 = vpack.c.b16 %v966, %v965
  %v1073 = vpack.c.b16 %v968, %v967
  %v1074 = vpack.c.b16 %v970, %v969
  %v1075 = vpack.c.b16 %v972, %v971
  %v1076 = vpack.c.b16 %v974, %v973
  %v1077 = vpack.c.b16 %v976, %v975
  %v1078 = vpack.c.b16 %v978, %v977
  %v1079 = vpack.c.b16 %v980, %v979
  %v1080 = vpack.c.b16 %v982, %v981
  %v1081 = vpack.c.b16 %v984, %v983
  %v1082 = vpack.c.b16 %v986, %v985
  %v1083 = vpack.c.b16 %v988, %v987
  %v1084 = vpack.c.b16 %v990, %v989
  %v1085 = vpack.c.b16 %v992, %v991
  %v1086 = vpack.c.b16 %v994, %v993
  %v1087 = vpack.c.b16 %v996, %v995
  %v1088 = vpack.c.b16 %v998, %v997
  %v1089 = vpack.c.b16 %v1000, %v999
  %v1090 = vpack.c.b16 %v1002, %v1001
  %v1091 = vpack.c.b16 %v1004, %v1003
  %v1092 = vpack.c.b16 %v1006, %v1005
  %v1093 = vpack.c.b16 %v1008, %v1007
  %v1094 = vpack.c.b16 %v1010, %v1009
  %v1095 = vpack.c.b16 %v1012, %v1011
  %v1096 = vpack.c.b16 %v1014, %v1013
  %v1097 = vpack.c.b16 %v1016, %v1015
  %v1098 = vpack.c.b16 %v1018, %v1017
  %v1099 = vpack.c.b16 %v1020, %v1019
  %v1100 = vpack.c.b16 %v1022, %v1021
  %v1101 = vpack.c.b16 %v1024, %v1023
  %v1102 = vpack.c.b16 %v1026, %v1025
  %v1103 = vpack.c.b16 %v1028, %v1027
  %v1104 = vpack.c.b16 %v1030, %v1029
  %v1105 = vpack.c.b16 %v1032, %v1031
  %v1106 = vpack.c.b16 %v1034, %v1033
  %v1107 = vpack.c.b16 %v1036, %v1035
  %v1108 = vpack.c.b16 %v1038, %v1037
  %v1109 = vpack.c.b16 %v1040, %v1039
  %v1110 = vpack.c.b16 %v1042, %v1041
  %v1111 = vpack.c.b16 %v1044, %v1043
  %v1112 = vpack.c.b16 %v1046, %v1045
  %v1113 = vpack.c.b16 %v1048, %v1047
  %v1114 = vpack.c.b16 %v1050, %v1049
  %v1115 = vpack.c.b16 %v1052, %v1051
  %v1116 = vpack.c.b16 %v1054, %v1053
  %v1117 = vpack.c.b16 %v1056, %v1055
  %v1118 = vpack.c.b16 %v1058, %v1057
  %v1119 = vpack.c.b16 %v1060, %v1059
  %v1120 = vpack.c.b16 %v1062, %v1061
  %v1121 = vpack.c.b16 %v1064, %v1063
  %v1122 = vpack.c.b16 %v1066, %v1065
  %1179 = vmatprep.subr.bf16.mxu0 0
  %1180 = vmatpush1.bf16.msra.mxu0 %v1067
  %1181 = vmatprep.subr.bf16.mxu0 0
  %1182 = vmatpush1.bf16.msra.mxu0 %v1068
  %1183 = vmatprep.subr.bf16.mxu0 0
  %1184 = vmatpush1.bf16.msra.mxu0 %v1069
  %1185 = vmatprep.subr.bf16.mxu0 0
  %1186 = vmatpush1.bf16.msra.mxu0 %v1070
  %1187 = vmatprep.subr.bf16.mxu0 0
  %1188 = vmatpush1.bf16.msra.mxu0 %v1071
  %1189 = vmatprep.subr.bf16.mxu0 0
  %1190 = vmatpush1.bf16.msra.mxu0 %v1072
  %1191 = vmatprep.subr.bf16.mxu0 0
  %1192 = vmatpush1.bf16.msra.mxu0 %v1073
  %1193 = vmatprep.subr.bf16.mxu0 0
  %1194 = vmatpush1.bf16.msra.mxu0 %v1074
  %1195 = vmatprep.subr.bf16.mxu0 0
  %1196 = vmatpush1.bf16.msra.mxu0 %v1075
  %1197 = vmatprep.subr.bf16.mxu0 0
  %1198 = vmatpush1.bf16.msra.mxu0 %v1076
  %1199 = vmatprep.subr.bf16.mxu0 0
  %1200 = vmatpush1.bf16.msra.mxu0 %v1077
  %1201 = vmatprep.subr.bf16.mxu0 0
  %1202 = vmatpush1.bf16.msra.mxu0 %v1078
  %1203 = vmatprep.subr.bf16.mxu0 0
  %1204 = vmatpush1.bf16.msra.mxu0 %v1079
  %1205 = vmatprep.subr.bf16.mxu0 0
  %1206 = vmatpush1.bf16.msra.mxu0 %v1080
  %1207 = vmatprep.subr.bf16.mxu0 0
  %1208 = vmatpush1.bf16.msra.mxu0 %v1081
  %1209 = vmatprep.subr.bf16.mxu0 0
  %1210 = vmatpush1.bf16.msra.mxu0 %v1082
  %1211 = vmatprep.mubr.bf16.mxu0 %v620
  %1212 = vmatmul.mubr.bf16.gmra.mrb[0].mxu0 %v619
  %v1213 = vpop.f32.mrb[0].mxu0
  %v1214 = vadd.f32 0.0, %v1213
  %v1215 = vpop.f32.mrb[0].mxu0
  %v1216 = vpop.f32.mrb[0].mxu0
  %v1217 = vadd.f32 0.0, %v1216
  %v1218 = vpop.f32.mrb[0].mxu0
  %1219 = vmatprep.mubr.bf16.mxu0 %v627
  %1220 = vmatmul.mubr.bf16.gmra.mrb[0].mxu0 %v626
  %v1221 = vpop.f32.mrb[0].mxu0
  %v1222 = vadd.f32 0.0, %v1221
  %v1223 = vpop.f32.mrb[0].mxu0
  %v1224 = vpop.f32.mrb[0].mxu0
  %v1225 = vadd.f32 0.0, %v1224
  %v1226 = vpop.f32.mrb[0].mxu0
  %1227 = vmatprep.mubr.bf16.mxu0 %v634
  %1228 = vmatmul.mubr.bf16.gmra.mrb[0].mxu0 %v633
  %v1229 = vpop.f32.mrb[0].mxu0
  %v1230 = vadd.f32 0.0, %v1229
  %v1231 = vpop.f32.mrb[0].mxu0
  %v1232 = vpop.f32.mrb[0].mxu0
  %v1233 = vadd.f32 0.0, %v1232
  %v1234 = vpop.f32.mrb[0].mxu0
  %1235 = vmatprep.mubr.bf16.mxu0 %v641
  %1236 = vmatmul.mubr.bf16.gmra.mrb[0].mxu0 %v640
  %v1237 = vpop.f32.mrb[0].mxu0
  %v1238 = vadd.f32 0.0, %v1237
  %v1239 = vpop.f32.mrb[0].mxu0
  %v1240 = vpop.f32.mrb[0].mxu0
  %v1241 = vadd.f32 0.0, %v1240
  %v1242 = vpop.f32.mrb[0].mxu0
  %1243 = vmatprep.mubr.bf16.mxu0 %v648
  %1244 = vmatmul.mubr.bf16.gmra.mrb[0].mxu0 %v647
  %v1245 = vpop.f32.mrb[0].mxu0
  %v1246 = vadd.f32 0.0, %v1245
  %v1247 = vpop.f32.mrb[0].mxu0
  %v1248 = vpop.f32.mrb[0].mxu0
  %v1249 = vadd.f32 0.0, %v1248
  %v1250 = vpop.f32.mrb[0].mxu0
  %1251 = vmatprep.mubr.bf16.mxu0 %v655
  %1252 = vmatmul.mubr.bf16.gmra.mrb[0].mxu0 %v654
  %v1253 = vpop.f32.mrb[0].mxu0
  %v1254 = vadd.f32 0.0, %v1253
  %v1255 = vpop.f32.mrb[0].mxu0
  %v1256 = vpop.f32.mrb[0].mxu0
  %v1257 = vadd.f32 0.0, %v1256
  %v1258 = vpop.f32.mrb[0].mxu0
  %1259 = vmatprep.mubr.bf16.mxu0 %v662
  %1260 = vmatmul.mubr.bf16.gmra.mrb[0].mxu0 %v661
  %v1261 = vpop.f32.mrb[0].mxu0
  %v1262 = vadd.f32 0.0, %v1261
  %v1263 = vpop.f32.mrb[0].mxu0
  %v1264 = vpop.f32.mrb[0].mxu0
  %v1265 = vadd.f32 0.0, %v1264
  %v1266 = vpop.f32.mrb[0].mxu0
  %1267 = vmatprep.mubr.bf16.mxu0 %v669
  %1268 = vmatmul.mubr.bf16.gmra.mrb[0].mxu0 %v668
  %v1269 = vpop.f32.mrb[0].mxu0
  %v1270 = vadd.f32 0.0, %v1269
  %v1271 = vpop.f32.mrb[0].mxu0
  %v1272 = vpop.f32.mrb[0].mxu0
  %v1273 = vadd.f32 0.0, %v1272
  %v1274 = vpop.f32.mrb[0].mxu0
  %1275 = vmatprep.mubr.bf16.mxu0 %v676
  %1276 = vmatmul.mubr.bf16.gmra.mrb[0].mxu0 %v675
  %v1277 = vpop.f32.mrb[0].mxu0
  %v1278 = vadd.f32 0.0, %v1277
  %v1279 = vpop.f32.mrb[0].mxu0
  %v1280 = vpop.f32.mrb[0].mxu0
  %v1281 = vadd.f32 0.0, %v1280
  %v1282 = vpop.f32.mrb[0].mxu0
  %1283 = vmatprep.mubr.bf16.mxu0 %v683
  %1284 = vmatmul.mubr.bf16.gmra.mrb[0].mxu0 %v682
  %v1285 = vpop.f32.mrb[0].mxu0
  %v1286 = vadd.f32 0.0, %v1285
  %v1287 = vpop.f32.mrb[0].mxu0
  %v1288 = vpop.f32.mrb[0].mxu0
  %v1289 = vadd.f32 0.0, %v1288
  %v1290 = vpop.f32.mrb[0].mxu0
  %1291 = vmatprep.mubr.bf16.mxu0 %v690
  %1292 = vmatmul.mubr.bf16.gmra.mrb[0].mxu0 %v689
  %v1293 = vpop.f32.mrb[0].mxu0
  %v1294 = vadd.f32 0.0, %v1293
  %v1295 = vpop.f32.mrb[0].mxu0
  %v1296 = vpop.f32.mrb[0].mxu0
  %v1297 = vadd.f32 0.0, %v1296
  %v1298 = vpop.f32.mrb[0].mxu0
  %1299 = vmatprep.mubr.bf16.mxu0 %v697
  %1300 = vmatmul.mubr.bf16.gmra.mrb[0].mxu0 %v696
  %v1301 = vpop.f32.mrb[0].mxu0
  %v1302 = vadd.f32 0.0, %v1301
  %v1303 = vpop.f32.mrb[0].mxu0
  %v1304 = vpop.f32.mrb[0].mxu0
  %v1305 = vadd.f32 0.0, %v1304
  %v1306 = vpop.f32.mrb[0].mxu0
  %1307 = vmatprep.mubr.bf16.mxu0 %v704
  %1308 = vmatmul.mubr.bf16.gmra.mrb[0].mxu0 %v703
  %v1309 = vpop.f32.mrb[0].mxu0
  %v1310 = vadd.f32 0.0, %v1309
  %v1311 = vpop.f32.mrb[0].mxu0
  %v1312 = vpop.f32.mrb[0].mxu0
  %v1313 = vadd.f32 0.0, %v1312
  %v1314 = vpop.f32.mrb[0].mxu0
  %1315 = vmatprep.mubr.bf16.mxu0 %v711
  %1316 = vmatmul.mubr.bf16.gmra.mrb[0].mxu0 %v710
  %v1317 = vpop.f32.mrb[0].mxu0
  %v1318 = vadd.f32 0.0, %v1317
  %v1319 = vpop.f32.mrb[0].mxu0
  %v1320 = vpop.f32.mrb[0].mxu0
  %v1321 = vadd.f32 0.0, %v1320
  %v1322 = vpop.f32.mrb[0].mxu0
  %1323 = vmatprep.mubr.bf16.mxu0 %v718
  %1324 = vmatmul.mubr.bf16.gmra.mrb[0].mxu0 %v717
  %v1325 = vpop.f32.mrb[0].mxu0
  %v1326 = vadd.f32 0.0, %v1325
  %v1327 = vpop.f32.mrb[0].mxu0
  %v1328 = vpop.f32.mrb[0].mxu0
  %v1329 = vadd.f32 0.0, %v1328
  %v1330 = vpop.f32.mrb[0].mxu0
  %1331 = vmatprep.mubr.bf16.mxu0 %v725
  %1332 = vmatmul.mubr.bf16.gmra.mrb[0].mxu0 %v724
  %v1333 = vpop.f32.mrb[0].mxu0
  %v1334 = vadd.f32 0.0, %v1333
  %v1335 = vpop.f32.mrb[0].mxu0
  %v1336 = vpop.f32.mrb[0].mxu0
  %v1337 = vadd.f32 0.0, %v1336
  %v1338 = vpop.f32.mrb[0].mxu0
  %1339 = vdwg.mxu0
  %1340 = vmatprep.subr.bf16.mxu0 0
  %1341 = vmatpush1.bf16.msra.mxu0 %v1083
  %1342 = vmatprep.subr.bf16.mxu0 0
  %1343 = vmatpush1.bf16.msra.mxu0 %v1084
  %1344 = vmatprep.subr.bf16.mxu0 0
  %1345 = vmatpush1.bf16.msra.mxu0 %v1085
  %1346 = vmatprep.subr.bf16.mxu0 0
  %1347 = vmatpush1.bf16.msra.mxu0 %v1086
  %1348 = vmatprep.subr.bf16.mxu0 0
  %1349 = vmatpush1.bf16.msra.mxu0 %v1087
  %1350 = vmatprep.subr.bf16.mxu0 0
  %1351 = vmatpush1.bf16.msra.mxu0 %v1088
  %1352 = vmatprep.subr.bf16.mxu0 0
  %1353 = vmatpush1.bf16.msra.mxu0 %v1089
  %1354 = vmatprep.subr.bf16.mxu0 0
  %1355 = vmatpush1.bf16.msra.mxu0 %v1090
  %1356 = vmatprep.subr.bf16.mxu0 0
  %1357 = vmatpush1.bf16.msra.mxu0 %v1091
  %1358 = vmatprep.subr.bf16.mxu0 0
  %1359 = vmatpush1.bf16.msra.mxu0 %v1092
  %1360 = vmatprep.subr.bf16.mxu0 0
  %1361 = vmatpush1.bf16.msra.mxu0 %v1093
  %1362 = vmatprep.subr.bf16.mxu0 0
  %1363 = vmatpush1.bf16.msra.mxu0 %v1094
  %1364 = vmatprep.subr.bf16.mxu0 0
  %1365 = vmatpush1.bf16.msra.mxu0 %v1095
  %1366 = vmatprep.subr.bf16.mxu0 0
  %1367 = vmatpush1.bf16.msra.mxu0 %v1096
  %1368 = vmatprep.subr.bf16.mxu0 0
  %1369 = vmatpush1.bf16.msra.mxu0 %v1097
  %1370 = vmatprep.subr.bf16.mxu0 0
  %1371 = vmatpush1.bf16.msra.mxu0 %v1098
  %1372 = vmatprep.mubr.bf16.mxu0 %v622
  %1373 = vmatmul.mubr.bf16.gmra.mrb[0].mxu0 %v621
  %v1374 = vpop.f32.mrb[0].mxu0
  %v1375 = vadd.f32 %v1214, %v1374
  %v1376 = vpop.f32.mrb[0].mxu0
  %v1377 = vpop.f32.mrb[0].mxu0
  %v1378 = vadd.f32 %v1217, %v1377
  %v1379 = vpop.f32.mrb[0].mxu0
  %1380 = vmatprep.mubr.bf16.mxu0 %v629
  %1381 = vmatmul.mubr.bf16.gmra.mrb[0].mxu0 %v628
  %v1382 = vpop.f32.mrb[0].mxu0
  %v1383 = vadd.f32 %v1222, %v1382
  %v1384 = vpop.f32.mrb[0].mxu0
  %v1385 = vpop.f32.mrb[0].mxu0
  %v1386 = vadd.f32 %v1225, %v1385
  %v1387 = vpop.f32.mrb[0].mxu0
  %1388 = vmatprep.mubr.bf16.mxu0 %v636
  %1389 = vmatmul.mubr.bf16.gmra.mrb[0].mxu0 %v635
  %v1390 = vpop.f32.mrb[0].mxu0
  %v1391 = vadd.f32 %v1230, %v1390
  %v1392 = vpop.f32.mrb[0].mxu0
  %v1393 = vpop.f32.mrb[0].mxu0
  %v1394 = vadd.f32 %v1233, %v1393
  %v1395 = vpop.f32.mrb[0].mxu0
  %1396 = vmatprep.mubr.bf16.mxu0 %v643
  %1397 = vmatmul.mubr.bf16.gmra.mrb[0].mxu0 %v642
  %v1398 = vpop.f32.mrb[0].mxu0
  %v1399 = vadd.f32 %v1238, %v1398
  %v1400 = vpop.f32.mrb[0].mxu0
  %v1401 = vpop.f32.mrb[0].mxu0
  %v1402 = vadd.f32 %v1241, %v1401
  %v1403 = vpop.f32.mrb[0].mxu0
  %1404 = vmatprep.mubr.bf16.mxu0 %v650
  %1405 = vmatmul.mubr.bf16.gmra.mrb[0].mxu0 %v649
  %v1406 = vpop.f32.mrb[0].mxu0
  %v1407 = vadd.f32 %v1246, %v1406
  %v1408 = vpop.f32.mrb[0].mxu0
  %v1409 = vpop.f32.mrb[0].mxu0
  %v1410 = vadd.f32 %v1249, %v1409
  %v1411 = vpop.f32.mrb[0].mxu0
  %1412 = vmatprep.mubr.bf16.mxu0 %v657
  %1413 = vmatmul.mubr.bf16.gmra.mrb[0].mxu0 %v656
  %v1414 = vpop.f32.mrb[0].mxu0
  %v1415 = vadd.f32 %v1254, %v1414
  %v1416 = vpop.f32.mrb[0].mxu0
  %v1417 = vpop.f32.mrb[0].mxu0
  %v1418 = vadd.f32 %v1257, %v1417
  %v1419 = vpop.f32.mrb[0].mxu0
  %1420 = vmatprep.mubr.bf16.mxu0 %v664
  %1421 = vmatmul.mubr.bf16.gmra.mrb[0].mxu0 %v663
  %v1422 = vpop.f32.mrb[0].mxu0
  %v1423 = vadd.f32 %v1262, %v1422
  %v1424 = vpop.f32.mrb[0].mxu0
  %v1425 = vpop.f32.mrb[0].mxu0
  %v1426 = vadd.f32 %v1265, %v1425
  %v1427 = vpop.f32.mrb[0].mxu0
  %1428 = vmatprep.mubr.bf16.mxu0 %v671
  %1429 = vmatmul.mubr.bf16.gmra.mrb[0].mxu0 %v670
  %v1430 = vpop.f32.mrb[0].mxu0
  %v1431 = vadd.f32 %v1270, %v1430
  %v1432 = vpop.f32.mrb[0].mxu0
  %v1433 = vpop.f32.mrb[0].mxu0
  %v1434 = vadd.f32 %v1273, %v1433
  %v1435 = vpop.f32.mrb[0].mxu0
  %1436 = vmatprep.mubr.bf16.mxu0 %v678
  %1437 = vmatmul.mubr.bf16.gmra.mrb[0].mxu0 %v677
  %v1438 = vpop.f32.mrb[0].mxu0
  %v1439 = vadd.f32 %v1278, %v1438
  %v1440 = vpop.f32.mrb[0].mxu0
  %v1441 = vpop.f32.mrb[0].mxu0
  %v1442 = vadd.f32 %v1281, %v1441
  %v1443 = vpop.f32.mrb[0].mxu0
  %1444 = vmatprep.mubr.bf16.mxu0 %v685
  %1445 = vmatmul.mubr.bf16.gmra.mrb[0].mxu0 %v684
  %v1446 = vpop.f32.mrb[0].mxu0
  %v1447 = vadd.f32 %v1286, %v1446
  %v1448 = vpop.f32.mrb[0].mxu0
  %v1449 = vpop.f32.mrb[0].mxu0
  %v1450 = vadd.f32 %v1289, %v1449
  %v1451 = vpop.f32.mrb[0].mxu0
  %1452 = vmatprep.mubr.bf16.mxu0 %v692
  %1453 = vmatmul.mubr.bf16.gmra.mrb[0].mxu0 %v691
  %v1454 = vpop.f32.mrb[0].mxu0
  %v1455 = vadd.f32 %v1294, %v1454
  %v1456 = vpop.f32.mrb[0].mxu0
  %v1457 = vpop.f32.mrb[0].mxu0
  %v1458 = vadd.f32 %v1297, %v1457
  %v1459 = vpop.f32.mrb[0].mxu0
  %1460 = vmatprep.mubr.bf16.mxu0 %v699
  %1461 = vmatmul.mubr.bf16.gmra.mrb[0].mxu0 %v698
  %v1462 = vpop.f32.mrb[0].mxu0
  %v1463 = vadd.f32 %v1302, %v1462
  %v1464 = vpop.f32.mrb[0].mxu0
  %v1465 = vpop.f32.mrb[0].mxu0
  %v1466 = vadd.f32 %v1305, %v1465
  %v1467 = vpop.f32.mrb[0].mxu0
  %1468 = vmatprep.mubr.bf16.mxu0 %v706
  %1469 = vmatmul.mubr.bf16.gmra.mrb[0].mxu0 %v705
  %v1470 = vpop.f32.mrb[0].mxu0
  %v1471 = vadd.f32 %v1310, %v1470
  %v1472 = vpop.f32.mrb[0].mxu0
  %v1473 = vpop.f32.mrb[0].mxu0
  %v1474 = vadd.f32 %v1313, %v1473
  %v1475 = vpop.f32.mrb[0].mxu0
  %1476 = vmatprep.mubr.bf16.mxu0 %v713
  %1477 = vmatmul.mubr.bf16.gmra.mrb[0].mxu0 %v712
  %v1478 = vpop.f32.mrb[0].mxu0
  %v1479 = vadd.f32 %v1318, %v1478
  %v1480 = vpop.f32.mrb[0].mxu0
  %v1481 = vpop.f32.mrb[0].mxu0
  %v1482 = vadd.f32 %v1321, %v1481
  %v1483 = vpop.f32.mrb[0].mxu0
  %1484 = vmatprep.mubr.bf16.mxu0 %v720
  %1485 = vmatmul.mubr.bf16.gmra.mrb[0].mxu0 %v719
  %v1486 = vpop.f32.mrb[0].mxu0
  %v1487 = vadd.f32 %v1326, %v1486
  %v1488 = vpop.f32.mrb[0].mxu0
  %v1489 = vpop.f32.mrb[0].mxu0
  %v1490 = vadd.f32 %v1329, %v1489
  %v1491 = vpop.f32.mrb[0].mxu0
  %1492 = vmatprep.mubr.bf16.mxu0 %v727
  %1493 = vmatmul.mubr.bf16.gmra.mrb[0].mxu0 %v726
  %v1494 = vpop.f32.mrb[0].mxu0
  %v1495 = vadd.f32 %v1334, %v1494
  %v1496 = vpop.f32.mrb[0].mxu0
  %v1497 = vpop.f32.mrb[0].mxu0
  %v1498 = vadd.f32 %v1337, %v1497
  %v1499 = vpop.f32.mrb[0].mxu0
  %1500 = vdwg.mxu0
  %1501 = vmatprep.subr.bf16.mxu0 0
  %1502 = vmatpush1.bf16.msra.mxu0 %v1099
  %1503 = vmatprep.subr.bf16.mxu0 0
  %1504 = vmatpush1.bf16.msra.mxu0 %v1100
  %1505 = vmatprep.subr.bf16.mxu0 0
  %1506 = vmatpush1.bf16.msra.mxu0 %v1101
  %1507 = vmatprep.subr.bf16.mxu0 0
  %1508 = vmatpush1.bf16.msra.mxu0 %v1102
  %1509 = vmatprep.subr.bf16.mxu0 0
  %1510 = vmatpush1.bf16.msra.mxu0 %v1103
  %1511 = vmatprep.subr.bf16.mxu0 0
  %1512 = vmatpush1.bf16.msra.mxu0 %v1104
  %1513 = vmatprep.subr.bf16.mxu0 0
  %1514 = vmatpush1.bf16.msra.mxu0 %v1105
  %1515 = vmatprep.subr.bf16.mxu0 0
  %1516 = vmatpush1.bf16.msra.mxu0 %v1106
  %1517 = vmatprep.subr.bf16.mxu0 0
  %1518 = vmatpush1.bf16.msra.mxu0 %v1107
  %1519 = vmatprep.subr.bf16.mxu0 0
  %1520 = vmatpush1.bf16.msra.mxu0 %v1108
  %1521 = vmatprep.subr.bf16.mxu0 0
  %1522 = vmatpush1.bf16.msra.mxu0 %v1109
  %1523 = vmatprep.subr.bf16.mxu0 0
  %1524 = vmatpush1.bf16.msra.mxu0 %v1110
  %1525 = vmatprep.subr.bf16.mxu0 0
  %1526 = vmatpush1.bf16.msra.mxu0 %v1111
  %1527 = vmatprep.subr.bf16.mxu0 0
  %1528 = vmatpush1.bf16.msra.mxu0 %v1112
  %1529 = vmatprep.subr.bf16.mxu0 0
  %1530 = vmatpush1.bf16.msra.mxu0 %v1113
  %1531 = vmatprep.subr.bf16.mxu0 0
  %1532 = vmatpush1.bf16.msra.mxu0 %v1114
  %1533 = vmatprep.mubr.bf16.mxu0 %v624
  %1534 = vmatmul.mubr.bf16.gmra.mrb[0].mxu0 %v623
  %v1535 = vpop.f32.mrb[0].mxu0
  %v1536 = vadd.f32 %v1375, %v1535
  %v1537 = vpop.f32.mrb[0].mxu0
  %v1538 = vpop.f32.mrb[0].mxu0
  %v1539 = vadd.f32 %v1378, %v1538
  %v1540 = vpop.f32.mrb[0].mxu0
  %1541 = vmatprep.mubr.bf16.mxu0 %v631
  %1542 = vmatmul.mubr.bf16.gmra.mrb[0].mxu0 %v630
  %v1543 = vpop.f32.mrb[0].mxu0
  %v1544 = vadd.f32 %v1383, %v1543
  %v1545 = vpop.f32.mrb[0].mxu0
  %v1546 = vpop.f32.mrb[0].mxu0
  %v1547 = vadd.f32 %v1386, %v1546
  %v1548 = vpop.f32.mrb[0].mxu0
  %1549 = vmatprep.mubr.bf16.mxu0 %v638
  %1550 = vmatmul.mubr.bf16.gmra.mrb[0].mxu0 %v637
  %v1551 = vpop.f32.mrb[0].mxu0
  %v1552 = vadd.f32 %v1391, %v1551
  %v1553 = vpop.f32.mrb[0].mxu0
  %v1554 = vpop.f32.mrb[0].mxu0
  %v1555 = vadd.f32 %v1394, %v1554
  %v1556 = vpop.f32.mrb[0].mxu0
  %1557 = vmatprep.mubr.bf16.mxu0 %v645
  %1558 = vmatmul.mubr.bf16.gmra.mrb[0].mxu0 %v644
  %v1559 = vpop.f32.mrb[0].mxu0
  %v1560 = vadd.f32 %v1399, %v1559
  %v1561 = vpop.f32.mrb[0].mxu0
  %v1562 = vpop.f32.mrb[0].mxu0
  %v1563 = vadd.f32 %v1402, %v1562
  %v1564 = vpop.f32.mrb[0].mxu0
  %1565 = vmatprep.mubr.bf16.mxu0 %v652
  %1566 = vmatmul.mubr.bf16.gmra.mrb[0].mxu0 %v651
  %v1567 = vpop.f32.mrb[0].mxu0
  %v1568 = vadd.f32 %v1407, %v1567
  %v1569 = vpop.f32.mrb[0].mxu0
  %v1570 = vpop.f32.mrb[0].mxu0
  %v1571 = vadd.f32 %v1410, %v1570
  %v1572 = vpop.f32.mrb[0].mxu0
  %1573 = vmatprep.mubr.bf16.mxu0 %v659
  %1574 = vmatmul.mubr.bf16.gmra.mrb[0].mxu0 %v658
  %v1575 = vpop.f32.mrb[0].mxu0
  %v1576 = vadd.f32 %v1415, %v1575
  %v1577 = vpop.f32.mrb[0].mxu0
  %v1578 = vpop.f32.mrb[0].mxu0
  %v1579 = vadd.f32 %v1418, %v1578
  %v1580 = vpop.f32.mrb[0].mxu0
  %1581 = vmatprep.mubr.bf16.mxu0 %v666
  %1582 = vmatmul.mubr.bf16.gmra.mrb[0].mxu0 %v665
  %v1583 = vpop.f32.mrb[0].mxu0
  %v1584 = vadd.f32 %v1423, %v1583
  %v1585 = vpop.f32.mrb[0].mxu0
  %v1586 = vpop.f32.mrb[0].mxu0
  %v1587 = vadd.f32 %v1426, %v1586
  %v1588 = vpop.f32.mrb[0].mxu0
  %1589 = vmatprep.mubr.bf16.mxu0 %v673
  %1590 = vmatmul.mubr.bf16.gmra.mrb[0].mxu0 %v672
  %v1591 = vpop.f32.mrb[0].mxu0
  %v1592 = vadd.f32 %v1431, %v1591
  %v1593 = vpop.f32.mrb[0].mxu0
  %v1594 = vpop.f32.mrb[0].mxu0
  %v1595 = vadd.f32 %v1434, %v1594
  %v1596 = vpop.f32.mrb[0].mxu0
  %1597 = vmatprep.mubr.bf16.mxu0 %v680
  %1598 = vmatmul.mubr.bf16.gmra.mrb[0].mxu0 %v679
  %v1599 = vpop.f32.mrb[0].mxu0
  %v1600 = vadd.f32 %v1439, %v1599
  %v1601 = vpop.f32.mrb[0].mxu0
  %v1602 = vpop.f32.mrb[0].mxu0
  %v1603 = vadd.f32 %v1442, %v1602
  %v1604 = vpop.f32.mrb[0].mxu0
  %1605 = vmatprep.mubr.bf16.mxu0 %v687
  %1606 = vmatmul.mubr.bf16.gmra.mrb[0].mxu0 %v686
  %v1607 = vpop.f32.mrb[0].mxu0
  %v1608 = vadd.f32 %v1447, %v1607
  %v1609 = vpop.f32.mrb[0].mxu0
  %v1610 = vpop.f32.mrb[0].mxu0
  %v1611 = vadd.f32 %v1450, %v1610
  %v1612 = vpop.f32.mrb[0].mxu0
  %1613 = vmatprep.mubr.bf16.mxu0 %v694
  %1614 = vmatmul.mubr.bf16.gmra.mrb[0].mxu0 %v693
  %v1615 = vpop.f32.mrb[0].mxu0
  %v1616 = vadd.f32 %v1455, %v1615
  %v1617 = vpop.f32.mrb[0].mxu0
  %v1618 = vpop.f32.mrb[0].mxu0
  %v1619 = vadd.f32 %v1458, %v1618
  %v1620 = vpop.f32.mrb[0].mxu0
  %1621 = vmatprep.mubr.bf16.mxu0 %v701
  %1622 = vmatmul.mubr.bf16.gmra.mrb[0].mxu0 %v700
  %v1623 = vpop.f32.mrb[0].mxu0
  %v1624 = vadd.f32 %v1463, %v1623
  %v1625 = vpop.f32.mrb[0].mxu0
  %v1626 = vpop.f32.mrb[0].mxu0
  %v1627 = vadd.f32 %v1466, %v1626
  %v1628 = vpop.f32.mrb[0].mxu0
  %1629 = vmatprep.mubr.bf16.mxu0 %v708
  %1630 = vmatmul.mubr.bf16.gmra.mrb[0].mxu0 %v707
  %v1631 = vpop.f32.mrb[0].mxu0
  %v1632 = vadd.f32 %v1471, %v1631
  %v1633 = vpop.f32.mrb[0].mxu0
  %v1634 = vpop.f32.mrb[0].mxu0
  %v1635 = vadd.f32 %v1474, %v1634
  %v1636 = vpop.f32.mrb[0].mxu0
  %1637 = vmatprep.mubr.bf16.mxu0 %v715
  %1638 = vmatmul.mubr.bf16.gmra.mrb[0].mxu0 %v714
  %v1639 = vpop.f32.mrb[0].mxu0
  %v1640 = vadd.f32 %v1479, %v1639
  %v1641 = vpop.f32.mrb[0].mxu0
  %v1642 = vpop.f32.mrb[0].mxu0
  %v1643 = vadd.f32 %v1482, %v1642
  %v1644 = vpop.f32.mrb[0].mxu0
  %1645 = vmatprep.mubr.bf16.mxu0 %v722
  %1646 = vmatmul.mubr.bf16.gmra.mrb[0].mxu0 %v721
  %v1647 = vpop.f32.mrb[0].mxu0
  %v1648 = vadd.f32 %v1487, %v1647
  %v1649 = vpop.f32.mrb[0].mxu0
  %v1650 = vpop.f32.mrb[0].mxu0
  %v1651 = vadd.f32 %v1490, %v1650
  %v1652 = vpop.f32.mrb[0].mxu0
  %1653 = vmatprep.mubr.bf16.mxu0 %v729
  %1654 = vmatmul.mubr.bf16.gmra.mrb[0].mxu0 %v728
  %v1655 = vpop.f32.mrb[0].mxu0
  %v1656 = vadd.f32 %v1495, %v1655
  %v1657 = vpop.f32.mrb[0].mxu0
  %v1658 = vpop.f32.mrb[0].mxu0
  %v1659 = vadd.f32 %v1498, %v1658
  %v1660 = vpop.f32.mrb[0].mxu0
  %1661 = vdwg.mxu0
  %1662 = vmatprep.subr.bf16.mxu0 0
  %1663 = vmatpush1.bf16.msra.mxu0 %v1115
  %1664 = vmatprep.subr.bf16.mxu0 0
  %1665 = vmatpush1.bf16.msra.mxu0 %v1116
  %1666 = vmatprep.subr.bf16.mxu0 0
  %1667 = vmatpush1.bf16.msra.mxu0 %v1117
  %1668 = vmatprep.subr.bf16.mxu0 0
  %1669 = vmatpush1.bf16.msra.mxu0 %v1118
  %1670 = vmatprep.subr.bf16.mxu0 0
  %1671 = vmatpush1.bf16.msra.mxu0 %v1119
  %1672 = vmatprep.subr.bf16.mxu0 0
  %1673 = vmatpush1.bf16.msra.mxu0 %v1120
  %1674 = vmatprep.subr.bf16.mxu0 0
  %1675 = vmatpush1.bf16.msra.mxu0 %v1121
  %1676 = vmatprep.subr.bf16.mxu0 0
  %1677 = vmatpush1.bf16.msra.mxu0 %v1122
  %1678 = vmatprep.subr.bf16.mxu0 0
  %1679 = vmatpush1.bf16.msra.mxu0 0
  %1680 = vmatprep.subr.bf16.mxu0 0
  %1681 = vmatpush1.bf16.msra.mxu0 0
  %1682 = vmatprep.subr.bf16.mxu0 0
  %1683 = vmatpush1.bf16.msra.mxu0 0
  %1684 = vmatprep.subr.bf16.mxu0 0
  %1685 = vmatpush1.bf16.msra.mxu0 0
  %1686 = vmatprep.subr.bf16.mxu0 0
  %1687 = vmatpush1.bf16.msra.mxu0 0
  %1688 = vmatprep.subr.bf16.mxu0 0
  %1689 = vmatpush1.bf16.msra.mxu0 0
  %1690 = vmatprep.subr.bf16.mxu0 0
  %1691 = vmatpush1.bf16.msra.mxu0 0
  %1692 = vmatprep.subr.bf16.mxu0 0
  %1693 = vmatpush1.bf16.msra.mxu0 0
  %1694 = vmatprep.mubr.bf16.mxu0 0
  %1695 = vmatmul.mubr.bf16.gmra.mrb[0].mxu0 %v625
  %v1696 = vpop.f32.mrb[0].mxu0
  %v1697 = vadd.f32 %v1536, %v1696
  %v1698 = vpop.f32.mrb[0].mxu0
  %v1699 = vpop.f32.mrb[0].mxu0
  %v1700 = vadd.f32 %v1539, %v1699
  %v1701 = vpop.f32.mrb[0].mxu0
  %1702 = vmatprep.mubr.bf16.mxu0 0
  %1703 = vmatmul.mubr.bf16.gmra.mrb[0].mxu0 %v632
  %v1704 = vpop.f32.mrb[0].mxu0
  %v1705 = vadd.f32 %v1544, %v1704
  %v1706 = vpop.f32.mrb[0].mxu0
  %v1707 = vpop.f32.mrb[0].mxu0
  %v1708 = vadd.f32 %v1547, %v1707
  %v1709 = vpop.f32.mrb[0].mxu0
  %1710 = vmatprep.mubr.bf16.mxu0 0
  %1711 = vmatmul.mubr.bf16.gmra.mrb[0].mxu0 %v639
  %v1712 = vpop.f32.mrb[0].mxu0
  %v1713 = vadd.f32 %v1552, %v1712
  %v1714 = vpop.f32.mrb[0].mxu0
  %v1715 = vpop.f32.mrb[0].mxu0
  %v1716 = vadd.f32 %v1555, %v1715
  %v1717 = vpop.f32.mrb[0].mxu0
  %1718 = vmatprep.mubr.bf16.mxu0 0
  %1719 = vmatmul.mubr.bf16.gmra.mrb[0].mxu0 %v646
  %v1720 = vpop.f32.mrb[0].mxu0
  %v1721 = vadd.f32 %v1560, %v1720
  %v1722 = vpop.f32.mrb[0].mxu0
  %v1723 = vpop.f32.mrb[0].mxu0
  %v1724 = vadd.f32 %v1563, %v1723
  %v1725 = vpop.f32.mrb[0].mxu0
  %1726 = vmatprep.mubr.bf16.mxu0 0
  %1727 = vmatmul.mubr.bf16.gmra.mrb[0].mxu0 %v653
  %v1728 = vpop.f32.mrb[0].mxu0
  %v1729 = vadd.f32 %v1568, %v1728
  %v1730 = vpop.f32.mrb[0].mxu0
  %v1731 = vpop.f32.mrb[0].mxu0
  %v1732 = vadd.f32 %v1571, %v1731
  %v1733 = vpop.f32.mrb[0].mxu0
  %1734 = vmatprep.mubr.bf16.mxu0 0
  %1735 = vmatmul.mubr.bf16.gmra.mrb[0].mxu0 %v660
  %v1736 = vpop.f32.mrb[0].mxu0
  %v1737 = vadd.f32 %v1576, %v1736
  %v1738 = vpop.f32.mrb[0].mxu0
  %v1739 = vpop.f32.mrb[0].mxu0
  %v1740 = vadd.f32 %v1579, %v1739
  %v1741 = vpop.f32.mrb[0].mxu0
  %1742 = vmatprep.mubr.bf16.mxu0 0
  %1743 = vmatmul.mubr.bf16.gmra.mrb[0].mxu0 %v667
  %v1744 = vpop.f32.mrb[0].mxu0
  %v1745 = vadd.f32 %v1584, %v1744
  %v1746 = vpop.f32.mrb[0].mxu0
  %v1747 = vpop.f32.mrb[0].mxu0
  %v1748 = vadd.f32 %v1587, %v1747
  %v1749 = vpop.f32.mrb[0].mxu0
  %1750 = vmatprep.mubr.bf16.mxu0 0
  %1751 = vmatmul.mubr.bf16.gmra.mrb[0].mxu0 %v674
  %v1752 = vpop.f32.mrb[0].mxu0
  %v1753 = vadd.f32 %v1592, %v1752
  %v1754 = vpop.f32.mrb[0].mxu0
  %v1755 = vpop.f32.mrb[0].mxu0
  %v1756 = vadd.f32 %v1595, %v1755
  %v1757 = vpop.f32.mrb[0].mxu0
  %1758 = vmatprep.mubr.bf16.mxu0 0
  %1759 = vmatmul.mubr.bf16.gmra.mrb[0].mxu0 %v681
  %v1760 = vpop.f32.mrb[0].mxu0
  %v1761 = vadd.f32 %v1600, %v1760
  %v1762 = vpop.f32.mrb[0].mxu0
  %v1763 = vpop.f32.mrb[0].mxu0
  %v1764 = vadd.f32 %v1603, %v1763
  %v1765 = vpop.f32.mrb[0].mxu0
  %1766 = vmatprep.mubr.bf16.mxu0 0
  %1767 = vmatmul.mubr.bf16.gmra.mrb[0].mxu0 %v688
  %v1768 = vpop.f32.mrb[0].mxu0
  %v1769 = vadd.f32 %v1608, %v1768
  %v1770 = vpop.f32.mrb[0].mxu0
  %v1771 = vpop.f32.mrb[0].mxu0
  %v1772 = vadd.f32 %v1611, %v1771
  %v1773 = vpop.f32.mrb[0].mxu0
  %1774 = vmatprep.mubr.bf16.mxu0 0
  %1775 = vmatmul.mubr.bf16.gmra.mrb[0].mxu0 %v695
  %v1776 = vpop.f32.mrb[0].mxu0
  %v1777 = vadd.f32 %v1616, %v1776
  %v1778 = vpop.f32.mrb[0].mxu0
  %v1779 = vpop.f32.mrb[0].mxu0
  %v1780 = vadd.f32 %v1619, %v1779
  %v1781 = vpop.f32.mrb[0].mxu0
  %1782 = vmatprep.mubr.bf16.mxu0 0
  %1783 = vmatmul.mubr.bf16.gmra.mrb[0].mxu0 %v702
  %v1784 = vpop.f32.mrb[0].mxu0
  %v1785 = vadd.f32 %v1624, %v1784
  %v1786 = vpop.f32.mrb[0].mxu0
  %v1787 = vpop.f32.mrb[0].mxu0
  %v1788 = vadd.f32 %v1627, %v1787
  %v1789 = vpop.f32.mrb[0].mxu0
  %1790 = vmatprep.mubr.bf16.mxu0 0
  %1791 = vmatmul.mubr.bf16.gmra.mrb[0].mxu0 %v709
  %v1792 = vpop.f32.mrb[0].mxu0
  %v1793 = vadd.f32 %v1632, %v1792
  %v1794 = vpop.f32.mrb[0].mxu0
  %v1795 = vpop.f32.mrb[0].mxu0
  %v1796 = vadd.f32 %v1635, %v1795
  %v1797 = vpop.f32.mrb[0].mxu0
  %1798 = vmatprep.mubr.bf16.mxu0 0
  %1799 = vmatmul.mubr.bf16.gmra.mrb[0].mxu0 %v716
  %v1800 = vpop.f32.mrb[0].mxu0
  %v1801 = vadd.f32 %v1640, %v1800
  %v1802 = vpop.f32.mrb[0].mxu0
  %v1803 = vpop.f32.mrb[0].mxu0
  %v1804 = vadd.f32 %v1643, %v1803
  %v1805 = vpop.f32.mrb[0].mxu0
  %1806 = vmatprep.mubr.bf16.mxu0 0
  %1807 = vmatmul.mubr.bf16.gmra.mrb[0].mxu0 %v723
  %v1808 = vpop.f32.mrb[0].mxu0
  %v1809 = vadd.f32 %v1648, %v1808
  %v1810 = vpop.f32.mrb[0].mxu0
  %v1811 = vpop.f32.mrb[0].mxu0
  %v1812 = vadd.f32 %v1651, %v1811
  %v1813 = vpop.f32.mrb[0].mxu0
  %1814 = vmatprep.mubr.bf16.mxu0 0
  %1815 = vmatmul.mubr.bf16.gmra.mrb[0].mxu0 %v730
  %v1816 = vpop.f32.mrb[0].mxu0
  %v1817 = vadd.f32 %v1656, %v1816
  %v1818 = vpop.f32.mrb[0].mxu0
  %v1819 = vpop.f32.mrb[0].mxu0
  %v1820 = vadd.f32 %v1659, %v1819
  %v1821 = vpop.f32.mrb[0].mxu0
  %1822 = vdwg.mxu0
  %v1823 = vld [vmem:[%s6] sm:$0x1]
  %v1824 = vld [vmem:[%s6 + $0x1] sm:$0x1]
  %v1825 = vadd.f32 %v1697, %v1700
  %v1826 = vadd.f32 %v1825, %v1705
  %v1827 = vadd.f32 %v1826, %v1708
  %v1828 = vadd.f32 %v1827, %v1713
  %v1829 = vadd.f32 %v1828, %v1716
  %v1830 = vadd.f32 %v1829, %v1721
  %v1831 = vadd.f32 %v1830, %v1724
  %v1832 = vadd.f32 %v1831, %v1729
  %v1833 = vadd.f32 %v1832, %v1732
  %v1834 = vadd.f32 %v1833, %v1737
  %v1835 = vadd.f32 %v1834, %v1740
  %v1836 = vadd.f32 %v1835, %v1745
  %v1837 = vadd.f32 %v1836, %v1748
  %v1838 = vadd.f32 %v1837, %v1753
  %v1839 = vadd.f32 %v1838, %v1756
  %v1840 = vadd.f32 %v1839, %v1761
  %v1841 = vadd.f32 %v1840, %v1764
  %v1842 = vadd.f32 %v1841, %v1769
  %v1843 = vadd.f32 %v1842, %v1772
  %v1844 = vadd.f32 %v1843, %v1777
  %v1845 = vadd.f32 %v1844, %v1780
  %v1846 = vadd.f32 %v1845, %v1785
  %v1847 = vadd.f32 %v1846, %v1788
  %v1848 = vadd.f32 %v1847, %v1793
  %v1849 = vadd.f32 %v1848, %v1796
  %v1850 = vadd.f32 %v1849, %v1801
  %v1851 = vadd.f32 %v1850, %v1804
  %v1852 = vadd.f32 %v1851, %v1809
  %v1853 = vadd.f32 %v1852, %v1812
  %v1854 = vadd.f32 %v1853, %v1817
  %v1855 = vadd.f32 %v1854, %v1820
  %v1856 = vrot.slane %v1855, 4
  %v1857 = vadd.f32 %v1855, %v1856
  %v1858 = vrot.slane %v1857, 2
  %v1859 = vadd.f32 %v1857, %v1858
  %v1860 = vrot.slane %v1859, 1
  %v1861 = vadd.f32 %v1859, %v1860
  %v1862 = vmul.f32 %v1861, 0.00390625
  %v1863 = vmul.f32 %v1697, %v1697
  %v1864 = vmul.f32 %v1700, %v1700
  %v1865 = vmul.f32 %v1705, %v1705
  %v1866 = vmul.f32 %v1708, %v1708
  %v1867 = vmul.f32 %v1713, %v1713
  %v1868 = vmul.f32 %v1716, %v1716
  %v1869 = vmul.f32 %v1721, %v1721
  %v1870 = vmul.f32 %v1724, %v1724
  %v1871 = vmul.f32 %v1729, %v1729
  %v1872 = vmul.f32 %v1732, %v1732
  %v1873 = vmul.f32 %v1737, %v1737
  %v1874 = vmul.f32 %v1740, %v1740
  %v1875 = vmul.f32 %v1745, %v1745
  %v1876 = vmul.f32 %v1748, %v1748
  %v1877 = vmul.f32 %v1753, %v1753
  %v1878 = vmul.f32 %v1756, %v1756
  %v1879 = vmul.f32 %v1761, %v1761
  %v1880 = vmul.f32 %v1764, %v1764
  %v1881 = vmul.f32 %v1769, %v1769
  %v1882 = vmul.f32 %v1772, %v1772
  %v1883 = vmul.f32 %v1777, %v1777
  %v1884 = vmul.f32 %v1780, %v1780
  %v1885 = vmul.f32 %v1785, %v1785
  %v1886 = vmul.f32 %v1788, %v1788
  %v1887 = vmul.f32 %v1793, %v1793
  %v1888 = vmul.f32 %v1796, %v1796
  %v1889 = vmul.f32 %v1801, %v1801
  %v1890 = vmul.f32 %v1804, %v1804
  %v1891 = vmul.f32 %v1809, %v1809
  %v1892 = vmul.f32 %v1812, %v1812
  %v1893 = vmul.f32 %v1817, %v1817
  %v1894 = vmul.f32 %v1820, %v1820
  %v1895 = vadd.f32 %v1863, %v1864
  %v1896 = vadd.f32 %v1895, %v1865
  %v1897 = vadd.f32 %v1896, %v1866
  %v1898 = vadd.f32 %v1897, %v1867
  %v1899 = vadd.f32 %v1898, %v1868
  %v1900 = vadd.f32 %v1899, %v1869
  %v1901 = vadd.f32 %v1900, %v1870
  %v1902 = vadd.f32 %v1901, %v1871
  %v1903 = vadd.f32 %v1902, %v1872
  %v1904 = vadd.f32 %v1903, %v1873
  %v1905 = vadd.f32 %v1904, %v1874
  %v1906 = vadd.f32 %v1905, %v1875
  %v1907 = vadd.f32 %v1906, %v1876
  %v1908 = vadd.f32 %v1907, %v1877
  %v1909 = vadd.f32 %v1908, %v1878
  %v1910 = vadd.f32 %v1909, %v1879
  %v1911 = vadd.f32 %v1910, %v1880
  %v1912 = vadd.f32 %v1911, %v1881
  %v1913 = vadd.f32 %v1912, %v1882
  %v1914 = vadd.f32 %v1913, %v1883
  %v1915 = vadd.f32 %v1914, %v1884
  %v1916 = vadd.f32 %v1915, %v1885
  %v1917 = vadd.f32 %v1916, %v1886
  %v1918 = vadd.f32 %v1917, %v1887
  %v1919 = vadd.f32 %v1918, %v1888
  %v1920 = vadd.f32 %v1919, %v1889
  %v1921 = vadd.f32 %v1920, %v1890
  %v1922 = vadd.f32 %v1921, %v1891
  %v1923 = vadd.f32 %v1922, %v1892
  %v1924 = vadd.f32 %v1923, %v1893
  %v1925 = vadd.f32 %v1924, %v1894
  %v1926 = vrot.slane %v1925, 4
  %v1927 = vadd.f32 %v1925, %v1926
  %v1928 = vrot.slane %v1927, 2
  %v1929 = vadd.f32 %v1927, %v1928
  %v1930 = vrot.slane %v1929, 1
  %v1931 = vadd.f32 %v1929, %v1930
  %v1932 = vmul.f32 %v1931, 0.00390625
  %v1933 = vmul.f32 %v1862, %v1862
  %v1934 = vsub.f32 %v1932, %v1933
  %v1935 = vmax.f32 %v1934, 0.0
  %v1936 = vadd.f32 %v1935, 1e-05
  %v1937 = vrsqrt.pop %v1936
  %v1938 = vmul.f32 %v1823, %v1937
  %v1939 = vmul.f32 %v1862, %v1938
  %v1940 = vsub.f32 %v1824, %v1939
  %v1941 = vlaneseq
  %v1942 = vshrl.u32 %v1941, 7
  %v1943 = vsub.s32 0, %v1942
  %v1944 = vrot.slane %v1938, %v1943
  %v1945 = vmul.f32 %v1697, %v1944
  %v1946 = vmul.f32 %v1700, %v1944
  %v1947 = vmul.f32 %v1705, %v1944
  %v1948 = vmul.f32 %v1708, %v1944
  %v1949 = vmul.f32 %v1713, %v1944
  %v1950 = vmul.f32 %v1716, %v1944
  %v1951 = vmul.f32 %v1721, %v1944
  %v1952 = vmul.f32 %v1724, %v1944
  %v1953 = vmul.f32 %v1729, %v1944
  %v1954 = vmul.f32 %v1732, %v1944
  %v1955 = vmul.f32 %v1737, %v1944
  %v1956 = vmul.f32 %v1740, %v1944
  %v1957 = vmul.f32 %v1745, %v1944
  %v1958 = vmul.f32 %v1748, %v1944
  %v1959 = vmul.f32 %v1753, %v1944
  %v1960 = vmul.f32 %v1756, %v1944
  %v1961 = vmul.f32 %v1761, %v1944
  %v1962 = vmul.f32 %v1764, %v1944
  %v1963 = vmul.f32 %v1769, %v1944
  %v1964 = vmul.f32 %v1772, %v1944
  %v1965 = vmul.f32 %v1777, %v1944
  %v1966 = vmul.f32 %v1780, %v1944
  %v1967 = vmul.f32 %v1785, %v1944
  %v1968 = vmul.f32 %v1788, %v1944
  %v1969 = vmul.f32 %v1793, %v1944
  %v1970 = vmul.f32 %v1796, %v1944
  %v1971 = vmul.f32 %v1801, %v1944
  %v1972 = vmul.f32 %v1804, %v1944
  %v1973 = vmul.f32 %v1809, %v1944
  %v1974 = vmul.f32 %v1812, %v1944
  %v1975 = vmul.f32 %v1817, %v1944
  %v1976 = vmul.f32 %v1820, %v1944
  %v1977 = vlaneseq
  %v1978 = vshrl.u32 %v1977, 7
  %v1979 = vsub.s32 0, %v1978
  %v1980 = vrot.slane %v1940, %v1979
  %v1981 = vadd.f32 %v1945, %v1980
  %v1982 = vadd.f32 %v1946, %v1980
  %v1983 = vadd.f32 %v1947, %v1980
  %v1984 = vadd.f32 %v1948, %v1980
  %v1985 = vadd.f32 %v1949, %v1980
  %v1986 = vadd.f32 %v1950, %v1980
  %v1987 = vadd.f32 %v1951, %v1980
  %v1988 = vadd.f32 %v1952, %v1980
  %v1989 = vadd.f32 %v1953, %v1980
  %v1990 = vadd.f32 %v1954, %v1980
  %v1991 = vadd.f32 %v1955, %v1980
  %v1992 = vadd.f32 %v1956, %v1980
  %v1993 = vadd.f32 %v1957, %v1980
  %v1994 = vadd.f32 %v1958, %v1980
  %v1995 = vadd.f32 %v1959, %v1980
  %v1996 = vadd.f32 %v1960, %v1980
  %v1997 = vadd.f32 %v1961, %v1980
  %v1998 = vadd.f32 %v1962, %v1980
  %v1999 = vadd.f32 %v1963, %v1980
  %v2000 = vadd.f32 %v1964, %v1980
  %v2001 = vadd.f32 %v1965, %v1980
  %v2002 = vadd.f32 %v1966, %v1980
  %v2003 = vadd.f32 %v1967, %v1980
  %v2004 = vadd.f32 %v1968, %v1980
  %v2005 = vadd.f32 %v1969, %v1980
  %v2006 = vadd.f32 %v1970, %v1980
  %v2007 = vadd.f32 %v1971, %v1980
  %v2008 = vadd.f32 %v1972, %v1980
  %v2009 = vadd.f32 %v1973, %v1980
  %v2010 = vadd.f32 %v1974, %v1980
  %v2011 = vadd.f32 %v1975, %v1980
  %v2012 = vadd.f32 %v1976, %v1980
  %v2013 = vmul.f32 %v1981, 0.5
  %v2014 = vmul.f32 %v1982, 0.5
  %v2015 = vmul.f32 %v1983, 0.5
  %v2016 = vmul.f32 %v1984, 0.5
  %v2017 = vmul.f32 %v1985, 0.5
  %v2018 = vmul.f32 %v1986, 0.5
  %v2019 = vmul.f32 %v1987, 0.5
  %v2020 = vmul.f32 %v1988, 0.5
  %v2021 = vmul.f32 %v1989, 0.5
  %v2022 = vmul.f32 %v1990, 0.5
  %v2023 = vmul.f32 %v1991, 0.5
  %v2024 = vmul.f32 %v1992, 0.5
  %v2025 = vmul.f32 %v1993, 0.5
  %v2026 = vmul.f32 %v1994, 0.5
  %v2027 = vmul.f32 %v1995, 0.5
  %v2028 = vmul.f32 %v1996, 0.5
  %v2029 = vmul.f32 %v1997, 0.5
  %v2030 = vmul.f32 %v1998, 0.5
  %v2031 = vmul.f32 %v1999, 0.5
  %v2032 = vmul.f32 %v2000, 0.5
  %v2033 = vmul.f32 %v2001, 0.5
  %v2034 = vmul.f32 %v2002, 0.5
  %v2035 = vmul.f32 %v2003, 0.5
  %v2036 = vmul.f32 %v2004, 0.5
  %v2037 = vmul.f32 %v2005, 0.5
  %v2038 = vmul.f32 %v2006, 0.5
  %v2039 = vmul.f32 %v2007, 0.5
  %v2040 = vmul.f32 %v2008, 0.5
  %v2041 = vmul.f32 %v2009, 0.5
  %v2042 = vmul.f32 %v2010, 0.5
  %v2043 = vmul.f32 %v2011, 0.5
  %v2044 = vmul.f32 %v2012, 0.5
  %v2045 = vmul.f32 %v1981, 0.70710677
  %v2046 = vmul.f32 %v1982, 0.70710677
  %v2047 = vmul.f32 %v1983, 0.70710677
  %v2048 = vmul.f32 %v1984, 0.70710677
  %v2049 = vmul.f32 %v1985, 0.70710677
  %v2050 = vmul.f32 %v1986, 0.70710677
  %v2051 = vmul.f32 %v1987, 0.70710677
  %v2052 = vmul.f32 %v1988, 0.70710677
  %v2053 = vmul.f32 %v1989, 0.70710677
  %v2054 = vmul.f32 %v1990, 0.70710677
  %v2055 = vmul.f32 %v1991, 0.70710677
  %v2056 = vmul.f32 %v1992, 0.70710677
  %v2057 = vmul.f32 %v1993, 0.70710677
  %v2058 = vmul.f32 %v1994, 0.70710677
  %v2059 = vmul.f32 %v1995, 0.70710677
  %v2060 = vmul.f32 %v1996, 0.70710677
  %v2061 = vmul.f32 %v1997, 0.70710677
  %v2062 = vmul.f32 %v1998, 0.70710677
  %v2063 = vmul.f32 %v1999, 0.70710677
  %v2064 = vmul.f32 %v2000, 0.70710677
  %v2065 = vmul.f32 %v2001, 0.70710677
  %v2066 = vmul.f32 %v2002, 0.70710677
  %v2067 = vmul.f32 %v2003, 0.70710677
  %v2068 = vmul.f32 %v2004, 0.70710677
  %v2069 = vmul.f32 %v2005, 0.70710677
  %v2070 = vmul.f32 %v2006, 0.70710677
  %v2071 = vmul.f32 %v2007, 0.70710677
  %v2072 = vmul.f32 %v2008, 0.70710677
  %v2073 = vmul.f32 %v2009, 0.70710677
  %v2074 = vmul.f32 %v2010, 0.70710677
  %v2075 = vmul.f32 %v2011, 0.70710677
  %v2076 = vmul.f32 %v2012, 0.70710677
  %v2077 = verf.f32.pop %v2045
  %v2078 = verf.f32.pop %v2046
  %v2079 = verf.f32.pop %v2047
  %v2080 = verf.f32.pop %v2048
  %v2081 = verf.f32.pop %v2049
  %v2082 = verf.f32.pop %v2050
  %v2083 = verf.f32.pop %v2051
  %v2084 = verf.f32.pop %v2052
  %v2085 = verf.f32.pop %v2053
  %v2086 = verf.f32.pop %v2054
  %v2087 = verf.f32.pop %v2055
  %v2088 = verf.f32.pop %v2056
  %v2089 = verf.f32.pop %v2057
  %v2090 = verf.f32.pop %v2058
  %v2091 = verf.f32.pop %v2059
  %v2092 = verf.f32.pop %v2060
  %v2093 = verf.f32.pop %v2061
  %v2094 = verf.f32.pop %v2062
  %v2095 = verf.f32.pop %v2063
  %v2096 = verf.f32.pop %v2064
  %v2097 = verf.f32.pop %v2065
  %v2098 = verf.f32.pop %v2066
  %v2099 = verf.f32.pop %v2067
  %v2100 = verf.f32.pop %v2068
  %v2101 = verf.f32.pop %v2069
  %v2102 = verf.f32.pop %v2070
  %v2103 = verf.f32.pop %v2071
  %v2104 = verf.f32.pop %v2072
  %v2105 = verf.f32.pop %v2073
  %v2106 = verf.f32.pop %v2074
  %v2107 = verf.f32.pop %v2075
  %v2108 = verf.f32.pop %v2076
  %v2109 = vadd.f32 %v2077, 1.0
  %v2110 = vadd.f32 %v2078, 1.0
  %v2111 = vadd.f32 %v2079, 1.0
  %v2112 = vadd.f32 %v2080, 1.0
  %v2113 = vadd.f32 %v2081, 1.0
  %v2114 = vadd.f32 %v2082, 1.0
  %v2115 = vadd.f32 %v2083, 1.0
  %v2116 = vadd.f32 %v2084, 1.0
  %v2117 = vadd.f32 %v2085, 1.0
  %v2118 = vadd.f32 %v2086, 1.0
  %v2119 = vadd.f32 %v2087, 1.0
  %v2120 = vadd.f32 %v2088, 1.0
  %v2121 = vadd.f32 %v2089, 1.0
  %v2122 = vadd.f32 %v2090, 1.0
  %v2123 = vadd.f32 %v2091, 1.0
  %v2124 = vadd.f32 %v2092, 1.0
  %v2125 = vadd.f32 %v2093, 1.0
  %v2126 = vadd.f32 %v2094, 1.0
  %v2127 = vadd.f32 %v2095, 1.0
  %v2128 = vadd.f32 %v2096, 1.0
  %v2129 = vadd.f32 %v2097, 1.0
  %v2130 = vadd.f32 %v2098, 1.0
  %v2131 = vadd.f32 %v2099, 1.0
  %v2132 = vadd.f32 %v2100, 1.0
  %v2133 = vadd.f32 %v2101, 1.0
  %v2134 = vadd.f32 %v2102, 1.0
  %v2135 = vadd.f32 %v2103, 1.0
  %v2136 = vadd.f32 %v2104, 1.0
  %v2137 = vadd.f32 %v2105, 1.0
  %v2138 = vadd.f32 %v2106, 1.0
  %v2139 = vadd.f32 %v2107, 1.0
  %v2140 = vadd.f32 %v2108, 1.0
  %v2141 = vmul.f32 %v2013, %v2109
  %v2142 = vmul.f32 %v2014, %v2110
  %v2143 = vmul.f32 %v2015, %v2111
  %v2144 = vmul.f32 %v2016, %v2112
  %v2145 = vmul.f32 %v2017, %v2113
  %v2146 = vmul.f32 %v2018, %v2114
  %v2147 = vmul.f32 %v2019, %v2115
  %v2148 = vmul.f32 %v2020, %v2116
  %v2149 = vmul.f32 %v2021, %v2117
  %v2150 = vmul.f32 %v2022, %v2118
  %v2151 = vmul.f32 %v2023, %v2119
  %v2152 = vmul.f32 %v2024, %v2120
  %v2153 = vmul.f32 %v2025, %v2121
  %v2154 = vmul.f32 %v2026, %v2122
  %v2155 = vmul.f32 %v2027, %v2123
  %v2156 = vmul.f32 %v2028, %v2124
  %v2157 = vmul.f32 %v2029, %v2125
  %v2158 = vmul.f32 %v2030, %v2126
  %v2159 = vmul.f32 %v2031, %v2127
  %v2160 = vmul.f32 %v2032, %v2128
  %v2161 = vmul.f32 %v2033, %v2129
  %v2162 = vmul.f32 %v2034, %v2130
  %v2163 = vmul.f32 %v2035, %v2131
  %v2164 = vmul.f32 %v2036, %v2132
  %v2165 = vmul.f32 %v2037, %v2133
  %v2166 = vmul.f32 %v2038, %v2134
  %v2167 = vmul.f32 %v2039, %v2135
  %v2168 = vmul.f32 %v2040, %v2136
  %v2169 = vmul.f32 %v2041, %v2137
  %v2170 = vmul.f32 %v2042, %v2138
  %v2171 = vmul.f32 %v2043, %v2139
  %v2172 = vmul.f32 %v2044, %v2140
  %v2173 = vpack.c.bf16 %v2142, %v2141
  %v2174 = vpack.c.bf16 %v2144, %v2143
  %v2175 = vpack.c.bf16 %v2146, %v2145
  %v2176 = vpack.c.bf16 %v2148, %v2147
  %v2177 = vpack.c.bf16 %v2150, %v2149
  %v2178 = vpack.c.bf16 %v2152, %v2151
  %v2179 = vpack.c.bf16 %v2154, %v2153
  %v2180 = vpack.c.bf16 %v2156, %v2155
  %v2181 = vpack.c.bf16 %v2158, %v2157
  %v2182 = vpack.c.bf16 %v2160, %v2159
  %v2183 = vpack.c.bf16 %v2162, %v2161
  %v2184 = vpack.c.bf16 %v2164, %v2163
  %v2185 = vpack.c.bf16 %v2166, %v2165
  %v2186 = vpack.c.bf16 %v2168, %v2167
  %v2187 = vpack.c.bf16 %v2170, %v2169
  %v2188 = vpack.c.bf16 %v2172, %v2171
  %v2189 = vld [vmem:[%s2] sm:$0xf]
  %v2190 = vld [vmem:[%s2 + $0x4] sm:$0xf]
  %v2191 = vld [vmem:[%s2 + $0x8] sm:$0xf]
  %v2192 = vld [vmem:[%s2 + $0xc] sm:$0xf]
  %v2193 = vld [vmem:[%s2 + $0x10] sm:$0xf]
  %v2194 = vld [vmem:[%s2 + $0x14] sm:$0xf]
  %v2195 = vld [vmem:[%s2 + $0x18] sm:$0xf]
  %v2196 = vld [vmem:[%s2 + $0x1c] sm:$0xf]
  %v2197 = vld [vmem:[%s2 + $0x20] sm:$0xf]
  %v2198 = vld [vmem:[%s2 + $0x24] sm:$0xf]
  %v2199 = vld [vmem:[%s2 + $0x28] sm:$0xf]
  %v2200 = vld [vmem:[%s2 + $0x2c] sm:$0xf]
  %v2201 = vld [vmem:[%s2 + $0x30] sm:$0xf]
  %v2202 = vld [vmem:[%s2 + $0x34] sm:$0xf]
  %v2203 = vld [vmem:[%s2 + $0x38] sm:$0xf]
  %v2204 = vld [vmem:[%s2 + $0x3c] sm:$0xf]
  %v2221 = vunpack.c.l.b16 %v2189
  %v2222 = vunpack.c.l.b16 %v2190
  %v2223 = vunpack.c.l.b16 %v2191
  %v2224 = vunpack.c.l.b16 %v2192
  %v2225 = vunpack.c.l.b16 %v2193
  %v2226 = vunpack.c.l.b16 %v2194
  %v2227 = vunpack.c.l.b16 %v2195
  %v2228 = vunpack.c.l.b16 %v2196
  %v2229 = vunpack.c.l.b16 %v2197
  %v2230 = vunpack.c.l.b16 %v2198
  %v2231 = vunpack.c.l.b16 %v2199
  %v2232 = vunpack.c.l.b16 %v2200
  %v2233 = vunpack.c.l.b16 %v2201
  %v2234 = vunpack.c.l.b16 %v2202
  %v2235 = vunpack.c.l.b16 %v2203
  %v2236 = vunpack.c.l.b16 %v2204
  %v2237 = vpack.c.b16 %v2222, %v2221
  %v2238 = vpack.c.b16 %v2224, %v2223
  %v2239 = vpack.c.b16 %v2226, %v2225
  %v2240 = vpack.c.b16 %v2228, %v2227
  %v2241 = vpack.c.b16 %v2230, %v2229
  %v2242 = vpack.c.b16 %v2232, %v2231
  %v2243 = vpack.c.b16 %v2234, %v2233
  %v2244 = vpack.c.b16 %v2236, %v2235
  %2253 = vmatprep.subr.bf16.mxu0 0
  %2254 = vmatpush1.bf16.msra.mxu0 %v2237
  %2255 = vmatprep.subr.bf16.mxu0 0
  %2256 = vmatpush1.bf16.msra.mxu0 %v2238
  %2257 = vmatprep.subr.bf16.mxu0 0
  %2258 = vmatpush1.bf16.msra.mxu0 %v2239
  %2259 = vmatprep.subr.bf16.mxu0 0
  %2260 = vmatpush1.bf16.msra.mxu0 %v2240
  %2261 = vmatprep.subr.bf16.mxu0 0
  %2262 = vmatpush1.bf16.msra.mxu0 %v2241
  %2263 = vmatprep.subr.bf16.mxu0 0
  %2264 = vmatpush1.bf16.msra.mxu0 %v2242
  %2265 = vmatprep.subr.bf16.mxu0 0
  %2266 = vmatpush1.bf16.msra.mxu0 %v2243
  %2267 = vmatprep.subr.bf16.mxu0 0
  %2268 = vmatpush1.bf16.msra.mxu0 %v2244
  %2269 = vmatprep.subr.bf16.mxu0 0
  %2270 = vmatpush1.bf16.msra.mxu0 0
  %2271 = vmatprep.subr.bf16.mxu0 0
  %2272 = vmatpush1.bf16.msra.mxu0 0
  %2273 = vmatprep.subr.bf16.mxu0 0
  %2274 = vmatpush1.bf16.msra.mxu0 0
  %2275 = vmatprep.subr.bf16.mxu0 0
  %2276 = vmatpush1.bf16.msra.mxu0 0
  %2277 = vmatprep.subr.bf16.mxu0 0
  %2278 = vmatpush1.bf16.msra.mxu0 0
  %2279 = vmatprep.subr.bf16.mxu0 0
  %2280 = vmatpush1.bf16.msra.mxu0 0
  %2281 = vmatprep.subr.bf16.mxu0 0
  %2282 = vmatpush1.bf16.msra.mxu0 0
  %2283 = vmatprep.subr.bf16.mxu0 0
  %2284 = vmatpush1.bf16.msra.mxu0 0
  %2285 = vmatprep.mubr.bf16.mxu0 0
  %2286 = vmatmul.mubr.bf16.gmra.mrb[0].mxu0 %v2173
  %v2287 = vpop.f32.mrb[0].mxu0
  %v2288 = vadd.f32 0.0, %v2287
  %v2289 = vpop.f32.mrb[0].mxu0
  %v2290 = vpop.f32.mrb[0].mxu0
  %v2291 = vadd.f32 0.0, %v2290
  %v2292 = vpop.f32.mrb[0].mxu0
  %2293 = vmatprep.mubr.bf16.mxu0 0
  %2294 = vmatmul.mubr.bf16.gmra.mrb[0].mxu0 %v2174
  %v2295 = vpop.f32.mrb[0].mxu0
  %v2296 = vadd.f32 0.0, %v2295
  %v2297 = vpop.f32.mrb[0].mxu0
  %v2298 = vpop.f32.mrb[0].mxu0
  %v2299 = vadd.f32 0.0, %v2298
  %v2300 = vpop.f32.mrb[0].mxu0
  %2301 = vmatprep.mubr.bf16.mxu0 0
  %2302 = vmatmul.mubr.bf16.gmra.mrb[0].mxu0 %v2175
  %v2303 = vpop.f32.mrb[0].mxu0
  %v2304 = vadd.f32 0.0, %v2303
  %v2305 = vpop.f32.mrb[0].mxu0
  %v2306 = vpop.f32.mrb[0].mxu0
  %v2307 = vadd.f32 0.0, %v2306
  %v2308 = vpop.f32.mrb[0].mxu0
  %2309 = vmatprep.mubr.bf16.mxu0 0
  %2310 = vmatmul.mubr.bf16.gmra.mrb[0].mxu0 %v2176
  %v2311 = vpop.f32.mrb[0].mxu0
  %v2312 = vadd.f32 0.0, %v2311
  %v2313 = vpop.f32.mrb[0].mxu0
  %v2314 = vpop.f32.mrb[0].mxu0
  %v2315 = vadd.f32 0.0, %v2314
  %v2316 = vpop.f32.mrb[0].mxu0
  %2317 = vmatprep.mubr.bf16.mxu0 0
  %2318 = vmatmul.mubr.bf16.gmra.mrb[0].mxu0 %v2177
  %v2319 = vpop.f32.mrb[0].mxu0
  %v2320 = vadd.f32 0.0, %v2319
  %v2321 = vpop.f32.mrb[0].mxu0
  %v2322 = vpop.f32.mrb[0].mxu0
  %v2323 = vadd.f32 0.0, %v2322
  %v2324 = vpop.f32.mrb[0].mxu0
  %2325 = vmatprep.mubr.bf16.mxu0 0
  %2326 = vmatmul.mubr.bf16.gmra.mrb[0].mxu0 %v2178
  %v2327 = vpop.f32.mrb[0].mxu0
  %v2328 = vadd.f32 0.0, %v2327
  %v2329 = vpop.f32.mrb[0].mxu0
  %v2330 = vpop.f32.mrb[0].mxu0
  %v2331 = vadd.f32 0.0, %v2330
  %v2332 = vpop.f32.mrb[0].mxu0
  %2333 = vmatprep.mubr.bf16.mxu0 0
  %2334 = vmatmul.mubr.bf16.gmra.mrb[0].mxu0 %v2179
  %v2335 = vpop.f32.mrb[0].mxu0
  %v2336 = vadd.f32 0.0, %v2335
  %v2337 = vpop.f32.mrb[0].mxu0
  %v2338 = vpop.f32.mrb[0].mxu0
  %v2339 = vadd.f32 0.0, %v2338
  %v2340 = vpop.f32.mrb[0].mxu0
  %2341 = vmatprep.mubr.bf16.mxu0 0
  %2342 = vmatmul.mubr.bf16.gmra.mrb[0].mxu0 %v2180
  %v2343 = vpop.f32.mrb[0].mxu0
  %v2344 = vadd.f32 0.0, %v2343
  %v2345 = vpop.f32.mrb[0].mxu0
  %v2346 = vpop.f32.mrb[0].mxu0
  %v2347 = vadd.f32 0.0, %v2346
  %v2348 = vpop.f32.mrb[0].mxu0
  %2349 = vmatprep.mubr.bf16.mxu0 0
  %2350 = vmatmul.mubr.bf16.gmra.mrb[0].mxu0 %v2181
  %v2351 = vpop.f32.mrb[0].mxu0
  %v2352 = vadd.f32 0.0, %v2351
  %v2353 = vpop.f32.mrb[0].mxu0
  %v2354 = vpop.f32.mrb[0].mxu0
  %v2355 = vadd.f32 0.0, %v2354
  %v2356 = vpop.f32.mrb[0].mxu0
  %2357 = vmatprep.mubr.bf16.mxu0 0
  %2358 = vmatmul.mubr.bf16.gmra.mrb[0].mxu0 %v2182
  %v2359 = vpop.f32.mrb[0].mxu0
  %v2360 = vadd.f32 0.0, %v2359
  %v2361 = vpop.f32.mrb[0].mxu0
  %v2362 = vpop.f32.mrb[0].mxu0
  %v2363 = vadd.f32 0.0, %v2362
  %v2364 = vpop.f32.mrb[0].mxu0
  %2365 = vmatprep.mubr.bf16.mxu0 0
  %2366 = vmatmul.mubr.bf16.gmra.mrb[0].mxu0 %v2183
  %v2367 = vpop.f32.mrb[0].mxu0
  %v2368 = vadd.f32 0.0, %v2367
  %v2369 = vpop.f32.mrb[0].mxu0
  %v2370 = vpop.f32.mrb[0].mxu0
  %v2371 = vadd.f32 0.0, %v2370
  %v2372 = vpop.f32.mrb[0].mxu0
  %2373 = vmatprep.mubr.bf16.mxu0 0
  %2374 = vmatmul.mubr.bf16.gmra.mrb[0].mxu0 %v2184
  %v2375 = vpop.f32.mrb[0].mxu0
  %v2376 = vadd.f32 0.0, %v2375
  %v2377 = vpop.f32.mrb[0].mxu0
  %v2378 = vpop.f32.mrb[0].mxu0
  %v2379 = vadd.f32 0.0, %v2378
  %v2380 = vpop.f32.mrb[0].mxu0
  %2381 = vmatprep.mubr.bf16.mxu0 0
  %2382 = vmatmul.mubr.bf16.gmra.mrb[0].mxu0 %v2185
  %v2383 = vpop.f32.mrb[0].mxu0
  %v2384 = vadd.f32 0.0, %v2383
  %v2385 = vpop.f32.mrb[0].mxu0
  %v2386 = vpop.f32.mrb[0].mxu0
  %v2387 = vadd.f32 0.0, %v2386
  %v2388 = vpop.f32.mrb[0].mxu0
  %2389 = vmatprep.mubr.bf16.mxu0 0
  %2390 = vmatmul.mubr.bf16.gmra.mrb[0].mxu0 %v2186
  %v2391 = vpop.f32.mrb[0].mxu0
  %v2392 = vadd.f32 0.0, %v2391
  %v2393 = vpop.f32.mrb[0].mxu0
  %v2394 = vpop.f32.mrb[0].mxu0
  %v2395 = vadd.f32 0.0, %v2394
  %v2396 = vpop.f32.mrb[0].mxu0
  %2397 = vmatprep.mubr.bf16.mxu0 0
  %2398 = vmatmul.mubr.bf16.gmra.mrb[0].mxu0 %v2187
  %v2399 = vpop.f32.mrb[0].mxu0
  %v2400 = vadd.f32 0.0, %v2399
  %v2401 = vpop.f32.mrb[0].mxu0
  %v2402 = vpop.f32.mrb[0].mxu0
  %v2403 = vadd.f32 0.0, %v2402
  %v2404 = vpop.f32.mrb[0].mxu0
  %2405 = vmatprep.mubr.bf16.mxu0 0
  %2406 = vmatmul.mubr.bf16.gmra.mrb[0].mxu0 %v2188
  %v2407 = vpop.f32.mrb[0].mxu0
  %v2408 = vadd.f32 0.0, %v2407
  %v2409 = vpop.f32.mrb[0].mxu0
  %v2410 = vpop.f32.mrb[0].mxu0
  %v2411 = vadd.f32 0.0, %v2410
  %v2412 = vpop.f32.mrb[0].mxu0
  %2413 = vdwg.mxu0
  %v2414 = vld [vmem:[%s6 + $0x4] sm:$0x1]
  %v2415 = vld [vmem:[%s6 + $0x5] sm:$0x1]
  %v2416 = vadd.f32 %v2288, %v2291
  %v2417 = vadd.f32 %v2416, %v2296
  %v2418 = vadd.f32 %v2417, %v2299
  %v2419 = vadd.f32 %v2418, %v2304
  %v2420 = vadd.f32 %v2419, %v2307
  %v2421 = vadd.f32 %v2420, %v2312
  %v2422 = vadd.f32 %v2421, %v2315
  %v2423 = vadd.f32 %v2422, %v2320
  %v2424 = vadd.f32 %v2423, %v2323
  %v2425 = vadd.f32 %v2424, %v2328
  %v2426 = vadd.f32 %v2425, %v2331
  %v2427 = vadd.f32 %v2426, %v2336
  %v2428 = vadd.f32 %v2427, %v2339
  %v2429 = vadd.f32 %v2428, %v2344
  %v2430 = vadd.f32 %v2429, %v2347
  %v2431 = vadd.f32 %v2430, %v2352
  %v2432 = vadd.f32 %v2431, %v2355
  %v2433 = vadd.f32 %v2432, %v2360
  %v2434 = vadd.f32 %v2433, %v2363
  %v2435 = vadd.f32 %v2434, %v2368
  %v2436 = vadd.f32 %v2435, %v2371
  %v2437 = vadd.f32 %v2436, %v2376
  %v2438 = vadd.f32 %v2437, %v2379
  %v2439 = vadd.f32 %v2438, %v2384
  %v2440 = vadd.f32 %v2439, %v2387
  %v2441 = vadd.f32 %v2440, %v2392
  %v2442 = vadd.f32 %v2441, %v2395
  %v2443 = vadd.f32 %v2442, %v2400
  %v2444 = vadd.f32 %v2443, %v2403
  %v2445 = vadd.f32 %v2444, %v2408
  %v2446 = vadd.f32 %v2445, %v2411
  %v2447 = vrot.slane %v2446, 4
  %v2448 = vadd.f32 %v2446, %v2447
  %v2449 = vrot.slane %v2448, 2
  %v2450 = vadd.f32 %v2448, %v2449
  %v2451 = vrot.slane %v2450, 1
  %v2452 = vadd.f32 %v2450, %v2451
  %v2453 = vmul.f32 %v2452, 0.00390625
  %v2454 = vmul.f32 %v2288, %v2288
  %v2455 = vmul.f32 %v2291, %v2291
  %v2456 = vmul.f32 %v2296, %v2296
  %v2457 = vmul.f32 %v2299, %v2299
  %v2458 = vmul.f32 %v2304, %v2304
  %v2459 = vmul.f32 %v2307, %v2307
  %v2460 = vmul.f32 %v2312, %v2312
  %v2461 = vmul.f32 %v2315, %v2315
  %v2462 = vmul.f32 %v2320, %v2320
  %v2463 = vmul.f32 %v2323, %v2323
  %v2464 = vmul.f32 %v2328, %v2328
  %v2465 = vmul.f32 %v2331, %v2331
  %v2466 = vmul.f32 %v2336, %v2336
  %v2467 = vmul.f32 %v2339, %v2339
  %v2468 = vmul.f32 %v2344, %v2344
  %v2469 = vmul.f32 %v2347, %v2347
  %v2470 = vmul.f32 %v2352, %v2352
  %v2471 = vmul.f32 %v2355, %v2355
  %v2472 = vmul.f32 %v2360, %v2360
  %v2473 = vmul.f32 %v2363, %v2363
  %v2474 = vmul.f32 %v2368, %v2368
  %v2475 = vmul.f32 %v2371, %v2371
  %v2476 = vmul.f32 %v2376, %v2376
  %v2477 = vmul.f32 %v2379, %v2379
  %v2478 = vmul.f32 %v2384, %v2384
  %v2479 = vmul.f32 %v2387, %v2387
  %v2480 = vmul.f32 %v2392, %v2392
  %v2481 = vmul.f32 %v2395, %v2395
  %v2482 = vmul.f32 %v2400, %v2400
  %v2483 = vmul.f32 %v2403, %v2403
  %v2484 = vmul.f32 %v2408, %v2408
  %v2485 = vmul.f32 %v2411, %v2411
  %v2486 = vadd.f32 %v2454, %v2455
  %v2487 = vadd.f32 %v2486, %v2456
  %v2488 = vadd.f32 %v2487, %v2457
  %v2489 = vadd.f32 %v2488, %v2458
  %v2490 = vadd.f32 %v2489, %v2459
  %v2491 = vadd.f32 %v2490, %v2460
  %v2492 = vadd.f32 %v2491, %v2461
  %v2493 = vadd.f32 %v2492, %v2462
  %v2494 = vadd.f32 %v2493, %v2463
  %v2495 = vadd.f32 %v2494, %v2464
  %v2496 = vadd.f32 %v2495, %v2465
  %v2497 = vadd.f32 %v2496, %v2466
  %v2498 = vadd.f32 %v2497, %v2467
  %v2499 = vadd.f32 %v2498, %v2468
  %v2500 = vadd.f32 %v2499, %v2469
  %v2501 = vadd.f32 %v2500, %v2470
  %v2502 = vadd.f32 %v2501, %v2471
  %v2503 = vadd.f32 %v2502, %v2472
  %v2504 = vadd.f32 %v2503, %v2473
  %v2505 = vadd.f32 %v2504, %v2474
  %v2506 = vadd.f32 %v2505, %v2475
  %v2507 = vadd.f32 %v2506, %v2476
  %v2508 = vadd.f32 %v2507, %v2477
  %v2509 = vadd.f32 %v2508, %v2478
  %v2510 = vadd.f32 %v2509, %v2479
  %v2511 = vadd.f32 %v2510, %v2480
  %v2512 = vadd.f32 %v2511, %v2481
  %v2513 = vadd.f32 %v2512, %v2482
  %v2514 = vadd.f32 %v2513, %v2483
  %v2515 = vadd.f32 %v2514, %v2484
  %v2516 = vadd.f32 %v2515, %v2485
  %v2517 = vrot.slane %v2516, 4
  %v2518 = vadd.f32 %v2516, %v2517
  %v2519 = vrot.slane %v2518, 2
  %v2520 = vadd.f32 %v2518, %v2519
  %v2521 = vrot.slane %v2520, 1
  %v2522 = vadd.f32 %v2520, %v2521
  %v2523 = vmul.f32 %v2522, 0.00390625
  %v2524 = vmul.f32 %v2453, %v2453
  %v2525 = vsub.f32 %v2523, %v2524
  %v2526 = vmax.f32 %v2525, 0.0
  %v2527 = vadd.f32 %v2526, 1e-05
  %v2528 = vrsqrt.pop %v2527
  %v2529 = vmul.f32 %v2414, %v2528
  %v2530 = vmul.f32 %v2453, %v2529
  %v2531 = vsub.f32 %v2415, %v2530
  %v2532 = vlaneseq
  %v2533 = vshrl.u32 %v2532, 7
  %v2534 = vsub.s32 0, %v2533
  %v2535 = vrot.slane %v2529, %v2534
  %v2536 = vmul.f32 %v2288, %v2535
  %v2537 = vmul.f32 %v2291, %v2535
  %v2538 = vmul.f32 %v2296, %v2535
  %v2539 = vmul.f32 %v2299, %v2535
  %v2540 = vmul.f32 %v2304, %v2535
  %v2541 = vmul.f32 %v2307, %v2535
  %v2542 = vmul.f32 %v2312, %v2535
  %v2543 = vmul.f32 %v2315, %v2535
  %v2544 = vmul.f32 %v2320, %v2535
  %v2545 = vmul.f32 %v2323, %v2535
  %v2546 = vmul.f32 %v2328, %v2535
  %v2547 = vmul.f32 %v2331, %v2535
  %v2548 = vmul.f32 %v2336, %v2535
  %v2549 = vmul.f32 %v2339, %v2535
  %v2550 = vmul.f32 %v2344, %v2535
  %v2551 = vmul.f32 %v2347, %v2535
  %v2552 = vmul.f32 %v2352, %v2535
  %v2553 = vmul.f32 %v2355, %v2535
  %v2554 = vmul.f32 %v2360, %v2535
  %v2555 = vmul.f32 %v2363, %v2535
  %v2556 = vmul.f32 %v2368, %v2535
  %v2557 = vmul.f32 %v2371, %v2535
  %v2558 = vmul.f32 %v2376, %v2535
  %v2559 = vmul.f32 %v2379, %v2535
  %v2560 = vmul.f32 %v2384, %v2535
  %v2561 = vmul.f32 %v2387, %v2535
  %v2562 = vmul.f32 %v2392, %v2535
  %v2563 = vmul.f32 %v2395, %v2535
  %v2564 = vmul.f32 %v2400, %v2535
  %v2565 = vmul.f32 %v2403, %v2535
  %v2566 = vmul.f32 %v2408, %v2535
  %v2567 = vmul.f32 %v2411, %v2535
  %v2568 = vlaneseq
  %v2569 = vshrl.u32 %v2568, 7
  %v2570 = vsub.s32 0, %v2569
  %v2571 = vrot.slane %v2531, %v2570
  %v2572 = vadd.f32 %v2536, %v2571
  %v2573 = vadd.f32 %v2537, %v2571
  %v2574 = vadd.f32 %v2538, %v2571
  %v2575 = vadd.f32 %v2539, %v2571
  %v2576 = vadd.f32 %v2540, %v2571
  %v2577 = vadd.f32 %v2541, %v2571
  %v2578 = vadd.f32 %v2542, %v2571
  %v2579 = vadd.f32 %v2543, %v2571
  %v2580 = vadd.f32 %v2544, %v2571
  %v2581 = vadd.f32 %v2545, %v2571
  %v2582 = vadd.f32 %v2546, %v2571
  %v2583 = vadd.f32 %v2547, %v2571
  %v2584 = vadd.f32 %v2548, %v2571
  %v2585 = vadd.f32 %v2549, %v2571
  %v2586 = vadd.f32 %v2550, %v2571
  %v2587 = vadd.f32 %v2551, %v2571
  %v2588 = vadd.f32 %v2552, %v2571
  %v2589 = vadd.f32 %v2553, %v2571
  %v2590 = vadd.f32 %v2554, %v2571
  %v2591 = vadd.f32 %v2555, %v2571
  %v2592 = vadd.f32 %v2556, %v2571
  %v2593 = vadd.f32 %v2557, %v2571
  %v2594 = vadd.f32 %v2558, %v2571
  %v2595 = vadd.f32 %v2559, %v2571
  %v2596 = vadd.f32 %v2560, %v2571
  %v2597 = vadd.f32 %v2561, %v2571
  %v2598 = vadd.f32 %v2562, %v2571
  %v2599 = vadd.f32 %v2563, %v2571
  %v2600 = vadd.f32 %v2564, %v2571
  %v2601 = vadd.f32 %v2565, %v2571
  %v2602 = vadd.f32 %v2566, %v2571
  %v2603 = vadd.f32 %v2567, %v2571
  %v2604 = vmul.f32 %v2572, 0.5
  %v2605 = vmul.f32 %v2573, 0.5
  %v2606 = vmul.f32 %v2574, 0.5
  %v2607 = vmul.f32 %v2575, 0.5
  %v2608 = vmul.f32 %v2576, 0.5
  %v2609 = vmul.f32 %v2577, 0.5
  %v2610 = vmul.f32 %v2578, 0.5
  %v2611 = vmul.f32 %v2579, 0.5
  %v2612 = vmul.f32 %v2580, 0.5
  %v2613 = vmul.f32 %v2581, 0.5
  %v2614 = vmul.f32 %v2582, 0.5
  %v2615 = vmul.f32 %v2583, 0.5
  %v2616 = vmul.f32 %v2584, 0.5
  %v2617 = vmul.f32 %v2585, 0.5
  %v2618 = vmul.f32 %v2586, 0.5
  %v2619 = vmul.f32 %v2587, 0.5
  %v2620 = vmul.f32 %v2588, 0.5
  %v2621 = vmul.f32 %v2589, 0.5
  %v2622 = vmul.f32 %v2590, 0.5
  %v2623 = vmul.f32 %v2591, 0.5
  %v2624 = vmul.f32 %v2592, 0.5
  %v2625 = vmul.f32 %v2593, 0.5
  %v2626 = vmul.f32 %v2594, 0.5
  %v2627 = vmul.f32 %v2595, 0.5
  %v2628 = vmul.f32 %v2596, 0.5
  %v2629 = vmul.f32 %v2597, 0.5
  %v2630 = vmul.f32 %v2598, 0.5
  %v2631 = vmul.f32 %v2599, 0.5
  %v2632 = vmul.f32 %v2600, 0.5
  %v2633 = vmul.f32 %v2601, 0.5
  %v2634 = vmul.f32 %v2602, 0.5
  %v2635 = vmul.f32 %v2603, 0.5
  %v2636 = vmul.f32 %v2572, 0.70710677
  %v2637 = vmul.f32 %v2573, 0.70710677
  %v2638 = vmul.f32 %v2574, 0.70710677
  %v2639 = vmul.f32 %v2575, 0.70710677
  %v2640 = vmul.f32 %v2576, 0.70710677
  %v2641 = vmul.f32 %v2577, 0.70710677
  %v2642 = vmul.f32 %v2578, 0.70710677
  %v2643 = vmul.f32 %v2579, 0.70710677
  %v2644 = vmul.f32 %v2580, 0.70710677
  %v2645 = vmul.f32 %v2581, 0.70710677
  %v2646 = vmul.f32 %v2582, 0.70710677
  %v2647 = vmul.f32 %v2583, 0.70710677
  %v2648 = vmul.f32 %v2584, 0.70710677
  %v2649 = vmul.f32 %v2585, 0.70710677
  %v2650 = vmul.f32 %v2586, 0.70710677
  %v2651 = vmul.f32 %v2587, 0.70710677
  %v2652 = vmul.f32 %v2588, 0.70710677
  %v2653 = vmul.f32 %v2589, 0.70710677
  %v2654 = vmul.f32 %v2590, 0.70710677
  %v2655 = vmul.f32 %v2591, 0.70710677
  %v2656 = vmul.f32 %v2592, 0.70710677
  %v2657 = vmul.f32 %v2593, 0.70710677
  %v2658 = vmul.f32 %v2594, 0.70710677
  %v2659 = vmul.f32 %v2595, 0.70710677
  %v2660 = vmul.f32 %v2596, 0.70710677
  %v2661 = vmul.f32 %v2597, 0.70710677
  %v2662 = vmul.f32 %v2598, 0.70710677
  %v2663 = vmul.f32 %v2599, 0.70710677
  %v2664 = vmul.f32 %v2600, 0.70710677
  %v2665 = vmul.f32 %v2601, 0.70710677
  %v2666 = vmul.f32 %v2602, 0.70710677
  %v2667 = vmul.f32 %v2603, 0.70710677
  %v2668 = verf.f32.pop %v2636
  %v2669 = verf.f32.pop %v2637
  %v2670 = verf.f32.pop %v2638
  %v2671 = verf.f32.pop %v2639
  %v2672 = verf.f32.pop %v2640
  %v2673 = verf.f32.pop %v2641
  %v2674 = verf.f32.pop %v2642
  %v2675 = verf.f32.pop %v2643
  %v2676 = verf.f32.pop %v2644
  %v2677 = verf.f32.pop %v2645
  %v2678 = verf.f32.pop %v2646
  %v2679 = verf.f32.pop %v2647
  %v2680 = verf.f32.pop %v2648
  %v2681 = verf.f32.pop %v2649
  %v2682 = verf.f32.pop %v2650
  %v2683 = verf.f32.pop %v2651
  %v2684 = verf.f32.pop %v2652
  %v2685 = verf.f32.pop %v2653
  %v2686 = verf.f32.pop %v2654
  %v2687 = verf.f32.pop %v2655
  %v2688 = verf.f32.pop %v2656
  %v2689 = verf.f32.pop %v2657
  %v2690 = verf.f32.pop %v2658
  %v2691 = verf.f32.pop %v2659
  %v2692 = verf.f32.pop %v2660
  %v2693 = verf.f32.pop %v2661
  %v2694 = verf.f32.pop %v2662
  %v2695 = verf.f32.pop %v2663
  %v2696 = verf.f32.pop %v2664
  %v2697 = verf.f32.pop %v2665
  %v2698 = verf.f32.pop %v2666
  %v2699 = verf.f32.pop %v2667
  %v2700 = vadd.f32 %v2668, 1.0
  %v2701 = vadd.f32 %v2669, 1.0
  %v2702 = vadd.f32 %v2670, 1.0
  %v2703 = vadd.f32 %v2671, 1.0
  %v2704 = vadd.f32 %v2672, 1.0
  %v2705 = vadd.f32 %v2673, 1.0
  %v2706 = vadd.f32 %v2674, 1.0
  %v2707 = vadd.f32 %v2675, 1.0
  %v2708 = vadd.f32 %v2676, 1.0
  %v2709 = vadd.f32 %v2677, 1.0
  %v2710 = vadd.f32 %v2678, 1.0
  %v2711 = vadd.f32 %v2679, 1.0
  %v2712 = vadd.f32 %v2680, 1.0
  %v2713 = vadd.f32 %v2681, 1.0
  %v2714 = vadd.f32 %v2682, 1.0
  %v2715 = vadd.f32 %v2683, 1.0
  %v2716 = vadd.f32 %v2684, 1.0
  %v2717 = vadd.f32 %v2685, 1.0
  %v2718 = vadd.f32 %v2686, 1.0
  %v2719 = vadd.f32 %v2687, 1.0
  %v2720 = vadd.f32 %v2688, 1.0
  %v2721 = vadd.f32 %v2689, 1.0
  %v2722 = vadd.f32 %v2690, 1.0
  %v2723 = vadd.f32 %v2691, 1.0
  %v2724 = vadd.f32 %v2692, 1.0
  %v2725 = vadd.f32 %v2693, 1.0
  %v2726 = vadd.f32 %v2694, 1.0
  %v2727 = vadd.f32 %v2695, 1.0
  %v2728 = vadd.f32 %v2696, 1.0
  %v2729 = vadd.f32 %v2697, 1.0
  %v2730 = vadd.f32 %v2698, 1.0
  %v2731 = vadd.f32 %v2699, 1.0
  %v2732 = vmul.f32 %v2604, %v2700
  %v2733 = vmul.f32 %v2605, %v2701
  %v2734 = vmul.f32 %v2606, %v2702
  %v2735 = vmul.f32 %v2607, %v2703
  %v2736 = vmul.f32 %v2608, %v2704
  %v2737 = vmul.f32 %v2609, %v2705
  %v2738 = vmul.f32 %v2610, %v2706
  %v2739 = vmul.f32 %v2611, %v2707
  %v2740 = vmul.f32 %v2612, %v2708
  %v2741 = vmul.f32 %v2613, %v2709
  %v2742 = vmul.f32 %v2614, %v2710
  %v2743 = vmul.f32 %v2615, %v2711
  %v2744 = vmul.f32 %v2616, %v2712
  %v2745 = vmul.f32 %v2617, %v2713
  %v2746 = vmul.f32 %v2618, %v2714
  %v2747 = vmul.f32 %v2619, %v2715
  %v2748 = vmul.f32 %v2620, %v2716
  %v2749 = vmul.f32 %v2621, %v2717
  %v2750 = vmul.f32 %v2622, %v2718
  %v2751 = vmul.f32 %v2623, %v2719
  %v2752 = vmul.f32 %v2624, %v2720
  %v2753 = vmul.f32 %v2625, %v2721
  %v2754 = vmul.f32 %v2626, %v2722
  %v2755 = vmul.f32 %v2627, %v2723
  %v2756 = vmul.f32 %v2628, %v2724
  %v2757 = vmul.f32 %v2629, %v2725
  %v2758 = vmul.f32 %v2630, %v2726
  %v2759 = vmul.f32 %v2631, %v2727
  %v2760 = vmul.f32 %v2632, %v2728
  %v2761 = vmul.f32 %v2633, %v2729
  %v2762 = vmul.f32 %v2634, %v2730
  %v2763 = vmul.f32 %v2635, %v2731
  %v2764 = vpack.c.bf16 %v2733, %v2732
  %v2765 = vpack.c.bf16 %v2735, %v2734
  %v2766 = vpack.c.bf16 %v2737, %v2736
  %v2767 = vpack.c.bf16 %v2739, %v2738
  %v2768 = vpack.c.bf16 %v2741, %v2740
  %v2769 = vpack.c.bf16 %v2743, %v2742
  %v2770 = vpack.c.bf16 %v2745, %v2744
  %v2771 = vpack.c.bf16 %v2747, %v2746
  %v2772 = vpack.c.bf16 %v2749, %v2748
  %v2773 = vpack.c.bf16 %v2751, %v2750
  %v2774 = vpack.c.bf16 %v2753, %v2752
  %v2775 = vpack.c.bf16 %v2755, %v2754
  %v2776 = vpack.c.bf16 %v2757, %v2756
  %v2777 = vpack.c.bf16 %v2759, %v2758
  %v2778 = vpack.c.bf16 %v2761, %v2760
  %v2779 = vpack.c.bf16 %v2763, %v2762
  %v2780 = vld [vmem:[%s3] sm:$0xf]
  %v2781 = vld [vmem:[%s3 + $0x4] sm:$0xf]
  %v2782 = vld [vmem:[%s3 + $0x8] sm:$0xf]
  %v2783 = vld [vmem:[%s3 + $0xc] sm:$0xf]
  %v2784 = vld [vmem:[%s3 + $0x10] sm:$0xf]
  %v2785 = vld [vmem:[%s3 + $0x14] sm:$0xf]
  %v2786 = vld [vmem:[%s3 + $0x18] sm:$0xf]
  %v2787 = vld [vmem:[%s3 + $0x1c] sm:$0xf]
  %v2788 = vld [vmem:[%s3 + $0x20] sm:$0xf]
  %v2789 = vld [vmem:[%s3 + $0x24] sm:$0xf]
  %v2790 = vld [vmem:[%s3 + $0x28] sm:$0xf]
  %v2791 = vld [vmem:[%s3 + $0x2c] sm:$0xf]
  %v2792 = vld [vmem:[%s3 + $0x30] sm:$0xf]
  %v2793 = vld [vmem:[%s3 + $0x34] sm:$0xf]
  %v2794 = vld [vmem:[%s3 + $0x38] sm:$0xf]
  %v2795 = vld [vmem:[%s3 + $0x3c] sm:$0xf]
  %v2812 = vunpack.c.l.b16 %v2780
  %v2813 = vunpack.c.l.b16 %v2781
  %v2814 = vunpack.c.l.b16 %v2782
  %v2815 = vunpack.c.l.b16 %v2783
  %v2816 = vunpack.c.l.b16 %v2784
  %v2817 = vunpack.c.l.b16 %v2785
  %v2818 = vunpack.c.l.b16 %v2786
  %v2819 = vunpack.c.l.b16 %v2787
  %v2820 = vunpack.c.l.b16 %v2788
  %v2821 = vunpack.c.l.b16 %v2789
  %v2822 = vunpack.c.l.b16 %v2790
  %v2823 = vunpack.c.l.b16 %v2791
  %v2824 = vunpack.c.l.b16 %v2792
  %v2825 = vunpack.c.l.b16 %v2793
  %v2826 = vunpack.c.l.b16 %v2794
  %v2827 = vunpack.c.l.b16 %v2795
  %v2828 = vpack.c.b16 %v2813, %v2812
  %v2829 = vpack.c.b16 %v2815, %v2814
  %v2830 = vpack.c.b16 %v2817, %v2816
  %v2831 = vpack.c.b16 %v2819, %v2818
  %v2832 = vpack.c.b16 %v2821, %v2820
  %v2833 = vpack.c.b16 %v2823, %v2822
  %v2834 = vpack.c.b16 %v2825, %v2824
  %v2835 = vpack.c.b16 %v2827, %v2826
  %2844 = vmatprep.subr.bf16.mxu0 0
  %2845 = vmatpush1.bf16.msra.mxu0 %v2828
  %2846 = vmatprep.subr.bf16.mxu0 0
  %2847 = vmatpush1.bf16.msra.mxu0 %v2829
  %2848 = vmatprep.subr.bf16.mxu0 0
  %2849 = vmatpush1.bf16.msra.mxu0 %v2830
  %2850 = vmatprep.subr.bf16.mxu0 0
  %2851 = vmatpush1.bf16.msra.mxu0 %v2831
  %2852 = vmatprep.subr.bf16.mxu0 0
  %2853 = vmatpush1.bf16.msra.mxu0 %v2832
  %2854 = vmatprep.subr.bf16.mxu0 0
  %2855 = vmatpush1.bf16.msra.mxu0 %v2833
  %2856 = vmatprep.subr.bf16.mxu0 0
  %2857 = vmatpush1.bf16.msra.mxu0 %v2834
  %2858 = vmatprep.subr.bf16.mxu0 0
  %2859 = vmatpush1.bf16.msra.mxu0 %v2835
  %2860 = vmatprep.subr.bf16.mxu0 0
  %2861 = vmatpush1.bf16.msra.mxu0 0
  %2862 = vmatprep.subr.bf16.mxu0 0
  %2863 = vmatpush1.bf16.msra.mxu0 0
  %2864 = vmatprep.subr.bf16.mxu0 0
  %2865 = vmatpush1.bf16.msra.mxu0 0
  %2866 = vmatprep.subr.bf16.mxu0 0
  %2867 = vmatpush1.bf16.msra.mxu0 0
  %2868 = vmatprep.subr.bf16.mxu0 0
  %2869 = vmatpush1.bf16.msra.mxu0 0
  %2870 = vmatprep.subr.bf16.mxu0 0
  %2871 = vmatpush1.bf16.msra.mxu0 0
  %2872 = vmatprep.subr.bf16.mxu0 0
  %2873 = vmatpush1.bf16.msra.mxu0 0
  %2874 = vmatprep.subr.bf16.mxu0 0
  %2875 = vmatpush1.bf16.msra.mxu0 0
  %2876 = vmatprep.mubr.bf16.mxu0 0
  %2877 = vmatmul.mubr.bf16.gmra.mrb[0].mxu0 %v2764
  %v2878 = vpop.f32.mrb[0].mxu0
  %v2879 = vadd.f32 0.0, %v2878
  %v2880 = vpop.f32.mrb[0].mxu0
  %v2881 = vpop.f32.mrb[0].mxu0
  %v2882 = vadd.f32 0.0, %v2881
  %v2883 = vpop.f32.mrb[0].mxu0
  %2884 = vmatprep.mubr.bf16.mxu0 0
  %2885 = vmatmul.mubr.bf16.gmra.mrb[0].mxu0 %v2765
  %v2886 = vpop.f32.mrb[0].mxu0
  %v2887 = vadd.f32 0.0, %v2886
  %v2888 = vpop.f32.mrb[0].mxu0
  %v2889 = vpop.f32.mrb[0].mxu0
  %v2890 = vadd.f32 0.0, %v2889
  %v2891 = vpop.f32.mrb[0].mxu0
  %2892 = vmatprep.mubr.bf16.mxu0 0
  %2893 = vmatmul.mubr.bf16.gmra.mrb[0].mxu0 %v2766
  %v2894 = vpop.f32.mrb[0].mxu0
  %v2895 = vadd.f32 0.0, %v2894
  %v2896 = vpop.f32.mrb[0].mxu0
  %v2897 = vpop.f32.mrb[0].mxu0
  %v2898 = vadd.f32 0.0, %v2897
  %v2899 = vpop.f32.mrb[0].mxu0
  %2900 = vmatprep.mubr.bf16.mxu0 0
  %2901 = vmatmul.mubr.bf16.gmra.mrb[0].mxu0 %v2767
  %v2902 = vpop.f32.mrb[0].mxu0
  %v2903 = vadd.f32 0.0, %v2902
  %v2904 = vpop.f32.mrb[0].mxu0
  %v2905 = vpop.f32.mrb[0].mxu0
  %v2906 = vadd.f32 0.0, %v2905
  %v2907 = vpop.f32.mrb[0].mxu0
  %2908 = vmatprep.mubr.bf16.mxu0 0
  %2909 = vmatmul.mubr.bf16.gmra.mrb[0].mxu0 %v2768
  %v2910 = vpop.f32.mrb[0].mxu0
  %v2911 = vadd.f32 0.0, %v2910
  %v2912 = vpop.f32.mrb[0].mxu0
  %v2913 = vpop.f32.mrb[0].mxu0
  %v2914 = vadd.f32 0.0, %v2913
  %v2915 = vpop.f32.mrb[0].mxu0
  %2916 = vmatprep.mubr.bf16.mxu0 0
  %2917 = vmatmul.mubr.bf16.gmra.mrb[0].mxu0 %v2769
  %v2918 = vpop.f32.mrb[0].mxu0
  %v2919 = vadd.f32 0.0, %v2918
  %v2920 = vpop.f32.mrb[0].mxu0
  %v2921 = vpop.f32.mrb[0].mxu0
  %v2922 = vadd.f32 0.0, %v2921
  %v2923 = vpop.f32.mrb[0].mxu0
  %2924 = vmatprep.mubr.bf16.mxu0 0
  %2925 = vmatmul.mubr.bf16.gmra.mrb[0].mxu0 %v2770
  %v2926 = vpop.f32.mrb[0].mxu0
  %v2927 = vadd.f32 0.0, %v2926
  %v2928 = vpop.f32.mrb[0].mxu0
  %v2929 = vpop.f32.mrb[0].mxu0
  %v2930 = vadd.f32 0.0, %v2929
  %v2931 = vpop.f32.mrb[0].mxu0
  %2932 = vmatprep.mubr.bf16.mxu0 0
  %2933 = vmatmul.mubr.bf16.gmra.mrb[0].mxu0 %v2771
  %v2934 = vpop.f32.mrb[0].mxu0
  %v2935 = vadd.f32 0.0, %v2934
  %v2936 = vpop.f32.mrb[0].mxu0
  %v2937 = vpop.f32.mrb[0].mxu0
  %v2938 = vadd.f32 0.0, %v2937
  %v2939 = vpop.f32.mrb[0].mxu0
  %2940 = vmatprep.mubr.bf16.mxu0 0
  %2941 = vmatmul.mubr.bf16.gmra.mrb[0].mxu0 %v2772
  %v2942 = vpop.f32.mrb[0].mxu0
  %v2943 = vadd.f32 0.0, %v2942
  %v2944 = vpop.f32.mrb[0].mxu0
  %v2945 = vpop.f32.mrb[0].mxu0
  %v2946 = vadd.f32 0.0, %v2945
  %v2947 = vpop.f32.mrb[0].mxu0
  %2948 = vmatprep.mubr.bf16.mxu0 0
  %2949 = vmatmul.mubr.bf16.gmra.mrb[0].mxu0 %v2773
  %v2950 = vpop.f32.mrb[0].mxu0
  %v2951 = vadd.f32 0.0, %v2950
  %v2952 = vpop.f32.mrb[0].mxu0
  %v2953 = vpop.f32.mrb[0].mxu0
  %v2954 = vadd.f32 0.0, %v2953
  %v2955 = vpop.f32.mrb[0].mxu0
  %2956 = vmatprep.mubr.bf16.mxu0 0
  %2957 = vmatmul.mubr.bf16.gmra.mrb[0].mxu0 %v2774
  %v2958 = vpop.f32.mrb[0].mxu0
  %v2959 = vadd.f32 0.0, %v2958
  %v2960 = vpop.f32.mrb[0].mxu0
  %v2961 = vpop.f32.mrb[0].mxu0
  %v2962 = vadd.f32 0.0, %v2961
  %v2963 = vpop.f32.mrb[0].mxu0
  %2964 = vmatprep.mubr.bf16.mxu0 0
  %2965 = vmatmul.mubr.bf16.gmra.mrb[0].mxu0 %v2775
  %v2966 = vpop.f32.mrb[0].mxu0
  %v2967 = vadd.f32 0.0, %v2966
  %v2968 = vpop.f32.mrb[0].mxu0
  %v2969 = vpop.f32.mrb[0].mxu0
  %v2970 = vadd.f32 0.0, %v2969
  %v2971 = vpop.f32.mrb[0].mxu0
  %2972 = vmatprep.mubr.bf16.mxu0 0
  %2973 = vmatmul.mubr.bf16.gmra.mrb[0].mxu0 %v2776
  %v2974 = vpop.f32.mrb[0].mxu0
  %v2975 = vadd.f32 0.0, %v2974
  %v2976 = vpop.f32.mrb[0].mxu0
  %v2977 = vpop.f32.mrb[0].mxu0
  %v2978 = vadd.f32 0.0, %v2977
  %v2979 = vpop.f32.mrb[0].mxu0
  %2980 = vmatprep.mubr.bf16.mxu0 0
  %2981 = vmatmul.mubr.bf16.gmra.mrb[0].mxu0 %v2777
  %v2982 = vpop.f32.mrb[0].mxu0
  %v2983 = vadd.f32 0.0, %v2982
  %v2984 = vpop.f32.mrb[0].mxu0
  %v2985 = vpop.f32.mrb[0].mxu0
  %v2986 = vadd.f32 0.0, %v2985
  %v2987 = vpop.f32.mrb[0].mxu0
  %2988 = vmatprep.mubr.bf16.mxu0 0
  %2989 = vmatmul.mubr.bf16.gmra.mrb[0].mxu0 %v2778
  %v2990 = vpop.f32.mrb[0].mxu0
  %v2991 = vadd.f32 0.0, %v2990
  %v2992 = vpop.f32.mrb[0].mxu0
  %v2993 = vpop.f32.mrb[0].mxu0
  %v2994 = vadd.f32 0.0, %v2993
  %v2995 = vpop.f32.mrb[0].mxu0
  %2996 = vmatprep.mubr.bf16.mxu0 0
  %2997 = vmatmul.mubr.bf16.gmra.mrb[0].mxu0 %v2779
  %v2998 = vpop.f32.mrb[0].mxu0
  %v2999 = vadd.f32 0.0, %v2998
  %v3000 = vpop.f32.mrb[0].mxu0
  %v3001 = vpop.f32.mrb[0].mxu0
  %v3002 = vadd.f32 0.0, %v3001
  %v3003 = vpop.f32.mrb[0].mxu0
  %3004 = vdwg.mxu0
  %v3005 = vld [vmem:[%s6 + $0x8] sm:$0x1]
  %v3006 = vld [vmem:[%s6 + $0x9] sm:$0x1]
  %v3007 = vadd.f32 %v2879, %v2882
  %v3008 = vadd.f32 %v3007, %v2887
  %v3009 = vadd.f32 %v3008, %v2890
  %v3010 = vadd.f32 %v3009, %v2895
  %v3011 = vadd.f32 %v3010, %v2898
  %v3012 = vadd.f32 %v3011, %v2903
  %v3013 = vadd.f32 %v3012, %v2906
  %v3014 = vadd.f32 %v3013, %v2911
  %v3015 = vadd.f32 %v3014, %v2914
  %v3016 = vadd.f32 %v3015, %v2919
  %v3017 = vadd.f32 %v3016, %v2922
  %v3018 = vadd.f32 %v3017, %v2927
  %v3019 = vadd.f32 %v3018, %v2930
  %v3020 = vadd.f32 %v3019, %v2935
  %v3021 = vadd.f32 %v3020, %v2938
  %v3022 = vadd.f32 %v3021, %v2943
  %v3023 = vadd.f32 %v3022, %v2946
  %v3024 = vadd.f32 %v3023, %v2951
  %v3025 = vadd.f32 %v3024, %v2954
  %v3026 = vadd.f32 %v3025, %v2959
  %v3027 = vadd.f32 %v3026, %v2962
  %v3028 = vadd.f32 %v3027, %v2967
  %v3029 = vadd.f32 %v3028, %v2970
  %v3030 = vadd.f32 %v3029, %v2975
  %v3031 = vadd.f32 %v3030, %v2978
  %v3032 = vadd.f32 %v3031, %v2983
  %v3033 = vadd.f32 %v3032, %v2986
  %v3034 = vadd.f32 %v3033, %v2991
  %v3035 = vadd.f32 %v3034, %v2994
  %v3036 = vadd.f32 %v3035, %v2999
  %v3037 = vadd.f32 %v3036, %v3002
  %v3038 = vrot.slane %v3037, 4
  %v3039 = vadd.f32 %v3037, %v3038
  %v3040 = vrot.slane %v3039, 2
  %v3041 = vadd.f32 %v3039, %v3040
  %v3042 = vrot.slane %v3041, 1
  %v3043 = vadd.f32 %v3041, %v3042
  %v3044 = vmul.f32 %v3043, 0.00390625
  %v3045 = vmul.f32 %v2879, %v2879
  %v3046 = vmul.f32 %v2882, %v2882
  %v3047 = vmul.f32 %v2887, %v2887
  %v3048 = vmul.f32 %v2890, %v2890
  %v3049 = vmul.f32 %v2895, %v2895
  %v3050 = vmul.f32 %v2898, %v2898
  %v3051 = vmul.f32 %v2903, %v2903
  %v3052 = vmul.f32 %v2906, %v2906
  %v3053 = vmul.f32 %v2911, %v2911
  %v3054 = vmul.f32 %v2914, %v2914
  %v3055 = vmul.f32 %v2919, %v2919
  %v3056 = vmul.f32 %v2922, %v2922
  %v3057 = vmul.f32 %v2927, %v2927
  %v3058 = vmul.f32 %v2930, %v2930
  %v3059 = vmul.f32 %v2935, %v2935
  %v3060 = vmul.f32 %v2938, %v2938
  %v3061 = vmul.f32 %v2943, %v2943
  %v3062 = vmul.f32 %v2946, %v2946
  %v3063 = vmul.f32 %v2951, %v2951
  %v3064 = vmul.f32 %v2954, %v2954
  %v3065 = vmul.f32 %v2959, %v2959
  %v3066 = vmul.f32 %v2962, %v2962
  %v3067 = vmul.f32 %v2967, %v2967
  %v3068 = vmul.f32 %v2970, %v2970
  %v3069 = vmul.f32 %v2975, %v2975
  %v3070 = vmul.f32 %v2978, %v2978
  %v3071 = vmul.f32 %v2983, %v2983
  %v3072 = vmul.f32 %v2986, %v2986
  %v3073 = vmul.f32 %v2991, %v2991
  %v3074 = vmul.f32 %v2994, %v2994
  %v3075 = vmul.f32 %v2999, %v2999
  %v3076 = vmul.f32 %v3002, %v3002
  %v3077 = vadd.f32 %v3045, %v3046
  %v3078 = vadd.f32 %v3077, %v3047
  %v3079 = vadd.f32 %v3078, %v3048
  %v3080 = vadd.f32 %v3079, %v3049
  %v3081 = vadd.f32 %v3080, %v3050
  %v3082 = vadd.f32 %v3081, %v3051
  %v3083 = vadd.f32 %v3082, %v3052
  %v3084 = vadd.f32 %v3083, %v3053
  %v3085 = vadd.f32 %v3084, %v3054
  %v3086 = vadd.f32 %v3085, %v3055
  %v3087 = vadd.f32 %v3086, %v3056
  %v3088 = vadd.f32 %v3087, %v3057
  %v3089 = vadd.f32 %v3088, %v3058
  %v3090 = vadd.f32 %v3089, %v3059
  %v3091 = vadd.f32 %v3090, %v3060
  %v3092 = vadd.f32 %v3091, %v3061
  %v3093 = vadd.f32 %v3092, %v3062
  %v3094 = vadd.f32 %v3093, %v3063
  %v3095 = vadd.f32 %v3094, %v3064
  %v3096 = vadd.f32 %v3095, %v3065
  %v3097 = vadd.f32 %v3096, %v3066
  %v3098 = vadd.f32 %v3097, %v3067
  %v3099 = vadd.f32 %v3098, %v3068
  %v3100 = vadd.f32 %v3099, %v3069
  %v3101 = vadd.f32 %v3100, %v3070
  %v3102 = vadd.f32 %v3101, %v3071
  %v3103 = vadd.f32 %v3102, %v3072
  %v3104 = vadd.f32 %v3103, %v3073
  %v3105 = vadd.f32 %v3104, %v3074
  %v3106 = vadd.f32 %v3105, %v3075
  %v3107 = vadd.f32 %v3106, %v3076
  %v3108 = vrot.slane %v3107, 4
  %v3109 = vadd.f32 %v3107, %v3108
  %v3110 = vrot.slane %v3109, 2
  %v3111 = vadd.f32 %v3109, %v3110
  %v3112 = vrot.slane %v3111, 1
  %v3113 = vadd.f32 %v3111, %v3112
  %v3114 = vmul.f32 %v3113, 0.00390625
  %v3115 = vmul.f32 %v3044, %v3044
  %v3116 = vsub.f32 %v3114, %v3115
  %v3117 = vmax.f32 %v3116, 0.0
  %v3118 = vadd.f32 %v3117, 1e-05
  %v3119 = vrsqrt.pop %v3118
  %v3120 = vmul.f32 %v3005, %v3119
  %v3121 = vmul.f32 %v3044, %v3120
  %v3122 = vsub.f32 %v3006, %v3121
  %v3123 = vlaneseq
  %v3124 = vshrl.u32 %v3123, 7
  %v3125 = vsub.s32 0, %v3124
  %v3126 = vrot.slane %v3120, %v3125
  %v3127 = vmul.f32 %v2879, %v3126
  %v3128 = vmul.f32 %v2882, %v3126
  %v3129 = vmul.f32 %v2887, %v3126
  %v3130 = vmul.f32 %v2890, %v3126
  %v3131 = vmul.f32 %v2895, %v3126
  %v3132 = vmul.f32 %v2898, %v3126
  %v3133 = vmul.f32 %v2903, %v3126
  %v3134 = vmul.f32 %v2906, %v3126
  %v3135 = vmul.f32 %v2911, %v3126
  %v3136 = vmul.f32 %v2914, %v3126
  %v3137 = vmul.f32 %v2919, %v3126
  %v3138 = vmul.f32 %v2922, %v3126
  %v3139 = vmul.f32 %v2927, %v3126
  %v3140 = vmul.f32 %v2930, %v3126
  %v3141 = vmul.f32 %v2935, %v3126
  %v3142 = vmul.f32 %v2938, %v3126
  %v3143 = vmul.f32 %v2943, %v3126
  %v3144 = vmul.f32 %v2946, %v3126
  %v3145 = vmul.f32 %v2951, %v3126
  %v3146 = vmul.f32 %v2954, %v3126
  %v3147 = vmul.f32 %v2959, %v3126
  %v3148 = vmul.f32 %v2962, %v3126
  %v3149 = vmul.f32 %v2967, %v3126
  %v3150 = vmul.f32 %v2970, %v3126
  %v3151 = vmul.f32 %v2975, %v3126
  %v3152 = vmul.f32 %v2978, %v3126
  %v3153 = vmul.f32 %v2983, %v3126
  %v3154 = vmul.f32 %v2986, %v3126
  %v3155 = vmul.f32 %v2991, %v3126
  %v3156 = vmul.f32 %v2994, %v3126
  %v3157 = vmul.f32 %v2999, %v3126
  %v3158 = vmul.f32 %v3002, %v3126
  %v3159 = vlaneseq
  %v3160 = vshrl.u32 %v3159, 7
  %v3161 = vsub.s32 0, %v3160
  %v3162 = vrot.slane %v3122, %v3161
  %v3163 = vadd.f32 %v3127, %v3162
  %v3164 = vadd.f32 %v3128, %v3162
  %v3165 = vadd.f32 %v3129, %v3162
  %v3166 = vadd.f32 %v3130, %v3162
  %v3167 = vadd.f32 %v3131, %v3162
  %v3168 = vadd.f32 %v3132, %v3162
  %v3169 = vadd.f32 %v3133, %v3162
  %v3170 = vadd.f32 %v3134, %v3162
  %v3171 = vadd.f32 %v3135, %v3162
  %v3172 = vadd.f32 %v3136, %v3162
  %v3173 = vadd.f32 %v3137, %v3162
  %v3174 = vadd.f32 %v3138, %v3162
  %v3175 = vadd.f32 %v3139, %v3162
  %v3176 = vadd.f32 %v3140, %v3162
  %v3177 = vadd.f32 %v3141, %v3162
  %v3178 = vadd.f32 %v3142, %v3162
  %v3179 = vadd.f32 %v3143, %v3162
  %v3180 = vadd.f32 %v3144, %v3162
  %v3181 = vadd.f32 %v3145, %v3162
  %v3182 = vadd.f32 %v3146, %v3162
  %v3183 = vadd.f32 %v3147, %v3162
  %v3184 = vadd.f32 %v3148, %v3162
  %v3185 = vadd.f32 %v3149, %v3162
  %v3186 = vadd.f32 %v3150, %v3162
  %v3187 = vadd.f32 %v3151, %v3162
  %v3188 = vadd.f32 %v3152, %v3162
  %v3189 = vadd.f32 %v3153, %v3162
  %v3190 = vadd.f32 %v3154, %v3162
  %v3191 = vadd.f32 %v3155, %v3162
  %v3192 = vadd.f32 %v3156, %v3162
  %v3193 = vadd.f32 %v3157, %v3162
  %v3194 = vadd.f32 %v3158, %v3162
  %v3195 = vmul.f32 %v3163, 0.5
  %v3196 = vmul.f32 %v3164, 0.5
  %v3197 = vmul.f32 %v3165, 0.5
  %v3198 = vmul.f32 %v3166, 0.5
  %v3199 = vmul.f32 %v3167, 0.5
  %v3200 = vmul.f32 %v3168, 0.5
  %v3201 = vmul.f32 %v3169, 0.5
  %v3202 = vmul.f32 %v3170, 0.5
  %v3203 = vmul.f32 %v3171, 0.5
  %v3204 = vmul.f32 %v3172, 0.5
  %v3205 = vmul.f32 %v3173, 0.5
  %v3206 = vmul.f32 %v3174, 0.5
  %v3207 = vmul.f32 %v3175, 0.5
  %v3208 = vmul.f32 %v3176, 0.5
  %v3209 = vmul.f32 %v3177, 0.5
  %v3210 = vmul.f32 %v3178, 0.5
  %v3211 = vmul.f32 %v3179, 0.5
  %v3212 = vmul.f32 %v3180, 0.5
  %v3213 = vmul.f32 %v3181, 0.5
  %v3214 = vmul.f32 %v3182, 0.5
  %v3215 = vmul.f32 %v3183, 0.5
  %v3216 = vmul.f32 %v3184, 0.5
  %v3217 = vmul.f32 %v3185, 0.5
  %v3218 = vmul.f32 %v3186, 0.5
  %v3219 = vmul.f32 %v3187, 0.5
  %v3220 = vmul.f32 %v3188, 0.5
  %v3221 = vmul.f32 %v3189, 0.5
  %v3222 = vmul.f32 %v3190, 0.5
  %v3223 = vmul.f32 %v3191, 0.5
  %v3224 = vmul.f32 %v3192, 0.5
  %v3225 = vmul.f32 %v3193, 0.5
  %v3226 = vmul.f32 %v3194, 0.5
  %v3227 = vmul.f32 %v3163, 0.70710677
  %v3228 = vmul.f32 %v3164, 0.70710677
  %v3229 = vmul.f32 %v3165, 0.70710677
  %v3230 = vmul.f32 %v3166, 0.70710677
  %v3231 = vmul.f32 %v3167, 0.70710677
  %v3232 = vmul.f32 %v3168, 0.70710677
  %v3233 = vmul.f32 %v3169, 0.70710677
  %v3234 = vmul.f32 %v3170, 0.70710677
  %v3235 = vmul.f32 %v3171, 0.70710677
  %v3236 = vmul.f32 %v3172, 0.70710677
  %v3237 = vmul.f32 %v3173, 0.70710677
  %v3238 = vmul.f32 %v3174, 0.70710677
  %v3239 = vmul.f32 %v3175, 0.70710677
  %v3240 = vmul.f32 %v3176, 0.70710677
  %v3241 = vmul.f32 %v3177, 0.70710677
  %v3242 = vmul.f32 %v3178, 0.70710677
  %v3243 = vmul.f32 %v3179, 0.70710677
  %v3244 = vmul.f32 %v3180, 0.70710677
  %v3245 = vmul.f32 %v3181, 0.70710677
  %v3246 = vmul.f32 %v3182, 0.70710677
  %v3247 = vmul.f32 %v3183, 0.70710677
  %v3248 = vmul.f32 %v3184, 0.70710677
  %v3249 = vmul.f32 %v3185, 0.70710677
  %v3250 = vmul.f32 %v3186, 0.70710677
  %v3251 = vmul.f32 %v3187, 0.70710677
  %v3252 = vmul.f32 %v3188, 0.70710677
  %v3253 = vmul.f32 %v3189, 0.70710677
  %v3254 = vmul.f32 %v3190, 0.70710677
  %v3255 = vmul.f32 %v3191, 0.70710677
  %v3256 = vmul.f32 %v3192, 0.70710677
  %v3257 = vmul.f32 %v3193, 0.70710677
  %v3258 = vmul.f32 %v3194, 0.70710677
  %v3259 = verf.f32.pop %v3227
  %v3260 = verf.f32.pop %v3228
  %v3261 = verf.f32.pop %v3229
  %v3262 = verf.f32.pop %v3230
  %v3263 = verf.f32.pop %v3231
  %v3264 = verf.f32.pop %v3232
  %v3265 = verf.f32.pop %v3233
  %v3266 = verf.f32.pop %v3234
  %v3267 = verf.f32.pop %v3235
  %v3268 = verf.f32.pop %v3236
  %v3269 = verf.f32.pop %v3237
  %v3270 = verf.f32.pop %v3238
  %v3271 = verf.f32.pop %v3239
  %v3272 = verf.f32.pop %v3240
  %v3273 = verf.f32.pop %v3241
  %v3274 = verf.f32.pop %v3242
  %v3275 = verf.f32.pop %v3243
  %v3276 = verf.f32.pop %v3244
  %v3277 = verf.f32.pop %v3245
  %v3278 = verf.f32.pop %v3246
  %v3279 = verf.f32.pop %v3247
  %v3280 = verf.f32.pop %v3248
  %v3281 = verf.f32.pop %v3249
  %v3282 = verf.f32.pop %v3250
  %v3283 = verf.f32.pop %v3251
  %v3284 = verf.f32.pop %v3252
  %v3285 = verf.f32.pop %v3253
  %v3286 = verf.f32.pop %v3254
  %v3287 = verf.f32.pop %v3255
  %v3288 = verf.f32.pop %v3256
  %v3289 = verf.f32.pop %v3257
  %v3290 = verf.f32.pop %v3258
  %v3291 = vadd.f32 %v3259, 1.0
  %v3292 = vadd.f32 %v3260, 1.0
  %v3293 = vadd.f32 %v3261, 1.0
  %v3294 = vadd.f32 %v3262, 1.0
  %v3295 = vadd.f32 %v3263, 1.0
  %v3296 = vadd.f32 %v3264, 1.0
  %v3297 = vadd.f32 %v3265, 1.0
  %v3298 = vadd.f32 %v3266, 1.0
  %v3299 = vadd.f32 %v3267, 1.0
  %v3300 = vadd.f32 %v3268, 1.0
  %v3301 = vadd.f32 %v3269, 1.0
  %v3302 = vadd.f32 %v3270, 1.0
  %v3303 = vadd.f32 %v3271, 1.0
  %v3304 = vadd.f32 %v3272, 1.0
  %v3305 = vadd.f32 %v3273, 1.0
  %v3306 = vadd.f32 %v3274, 1.0
  %v3307 = vadd.f32 %v3275, 1.0
  %v3308 = vadd.f32 %v3276, 1.0
  %v3309 = vadd.f32 %v3277, 1.0
  %v3310 = vadd.f32 %v3278, 1.0
  %v3311 = vadd.f32 %v3279, 1.0
  %v3312 = vadd.f32 %v3280, 1.0
  %v3313 = vadd.f32 %v3281, 1.0
  %v3314 = vadd.f32 %v3282, 1.0
  %v3315 = vadd.f32 %v3283, 1.0
  %v3316 = vadd.f32 %v3284, 1.0
  %v3317 = vadd.f32 %v3285, 1.0
  %v3318 = vadd.f32 %v3286, 1.0
  %v3319 = vadd.f32 %v3287, 1.0
  %v3320 = vadd.f32 %v3288, 1.0
  %v3321 = vadd.f32 %v3289, 1.0
  %v3322 = vadd.f32 %v3290, 1.0
  %v3323 = vmul.f32 %v3195, %v3291
  %v3324 = vmul.f32 %v3196, %v3292
  %v3325 = vmul.f32 %v3197, %v3293
  %v3326 = vmul.f32 %v3198, %v3294
  %v3327 = vmul.f32 %v3199, %v3295
  %v3328 = vmul.f32 %v3200, %v3296
  %v3329 = vmul.f32 %v3201, %v3297
  %v3330 = vmul.f32 %v3202, %v3298
  %v3331 = vmul.f32 %v3203, %v3299
  %v3332 = vmul.f32 %v3204, %v3300
  %v3333 = vmul.f32 %v3205, %v3301
  %v3334 = vmul.f32 %v3206, %v3302
  %v3335 = vmul.f32 %v3207, %v3303
  %v3336 = vmul.f32 %v3208, %v3304
  %v3337 = vmul.f32 %v3209, %v3305
  %v3338 = vmul.f32 %v3210, %v3306
  %v3339 = vmul.f32 %v3211, %v3307
  %v3340 = vmul.f32 %v3212, %v3308
  %v3341 = vmul.f32 %v3213, %v3309
  %v3342 = vmul.f32 %v3214, %v3310
  %v3343 = vmul.f32 %v3215, %v3311
  %v3344 = vmul.f32 %v3216, %v3312
  %v3345 = vmul.f32 %v3217, %v3313
  %v3346 = vmul.f32 %v3218, %v3314
  %v3347 = vmul.f32 %v3219, %v3315
  %v3348 = vmul.f32 %v3220, %v3316
  %v3349 = vmul.f32 %v3221, %v3317
  %v3350 = vmul.f32 %v3222, %v3318
  %v3351 = vmul.f32 %v3223, %v3319
  %v3352 = vmul.f32 %v3224, %v3320
  %v3353 = vmul.f32 %v3225, %v3321
  %v3354 = vmul.f32 %v3226, %v3322
  %v3355 = vpack.c.bf16 %v3324, %v3323
  %v3356 = vpack.c.bf16 %v3326, %v3325
  %v3357 = vpack.c.bf16 %v3328, %v3327
  %v3358 = vpack.c.bf16 %v3330, %v3329
  %v3359 = vpack.c.bf16 %v3332, %v3331
  %v3360 = vpack.c.bf16 %v3334, %v3333
  %v3361 = vpack.c.bf16 %v3336, %v3335
  %v3362 = vpack.c.bf16 %v3338, %v3337
  %v3363 = vpack.c.bf16 %v3340, %v3339
  %v3364 = vpack.c.bf16 %v3342, %v3341
  %v3365 = vpack.c.bf16 %v3344, %v3343
  %v3366 = vpack.c.bf16 %v3346, %v3345
  %v3367 = vpack.c.bf16 %v3348, %v3347
  %v3368 = vpack.c.bf16 %v3350, %v3349
  %v3369 = vpack.c.bf16 %v3352, %v3351
  %v3370 = vpack.c.bf16 %v3354, %v3353
  %v3371 = vld [vmem:[%s4] sm:$0xff]
  %v3372 = vld [vmem:[%s4 + $0x8] sm:$0xff]
  %v3373 = vld [vmem:[%s4 + $0x10] sm:$0xff]
  %v3374 = vld [vmem:[%s4 + $0x18] sm:$0xff]
  %v3375 = vld [vmem:[%s4 + $0x20] sm:$0xff]
  %v3376 = vld [vmem:[%s4 + $0x28] sm:$0xff]
  %v3377 = vld [vmem:[%s4 + $0x30] sm:$0xff]
  %v3378 = vld [vmem:[%s4 + $0x38] sm:$0xff]
  %v3379 = vld [vmem:[%s4 + $0x40] sm:$0xff]
  %v3380 = vld [vmem:[%s4 + $0x48] sm:$0xff]
  %v3381 = vld [vmem:[%s4 + $0x50] sm:$0xff]
  %v3382 = vld [vmem:[%s4 + $0x58] sm:$0xff]
  %v3383 = vld [vmem:[%s4 + $0x60] sm:$0xff]
  %v3384 = vld [vmem:[%s4 + $0x68] sm:$0xff]
  %v3385 = vld [vmem:[%s4 + $0x70] sm:$0xff]
  %v3386 = vld [vmem:[%s4 + $0x78] sm:$0xff]
  %v3403 = vunpack.c.l.b16 %v3371
  %v3404 = vunpack.c.h.b16 %v3371
  %v3405 = vunpack.c.l.b16 %v3372
  %v3406 = vunpack.c.h.b16 %v3372
  %v3407 = vunpack.c.l.b16 %v3373
  %v3408 = vunpack.c.h.b16 %v3373
  %v3409 = vunpack.c.l.b16 %v3374
  %v3410 = vunpack.c.h.b16 %v3374
  %v3411 = vunpack.c.l.b16 %v3375
  %v3412 = vunpack.c.h.b16 %v3375
  %v3413 = vunpack.c.l.b16 %v3376
  %v3414 = vunpack.c.h.b16 %v3376
  %v3415 = vunpack.c.l.b16 %v3377
  %v3416 = vunpack.c.h.b16 %v3377
  %v3417 = vunpack.c.l.b16 %v3378
  %v3418 = vunpack.c.h.b16 %v3378
  %v3419 = vunpack.c.l.b16 %v3379
  %v3420 = vunpack.c.h.b16 %v3379
  %v3421 = vunpack.c.l.b16 %v3380
  %v3422 = vunpack.c.h.b16 %v3380
  %v3423 = vunpack.c.l.b16 %v3381
  %v3424 = vunpack.c.h.b16 %v3381
  %v3425 = vunpack.c.l.b16 %v3382
  %v3426 = vunpack.c.h.b16 %v3382
  %v3427 = vunpack.c.l.b16 %v3383
  %v3428 = vunpack.c.h.b16 %v3383
  %v3429 = vunpack.c.l.b16 %v3384
  %v3430 = vunpack.c.h.b16 %v3384
  %v3431 = vunpack.c.l.b16 %v3385
  %v3432 = vunpack.c.h.b16 %v3385
  %v3433 = vunpack.c.l.b16 %v3386
  %v3434 = vunpack.c.h.b16 %v3386
  %v3435 = vpack.c.b16 %v3405, %v3403
  %v3436 = vpack.c.b16 %v3406, %v3404
  %v3437 = vpack.c.b16 %v3409, %v3407
  %v3438 = vpack.c.b16 %v3410, %v3408
  %v3439 = vpack.c.b16 %v3413, %v3411
  %v3440 = vpack.c.b16 %v3414, %v3412
  %v3441 = vpack.c.b16 %v3417, %v3415
  %v3442 = vpack.c.b16 %v3418, %v3416
  %v3443 = vpack.c.b16 %v3421, %v3419
  %v3444 = vpack.c.b16 %v3422, %v3420
  %v3445 = vpack.c.b16 %v3425, %v3423
  %v3446 = vpack.c.b16 %v3426, %v3424
  %v3447 = vpack.c.b16 %v3429, %v3427
  %v3448 = vpack.c.b16 %v3430, %v3428
  %v3449 = vpack.c.b16 %v3433, %v3431
  %v3450 = vpack.c.b16 %v3434, %v3432
  %3467 = vmatprep.subr.bf16.mxu0 %v3436
  %3468 = vmatpush1.bf16.msra.mxu0 %v3435
  %3469 = vmatprep.subr.bf16.mxu0 %v3438
  %3470 = vmatpush1.bf16.msra.mxu0 %v3437
  %3471 = vmatprep.subr.bf16.mxu0 %v3440
  %3472 = vmatpush1.bf16.msra.mxu0 %v3439
  %3473 = vmatprep.subr.bf16.mxu0 %v3442
  %3474 = vmatpush1.bf16.msra.mxu0 %v3441
  %3475 = vmatprep.subr.bf16.mxu0 %v3444
  %3476 = vmatpush1.bf16.msra.mxu0 %v3443
  %3477 = vmatprep.subr.bf16.mxu0 %v3446
  %3478 = vmatpush1.bf16.msra.mxu0 %v3445
  %3479 = vmatprep.subr.bf16.mxu0 %v3448
  %3480 = vmatpush1.bf16.msra.mxu0 %v3447
  %3481 = vmatprep.subr.bf16.mxu0 %v3450
  %3482 = vmatpush1.bf16.msra.mxu0 %v3449
  %3483 = vmatprep.subr.bf16.mxu0 0
  %3484 = vmatpush1.bf16.msra.mxu0 0
  %3485 = vmatprep.subr.bf16.mxu0 0
  %3486 = vmatpush1.bf16.msra.mxu0 0
  %3487 = vmatprep.subr.bf16.mxu0 0
  %3488 = vmatpush1.bf16.msra.mxu0 0
  %3489 = vmatprep.subr.bf16.mxu0 0
  %3490 = vmatpush1.bf16.msra.mxu0 0
  %3491 = vmatprep.subr.bf16.mxu0 0
  %3492 = vmatpush1.bf16.msra.mxu0 0
  %3493 = vmatprep.subr.bf16.mxu0 0
  %3494 = vmatpush1.bf16.msra.mxu0 0
  %3495 = vmatprep.subr.bf16.mxu0 0
  %3496 = vmatpush1.bf16.msra.mxu0 0
  %3497 = vmatprep.subr.bf16.mxu0 0
  %3498 = vmatpush1.bf16.msra.mxu0 0
  %3499 = vmatprep.mubr.bf16.mxu0 0
  %3500 = vmatmul.mubr.bf16.gmra.mrb[0].mxu0 %v3355
  %v3501 = vpop.f32.mrb[0].mxu0
  %v3502 = vadd.f32 0.0, %v3501
  %v3503 = vpop.f32.mrb[0].mxu0
  %v3504 = vadd.f32 0.0, %v3503
  %v3505 = vpop.f32.mrb[0].mxu0
  %v3506 = vadd.f32 0.0, %v3505
  %v3507 = vpop.f32.mrb[0].mxu0
  %v3508 = vadd.f32 0.0, %v3507
  %3509 = vmatprep.mubr.bf16.mxu0 0
  %3510 = vmatmul.mubr.bf16.gmra.mrb[0].mxu0 %v3356
  %v3511 = vpop.f32.mrb[0].mxu0
  %v3512 = vadd.f32 0.0, %v3511
  %v3513 = vpop.f32.mrb[0].mxu0
  %v3514 = vadd.f32 0.0, %v3513
  %v3515 = vpop.f32.mrb[0].mxu0
  %v3516 = vadd.f32 0.0, %v3515
  %v3517 = vpop.f32.mrb[0].mxu0
  %v3518 = vadd.f32 0.0, %v3517
  %3519 = vmatprep.mubr.bf16.mxu0 0
  %3520 = vmatmul.mubr.bf16.gmra.mrb[0].mxu0 %v3357
  %v3521 = vpop.f32.mrb[0].mxu0
  %v3522 = vadd.f32 0.0, %v3521
  %v3523 = vpop.f32.mrb[0].mxu0
  %v3524 = vadd.f32 0.0, %v3523
  %v3525 = vpop.f32.mrb[0].mxu0
  %v3526 = vadd.f32 0.0, %v3525
  %v3527 = vpop.f32.mrb[0].mxu0
  %v3528 = vadd.f32 0.0, %v3527
  %3529 = vmatprep.mubr.bf16.mxu0 0
  %3530 = vmatmul.mubr.bf16.gmra.mrb[0].mxu0 %v3358
  %v3531 = vpop.f32.mrb[0].mxu0
  %v3532 = vadd.f32 0.0, %v3531
  %v3533 = vpop.f32.mrb[0].mxu0
  %v3534 = vadd.f32 0.0, %v3533
  %v3535 = vpop.f32.mrb[0].mxu0
  %v3536 = vadd.f32 0.0, %v3535
  %v3537 = vpop.f32.mrb[0].mxu0
  %v3538 = vadd.f32 0.0, %v3537
  %3539 = vmatprep.mubr.bf16.mxu0 0
  %3540 = vmatmul.mubr.bf16.gmra.mrb[0].mxu0 %v3359
  %v3541 = vpop.f32.mrb[0].mxu0
  %v3542 = vadd.f32 0.0, %v3541
  %v3543 = vpop.f32.mrb[0].mxu0
  %v3544 = vadd.f32 0.0, %v3543
  %v3545 = vpop.f32.mrb[0].mxu0
  %v3546 = vadd.f32 0.0, %v3545
  %v3547 = vpop.f32.mrb[0].mxu0
  %v3548 = vadd.f32 0.0, %v3547
  %3549 = vmatprep.mubr.bf16.mxu0 0
  %3550 = vmatmul.mubr.bf16.gmra.mrb[0].mxu0 %v3360
  %v3551 = vpop.f32.mrb[0].mxu0
  %v3552 = vadd.f32 0.0, %v3551
  %v3553 = vpop.f32.mrb[0].mxu0
  %v3554 = vadd.f32 0.0, %v3553
  %v3555 = vpop.f32.mrb[0].mxu0
  %v3556 = vadd.f32 0.0, %v3555
  %v3557 = vpop.f32.mrb[0].mxu0
  %v3558 = vadd.f32 0.0, %v3557
  %3559 = vmatprep.mubr.bf16.mxu0 0
  %3560 = vmatmul.mubr.bf16.gmra.mrb[0].mxu0 %v3361
  %v3561 = vpop.f32.mrb[0].mxu0
  %v3562 = vadd.f32 0.0, %v3561
  %v3563 = vpop.f32.mrb[0].mxu0
  %v3564 = vadd.f32 0.0, %v3563
  %v3565 = vpop.f32.mrb[0].mxu0
  %v3566 = vadd.f32 0.0, %v3565
  %v3567 = vpop.f32.mrb[0].mxu0
  %v3568 = vadd.f32 0.0, %v3567
  %3569 = vmatprep.mubr.bf16.mxu0 0
  %3570 = vmatmul.mubr.bf16.gmra.mrb[0].mxu0 %v3362
  %v3571 = vpop.f32.mrb[0].mxu0
  %v3572 = vadd.f32 0.0, %v3571
  %v3573 = vpop.f32.mrb[0].mxu0
  %v3574 = vadd.f32 0.0, %v3573
  %v3575 = vpop.f32.mrb[0].mxu0
  %v3576 = vadd.f32 0.0, %v3575
  %v3577 = vpop.f32.mrb[0].mxu0
  %v3578 = vadd.f32 0.0, %v3577
  %3579 = vmatprep.mubr.bf16.mxu0 0
  %3580 = vmatmul.mubr.bf16.gmra.mrb[0].mxu0 %v3363
  %v3581 = vpop.f32.mrb[0].mxu0
  %v3582 = vadd.f32 0.0, %v3581
  %v3583 = vpop.f32.mrb[0].mxu0
  %v3584 = vadd.f32 0.0, %v3583
  %v3585 = vpop.f32.mrb[0].mxu0
  %v3586 = vadd.f32 0.0, %v3585
  %v3587 = vpop.f32.mrb[0].mxu0
  %v3588 = vadd.f32 0.0, %v3587
  %3589 = vmatprep.mubr.bf16.mxu0 0
  %3590 = vmatmul.mubr.bf16.gmra.mrb[0].mxu0 %v3364
  %v3591 = vpop.f32.mrb[0].mxu0
  %v3592 = vadd.f32 0.0, %v3591
  %v3593 = vpop.f32.mrb[0].mxu0
  %v3594 = vadd.f32 0.0, %v3593
  %v3595 = vpop.f32.mrb[0].mxu0
  %v3596 = vadd.f32 0.0, %v3595
  %v3597 = vpop.f32.mrb[0].mxu0
  %v3598 = vadd.f32 0.0, %v3597
  %3599 = vmatprep.mubr.bf16.mxu0 0
  %3600 = vmatmul.mubr.bf16.gmra.mrb[0].mxu0 %v3365
  %v3601 = vpop.f32.mrb[0].mxu0
  %v3602 = vadd.f32 0.0, %v3601
  %v3603 = vpop.f32.mrb[0].mxu0
  %v3604 = vadd.f32 0.0, %v3603
  %v3605 = vpop.f32.mrb[0].mxu0
  %v3606 = vadd.f32 0.0, %v3605
  %v3607 = vpop.f32.mrb[0].mxu0
  %v3608 = vadd.f32 0.0, %v3607
  %3609 = vmatprep.mubr.bf16.mxu0 0
  %3610 = vmatmul.mubr.bf16.gmra.mrb[0].mxu0 %v3366
  %v3611 = vpop.f32.mrb[0].mxu0
  %v3612 = vadd.f32 0.0, %v3611
  %v3613 = vpop.f32.mrb[0].mxu0
  %v3614 = vadd.f32 0.0, %v3613
  %v3615 = vpop.f32.mrb[0].mxu0
  %v3616 = vadd.f32 0.0, %v3615
  %v3617 = vpop.f32.mrb[0].mxu0
  %v3618 = vadd.f32 0.0, %v3617
  %3619 = vmatprep.mubr.bf16.mxu0 0
  %3620 = vmatmul.mubr.bf16.gmra.mrb[0].mxu0 %v3367
  %v3621 = vpop.f32.mrb[0].mxu0
  %v3622 = vadd.f32 0.0, %v3621
  %v3623 = vpop.f32.mrb[0].mxu0
  %v3624 = vadd.f32 0.0, %v3623
  %v3625 = vpop.f32.mrb[0].mxu0
  %v3626 = vadd.f32 0.0, %v3625
  %v3627 = vpop.f32.mrb[0].mxu0
  %v3628 = vadd.f32 0.0, %v3627
  %3629 = vmatprep.mubr.bf16.mxu0 0
  %3630 = vmatmul.mubr.bf16.gmra.mrb[0].mxu0 %v3368
  %v3631 = vpop.f32.mrb[0].mxu0
  %v3632 = vadd.f32 0.0, %v3631
  %v3633 = vpop.f32.mrb[0].mxu0
  %v3634 = vadd.f32 0.0, %v3633
  %v3635 = vpop.f32.mrb[0].mxu0
  %v3636 = vadd.f32 0.0, %v3635
  %v3637 = vpop.f32.mrb[0].mxu0
  %v3638 = vadd.f32 0.0, %v3637
  %3639 = vmatprep.mubr.bf16.mxu0 0
  %3640 = vmatmul.mubr.bf16.gmra.mrb[0].mxu0 %v3369
  %v3641 = vpop.f32.mrb[0].mxu0
  %v3642 = vadd.f32 0.0, %v3641
  %v3643 = vpop.f32.mrb[0].mxu0
  %v3644 = vadd.f32 0.0, %v3643
  %v3645 = vpop.f32.mrb[0].mxu0
  %v3646 = vadd.f32 0.0, %v3645
  %v3647 = vpop.f32.mrb[0].mxu0
  %v3648 = vadd.f32 0.0, %v3647
  %3649 = vmatprep.mubr.bf16.mxu0 0
  %3650 = vmatmul.mubr.bf16.gmra.mrb[0].mxu0 %v3370
  %v3651 = vpop.f32.mrb[0].mxu0
  %v3652 = vadd.f32 0.0, %v3651
  %v3653 = vpop.f32.mrb[0].mxu0
  %v3654 = vadd.f32 0.0, %v3653
  %v3655 = vpop.f32.mrb[0].mxu0
  %v3656 = vadd.f32 0.0, %v3655
  %v3657 = vpop.f32.mrb[0].mxu0
  %v3658 = vadd.f32 0.0, %v3657
  %3659 = vdwg.mxu0
  %s3660 = scalar_lea.vmem %s6, 12
  %v3661 = vld [vmem:[%s3660] ss:$4 sm:$0x3]
  %s3662 = scalar_lea.vmem %s6, 13
  %v3663 = vld [vmem:[%s3662] ss:$4 sm:$0x3]
  %v3664 = vadd.f32 %v3502, %v3506
  %v3665 = vadd.f32 %v3664, %v3512
  %v3666 = vadd.f32 %v3665, %v3516
  %v3667 = vadd.f32 %v3666, %v3522
  %v3668 = vadd.f32 %v3667, %v3526
  %v3669 = vadd.f32 %v3668, %v3532
  %v3670 = vadd.f32 %v3669, %v3536
  %v3671 = vadd.f32 %v3670, %v3542
  %v3672 = vadd.f32 %v3671, %v3546
  %v3673 = vadd.f32 %v3672, %v3552
  %v3674 = vadd.f32 %v3673, %v3556
  %v3675 = vadd.f32 %v3674, %v3562
  %v3676 = vadd.f32 %v3675, %v3566
  %v3677 = vadd.f32 %v3676, %v3572
  %v3678 = vadd.f32 %v3677, %v3576
  %v3679 = vadd.f32 %v3678, %v3582
  %v3680 = vadd.f32 %v3679, %v3586
  %v3681 = vadd.f32 %v3680, %v3592
  %v3682 = vadd.f32 %v3681, %v3596
  %v3683 = vadd.f32 %v3682, %v3602
  %v3684 = vadd.f32 %v3683, %v3606
  %v3685 = vadd.f32 %v3684, %v3612
  %v3686 = vadd.f32 %v3685, %v3616
  %v3687 = vadd.f32 %v3686, %v3622
  %v3688 = vadd.f32 %v3687, %v3626
  %v3689 = vadd.f32 %v3688, %v3632
  %v3690 = vadd.f32 %v3689, %v3636
  %v3691 = vadd.f32 %v3690, %v3642
  %v3692 = vadd.f32 %v3691, %v3646
  %v3693 = vadd.f32 %v3692, %v3652
  %v3694 = vadd.f32 %v3693, %v3656
  %v3695 = vrot.slane %v3694, 4
  %v3696 = vadd.f32 %v3694, %v3695
  %v3697 = vrot.slane %v3696, 2
  %v3698 = vadd.f32 %v3696, %v3697
  %v3699 = vrot.slane %v3698, 1
  %v3700 = vadd.f32 %v3698, %v3699
  %v3701 = vadd.f32 %v3504, %v3508
  %v3702 = vadd.f32 %v3701, %v3514
  %v3703 = vadd.f32 %v3702, %v3518
  %v3704 = vadd.f32 %v3703, %v3524
  %v3705 = vadd.f32 %v3704, %v3528
  %v3706 = vadd.f32 %v3705, %v3534
  %v3707 = vadd.f32 %v3706, %v3538
  %v3708 = vadd.f32 %v3707, %v3544
  %v3709 = vadd.f32 %v3708, %v3548
  %v3710 = vadd.f32 %v3709, %v3554
  %v3711 = vadd.f32 %v3710, %v3558
  %v3712 = vadd.f32 %v3711, %v3564
  %v3713 = vadd.f32 %v3712, %v3568
  %v3714 = vadd.f32 %v3713, %v3574
  %v3715 = vadd.f32 %v3714, %v3578
  %v3716 = vadd.f32 %v3715, %v3584
  %v3717 = vadd.f32 %v3716, %v3588
  %v3718 = vadd.f32 %v3717, %v3594
  %v3719 = vadd.f32 %v3718, %v3598
  %v3720 = vadd.f32 %v3719, %v3604
  %v3721 = vadd.f32 %v3720, %v3608
  %v3722 = vadd.f32 %v3721, %v3614
  %v3723 = vadd.f32 %v3722, %v3618
  %v3724 = vadd.f32 %v3723, %v3624
  %v3725 = vadd.f32 %v3724, %v3628
  %v3726 = vadd.f32 %v3725, %v3634
  %v3727 = vadd.f32 %v3726, %v3638
  %v3728 = vadd.f32 %v3727, %v3644
  %v3729 = vadd.f32 %v3728, %v3648
  %v3730 = vadd.f32 %v3729, %v3654
  %v3731 = vadd.f32 %v3730, %v3658
  %v3732 = vrot.slane %v3731, 4
  %v3733 = vadd.f32 %v3731, %v3732
  %v3734 = vrot.slane %v3733, 2
  %v3735 = vadd.f32 %v3733, %v3734
  %v3736 = vrot.slane %v3735, 1
  %v3737 = vadd.f32 %v3735, %v3736
  %v3738 = vmul.f32 %v3700, 0.00390625
  %v3739 = vmul.f32 %v3737, 0.00390625
  %v3740 = vmul.f32 %v3502, %v3502
  %v3741 = vmul.f32 %v3504, %v3504
  %v3742 = vmul.f32 %v3506, %v3506
  %v3743 = vmul.f32 %v3508, %v3508
  %v3744 = vmul.f32 %v3512, %v3512
  %v3745 = vmul.f32 %v3514, %v3514
  %v3746 = vmul.f32 %v3516, %v3516
  %v3747 = vmul.f32 %v3518, %v3518
  %v3748 = vmul.f32 %v3522, %v3522
  %v3749 = vmul.f32 %v3524, %v3524
  %v3750 = vmul.f32 %v3526, %v3526
  %v3751 = vmul.f32 %v3528, %v3528
  %v3752 = vmul.f32 %v3532, %v3532
  %v3753 = vmul.f32 %v3534, %v3534
  %v3754 = vmul.f32 %v3536, %v3536
  %v3755 = vmul.f32 %v3538, %v3538
  %v3756 = vmul.f32 %v3542, %v3542
  %v3757 = vmul.f32 %v3544, %v3544
  %v3758 = vmul.f32 %v3546, %v3546
  %v3759 = vmul.f32 %v3548, %v3548
  %v3760 = vmul.f32 %v3552, %v3552
  %v3761 = vmul.f32 %v3554, %v3554
  %v3762 = vmul.f32 %v3556, %v3556
  %v3763 = vmul.f32 %v3558, %v3558
  %v3764 = vmul.f32 %v3562, %v3562
  %v3765 = vmul.f32 %v3564, %v3564
  %v3766 = vmul.f32 %v3566, %v3566
  %v3767 = vmul.f32 %v3568, %v3568
  %v3768 = vmul.f32 %v3572, %v3572
  %v3769 = vmul.f32 %v3574, %v3574
  %v3770 = vmul.f32 %v3576, %v3576
  %v3771 = vmul.f32 %v3578, %v3578
  %v3772 = vmul.f32 %v3582, %v3582
  %v3773 = vmul.f32 %v3584, %v3584
  %v3774 = vmul.f32 %v3586, %v3586
  %v3775 = vmul.f32 %v3588, %v3588
  %v3776 = vmul.f32 %v3592, %v3592
  %v3777 = vmul.f32 %v3594, %v3594
  %v3778 = vmul.f32 %v3596, %v3596
  %v3779 = vmul.f32 %v3598, %v3598
  %v3780 = vmul.f32 %v3602, %v3602
  %v3781 = vmul.f32 %v3604, %v3604
  %v3782 = vmul.f32 %v3606, %v3606
  %v3783 = vmul.f32 %v3608, %v3608
  %v3784 = vmul.f32 %v3612, %v3612
  %v3785 = vmul.f32 %v3614, %v3614
  %v3786 = vmul.f32 %v3616, %v3616
  %v3787 = vmul.f32 %v3618, %v3618
  %v3788 = vmul.f32 %v3622, %v3622
  %v3789 = vmul.f32 %v3624, %v3624
  %v3790 = vmul.f32 %v3626, %v3626
  %v3791 = vmul.f32 %v3628, %v3628
  %v3792 = vmul.f32 %v3632, %v3632
  %v3793 = vmul.f32 %v3634, %v3634
  %v3794 = vmul.f32 %v3636, %v3636
  %v3795 = vmul.f32 %v3638, %v3638
  %v3796 = vmul.f32 %v3642, %v3642
  %v3797 = vmul.f32 %v3644, %v3644
  %v3798 = vmul.f32 %v3646, %v3646
  %v3799 = vmul.f32 %v3648, %v3648
  %v3800 = vmul.f32 %v3652, %v3652
  %v3801 = vmul.f32 %v3654, %v3654
  %v3802 = vmul.f32 %v3656, %v3656
  %v3803 = vmul.f32 %v3658, %v3658
  %v3804 = vadd.f32 %v3740, %v3742
  %v3805 = vadd.f32 %v3804, %v3744
  %v3806 = vadd.f32 %v3805, %v3746
  %v3807 = vadd.f32 %v3806, %v3748
  %v3808 = vadd.f32 %v3807, %v3750
  %v3809 = vadd.f32 %v3808, %v3752
  %v3810 = vadd.f32 %v3809, %v3754
  %v3811 = vadd.f32 %v3810, %v3756
  %v3812 = vadd.f32 %v3811, %v3758
  %v3813 = vadd.f32 %v3812, %v3760
  %v3814 = vadd.f32 %v3813, %v3762
  %v3815 = vadd.f32 %v3814, %v3764
  %v3816 = vadd.f32 %v3815, %v3766
  %v3817 = vadd.f32 %v3816, %v3768
  %v3818 = vadd.f32 %v3817, %v3770
  %v3819 = vadd.f32 %v3818, %v3772
  %v3820 = vadd.f32 %v3819, %v3774
  %v3821 = vadd.f32 %v3820, %v3776
  %v3822 = vadd.f32 %v3821, %v3778
  %v3823 = vadd.f32 %v3822, %v3780
  %v3824 = vadd.f32 %v3823, %v3782
  %v3825 = vadd.f32 %v3824, %v3784
  %v3826 = vadd.f32 %v3825, %v3786
  %v3827 = vadd.f32 %v3826, %v3788
  %v3828 = vadd.f32 %v3827, %v3790
  %v3829 = vadd.f32 %v3828, %v3792
  %v3830 = vadd.f32 %v3829, %v3794
  %v3831 = vadd.f32 %v3830, %v3796
  %v3832 = vadd.f32 %v3831, %v3798
  %v3833 = vadd.f32 %v3832, %v3800
  %v3834 = vadd.f32 %v3833, %v3802
  %v3835 = vrot.slane %v3834, 4
  %v3836 = vadd.f32 %v3834, %v3835
  %v3837 = vrot.slane %v3836, 2
  %v3838 = vadd.f32 %v3836, %v3837
  %v3839 = vrot.slane %v3838, 1
  %v3840 = vadd.f32 %v3838, %v3839
  %v3841 = vadd.f32 %v3741, %v3743
  %v3842 = vadd.f32 %v3841, %v3745
  %v3843 = vadd.f32 %v3842, %v3747
  %v3844 = vadd.f32 %v3843, %v3749
  %v3845 = vadd.f32 %v3844, %v3751
  %v3846 = vadd.f32 %v3845, %v3753
  %v3847 = vadd.f32 %v3846, %v3755
  %v3848 = vadd.f32 %v3847, %v3757
  %v3849 = vadd.f32 %v3848, %v3759
  %v3850 = vadd.f32 %v3849, %v3761
  %v3851 = vadd.f32 %v3850, %v3763
  %v3852 = vadd.f32 %v3851, %v3765
  %v3853 = vadd.f32 %v3852, %v3767
  %v3854 = vadd.f32 %v3853, %v3769
  %v3855 = vadd.f32 %v3854, %v3771
  %v3856 = vadd.f32 %v3855, %v3773
  %v3857 = vadd.f32 %v3856, %v3775
  %v3858 = vadd.f32 %v3857, %v3777
  %v3859 = vadd.f32 %v3858, %v3779
  %v3860 = vadd.f32 %v3859, %v3781
  %v3861 = vadd.f32 %v3860, %v3783
  %v3862 = vadd.f32 %v3861, %v3785
  %v3863 = vadd.f32 %v3862, %v3787
  %v3864 = vadd.f32 %v3863, %v3789
  %v3865 = vadd.f32 %v3864, %v3791
  %v3866 = vadd.f32 %v3865, %v3793
  %v3867 = vadd.f32 %v3866, %v3795
  %v3868 = vadd.f32 %v3867, %v3797
  %v3869 = vadd.f32 %v3868, %v3799
  %v3870 = vadd.f32 %v3869, %v3801
  %v3871 = vadd.f32 %v3870, %v3803
  %v3872 = vrot.slane %v3871, 4
  %v3873 = vadd.f32 %v3871, %v3872
  %v3874 = vrot.slane %v3873, 2
  %v3875 = vadd.f32 %v3873, %v3874
  %v3876 = vrot.slane %v3875, 1
  %v3877 = vadd.f32 %v3875, %v3876
  %v3878 = vmul.f32 %v3840, 0.00390625
  %v3879 = vmul.f32 %v3877, 0.00390625
  %v3880 = vmul.f32 %v3738, %v3738
  %v3881 = vmul.f32 %v3739, %v3739
  %v3882 = vsub.f32 %v3878, %v3880
  %v3883 = vsub.f32 %v3879, %v3881
  %v3884 = vmax.f32 %v3882, 0.0
  %v3885 = vmax.f32 %v3883, 0.0
  %v3886 = vadd.f32 %v3884, 1e-05
  %v3887 = vadd.f32 %v3885, 1e-05
  %v3888 = vrsqrt.pop %v3886
  %v3889 = vrsqrt.pop %v3887
  %v3892 = vcombine.low %v3888, %v3889
  %v3894 = vunpack.c.l.s4 1966171168
  %v3895 = vunpack.c.0.s8 %v3894
  %v3896 = vlaneseq
  %v3897 = vshrl.u32 %v3896, 7
  %v3898 = vsub.s32 %v3895, %v3897
  %v3899 = vrot.slane %v3892, %v3898
  %v3901 = vunpack.c.l.s4 1966171168
  %v3902 = vunpack.c.0.s8 %v3901
  %v3903 = vlaneseq
  %v3904 = vshrl.u32 %v3903, 7
  %v3905 = vsub.s32 %v3902, %v3904
  %v3906 = vrot.slane %v3899, %v3905
  %v3908 = vmul.f32 %v3661, %v3906
  %v3910 = vlaneseq
  %v3911 = vshrl.u32 %v3910, 7
  %v3912 = vsub.s32 0, %v3911
  %v3913 = vrot.slane %v3908, %v3912
  %v3914 = vlaneseq
  %v3915 = vshrl.u32 %v3914, 7
  %v3916 = vsub.s32 1, %v3915
  %v3917 = vrot.slane %v3908, %v3916
  %v3920 = vmul.f32 %v3738, %v3913
  %v3921 = vmul.f32 %v3739, %v3917
  %v3924 = vcombine.low %v3920, %v3921
  %v3926 = vunpack.c.l.s4 1966171168
  %v3927 = vunpack.c.0.s8 %v3926
  %v3928 = vlaneseq
  %v3929 = vshrl.u32 %v3928, 7
  %v3930 = vsub.s32 %v3927, %v3929
  %v3931 = vrot.slane %v3924, %v3930
  %v3933 = vunpack.c.l.s4 1966171168
  %v3934 = vunpack.c.0.s8 %v3933
  %v3935 = vlaneseq
  %v3936 = vshrl.u32 %v3935, 7
  %v3937 = vsub.s32 %v3934, %v3936
  %v3938 = vrot.slane %v3931, %v3937
  %v3940 = vsub.f32 %v3663, %v3938
  %v3941 = vmul.f32 %v3502, %v3913
  %v3942 = vmul.f32 %v3504, %v3917
  %v3943 = vmul.f32 %v3506, %v3913
  %v3944 = vmul.f32 %v3508, %v3917
  %v3945 = vmul.f32 %v3512, %v3913
  %v3946 = vmul.f32 %v3514, %v3917
  %v3947 = vmul.f32 %v3516, %v3913
  %v3948 = vmul.f32 %v3518, %v3917
  %v3949 = vmul.f32 %v3522, %v3913
  %v3950 = vmul.f32 %v3524, %v3917
  %v3951 = vmul.f32 %v3526, %v3913
  %v3952 = vmul.f32 %v3528, %v3917
  %v3953 = vmul.f32 %v3532, %v3913
  %v3954 = vmul.f32 %v3534, %v3917
  %v3955 = vmul.f32 %v3536, %v3913
  %v3956 = vmul.f32 %v3538, %v3917
  %v3957 = vmul.f32 %v3542, %v3913
  %v3958 = vmul.f32 %v3544, %v3917
  %v3959 = vmul.f32 %v3546, %v3913
  %v3960 = vmul.f32 %v3548, %v3917
  %v3961 = vmul.f32 %v3552, %v3913
  %v3962 = vmul.f32 %v3554, %v3917
  %v3963 = vmul.f32 %v3556, %v3913
  %v3964 = vmul.f32 %v3558, %v3917
  %v3965 = vmul.f32 %v3562, %v3913
  %v3966 = vmul.f32 %v3564, %v3917
  %v3967 = vmul.f32 %v3566, %v3913
  %v3968 = vmul.f32 %v3568, %v3917
  %v3969 = vmul.f32 %v3572, %v3913
  %v3970 = vmul.f32 %v3574, %v3917
  %v3971 = vmul.f32 %v3576, %v3913
  %v3972 = vmul.f32 %v3578, %v3917
  %v3973 = vmul.f32 %v3582, %v3913
  %v3974 = vmul.f32 %v3584, %v3917
  %v3975 = vmul.f32 %v3586, %v3913
  %v3976 = vmul.f32 %v3588, %v3917
  %v3977 = vmul.f32 %v3592, %v3913
  %v3978 = vmul.f32 %v3594, %v3917
  %v3979 = vmul.f32 %v3596, %v3913
  %v3980 = vmul.f32 %v3598, %v3917
  %v3981 = vmul.f32 %v3602, %v3913
  %v3982 = vmul.f32 %v3604, %v3917
  %v3983 = vmul.f32 %v3606, %v3913
  %v3984 = vmul.f32 %v3608, %v3917
  %v3985 = vmul.f32 %v3612, %v3913
  %v3986 = vmul.f32 %v3614, %v3917
  %v3987 = vmul.f32 %v3616, %v3913
  %v3988 = vmul.f32 %v3618, %v3917
  %v3989 = vmul.f32 %v3622, %v3913
  %v3990 = vmul.f32 %v3624, %v3917
  %v3991 = vmul.f32 %v3626, %v3913
  %v3992 = vmul.f32 %v3628, %v3917
  %v3993 = vmul.f32 %v3632, %v3913
  %v3994 = vmul.f32 %v3634, %v3917
  %v3995 = vmul.f32 %v3636, %v3913
  %v3996 = vmul.f32 %v3638, %v3917
  %v3997 = vmul.f32 %v3642, %v3913
  %v3998 = vmul.f32 %v3644, %v3917
  %v3999 = vmul.f32 %v3646, %v3913
  %v4000 = vmul.f32 %v3648, %v3917
  %v4001 = vmul.f32 %v3652, %v3913
  %v4002 = vmul.f32 %v3654, %v3917
  %v4003 = vmul.f32 %v3656, %v3913
  %v4004 = vmul.f32 %v3658, %v3917
  %v4006 = vlaneseq
  %v4007 = vshrl.u32 %v4006, 7
  %v4008 = vsub.s32 0, %v4007
  %v4009 = vrot.slane %v3940, %v4008
  %v4010 = vlaneseq
  %v4011 = vshrl.u32 %v4010, 7
  %v4012 = vsub.s32 1, %v4011
  %v4013 = vrot.slane %v3940, %v4012
  %v4016 = vadd.f32 %v3941, %v4009
  %v4017 = vadd.f32 %v3942, %v4013
  %v4018 = vadd.f32 %v3943, %v4009
  %v4019 = vadd.f32 %v3944, %v4013
  %v4020 = vadd.f32 %v3945, %v4009
  %v4021 = vadd.f32 %v3946, %v4013
  %v4022 = vadd.f32 %v3947, %v4009
  %v4023 = vadd.f32 %v3948, %v4013
  %v4024 = vadd.f32 %v3949, %v4009
  %v4025 = vadd.f32 %v3950, %v4013
  %v4026 = vadd.f32 %v3951, %v4009
  %v4027 = vadd.f32 %v3952, %v4013
  %v4028 = vadd.f32 %v3953, %v4009
  %v4029 = vadd.f32 %v3954, %v4013
  %v4030 = vadd.f32 %v3955, %v4009
  %v4031 = vadd.f32 %v3956, %v4013
  %v4032 = vadd.f32 %v3957, %v4009
  %v4033 = vadd.f32 %v3958, %v4013
  %v4034 = vadd.f32 %v3959, %v4009
  %v4035 = vadd.f32 %v3960, %v4013
  %v4036 = vadd.f32 %v3961, %v4009
  %v4037 = vadd.f32 %v3962, %v4013
  %v4038 = vadd.f32 %v3963, %v4009
  %v4039 = vadd.f32 %v3964, %v4013
  %v4040 = vadd.f32 %v3965, %v4009
  %v4041 = vadd.f32 %v3966, %v4013
  %v4042 = vadd.f32 %v3967, %v4009
  %v4043 = vadd.f32 %v3968, %v4013
  %v4044 = vadd.f32 %v3969, %v4009
  %v4045 = vadd.f32 %v3970, %v4013
  %v4046 = vadd.f32 %v3971, %v4009
  %v4047 = vadd.f32 %v3972, %v4013
  %v4048 = vadd.f32 %v3973, %v4009
  %v4049 = vadd.f32 %v3974, %v4013
  %v4050 = vadd.f32 %v3975, %v4009
  %v4051 = vadd.f32 %v3976, %v4013
  %v4052 = vadd.f32 %v3977, %v4009
  %v4053 = vadd.f32 %v3978, %v4013
  %v4054 = vadd.f32 %v3979, %v4009
  %v4055 = vadd.f32 %v3980, %v4013
  %v4056 = vadd.f32 %v3981, %v4009
  %v4057 = vadd.f32 %v3982, %v4013
  %v4058 = vadd.f32 %v3983, %v4009
  %v4059 = vadd.f32 %v3984, %v4013
  %v4060 = vadd.f32 %v3985, %v4009
  %v4061 = vadd.f32 %v3986, %v4013
  %v4062 = vadd.f32 %v3987, %v4009
  %v4063 = vadd.f32 %v3988, %v4013
  %v4064 = vadd.f32 %v3989, %v4009
  %v4065 = vadd.f32 %v3990, %v4013
  %v4066 = vadd.f32 %v3991, %v4009
  %v4067 = vadd.f32 %v3992, %v4013
  %v4068 = vadd.f32 %v3993, %v4009
  %v4069 = vadd.f32 %v3994, %v4013
  %v4070 = vadd.f32 %v3995, %v4009
  %v4071 = vadd.f32 %v3996, %v4013
  %v4072 = vadd.f32 %v3997, %v4009
  %v4073 = vadd.f32 %v3998, %v4013
  %v4074 = vadd.f32 %v3999, %v4009
  %v4075 = vadd.f32 %v4000, %v4013
  %v4076 = vadd.f32 %v4001, %v4009
  %v4077 = vadd.f32 %v4002, %v4013
  %v4078 = vadd.f32 %v4003, %v4009
  %v4079 = vadd.f32 %v4004, %v4013
  %v4080 = vmul.f32 %v4016, 0.5
  %v4081 = vmul.f32 %v4017, 0.5
  %v4082 = vmul.f32 %v4018, 0.5
  %v4083 = vmul.f32 %v4019, 0.5
  %v4084 = vmul.f32 %v4020, 0.5
  %v4085 = vmul.f32 %v4021, 0.5
  %v4086 = vmul.f32 %v4022, 0.5
  %v4087 = vmul.f32 %v4023, 0.5
  %v4088 = vmul.f32 %v4024, 0.5
  %v4089 = vmul.f32 %v4025, 0.5
  %v4090 = vmul.f32 %v4026, 0.5
  %v4091 = vmul.f32 %v4027, 0.5
  %v4092 = vmul.f32 %v4028, 0.5
  %v4093 = vmul.f32 %v4029, 0.5
  %v4094 = vmul.f32 %v4030, 0.5
  %v4095 = vmul.f32 %v4031, 0.5
  %v4096 = vmul.f32 %v4032, 0.5
  %v4097 = vmul.f32 %v4033, 0.5
  %v4098 = vmul.f32 %v4034, 0.5
  %v4099 = vmul.f32 %v4035, 0.5
  %v4100 = vmul.f32 %v4036, 0.5
  %v4101 = vmul.f32 %v4037, 0.5
  %v4102 = vmul.f32 %v4038, 0.5
  %v4103 = vmul.f32 %v4039, 0.5
  %v4104 = vmul.f32 %v4040, 0.5
  %v4105 = vmul.f32 %v4041, 0.5
  %v4106 = vmul.f32 %v4042, 0.5
  %v4107 = vmul.f32 %v4043, 0.5
  %v4108 = vmul.f32 %v4044, 0.5
  %v4109 = vmul.f32 %v4045, 0.5
  %v4110 = vmul.f32 %v4046, 0.5
  %v4111 = vmul.f32 %v4047, 0.5
  %v4112 = vmul.f32 %v4048, 0.5
  %v4113 = vmul.f32 %v4049, 0.5
  %v4114 = vmul.f32 %v4050, 0.5
  %v4115 = vmul.f32 %v4051, 0.5
  %v4116 = vmul.f32 %v4052, 0.5
  %v4117 = vmul.f32 %v4053, 0.5
  %v4118 = vmul.f32 %v4054, 0.5
  %v4119 = vmul.f32 %v4055, 0.5
  %v4120 = vmul.f32 %v4056, 0.5
  %v4121 = vmul.f32 %v4057, 0.5
  %v4122 = vmul.f32 %v4058, 0.5
  %v4123 = vmul.f32 %v4059, 0.5
  %v4124 = vmul.f32 %v4060, 0.5
  %v4125 = vmul.f32 %v4061, 0.5
  %v4126 = vmul.f32 %v4062, 0.5
  %v4127 = vmul.f32 %v4063, 0.5
  %v4128 = vmul.f32 %v4064, 0.5
  %v4129 = vmul.f32 %v4065, 0.5
  %v4130 = vmul.f32 %v4066, 0.5
  %v4131 = vmul.f32 %v4067, 0.5
  %v4132 = vmul.f32 %v4068, 0.5
  %v4133 = vmul.f32 %v4069, 0.5
  %v4134 = vmul.f32 %v4070, 0.5
  %v4135 = vmul.f32 %v4071, 0.5
  %v4136 = vmul.f32 %v4072, 0.5
  %v4137 = vmul.f32 %v4073, 0.5
  %v4138 = vmul.f32 %v4074, 0.5
  %v4139 = vmul.f32 %v4075, 0.5
  %v4140 = vmul.f32 %v4076, 0.5
  %v4141 = vmul.f32 %v4077, 0.5
  %v4142 = vmul.f32 %v4078, 0.5
  %v4143 = vmul.f32 %v4079, 0.5
  %v4144 = vmul.f32 %v4016, 0.70710677
  %v4145 = vmul.f32 %v4017, 0.70710677
  %v4146 = vmul.f32 %v4018, 0.70710677
  %v4147 = vmul.f32 %v4019, 0.70710677
  %v4148 = vmul.f32 %v4020, 0.70710677
  %v4149 = vmul.f32 %v4021, 0.70710677
  %v4150 = vmul.f32 %v4022, 0.70710677
  %v4151 = vmul.f32 %v4023, 0.70710677
  %v4152 = vmul.f32 %v4024, 0.70710677
  %v4153 = vmul.f32 %v4025, 0.70710677
  %v4154 = vmul.f32 %v4026, 0.70710677
  %v4155 = vmul.f32 %v4027, 0.70710677
  %v4156 = vmul.f32 %v4028, 0.70710677
  %v4157 = vmul.f32 %v4029, 0.70710677
  %v4158 = vmul.f32 %v4030, 0.70710677
  %v4159 = vmul.f32 %v4031, 0.70710677
  %v4160 = vmul.f32 %v4032, 0.70710677
  %v4161 = vmul.f32 %v4033, 0.70710677
  %v4162 = vmul.f32 %v4034, 0.70710677
  %v4163 = vmul.f32 %v4035, 0.70710677
  %v4164 = vmul.f32 %v4036, 0.70710677
  %v4165 = vmul.f32 %v4037, 0.70710677
  %v4166 = vmul.f32 %v4038, 0.70710677
  %v4167 = vmul.f32 %v4039, 0.70710677
  %v4168 = vmul.f32 %v4040, 0.70710677
  %v4169 = vmul.f32 %v4041, 0.70710677
  %v4170 = vmul.f32 %v4042, 0.70710677
  %v4171 = vmul.f32 %v4043, 0.70710677
  %v4172 = vmul.f32 %v4044, 0.70710677
  %v4173 = vmul.f32 %v4045, 0.70710677
  %v4174 = vmul.f32 %v4046, 0.70710677
  %v4175 = vmul.f32 %v4047, 0.70710677
  %v4176 = vmul.f32 %v4048, 0.70710677
  %v4177 = vmul.f32 %v4049, 0.70710677
  %v4178 = vmul.f32 %v4050, 0.70710677
  %v4179 = vmul.f32 %v4051, 0.70710677
  %v4180 = vmul.f32 %v4052, 0.70710677
  %v4181 = vmul.f32 %v4053, 0.70710677
  %v4182 = vmul.f32 %v4054, 0.70710677
  %v4183 = vmul.f32 %v4055, 0.70710677
  %v4184 = vmul.f32 %v4056, 0.70710677
  %v4185 = vmul.f32 %v4057, 0.70710677
  %v4186 = vmul.f32 %v4058, 0.70710677
  %v4187 = vmul.f32 %v4059, 0.70710677
  %v4188 = vmul.f32 %v4060, 0.70710677
  %v4189 = vmul.f32 %v4061, 0.70710677
  %v4190 = vmul.f32 %v4062, 0.70710677
  %v4191 = vmul.f32 %v4063, 0.70710677
  %v4192 = vmul.f32 %v4064, 0.70710677
  %v4193 = vmul.f32 %v4065, 0.70710677
  %v4194 = vmul.f32 %v4066, 0.70710677
  %v4195 = vmul.f32 %v4067, 0.70710677
  %v4196 = vmul.f32 %v4068, 0.70710677
  %v4197 = vmul.f32 %v4069, 0.70710677
  %v4198 = vmul.f32 %v4070, 0.70710677
  %v4199 = vmul.f32 %v4071, 0.70710677
  %v4200 = vmul.f32 %v4072, 0.70710677
  %v4201 = vmul.f32 %v4073, 0.70710677
  %v4202 = vmul.f32 %v4074, 0.70710677
  %v4203 = vmul.f32 %v4075, 0.70710677
  %v4204 = vmul.f32 %v4076, 0.70710677
  %v4205 = vmul.f32 %v4077, 0.70710677
  %v4206 = vmul.f32 %v4078, 0.70710677
  %v4207 = vmul.f32 %v4079, 0.70710677
  %v4208 = verf.f32.pop %v4144
  %v4209 = verf.f32.pop %v4145
  %v4210 = verf.f32.pop %v4146
  %v4211 = verf.f32.pop %v4147
  %v4212 = verf.f32.pop %v4148
  %v4213 = verf.f32.pop %v4149
  %v4214 = verf.f32.pop %v4150
  %v4215 = verf.f32.pop %v4151
  %v4216 = verf.f32.pop %v4152
  %v4217 = verf.f32.pop %v4153
  %v4218 = verf.f32.pop %v4154
  %v4219 = verf.f32.pop %v4155
  %v4220 = verf.f32.pop %v4156
  %v4221 = verf.f32.pop %v4157
  %v4222 = verf.f32.pop %v4158
  %v4223 = verf.f32.pop %v4159
  %v4224 = verf.f32.pop %v4160
  %v4225 = verf.f32.pop %v4161
  %v4226 = verf.f32.pop %v4162
  %v4227 = verf.f32.pop %v4163
  %v4228 = verf.f32.pop %v4164
  %v4229 = verf.f32.pop %v4165
  %v4230 = verf.f32.pop %v4166
  %v4231 = verf.f32.pop %v4167
  %v4232 = verf.f32.pop %v4168
  %v4233 = verf.f32.pop %v4169
  %v4234 = verf.f32.pop %v4170
  %v4235 = verf.f32.pop %v4171
  %v4236 = verf.f32.pop %v4172
  %v4237 = verf.f32.pop %v4173
  %v4238 = verf.f32.pop %v4174
  %v4239 = verf.f32.pop %v4175
  %v4240 = verf.f32.pop %v4176
  %v4241 = verf.f32.pop %v4177
  %v4242 = verf.f32.pop %v4178
  %v4243 = verf.f32.pop %v4179
  %v4244 = verf.f32.pop %v4180
  %v4245 = verf.f32.pop %v4181
  %v4246 = verf.f32.pop %v4182
  %v4247 = verf.f32.pop %v4183
  %v4248 = verf.f32.pop %v4184
  %v4249 = verf.f32.pop %v4185
  %v4250 = verf.f32.pop %v4186
  %v4251 = verf.f32.pop %v4187
  %v4252 = verf.f32.pop %v4188
  %v4253 = verf.f32.pop %v4189
  %v4254 = verf.f32.pop %v4190
  %v4255 = verf.f32.pop %v4191
  %v4256 = verf.f32.pop %v4192
  %v4257 = verf.f32.pop %v4193
  %v4258 = verf.f32.pop %v4194
  %v4259 = verf.f32.pop %v4195
  %v4260 = verf.f32.pop %v4196
  %v4261 = verf.f32.pop %v4197
  %v4262 = verf.f32.pop %v4198
  %v4263 = verf.f32.pop %v4199
  %v4264 = verf.f32.pop %v4200
  %v4265 = verf.f32.pop %v4201
  %v4266 = verf.f32.pop %v4202
  %v4267 = verf.f32.pop %v4203
  %v4268 = verf.f32.pop %v4204
  %v4269 = verf.f32.pop %v4205
  %v4270 = verf.f32.pop %v4206
  %v4271 = verf.f32.pop %v4207
  %v4272 = vadd.f32 %v4208, 1.0
  %v4273 = vadd.f32 %v4209, 1.0
  %v4274 = vadd.f32 %v4210, 1.0
  %v4275 = vadd.f32 %v4211, 1.0
  %v4276 = vadd.f32 %v4212, 1.0
  %v4277 = vadd.f32 %v4213, 1.0
  %v4278 = vadd.f32 %v4214, 1.0
  %v4279 = vadd.f32 %v4215, 1.0
  %v4280 = vadd.f32 %v4216, 1.0
  %v4281 = vadd.f32 %v4217, 1.0
  %v4282 = vadd.f32 %v4218, 1.0
  %v4283 = vadd.f32 %v4219, 1.0
  %v4284 = vadd.f32 %v4220, 1.0
  %v4285 = vadd.f32 %v4221, 1.0
  %v4286 = vadd.f32 %v4222, 1.0
  %v4287 = vadd.f32 %v4223, 1.0
  %v4288 = vadd.f32 %v4224, 1.0
  %v4289 = vadd.f32 %v4225, 1.0
  %v4290 = vadd.f32 %v4226, 1.0
  %v4291 = vadd.f32 %v4227, 1.0
  %v4292 = vadd.f32 %v4228, 1.0
  %v4293 = vadd.f32 %v4229, 1.0
  %v4294 = vadd.f32 %v4230, 1.0
  %v4295 = vadd.f32 %v4231, 1.0
  %v4296 = vadd.f32 %v4232, 1.0
  %v4297 = vadd.f32 %v4233, 1.0
  %v4298 = vadd.f32 %v4234, 1.0
  %v4299 = vadd.f32 %v4235, 1.0
  %v4300 = vadd.f32 %v4236, 1.0
  %v4301 = vadd.f32 %v4237, 1.0
  %v4302 = vadd.f32 %v4238, 1.0
  %v4303 = vadd.f32 %v4239, 1.0
  %v4304 = vadd.f32 %v4240, 1.0
  %v4305 = vadd.f32 %v4241, 1.0
  %v4306 = vadd.f32 %v4242, 1.0
  %v4307 = vadd.f32 %v4243, 1.0
  %v4308 = vadd.f32 %v4244, 1.0
  %v4309 = vadd.f32 %v4245, 1.0
  %v4310 = vadd.f32 %v4246, 1.0
  %v4311 = vadd.f32 %v4247, 1.0
  %v4312 = vadd.f32 %v4248, 1.0
  %v4313 = vadd.f32 %v4249, 1.0
  %v4314 = vadd.f32 %v4250, 1.0
  %v4315 = vadd.f32 %v4251, 1.0
  %v4316 = vadd.f32 %v4252, 1.0
  %v4317 = vadd.f32 %v4253, 1.0
  %v4318 = vadd.f32 %v4254, 1.0
  %v4319 = vadd.f32 %v4255, 1.0
  %v4320 = vadd.f32 %v4256, 1.0
  %v4321 = vadd.f32 %v4257, 1.0
  %v4322 = vadd.f32 %v4258, 1.0
  %v4323 = vadd.f32 %v4259, 1.0
  %v4324 = vadd.f32 %v4260, 1.0
  %v4325 = vadd.f32 %v4261, 1.0
  %v4326 = vadd.f32 %v4262, 1.0
  %v4327 = vadd.f32 %v4263, 1.0
  %v4328 = vadd.f32 %v4264, 1.0
  %v4329 = vadd.f32 %v4265, 1.0
  %v4330 = vadd.f32 %v4266, 1.0
  %v4331 = vadd.f32 %v4267, 1.0
  %v4332 = vadd.f32 %v4268, 1.0
  %v4333 = vadd.f32 %v4269, 1.0
  %v4334 = vadd.f32 %v4270, 1.0
  %v4335 = vadd.f32 %v4271, 1.0
  %v4336 = vmul.f32 %v4080, %v4272
  %v4337 = vmul.f32 %v4081, %v4273
  %v4338 = vmul.f32 %v4082, %v4274
  %v4339 = vmul.f32 %v4083, %v4275
  %v4340 = vmul.f32 %v4084, %v4276
  %v4341 = vmul.f32 %v4085, %v4277
  %v4342 = vmul.f32 %v4086, %v4278
  %v4343 = vmul.f32 %v4087, %v4279
  %v4344 = vmul.f32 %v4088, %v4280
  %v4345 = vmul.f32 %v4089, %v4281
  %v4346 = vmul.f32 %v4090, %v4282
  %v4347 = vmul.f32 %v4091, %v4283
  %v4348 = vmul.f32 %v4092, %v4284
  %v4349 = vmul.f32 %v4093, %v4285
  %v4350 = vmul.f32 %v4094, %v4286
  %v4351 = vmul.f32 %v4095, %v4287
  %v4352 = vmul.f32 %v4096, %v4288
  %v4353 = vmul.f32 %v4097, %v4289
  %v4354 = vmul.f32 %v4098, %v4290
  %v4355 = vmul.f32 %v4099, %v4291
  %v4356 = vmul.f32 %v4100, %v4292
  %v4357 = vmul.f32 %v4101, %v4293
  %v4358 = vmul.f32 %v4102, %v4294
  %v4359 = vmul.f32 %v4103, %v4295
  %v4360 = vmul.f32 %v4104, %v4296
  %v4361 = vmul.f32 %v4105, %v4297
  %v4362 = vmul.f32 %v4106, %v4298
  %v4363 = vmul.f32 %v4107, %v4299
  %v4364 = vmul.f32 %v4108, %v4300
  %v4365 = vmul.f32 %v4109, %v4301
  %v4366 = vmul.f32 %v4110, %v4302
  %v4367 = vmul.f32 %v4111, %v4303
  %v4368 = vmul.f32 %v4112, %v4304
  %v4369 = vmul.f32 %v4113, %v4305
  %v4370 = vmul.f32 %v4114, %v4306
  %v4371 = vmul.f32 %v4115, %v4307
  %v4372 = vmul.f32 %v4116, %v4308
  %v4373 = vmul.f32 %v4117, %v4309
  %v4374 = vmul.f32 %v4118, %v4310
  %v4375 = vmul.f32 %v4119, %v4311
  %v4376 = vmul.f32 %v4120, %v4312
  %v4377 = vmul.f32 %v4121, %v4313
  %v4378 = vmul.f32 %v4122, %v4314
  %v4379 = vmul.f32 %v4123, %v4315
  %v4380 = vmul.f32 %v4124, %v4316
  %v4381 = vmul.f32 %v4125, %v4317
  %v4382 = vmul.f32 %v4126, %v4318
  %v4383 = vmul.f32 %v4127, %v4319
  %v4384 = vmul.f32 %v4128, %v4320
  %v4385 = vmul.f32 %v4129, %v4321
  %v4386 = vmul.f32 %v4130, %v4322
  %v4387 = vmul.f32 %v4131, %v4323
  %v4388 = vmul.f32 %v4132, %v4324
  %v4389 = vmul.f32 %v4133, %v4325
  %v4390 = vmul.f32 %v4134, %v4326
  %v4391 = vmul.f32 %v4135, %v4327
  %v4392 = vmul.f32 %v4136, %v4328
  %v4393 = vmul.f32 %v4137, %v4329
  %v4394 = vmul.f32 %v4138, %v4330
  %v4395 = vmul.f32 %v4139, %v4331
  %v4396 = vmul.f32 %v4140, %v4332
  %v4397 = vmul.f32 %v4141, %v4333
  %v4398 = vmul.f32 %v4142, %v4334
  %v4399 = vmul.f32 %v4143, %v4335
  %v4400 = vpack.c.bf16 %v4338, %v4336
  %v4401 = vpack.c.bf16 %v4339, %v4337
  %v4402 = vpack.c.bf16 %v4342, %v4340
  %v4403 = vpack.c.bf16 %v4343, %v4341
  %v4404 = vpack.c.bf16 %v4346, %v4344
  %v4405 = vpack.c.bf16 %v4347, %v4345
  %v4406 = vpack.c.bf16 %v4350, %v4348
  %v4407 = vpack.c.bf16 %v4351, %v4349
  %v4408 = vpack.c.bf16 %v4354, %v4352
  %v4409 = vpack.c.bf16 %v4355, %v4353
  %v4410 = vpack.c.bf16 %v4358, %v4356
  %v4411 = vpack.c.bf16 %v4359, %v4357
  %v4412 = vpack.c.bf16 %v4362, %v4360
  %v4413 = vpack.c.bf16 %v4363, %v4361
  %v4414 = vpack.c.bf16 %v4366, %v4364
  %v4415 = vpack.c.bf16 %v4367, %v4365
  %v4416 = vpack.c.bf16 %v4370, %v4368
  %v4417 = vpack.c.bf16 %v4371, %v4369
  %v4418 = vpack.c.bf16 %v4374, %v4372
  %v4419 = vpack.c.bf16 %v4375, %v4373
  %v4420 = vpack.c.bf16 %v4378, %v4376
  %v4421 = vpack.c.bf16 %v4379, %v4377
  %v4422 = vpack.c.bf16 %v4382, %v4380
  %v4423 = vpack.c.bf16 %v4383, %v4381
  %v4424 = vpack.c.bf16 %v4386, %v4384
  %v4425 = vpack.c.bf16 %v4387, %v4385
  %v4426 = vpack.c.bf16 %v4390, %v4388
  %v4427 = vpack.c.bf16 %v4391, %v4389
  %v4428 = vpack.c.bf16 %v4394, %v4392
  %v4429 = vpack.c.bf16 %v4395, %v4393
  %v4430 = vpack.c.bf16 %v4398, %v4396
  %v4431 = vpack.c.bf16 %v4399, %v4397
  %s4432 = scalar_lea.vmem %s6, 2
  %v4433 = vld [vmem:[%s4432] ss:$4 sm:$0xff]
  %v4434 = vld [vmem:[%s5] sm:$0xff]
  %v4435 = vld [vmem:[%s5 + $0x8] sm:$0xff]
  %v4436 = vld [vmem:[%s5 + $0x10] sm:$0xff]
  %v4437 = vld [vmem:[%s5 + $0x18] sm:$0xf]
  %v4438 = vld [vmem:[%s5 + $0x1c] sm:$0xff]
  %v4439 = vld [vmem:[%s5 + $0x24] sm:$0xff]
  %v4440 = vld [vmem:[%s5 + $0x2c] sm:$0xff]
  %v4441 = vld [vmem:[%s5 + $0x34] sm:$0xf]
  %v4442 = vld [vmem:[%s5 + $0x38] sm:$0xff]
  %v4443 = vld [vmem:[%s5 + $0x40] sm:$0xff]
  %v4444 = vld [vmem:[%s5 + $0x48] sm:$0xff]
  %v4445 = vld [vmem:[%s5 + $0x50] sm:$0xf]
  %v4446 = vld [vmem:[%s5 + $0x54] sm:$0xff]
  %v4447 = vld [vmem:[%s5 + $0x5c] sm:$0xff]
  %v4448 = vld [vmem:[%s5 + $0x64] sm:$0xff]
  %v4449 = vld [vmem:[%s5 + $0x6c] sm:$0xf]
  %v4450 = vld [vmem:[%s5 + $0x70] sm:$0xff]
  %v4451 = vld [vmem:[%s5 + $0x78] sm:$0xff]
  %v4452 = vld [vmem:[%s5 + $0x80] sm:$0xff]
  %v4453 = vld [vmem:[%s5 + $0x88] sm:$0xf]
  %v4454 = vld [vmem:[%s5 + $0x8c] sm:$0xff]
  %v4455 = vld [vmem:[%s5 + $0x94] sm:$0xff]
  %v4456 = vld [vmem:[%s5 + $0x9c] sm:$0xff]
  %v4457 = vld [vmem:[%s5 + $0xa4] sm:$0xf]
  %v4458 = vld [vmem:[%s5 + $0xa8] sm:$0xff]
  %v4459 = vld [vmem:[%s5 + $0xb0] sm:$0xff]
  %v4460 = vld [vmem:[%s5 + $0xb8] sm:$0xff]
  %v4461 = vld [vmem:[%s5 + $0xc0] sm:$0xf]
  %v4462 = vld [vmem:[%s5 + $0xc4] sm:$0xff]
  %v4463 = vld [vmem:[%s5 + $0xcc] sm:$0xff]
  %v4464 = vld [vmem:[%s5 + $0xd4] sm:$0xff]
  %v4465 = vld [vmem:[%s5 + $0xdc] sm:$0xf]
  %v4466 = vld [vmem:[%s5 + $0xe0] sm:$0xff]
  %v4467 = vld [vmem:[%s5 + $0xe8] sm:$0xff]
  %v4468 = vld [vmem:[%s5 + $0xf0] sm:$0xff]
  %v4469 = vld [vmem:[%s5 + $0xf8] sm:$0xf]
  %v4470 = vld [vmem:[%s5 + $0xfc] sm:$0xff]
  %v4471 = vld [vmem:[%s5 + $0x104] sm:$0xff]
  %v4472 = vld [vmem:[%s5 + $0x10c] sm:$0xff]
  %v4473 = vld [vmem:[%s5 + $0x114] sm:$0xf]
  %v4474 = vld [vmem:[%s5 + $0x118] sm:$0xff]
  %v4475 = vld [vmem:[%s5 + $0x120] sm:$0xff]
  %v4476 = vld [vmem:[%s5 + $0x128] sm:$0xff]
  %v4477 = vld [vmem:[%s5 + $0x130] sm:$0xf]
  %v4478 = vld [vmem:[%s5 + $0x134] sm:$0xff]
  %v4479 = vld [vmem:[%s5 + $0x13c] sm:$0xff]
  %v4480 = vld [vmem:[%s5 + $0x144] sm:$0xff]
  %v4481 = vld [vmem:[%s5 + $0x14c] sm:$0xf]
  %v4482 = vld [vmem:[%s5 + $0x150] sm:$0xff]
  %v4483 = vld [vmem:[%s5 + $0x158] sm:$0xff]
  %v4484 = vld [vmem:[%s5 + $0x160] sm:$0xff]
  %v4485 = vld [vmem:[%s5 + $0x168] sm:$0xf]
  %v4486 = vld [vmem:[%s5 + $0x16c] sm:$0xff]
  %v4487 = vld [vmem:[%s5 + $0x174] sm:$0xff]
  %v4488 = vld [vmem:[%s5 + $0x17c] sm:$0xff]
  %v4489 = vld [vmem:[%s5 + $0x184] sm:$0xf]
  %v4490 = vld [vmem:[%s5 + $0x188] sm:$0xff]
  %v4491 = vld [vmem:[%s5 + $0x190] sm:$0xff]
  %v4492 = vld [vmem:[%s5 + $0x198] sm:$0xff]
  %v4493 = vld [vmem:[%s5 + $0x1a0] sm:$0xf]
  %v4494 = vld [vmem:[%s5 + $0x1a4] sm:$0xff]
  %v4495 = vld [vmem:[%s5 + $0x1ac] sm:$0xff]
  %v4496 = vld [vmem:[%s5 + $0x1b4] sm:$0xff]
  %v4497 = vld [vmem:[%s5 + $0x1bc] sm:$0xf]
  %v4498 = vld [vmem:[%s5 + $0x1c0] sm:$0xff]
  %v4499 = vld [vmem:[%s5 + $0x1c8] sm:$0xff]
  %v4500 = vld [vmem:[%s5 + $0x1d0] sm:$0xff]
  %v4501 = vld [vmem:[%s5 + $0x1d8] sm:$0xf]
  %v4502 = vld [vmem:[%s5 + $0x1dc] sm:$0xff]
  %v4503 = vld [vmem:[%s5 + $0x1e4] sm:$0xff]
  %v4504 = vld [vmem:[%s5 + $0x1ec] sm:$0xff]
  %v4505 = vld [vmem:[%s5 + $0x1f4] sm:$0xf]
  %v4506 = vld [vmem:[%s5 + $0x1f8] sm:$0xff]
  %v4507 = vld [vmem:[%s5 + $0x200] sm:$0xff]
  %v4508 = vld [vmem:[%s5 + $0x208] sm:$0xff]
  %v4509 = vld [vmem:[%s5 + $0x210] sm:$0xf]
  %v4510 = vld [vmem:[%s5 + $0x214] sm:$0xff]
  %v4511 = vld [vmem:[%s5 + $0x21c] sm:$0xff]
  %v4512 = vld [vmem:[%s5 + $0x224] sm:$0xff]
  %v4513 = vld [vmem:[%s5 + $0x22c] sm:$0xf]
  %v4514 = vld [vmem:[%s5 + $0x230] sm:$0xff]
  %v4515 = vld [vmem:[%s5 + $0x238] sm:$0xff]
  %v4516 = vld [vmem:[%s5 + $0x240] sm:$0xff]
  %v4517 = vld [vmem:[%s5 + $0x248] sm:$0xf]
  %v4518 = vld [vmem:[%s5 + $0x24c] sm:$0xff]
  %v4519 = vld [vmem:[%s5 + $0x254] sm:$0xff]
  %v4520 = vld [vmem:[%s5 + $0x25c] sm:$0xff]
  %v4521 = vld [vmem:[%s5 + $0x264] sm:$0xf]
  %v4522 = vld [vmem:[%s5 + $0x268] sm:$0xff]
  %v4523 = vld [vmem:[%s5 + $0x270] sm:$0xff]
  %v4524 = vld [vmem:[%s5 + $0x278] sm:$0xff]
  %v4525 = vld [vmem:[%s5 + $0x280] sm:$0xf]
  %v4526 = vld [vmem:[%s5 + $0x284] sm:$0xff]
  %v4527 = vld [vmem:[%s5 + $0x28c] sm:$0xff]
  %v4528 = vld [vmem:[%s5 + $0x294] sm:$0xff]
  %v4529 = vld [vmem:[%s5 + $0x29c] sm:$0xf]
  %v4530 = vld [vmem:[%s5 + $0x2a0] sm:$0xff]
  %v4531 = vld [vmem:[%s5 + $0x2a8] sm:$0xff]
  %v4532 = vld [vmem:[%s5 + $0x2b0] sm:$0xff]
  %v4533 = vld [vmem:[%s5 + $0x2b8] sm:$0xf]
  %v4534 = vld [vmem:[%s5 + $0x2bc] sm:$0xff]
  %v4535 = vld [vmem:[%s5 + $0x2c4] sm:$0xff]
  %v4536 = vld [vmem:[%s5 + $0x2cc] sm:$0xff]
  %v4537 = vld [vmem:[%s5 + $0x2d4] sm:$0xf]
  %v4538 = vld [vmem:[%s5 + $0x2d8] sm:$0xff]
  %v4539 = vld [vmem:[%s5 + $0x2e0] sm:$0xff]
  %v4540 = vld [vmem:[%s5 + $0x2e8] sm:$0xff]
  %v4541 = vld [vmem:[%s5 + $0x2f0] sm:$0xf]
  %v4542 = vld [vmem:[%s5 + $0x2f4] sm:$0xff]
  %v4543 = vld [vmem:[%s5 + $0x2fc] sm:$0xff]
  %v4544 = vld [vmem:[%s5 + $0x304] sm:$0xff]
  %v4545 = vld [vmem:[%s5 + $0x30c] sm:$0xf]
  %v4546 = vld [vmem:[%s5 + $0x310] sm:$0xff]
  %v4547 = vld [vmem:[%s5 + $0x318] sm:$0xff]
  %v4548 = vld [vmem:[%s5 + $0x320] sm:$0xff]
  %v4549 = vld [vmem:[%s5 + $0x328] sm:$0xf]
  %v4550 = vld [vmem:[%s5 + $0x32c] sm:$0xff]
  %v4551 = vld [vmem:[%s5 + $0x334] sm:$0xff]
  %v4552 = vld [vmem:[%s5 + $0x33c] sm:$0xff]
  %v4553 = vld [vmem:[%s5 + $0x344] sm:$0xf]
  %v4554 = vld [vmem:[%s5 + $0x348] sm:$0xff]
  %v4555 = vld [vmem:[%s5 + $0x350] sm:$0xff]
  %v4556 = vld [vmem:[%s5 + $0x358] sm:$0xff]
  %v4557 = vld [vmem:[%s5 + $0x360] sm:$0xf]
  %v4558 = vld [vmem:[%s5 + $0x364] sm:$0xff]
  %v4559 = vld [vmem:[%s5 + $0x36c] sm:$0xff]
  %v4560 = vld [vmem:[%s5 + $0x374] sm:$0xff]
  %v4561 = vld [vmem:[%s5 + $0x37c] sm:$0xf]
  %v4563 = vlaneseq
  %v4564 = vshrl.u32 %v4563, 7
  %v4565 = vsub.s32 0, %v4564
  %v4566 = vrot.slane %v4433, %v4565
  %v4567 = vlaneseq
  %v4568 = vshrl.u32 %v4567, 7
  %v4569 = vsub.s32 1, %v4568
  %v4570 = vrot.slane %v4433, %v4569
  %v4571 = vlaneseq
  %v4572 = vshrl.u32 %v4571, 7
  %v4573 = vsub.s32 2, %v4572
  %v4574 = vrot.slane %v4433, %v4573
  %v4575 = vlaneseq
  %v4576 = vshrl.u32 %v4575, 7
  %v4577 = vsub.s32 3, %v4576
  %v4578 = vrot.slane %v4433, %v4577
  %v4579 = vlaneseq
  %v4580 = vshrl.u32 %v4579, 7
  %v4581 = vsub.s32 4, %v4580
  %v4582 = vrot.slane %v4433, %v4581
  %v4583 = vlaneseq
  %v4584 = vshrl.u32 %v4583, 7
  %v4585 = vsub.s32 5, %v4584
  %v4586 = vrot.slane %v4433, %v4585
  %v4587 = vlaneseq
  %v4588 = vshrl.u32 %v4587, 7
  %v4589 = vsub.s32 6, %v4588
  %v4590 = vrot.slane %v4433, %v4589
  %v4726 = vunpack.c.l.b16 %v4434
  %v4727 = vunpack.c.h.b16 %v4434
  %v4728 = vunpack.c.l.b16 %v4435
  %v4729 = vunpack.c.h.b16 %v4435
  %v4730 = vunpack.c.l.b16 %v4436
  %v4731 = vunpack.c.h.b16 %v4436
  %v4732 = vunpack.c.l.b16 %v4437
  %v4733 = vunpack.c.l.b16 %v4438
  %v4734 = vunpack.c.h.b16 %v4438
  %v4735 = vunpack.c.l.b16 %v4439
  %v4736 = vunpack.c.h.b16 %v4439
  %v4737 = vunpack.c.l.b16 %v4440
  %v4738 = vunpack.c.h.b16 %v4440
  %v4739 = vunpack.c.l.b16 %v4441
  %v4740 = vunpack.c.l.b16 %v4442
  %v4741 = vunpack.c.h.b16 %v4442
  %v4742 = vunpack.c.l.b16 %v4443
  %v4743 = vunpack.c.h.b16 %v4443
  %v4744 = vunpack.c.l.b16 %v4444
  %v4745 = vunpack.c.h.b16 %v4444
  %v4746 = vunpack.c.l.b16 %v4445
  %v4747 = vunpack.c.l.b16 %v4446
  %v4748 = vunpack.c.h.b16 %v4446
  %v4749 = vunpack.c.l.b16 %v4447
  %v4750 = vunpack.c.h.b16 %v4447
  %v4751 = vunpack.c.l.b16 %v4448
  %v4752 = vunpack.c.h.b16 %v4448
  %v4753 = vunpack.c.l.b16 %v4449
  %v4754 = vunpack.c.l.b16 %v4450
  %v4755 = vunpack.c.h.b16 %v4450
  %v4756 = vunpack.c.l.b16 %v4451
  %v4757 = vunpack.c.h.b16 %v4451
  %v4758 = vunpack.c.l.b16 %v4452
  %v4759 = vunpack.c.h.b16 %v4452
  %v4760 = vunpack.c.l.b16 %v4453
  %v4761 = vunpack.c.l.b16 %v4454
  %v4762 = vunpack.c.h.b16 %v4454
  %v4763 = vunpack.c.l.b16 %v4455
  %v4764 = vunpack.c.h.b16 %v4455
  %v4765 = vunpack.c.l.b16 %v4456
  %v4766 = vunpack.c.h.b16 %v4456
  %v4767 = vunpack.c.l.b16 %v4457
  %v4768 = vunpack.c.l.b16 %v4458
  %v4769 = vunpack.c.h.b16 %v4458
  %v4770 = vunpack.c.l.b16 %v4459
  %v4771 = vunpack.c.h.b16 %v4459
  %v4772 = vunpack.c.l.b16 %v4460
  %v4773 = vunpack.c.h.b16 %v4460
  %v4774 = vunpack.c.l.b16 %v4461
  %v4775 = vunpack.c.l.b16 %v4462
  %v4776 = vunpack.c.h.b16 %v4462
  %v4777 = vunpack.c.l.b16 %v4463
  %v4778 = vunpack.c.h.b16 %v4463
  %v4779 = vunpack.c.l.b16 %v4464
  %v4780 = vunpack.c.h.b16 %v4464
  %v4781 = vunpack.c.l.b16 %v4465
  %v4782 = vunpack.c.l.b16 %v4466
  %v4783 = vunpack.c.h.b16 %v4466
  %v4784 = vunpack.c.l.b16 %v4467
  %v4785 = vunpack.c.h.b16 %v4467
  %v4786 = vunpack.c.l.b16 %v4468
  %v4787 = vunpack.c.h.b16 %v4468
  %v4788 = vunpack.c.l.b16 %v4469
  %v4789 = vunpack.c.l.b16 %v4470
  %v4790 = vunpack.c.h.b16 %v4470
  %v4791 = vunpack.c.l.b16 %v4471
  %v4792 = vunpack.c.h.b16 %v4471
  %v4793 = vunpack.c.l.b16 %v4472
  %v4794 = vunpack.c.h.b16 %v4472
  %v4795 = vunpack.c.l.b16 %v4473
  %v4796 = vunpack.c.l.b16 %v4474
  %v4797 = vunpack.c.h.b16 %v4474
  %v4798 = vunpack.c.l.b16 %v4475
  %v4799 = vunpack.c.h.b16 %v4475
  %v4800 = vunpack.c.l.b16 %v4476
  %v4801 = vunpack.c.h.b16 %v4476
  %v4802 = vunpack.c.l.b16 %v4477
  %v4803 = vunpack.c.l.b16 %v4478
  %v4804 = vunpack.c.h.b16 %v4478
  %v4805 = vunpack.c.l.b16 %v4479
  %v4806 = vunpack.c.h.b16 %v4479
  %v4807 = vunpack.c.l.b16 %v4480
  %v4808 = vunpack.c.h.b16 %v4480
  %v4809 = vunpack.c.l.b16 %v4481
  %v4810 = vunpack.c.l.b16 %v4482
  %v4811 = vunpack.c.h.b16 %v4482
  %v4812 = vunpack.c.l.b16 %v4483
  %v4813 = vunpack.c.h.b16 %v4483
  %v4814 = vunpack.c.l.b16 %v4484
  %v4815 = vunpack.c.h.b16 %v4484
  %v4816 = vunpack.c.l.b16 %v4485
  %v4817 = vunpack.c.l.b16 %v4486
  %v4818 = vunpack.c.h.b16 %v4486
  %v4819 = vunpack.c.l.b16 %v4487
  %v4820 = vunpack.c.h.b16 %v4487
  %v4821 = vunpack.c.l.b16 %v4488
  %v4822 = vunpack.c.h.b16 %v4488
  %v4823 = vunpack.c.l.b16 %v4489
  %v4824 = vunpack.c.l.b16 %v4490
  %v4825 = vunpack.c.h.b16 %v4490
  %v4826 = vunpack.c.l.b16 %v4491
  %v4827 = vunpack.c.h.b16 %v4491
  %v4828 = vunpack.c.l.b16 %v4492
  %v4829 = vunpack.c.h.b16 %v4492
  %v4830 = vunpack.c.l.b16 %v4493
  %v4831 = vunpack.c.l.b16 %v4494
  %v4832 = vunpack.c.h.b16 %v4494
  %v4833 = vunpack.c.l.b16 %v4495
  %v4834 = vunpack.c.h.b16 %v4495
  %v4835 = vunpack.c.l.b16 %v4496
  %v4836 = vunpack.c.h.b16 %v4496
  %v4837 = vunpack.c.l.b16 %v4497
  %v4838 = vunpack.c.l.b16 %v4498
  %v4839 = vunpack.c.h.b16 %v4498
  %v4840 = vunpack.c.l.b16 %v4499
  %v4841 = vunpack.c.h.b16 %v4499
  %v4842 = vunpack.c.l.b16 %v4500
  %v4843 = vunpack.c.h.b16 %v4500
  %v4844 = vunpack.c.l.b16 %v4501
  %v4845 = vunpack.c.l.b16 %v4502
  %v4846 = vunpack.c.h.b16 %v4502
  %v4847 = vunpack.c.l.b16 %v4503
  %v4848 = vunpack.c.h.b16 %v4503
  %v4849 = vunpack.c.l.b16 %v4504
  %v4850 = vunpack.c.h.b16 %v4504
  %v4851 = vunpack.c.l.b16 %v4505
  %v4852 = vunpack.c.l.b16 %v4506
  %v4853 = vunpack.c.h.b16 %v4506
  %v4854 = vunpack.c.l.b16 %v4507
  %v4855 = vunpack.c.h.b16 %v4507
  %v4856 = vunpack.c.l.b16 %v4508
  %v4857 = vunpack.c.h.b16 %v4508
  %v4858 = vunpack.c.l.b16 %v4509
  %v4859 = vunpack.c.l.b16 %v4510
  %v4860 = vunpack.c.h.b16 %v4510
  %v4861 = vunpack.c.l.b16 %v4511
  %v4862 = vunpack.c.h.b16 %v4511
  %v4863 = vunpack.c.l.b16 %v4512
  %v4864 = vunpack.c.h.b16 %v4512
  %v4865 = vunpack.c.l.b16 %v4513
  %v4866 = vunpack.c.l.b16 %v4514
  %v4867 = vunpack.c.h.b16 %v4514
  %v4868 = vunpack.c.l.b16 %v4515
  %v4869 = vunpack.c.h.b16 %v4515
  %v4870 = vunpack.c.l.b16 %v4516
  %v4871 = vunpack.c.h.b16 %v4516
  %v4872 = vunpack.c.l.b16 %v4517
  %v4873 = vunpack.c.l.b16 %v4518
  %v4874 = vunpack.c.h.b16 %v4518
  %v4875 = vunpack.c.l.b16 %v4519
  %v4876 = vunpack.c.h.b16 %v4519
  %v4877 = vunpack.c.l.b16 %v4520
  %v4878 = vunpack.c.h.b16 %v4520
  %v4879 = vunpack.c.l.b16 %v4521
  %v4880 = vunpack.c.l.b16 %v4522
  %v4881 = vunpack.c.h.b16 %v4522
  %v4882 = vunpack.c.l.b16 %v4523
  %v4883 = vunpack.c.h.b16 %v4523
  %v4884 = vunpack.c.l.b16 %v4524
  %v4885 = vunpack.c.h.b16 %v4524
  %v4886 = vunpack.c.l.b16 %v4525
  %v4887 = vunpack.c.l.b16 %v4526
  %v4888 = vunpack.c.h.b16 %v4526
  %v4889 = vunpack.c.l.b16 %v4527
  %v4890 = vunpack.c.h.b16 %v4527
  %v4891 = vunpack.c.l.b16 %v4528
  %v4892 = vunpack.c.h.b16 %v4528
  %v4893 = vunpack.c.l.b16 %v4529
  %v4894 = vunpack.c.l.b16 %v4530
  %v4895 = vunpack.c.h.b16 %v4530
  %v4896 = vunpack.c.l.b16 %v4531
  %v4897 = vunpack.c.h.b16 %v4531
  %v4898 = vunpack.c.l.b16 %v4532
  %v4899 = vunpack.c.h.b16 %v4532
  %v4900 = vunpack.c.l.b16 %v4533
  %v4901 = vunpack.c.l.b16 %v4534
  %v4902 = vunpack.c.h.b16 %v4534
  %v4903 = vunpack.c.l.b16 %v4535
  %v4904 = vunpack.c.h.b16 %v4535
  %v4905 = vunpack.c.l.b16 %v4536
  %v4906 = vunpack.c.h.b16 %v4536
  %v4907 = vunpack.c.l.b16 %v4537
  %v4908 = vunpack.c.l.b16 %v4538
  %v4909 = vunpack.c.h.b16 %v4538
  %v4910 = vunpack.c.l.b16 %v4539
  %v4911 = vunpack.c.h.b16 %v4539
  %v4912 = vunpack.c.l.b16 %v4540
  %v4913 = vunpack.c.h.b16 %v4540
  %v4914 = vunpack.c.l.b16 %v4541
  %v4915 = vunpack.c.l.b16 %v4542
  %v4916 = vunpack.c.h.b16 %v4542
  %v4917 = vunpack.c.l.b16 %v4543
  %v4918 = vunpack.c.h.b16 %v4543
  %v4919 = vunpack.c.l.b16 %v4544
  %v4920 = vunpack.c.h.b16 %v4544
  %v4921 = vunpack.c.l.b16 %v4545
  %v4922 = vunpack.c.l.b16 %v4546
  %v4923 = vunpack.c.h.b16 %v4546
  %v4924 = vunpack.c.l.b16 %v4547
  %v4925 = vunpack.c.h.b16 %v4547
  %v4926 = vunpack.c.l.b16 %v4548
  %v4927 = vunpack.c.h.b16 %v4548
  %v4928 = vunpack.c.l.b16 %v4549
  %v4929 = vunpack.c.l.b16 %v4550
  %v4930 = vunpack.c.h.b16 %v4550
  %v4931 = vunpack.c.l.b16 %v4551
  %v4932 = vunpack.c.h.b16 %v4551
  %v4933 = vunpack.c.l.b16 %v4552
  %v4934 = vunpack.c.h.b16 %v4552
  %v4935 = vunpack.c.l.b16 %v4553
  %v4936 = vunpack.c.l.b16 %v4554
  %v4937 = vunpack.c.h.b16 %v4554
  %v4938 = vunpack.c.l.b16 %v4555
  %v4939 = vunpack.c.h.b16 %v4555
  %v4940 = vunpack.c.l.b16 %v4556
  %v4941 = vunpack.c.h.b16 %v4556
  %v4942 = vunpack.c.l.b16 %v4557
  %v4943 = vunpack.c.l.b16 %v4558
  %v4944 = vunpack.c.h.b16 %v4558
  %v4945 = vunpack.c.l.b16 %v4559
  %v4946 = vunpack.c.h.b16 %v4559
  %v4947 = vunpack.c.l.b16 %v4560
  %v4948 = vunpack.c.h.b16 %v4560
  %v4949 = vunpack.c.l.b16 %v4561
  %v4950 = vpack.c.b16 %v4733, %v4726
  %v4951 = vpack.c.b16 %v4734, %v4727
  %v4952 = vpack.c.b16 %v4735, %v4728
  %v4953 = vpack.c.b16 %v4736, %v4729
  %v4954 = vpack.c.b16 %v4737, %v4730
  %v4955 = vpack.c.b16 %v4738, %v4731
  %v4956 = vpack.c.b16 %v4739, %v4732
  %v4957 = vpack.c.b16 %v4747, %v4740
  %v4958 = vpack.c.b16 %v4748, %v4741
  %v4959 = vpack.c.b16 %v4749, %v4742
  %v4960 = vpack.c.b16 %v4750, %v4743
  %v4961 = vpack.c.b16 %v4751, %v4744
  %v4962 = vpack.c.b16 %v4752, %v4745
  %v4963 = vpack.c.b16 %v4753, %v4746
  %v4964 = vpack.c.b16 %v4761, %v4754
  %v4965 = vpack.c.b16 %v4762, %v4755
  %v4966 = vpack.c.b16 %v4763, %v4756
  %v4967 = vpack.c.b16 %v4764, %v4757
  %v4968 = vpack.c.b16 %v4765, %v4758
  %v4969 = vpack.c.b16 %v4766, %v4759
  %v4970 = vpack.c.b16 %v4767, %v4760
  %v4971 = vpack.c.b16 %v4775, %v4768
  %v4972 = vpack.c.b16 %v4776, %v4769
  %v4973 = vpack.c.b16 %v4777, %v4770
  %v4974 = vpack.c.b16 %v4778, %v4771
  %v4975 = vpack.c.b16 %v4779, %v4772
  %v4976 = vpack.c.b16 %v4780, %v4773
  %v4977 = vpack.c.b16 %v4781, %v4774
  %v4978 = vpack.c.b16 %v4789, %v4782
  %v4979 = vpack.c.b16 %v4790, %v4783
  %v4980 = vpack.c.b16 %v4791, %v4784
  %v4981 = vpack.c.b16 %v4792, %v4785
  %v4982 = vpack.c.b16 %v4793, %v4786
  %v4983 = vpack.c.b16 %v4794, %v4787
  %v4984 = vpack.c.b16 %v4795, %v4788
  %v4985 = vpack.c.b16 %v4803, %v4796
  %v4986 = vpack.c.b16 %v4804, %v4797
  %v4987 = vpack.c.b16 %v4805, %v4798
  %v4988 = vpack.c.b16 %v4806, %v4799
  %v4989 = vpack.c.b16 %v4807, %v4800
  %v4990 = vpack.c.b16 %v4808, %v4801
  %v4991 = vpack.c.b16 %v4809, %v4802
  %v4992 = vpack.c.b16 %v4817, %v4810
  %v4993 = vpack.c.b16 %v4818, %v4811
  %v4994 = vpack.c.b16 %v4819, %v4812
  %v4995 = vpack.c.b16 %v4820, %v4813
  %v4996 = vpack.c.b16 %v4821, %v4814
  %v4997 = vpack.c.b16 %v4822, %v4815
  %v4998 = vpack.c.b16 %v4823, %v4816
  %v4999 = vpack.c.b16 %v4831, %v4824
  %v5000 = vpack.c.b16 %v4832, %v4825
  %v5001 = vpack.c.b16 %v4833, %v4826
  %v5002 = vpack.c.b16 %v4834, %v4827
  %v5003 = vpack.c.b16 %v4835, %v4828
  %v5004 = vpack.c.b16 %v4836, %v4829
  %v5005 = vpack.c.b16 %v4837, %v4830
  %v5006 = vpack.c.b16 %v4845, %v4838
  %v5007 = vpack.c.b16 %v4846, %v4839
  %v5008 = vpack.c.b16 %v4847, %v4840
  %v5009 = vpack.c.b16 %v4848, %v4841
  %v5010 = vpack.c.b16 %v4849, %v4842
  %v5011 = vpack.c.b16 %v4850, %v4843
  %v5012 = vpack.c.b16 %v4851, %v4844
  %v5013 = vpack.c.b16 %v4859, %v4852
  %v5014 = vpack.c.b16 %v4860, %v4853
  %v5015 = vpack.c.b16 %v4861, %v4854
  %v5016 = vpack.c.b16 %v4862, %v4855
  %v5017 = vpack.c.b16 %v4863, %v4856
  %v5018 = vpack.c.b16 %v4864, %v4857
  %v5019 = vpack.c.b16 %v4865, %v4858
  %v5020 = vpack.c.b16 %v4873, %v4866
  %v5021 = vpack.c.b16 %v4874, %v4867
  %v5022 = vpack.c.b16 %v4875, %v4868
  %v5023 = vpack.c.b16 %v4876, %v4869
  %v5024 = vpack.c.b16 %v4877, %v4870
  %v5025 = vpack.c.b16 %v4878, %v4871
  %v5026 = vpack.c.b16 %v4879, %v4872
  %v5027 = vpack.c.b16 %v4887, %v4880
  %v5028 = vpack.c.b16 %v4888, %v4881
  %v5029 = vpack.c.b16 %v4889, %v4882
  %v5030 = vpack.c.b16 %v4890, %v4883
  %v5031 = vpack.c.b16 %v4891, %v4884
  %v5032 = vpack.c.b16 %v4892, %v4885
  %v5033 = vpack.c.b16 %v4893, %v4886
  %v5034 = vpack.c.b16 %v4901, %v4894
  %v5035 = vpack.c.b16 %v4902, %v4895
  %v5036 = vpack.c.b16 %v4903, %v4896
  %v5037 = vpack.c.b16 %v4904, %v4897
  %v5038 = vpack.c.b16 %v4905, %v4898
  %v5039 = vpack.c.b16 %v4906, %v4899
  %v5040 = vpack.c.b16 %v4907, %v4900
  %v5041 = vpack.c.b16 %v4915, %v4908
  %v5042 = vpack.c.b16 %v4916, %v4909
  %v5043 = vpack.c.b16 %v4917, %v4910
  %v5044 = vpack.c.b16 %v4918, %v4911
  %v5045 = vpack.c.b16 %v4919, %v4912
  %v5046 = vpack.c.b16 %v4920, %v4913
  %v5047 = vpack.c.b16 %v4921, %v4914
  %v5048 = vpack.c.b16 %v4929, %v4922
  %v5049 = vpack.c.b16 %v4930, %v4923
  %v5050 = vpack.c.b16 %v4931, %v4924
  %v5051 = vpack.c.b16 %v4932, %v4925
  %v5052 = vpack.c.b16 %v4933, %v4926
  %v5053 = vpack.c.b16 %v4934, %v4927
  %v5054 = vpack.c.b16 %v4935, %v4928
  %v5055 = vpack.c.b16 %v4943, %v4936
  %v5056 = vpack.c.b16 %v4944, %v4937
  %v5057 = vpack.c.b16 %v4945, %v4938
  %v5058 = vpack.c.b16 %v4946, %v4939
  %v5059 = vpack.c.b16 %v4947, %v4940
  %v5060 = vpack.c.b16 %v4948, %v4941
  %v5061 = vpack.c.b16 %v4949, %v4942
  %5174 = vmatprep.subr.bf16.mxu0 %v4951
  %5175 = vmatpush1.bf16.msra.mxu0 %v4950
  %5176 = vmatprep.subr.bf16.mxu0 %v4958
  %5177 = vmatpush1.bf16.msra.mxu0 %v4957
  %5178 = vmatprep.subr.bf16.mxu0 %v4965
  %5179 = vmatpush1.bf16.msra.mxu0 %v4964
  %5180 = vmatprep.subr.bf16.mxu0 %v4972
  %5181 = vmatpush1.bf16.msra.mxu0 %v4971
  %5182 = vmatprep.subr.bf16.mxu0 %v4979
  %5183 = vmatpush1.bf16.msra.mxu0 %v4978
  %5184 = vmatprep.subr.bf16.mxu0 %v4986
  %5185 = vmatpush1.bf16.msra.mxu0 %v4985
  %5186 = vmatprep.subr.bf16.mxu0 %v4993
  %5187 = vmatpush1.bf16.msra.mxu0 %v4992
  %5188 = vmatprep.subr.bf16.mxu0 %v5000
  %5189 = vmatpush1.bf16.msra.mxu0 %v4999
  %5190 = vmatprep.subr.bf16.mxu0 %v5007
  %5191 = vmatpush1.bf16.msra.mxu0 %v5006
  %5192 = vmatprep.subr.bf16.mxu0 %v5014
  %5193 = vmatpush1.bf16.msra.mxu0 %v5013
  %5194 = vmatprep.subr.bf16.mxu0 %v5021
  %5195 = vmatpush1.bf16.msra.mxu0 %v5020
  %5196 = vmatprep.subr.bf16.mxu0 %v5028
  %5197 = vmatpush1.bf16.msra.mxu0 %v5027
  %5198 = vmatprep.subr.bf16.mxu0 %v5035
  %5199 = vmatpush1.bf16.msra.mxu0 %v5034
  %5200 = vmatprep.subr.bf16.mxu0 %v5042
  %5201 = vmatpush1.bf16.msra.mxu0 %v5041
  %5202 = vmatprep.subr.bf16.mxu0 %v5049
  %5203 = vmatpush1.bf16.msra.mxu0 %v5048
  %5204 = vmatprep.subr.bf16.mxu0 %v5056
  %5205 = vmatpush1.bf16.msra.mxu0 %v5055
  %5206 = vmatprep.mubr.bf16.mxu0 %v4401
  %5207 = vmatmul.mubr.bf16.gmra.mrb[0].mxu0 %v4400
  %v5208 = vpop.f32.mrb[0].mxu0
  %v5209 = vadd.f32 %v4566, %v5208
  %v5210 = vpop.f32.mrb[0].mxu0
  %v5211 = vadd.f32 %v4570, %v5210
  %v5212 = vpop.f32.mrb[0].mxu0
  %v5213 = vadd.f32 %v4566, %v5212
  %v5214 = vpop.f32.mrb[0].mxu0
  %v5215 = vadd.f32 %v4570, %v5214
  %5216 = vmatprep.mubr.bf16.mxu0 %v4403
  %5217 = vmatmul.mubr.bf16.gmra.mrb[0].mxu0 %v4402
  %v5218 = vpop.f32.mrb[0].mxu0
  %v5219 = vadd.f32 %v4566, %v5218
  %v5220 = vpop.f32.mrb[0].mxu0
  %v5221 = vadd.f32 %v4570, %v5220
  %v5222 = vpop.f32.mrb[0].mxu0
  %v5223 = vadd.f32 %v4566, %v5222
  %v5224 = vpop.f32.mrb[0].mxu0
  %v5225 = vadd.f32 %v4570, %v5224
  %5226 = vmatprep.mubr.bf16.mxu0 %v4405
  %5227 = vmatmul.mubr.bf16.gmra.mrb[0].mxu0 %v4404
  %v5228 = vpop.f32.mrb[0].mxu0
  %v5229 = vadd.f32 %v4566, %v5228
  %v5230 = vpop.f32.mrb[0].mxu0
  %v5231 = vadd.f32 %v4570, %v5230
  %v5232 = vpop.f32.mrb[0].mxu0
  %v5233 = vadd.f32 %v4566, %v5232
  %v5234 = vpop.f32.mrb[0].mxu0
  %v5235 = vadd.f32 %v4570, %v5234
  %5236 = vmatprep.mubr.bf16.mxu0 %v4407
  %5237 = vmatmul.mubr.bf16.gmra.mrb[0].mxu0 %v4406
  %v5238 = vpop.f32.mrb[0].mxu0
  %v5239 = vadd.f32 %v4566, %v5238
  %v5240 = vpop.f32.mrb[0].mxu0
  %v5241 = vadd.f32 %v4570, %v5240
  %v5242 = vpop.f32.mrb[0].mxu0
  %v5243 = vadd.f32 %v4566, %v5242
  %v5244 = vpop.f32.mrb[0].mxu0
  %v5245 = vadd.f32 %v4570, %v5244
  %5246 = vmatprep.mubr.bf16.mxu0 %v4409
  %5247 = vmatmul.mubr.bf16.gmra.mrb[0].mxu0 %v4408
  %v5248 = vpop.f32.mrb[0].mxu0
  %v5249 = vadd.f32 %v4566, %v5248
  %v5250 = vpop.f32.mrb[0].mxu0
  %v5251 = vadd.f32 %v4570, %v5250
  %v5252 = vpop.f32.mrb[0].mxu0
  %v5253 = vadd.f32 %v4566, %v5252
  %v5254 = vpop.f32.mrb[0].mxu0
  %v5255 = vadd.f32 %v4570, %v5254
  %5256 = vmatprep.mubr.bf16.mxu0 %v4411
  %5257 = vmatmul.mubr.bf16.gmra.mrb[0].mxu0 %v4410
  %v5258 = vpop.f32.mrb[0].mxu0
  %v5259 = vadd.f32 %v4566, %v5258
  %v5260 = vpop.f32.mrb[0].mxu0
  %v5261 = vadd.f32 %v4570, %v5260
  %v5262 = vpop.f32.mrb[0].mxu0
  %v5263 = vadd.f32 %v4566, %v5262
  %v5264 = vpop.f32.mrb[0].mxu0
  %v5265 = vadd.f32 %v4570, %v5264
  %5266 = vmatprep.mubr.bf16.mxu0 %v4413
  %5267 = vmatmul.mubr.bf16.gmra.mrb[0].mxu0 %v4412
  %v5268 = vpop.f32.mrb[0].mxu0
  %v5269 = vadd.f32 %v4566, %v5268
  %v5270 = vpop.f32.mrb[0].mxu0
  %v5271 = vadd.f32 %v4570, %v5270
  %v5272 = vpop.f32.mrb[0].mxu0
  %v5273 = vadd.f32 %v4566, %v5272
  %v5274 = vpop.f32.mrb[0].mxu0
  %v5275 = vadd.f32 %v4570, %v5274
  %5276 = vmatprep.mubr.bf16.mxu0 %v4415
  %5277 = vmatmul.mubr.bf16.gmra.mrb[0].mxu0 %v4414
  %v5278 = vpop.f32.mrb[0].mxu0
  %v5279 = vadd.f32 %v4566, %v5278
  %v5280 = vpop.f32.mrb[0].mxu0
  %v5281 = vadd.f32 %v4570, %v5280
  %v5282 = vpop.f32.mrb[0].mxu0
  %v5283 = vadd.f32 %v4566, %v5282
  %v5284 = vpop.f32.mrb[0].mxu0
  %v5285 = vadd.f32 %v4570, %v5284
  %5286 = vmatprep.mubr.bf16.mxu0 %v4417
  %5287 = vmatmul.mubr.bf16.gmra.mrb[0].mxu0 %v4416
  %v5288 = vpop.f32.mrb[0].mxu0
  %v5289 = vadd.f32 %v4566, %v5288
  %v5290 = vpop.f32.mrb[0].mxu0
  %v5291 = vadd.f32 %v4570, %v5290
  %v5292 = vpop.f32.mrb[0].mxu0
  %v5293 = vadd.f32 %v4566, %v5292
  %v5294 = vpop.f32.mrb[0].mxu0
  %v5295 = vadd.f32 %v4570, %v5294
  %5296 = vmatprep.mubr.bf16.mxu0 %v4419
  %5297 = vmatmul.mubr.bf16.gmra.mrb[0].mxu0 %v4418
  %v5298 = vpop.f32.mrb[0].mxu0
  %v5299 = vadd.f32 %v4566, %v5298
  %v5300 = vpop.f32.mrb[0].mxu0
  %v5301 = vadd.f32 %v4570, %v5300
  %v5302 = vpop.f32.mrb[0].mxu0
  %v5303 = vadd.f32 %v4566, %v5302
  %v5304 = vpop.f32.mrb[0].mxu0
  %v5305 = vadd.f32 %v4570, %v5304
  %5306 = vmatprep.mubr.bf16.mxu0 %v4421
  %5307 = vmatmul.mubr.bf16.gmra.mrb[0].mxu0 %v4420
  %v5308 = vpop.f32.mrb[0].mxu0
  %v5309 = vadd.f32 %v4566, %v5308
  %v5310 = vpop.f32.mrb[0].mxu0
  %v5311 = vadd.f32 %v4570, %v5310
  %v5312 = vpop.f32.mrb[0].mxu0
  %v5313 = vadd.f32 %v4566, %v5312
  %v5314 = vpop.f32.mrb[0].mxu0
  %v5315 = vadd.f32 %v4570, %v5314
  %5316 = vmatprep.mubr.bf16.mxu0 %v4423
  %5317 = vmatmul.mubr.bf16.gmra.mrb[0].mxu0 %v4422
  %v5318 = vpop.f32.mrb[0].mxu0
  %v5319 = vadd.f32 %v4566, %v5318
  %v5320 = vpop.f32.mrb[0].mxu0
  %v5321 = vadd.f32 %v4570, %v5320
  %v5322 = vpop.f32.mrb[0].mxu0
  %v5323 = vadd.f32 %v4566, %v5322
  %v5324 = vpop.f32.mrb[0].mxu0
  %v5325 = vadd.f32 %v4570, %v5324
  %5326 = vmatprep.mubr.bf16.mxu0 %v4425
  %5327 = vmatmul.mubr.bf16.gmra.mrb[0].mxu0 %v4424
  %v5328 = vpop.f32.mrb[0].mxu0
  %v5329 = vadd.f32 %v4566, %v5328
  %v5330 = vpop.f32.mrb[0].mxu0
  %v5331 = vadd.f32 %v4570, %v5330
  %v5332 = vpop.f32.mrb[0].mxu0
  %v5333 = vadd.f32 %v4566, %v5332
  %v5334 = vpop.f32.mrb[0].mxu0
  %v5335 = vadd.f32 %v4570, %v5334
  %5336 = vmatprep.mubr.bf16.mxu0 %v4427
  %5337 = vmatmul.mubr.bf16.gmra.mrb[0].mxu0 %v4426
  %v5338 = vpop.f32.mrb[0].mxu0
  %v5339 = vadd.f32 %v4566, %v5338
  %v5340 = vpop.f32.mrb[0].mxu0
  %v5341 = vadd.f32 %v4570, %v5340
  %v5342 = vpop.f32.mrb[0].mxu0
  %v5343 = vadd.f32 %v4566, %v5342
  %v5344 = vpop.f32.mrb[0].mxu0
  %v5345 = vadd.f32 %v4570, %v5344
  %5346 = vmatprep.mubr.bf16.mxu0 %v4429
  %5347 = vmatmul.mubr.bf16.gmra.mrb[0].mxu0 %v4428
  %v5348 = vpop.f32.mrb[0].mxu0
  %v5349 = vadd.f32 %v4566, %v5348
  %v5350 = vpop.f32.mrb[0].mxu0
  %v5351 = vadd.f32 %v4570, %v5350
  %v5352 = vpop.f32.mrb[0].mxu0
  %v5353 = vadd.f32 %v4566, %v5352
  %v5354 = vpop.f32.mrb[0].mxu0
  %v5355 = vadd.f32 %v4570, %v5354
  %5356 = vmatprep.mubr.bf16.mxu0 %v4431
  %5357 = vmatmul.mubr.bf16.gmra.mrb[0].mxu0 %v4430
  %v5358 = vpop.f32.mrb[0].mxu0
  %v5359 = vadd.f32 %v4566, %v5358
  %v5360 = vpop.f32.mrb[0].mxu0
  %v5361 = vadd.f32 %v4570, %v5360
  %v5362 = vpop.f32.mrb[0].mxu0
  %v5363 = vadd.f32 %v4566, %v5362
  %v5364 = vpop.f32.mrb[0].mxu0
  %v5365 = vadd.f32 %v4570, %v5364
  %5366 = vdwg.mxu0
  %5367 = vmatprep.subr.bf16.mxu0 %v4953
  %5368 = vmatpush1.bf16.msra.mxu0 %v4952
  %5369 = vmatprep.subr.bf16.mxu0 %v4960
  %5370 = vmatpush1.bf16.msra.mxu0 %v4959
  %5371 = vmatprep.subr.bf16.mxu0 %v4967
  %5372 = vmatpush1.bf16.msra.mxu0 %v4966
  %5373 = vmatprep.subr.bf16.mxu0 %v4974
  %5374 = vmatpush1.bf16.msra.mxu0 %v4973
  %5375 = vmatprep.subr.bf16.mxu0 %v4981
  %5376 = vmatpush1.bf16.msra.mxu0 %v4980
  %5377 = vmatprep.subr.bf16.mxu0 %v4988
  %5378 = vmatpush1.bf16.msra.mxu0 %v4987
  %5379 = vmatprep.subr.bf16.mxu0 %v4995
  %5380 = vmatpush1.bf16.msra.mxu0 %v4994
  %5381 = vmatprep.subr.bf16.mxu0 %v5002
  %5382 = vmatpush1.bf16.msra.mxu0 %v5001
  %5383 = vmatprep.subr.bf16.mxu0 %v5009
  %5384 = vmatpush1.bf16.msra.mxu0 %v5008
  %5385 = vmatprep.subr.bf16.mxu0 %v5016
  %5386 = vmatpush1.bf16.msra.mxu0 %v5015
  %5387 = vmatprep.subr.bf16.mxu0 %v5023
  %5388 = vmatpush1.bf16.msra.mxu0 %v5022
  %5389 = vmatprep.subr.bf16.mxu0 %v5030
  %5390 = vmatpush1.bf16.msra.mxu0 %v5029
  %5391 = vmatprep.subr.bf16.mxu0 %v5037
  %5392 = vmatpush1.bf16.msra.mxu0 %v5036
  %5393 = vmatprep.subr.bf16.mxu0 %v5044
  %5394 = vmatpush1.bf16.msra.mxu0 %v5043
  %5395 = vmatprep.subr.bf16.mxu0 %v5051
  %5396 = vmatpush1.bf16.msra.mxu0 %v5050
  %5397 = vmatprep.subr.bf16.mxu0 %v5058
  %5398 = vmatpush1.bf16.msra.mxu0 %v5057
  %5399 = vmatprep.mubr.bf16.mxu0 %v4401
  %5400 = vmatmul.mubr.bf16.gmra.mrb[0].mxu0 %v4400
  %v5401 = vpop.f32.mrb[0].mxu0
  %v5402 = vadd.f32 %v4574, %v5401
  %v5403 = vpop.f32.mrb[0].mxu0
  %v5404 = vadd.f32 %v4578, %v5403
  %v5405 = vpop.f32.mrb[0].mxu0
  %v5406 = vadd.f32 %v4574, %v5405
  %v5407 = vpop.f32.mrb[0].mxu0
  %v5408 = vadd.f32 %v4578, %v5407
  %5409 = vmatprep.mubr.bf16.mxu0 %v4403
  %5410 = vmatmul.mubr.bf16.gmra.mrb[0].mxu0 %v4402
  %v5411 = vpop.f32.mrb[0].mxu0
  %v5412 = vadd.f32 %v4574, %v5411
  %v5413 = vpop.f32.mrb[0].mxu0
  %v5414 = vadd.f32 %v4578, %v5413
  %v5415 = vpop.f32.mrb[0].mxu0
  %v5416 = vadd.f32 %v4574, %v5415
  %v5417 = vpop.f32.mrb[0].mxu0
  %v5418 = vadd.f32 %v4578, %v5417
  %5419 = vmatprep.mubr.bf16.mxu0 %v4405
  %5420 = vmatmul.mubr.bf16.gmra.mrb[0].mxu0 %v4404
  %v5421 = vpop.f32.mrb[0].mxu0
  %v5422 = vadd.f32 %v4574, %v5421
  %v5423 = vpop.f32.mrb[0].mxu0
  %v5424 = vadd.f32 %v4578, %v5423
  %v5425 = vpop.f32.mrb[0].mxu0
  %v5426 = vadd.f32 %v4574, %v5425
  %v5427 = vpop.f32.mrb[0].mxu0
  %v5428 = vadd.f32 %v4578, %v5427
  %5429 = vmatprep.mubr.bf16.mxu0 %v4407
  %5430 = vmatmul.mubr.bf16.gmra.mrb[0].mxu0 %v4406
  %v5431 = vpop.f32.mrb[0].mxu0
  %v5432 = vadd.f32 %v4574, %v5431
  %v5433 = vpop.f32.mrb[0].mxu0
  %v5434 = vadd.f32 %v4578, %v5433
  %v5435 = vpop.f32.mrb[0].mxu0
  %v5436 = vadd.f32 %v4574, %v5435
  %v5437 = vpop.f32.mrb[0].mxu0
  %v5438 = vadd.f32 %v4578, %v5437
  %5439 = vmatprep.mubr.bf16.mxu0 %v4409
  %5440 = vmatmul.mubr.bf16.gmra.mrb[0].mxu0 %v4408
  %v5441 = vpop.f32.mrb[0].mxu0
  %v5442 = vadd.f32 %v4574, %v5441
  %v5443 = vpop.f32.mrb[0].mxu0
  %v5444 = vadd.f32 %v4578, %v5443
  %v5445 = vpop.f32.mrb[0].mxu0
  %v5446 = vadd.f32 %v4574, %v5445
  %v5447 = vpop.f32.mrb[0].mxu0
  %v5448 = vadd.f32 %v4578, %v5447
  %5449 = vmatprep.mubr.bf16.mxu0 %v4411
  %5450 = vmatmul.mubr.bf16.gmra.mrb[0].mxu0 %v4410
  %v5451 = vpop.f32.mrb[0].mxu0
  %v5452 = vadd.f32 %v4574, %v5451
  %v5453 = vpop.f32.mrb[0].mxu0
  %v5454 = vadd.f32 %v4578, %v5453
  %v5455 = vpop.f32.mrb[0].mxu0
  %v5456 = vadd.f32 %v4574, %v5455
  %v5457 = vpop.f32.mrb[0].mxu0
  %v5458 = vadd.f32 %v4578, %v5457
  %5459 = vmatprep.mubr.bf16.mxu0 %v4413
  %5460 = vmatmul.mubr.bf16.gmra.mrb[0].mxu0 %v4412
  %v5461 = vpop.f32.mrb[0].mxu0
  %v5462 = vadd.f32 %v4574, %v5461
  %v5463 = vpop.f32.mrb[0].mxu0
  %v5464 = vadd.f32 %v4578, %v5463
  %v5465 = vpop.f32.mrb[0].mxu0
  %v5466 = vadd.f32 %v4574, %v5465
  %v5467 = vpop.f32.mrb[0].mxu0
  %v5468 = vadd.f32 %v4578, %v5467
  %5469 = vmatprep.mubr.bf16.mxu0 %v4415
  %5470 = vmatmul.mubr.bf16.gmra.mrb[0].mxu0 %v4414
  %v5471 = vpop.f32.mrb[0].mxu0
  %v5472 = vadd.f32 %v4574, %v5471
  %v5473 = vpop.f32.mrb[0].mxu0
  %v5474 = vadd.f32 %v4578, %v5473
  %v5475 = vpop.f32.mrb[0].mxu0
  %v5476 = vadd.f32 %v4574, %v5475
  %v5477 = vpop.f32.mrb[0].mxu0
  %v5478 = vadd.f32 %v4578, %v5477
  %5479 = vmatprep.mubr.bf16.mxu0 %v4417
  %5480 = vmatmul.mubr.bf16.gmra.mrb[0].mxu0 %v4416
  %v5481 = vpop.f32.mrb[0].mxu0
  %v5482 = vadd.f32 %v4574, %v5481
  %v5483 = vpop.f32.mrb[0].mxu0
  %v5484 = vadd.f32 %v4578, %v5483
  %v5485 = vpop.f32.mrb[0].mxu0
  %v5486 = vadd.f32 %v4574, %v5485
  %v5487 = vpop.f32.mrb[0].mxu0
  %v5488 = vadd.f32 %v4578, %v5487
  %5489 = vmatprep.mubr.bf16.mxu0 %v4419
  %5490 = vmatmul.mubr.bf16.gmra.mrb[0].mxu0 %v4418
  %v5491 = vpop.f32.mrb[0].mxu0
  %v5492 = vadd.f32 %v4574, %v5491
  %v5493 = vpop.f32.mrb[0].mxu0
  %v5494 = vadd.f32 %v4578, %v5493
  %v5495 = vpop.f32.mrb[0].mxu0
  %v5496 = vadd.f32 %v4574, %v5495
  %v5497 = vpop.f32.mrb[0].mxu0
  %v5498 = vadd.f32 %v4578, %v5497
  %5499 = vmatprep.mubr.bf16.mxu0 %v4421
  %5500 = vmatmul.mubr.bf16.gmra.mrb[0].mxu0 %v4420
  %v5501 = vpop.f32.mrb[0].mxu0
  %v5502 = vadd.f32 %v4574, %v5501
  %v5503 = vpop.f32.mrb[0].mxu0
  %v5504 = vadd.f32 %v4578, %v5503
  %v5505 = vpop.f32.mrb[0].mxu0
  %v5506 = vadd.f32 %v4574, %v5505
  %v5507 = vpop.f32.mrb[0].mxu0
  %v5508 = vadd.f32 %v4578, %v5507
  %5509 = vmatprep.mubr.bf16.mxu0 %v4423
  %5510 = vmatmul.mubr.bf16.gmra.mrb[0].mxu0 %v4422
  %v5511 = vpop.f32.mrb[0].mxu0
  %v5512 = vadd.f32 %v4574, %v5511
  %v5513 = vpop.f32.mrb[0].mxu0
  %v5514 = vadd.f32 %v4578, %v5513
  %v5515 = vpop.f32.mrb[0].mxu0
  %v5516 = vadd.f32 %v4574, %v5515
  %v5517 = vpop.f32.mrb[0].mxu0
  %v5518 = vadd.f32 %v4578, %v5517
  %5519 = vmatprep.mubr.bf16.mxu0 %v4425
  %5520 = vmatmul.mubr.bf16.gmra.mrb[0].mxu0 %v4424
  %v5521 = vpop.f32.mrb[0].mxu0
  %v5522 = vadd.f32 %v4574, %v5521
  %v5523 = vpop.f32.mrb[0].mxu0
  %v5524 = vadd.f32 %v4578, %v5523
  %v5525 = vpop.f32.mrb[0].mxu0
  %v5526 = vadd.f32 %v4574, %v5525
  %v5527 = vpop.f32.mrb[0].mxu0
  %v5528 = vadd.f32 %v4578, %v5527
  %5529 = vmatprep.mubr.bf16.mxu0 %v4427
  %5530 = vmatmul.mubr.bf16.gmra.mrb[0].mxu0 %v4426
  %v5531 = vpop.f32.mrb[0].mxu0
  %v5532 = vadd.f32 %v4574, %v5531
  %v5533 = vpop.f32.mrb[0].mxu0
  %v5534 = vadd.f32 %v4578, %v5533
  %v5535 = vpop.f32.mrb[0].mxu0
  %v5536 = vadd.f32 %v4574, %v5535
  %v5537 = vpop.f32.mrb[0].mxu0
  %v5538 = vadd.f32 %v4578, %v5537
  %5539 = vmatprep.mubr.bf16.mxu0 %v4429
  %5540 = vmatmul.mubr.bf16.gmra.mrb[0].mxu0 %v4428
  %v5541 = vpop.f32.mrb[0].mxu0
  %v5542 = vadd.f32 %v4574, %v5541
  %v5543 = vpop.f32.mrb[0].mxu0
  %v5544 = vadd.f32 %v4578, %v5543
  %v5545 = vpop.f32.mrb[0].mxu0
  %v5546 = vadd.f32 %v4574, %v5545
  %v5547 = vpop.f32.mrb[0].mxu0
  %v5548 = vadd.f32 %v4578, %v5547
  %5549 = vmatprep.mubr.bf16.mxu0 %v4431
  %5550 = vmatmul.mubr.bf16.gmra.mrb[0].mxu0 %v4430
  %v5551 = vpop.f32.mrb[0].mxu0
  %v5552 = vadd.f32 %v4574, %v5551
  %v5553 = vpop.f32.mrb[0].mxu0
  %v5554 = vadd.f32 %v4578, %v5553
  %v5555 = vpop.f32.mrb[0].mxu0
  %v5556 = vadd.f32 %v4574, %v5555
  %v5557 = vpop.f32.mrb[0].mxu0
  %v5558 = vadd.f32 %v4578, %v5557
  %5559 = vdwg.mxu0
  %5560 = vmatprep.subr.bf16.mxu0 %v4955
  %5561 = vmatpush1.bf16.msra.mxu0 %v4954
  %5562 = vmatprep.subr.bf16.mxu0 %v4962
  %5563 = vmatpush1.bf16.msra.mxu0 %v4961
  %5564 = vmatprep.subr.bf16.mxu0 %v4969
  %5565 = vmatpush1.bf16.msra.mxu0 %v4968
  %5566 = vmatprep.subr.bf16.mxu0 %v4976
  %5567 = vmatpush1.bf16.msra.mxu0 %v4975
  %5568 = vmatprep.subr.bf16.mxu0 %v4983
  %5569 = vmatpush1.bf16.msra.mxu0 %v4982
  %5570 = vmatprep.subr.bf16.mxu0 %v4990
  %5571 = vmatpush1.bf16.msra.mxu0 %v4989
  %5572 = vmatprep.subr.bf16.mxu0 %v4997
  %5573 = vmatpush1.bf16.msra.mxu0 %v4996
  %5574 = vmatprep.subr.bf16.mxu0 %v5004
  %5575 = vmatpush1.bf16.msra.mxu0 %v5003
  %5576 = vmatprep.subr.bf16.mxu0 %v5011
  %5577 = vmatpush1.bf16.msra.mxu0 %v5010
  %5578 = vmatprep.subr.bf16.mxu0 %v5018
  %5579 = vmatpush1.bf16.msra.mxu0 %v5017
  %5580 = vmatprep.subr.bf16.mxu0 %v5025
  %5581 = vmatpush1.bf16.msra.mxu0 %v5024
  %5582 = vmatprep.subr.bf16.mxu0 %v5032
  %5583 = vmatpush1.bf16.msra.mxu0 %v5031
  %5584 = vmatprep.subr.bf16.mxu0 %v5039
  %5585 = vmatpush1.bf16.msra.mxu0 %v5038
  %5586 = vmatprep.subr.bf16.mxu0 %v5046
  %5587 = vmatpush1.bf16.msra.mxu0 %v5045
  %5588 = vmatprep.subr.bf16.mxu0 %v5053
  %5589 = vmatpush1.bf16.msra.mxu0 %v5052
  %5590 = vmatprep.subr.bf16.mxu0 %v5060
  %5591 = vmatpush1.bf16.msra.mxu0 %v5059
  %5592 = vmatprep.mubr.bf16.mxu0 %v4401
  %5593 = vmatmul.mubr.bf16.gmra.mrb[0].mxu0 %v4400
  %v5594 = vpop.f32.mrb[0].mxu0
  %v5595 = vadd.f32 %v4582, %v5594
  %v5596 = vpop.f32.mrb[0].mxu0
  %v5597 = vadd.f32 %v4586, %v5596
  %v5598 = vpop.f32.mrb[0].mxu0
  %v5599 = vadd.f32 %v4582, %v5598
  %v5600 = vpop.f32.mrb[0].mxu0
  %v5601 = vadd.f32 %v4586, %v5600
  %5602 = vmatprep.mubr.bf16.mxu0 %v4403
  %5603 = vmatmul.mubr.bf16.gmra.mrb[0].mxu0 %v4402
  %v5604 = vpop.f32.mrb[0].mxu0
  %v5605 = vadd.f32 %v4582, %v5604
  %v5606 = vpop.f32.mrb[0].mxu0
  %v5607 = vadd.f32 %v4586, %v5606
  %v5608 = vpop.f32.mrb[0].mxu0
  %v5609 = vadd.f32 %v4582, %v5608
  %v5610 = vpop.f32.mrb[0].mxu0
  %v5611 = vadd.f32 %v4586, %v5610
  %5612 = vmatprep.mubr.bf16.mxu0 %v4405
  %5613 = vmatmul.mubr.bf16.gmra.mrb[0].mxu0 %v4404
  %v5614 = vpop.f32.mrb[0].mxu0
  %v5615 = vadd.f32 %v4582, %v5614
  %v5616 = vpop.f32.mrb[0].mxu0
  %v5617 = vadd.f32 %v4586, %v5616
  %v5618 = vpop.f32.mrb[0].mxu0
  %v5619 = vadd.f32 %v4582, %v5618
  %v5620 = vpop.f32.mrb[0].mxu0
  %v5621 = vadd.f32 %v4586, %v5620
  %5622 = vmatprep.mubr.bf16.mxu0 %v4407
  %5623 = vmatmul.mubr.bf16.gmra.mrb[0].mxu0 %v4406
  %v5624 = vpop.f32.mrb[0].mxu0
  %v5625 = vadd.f32 %v4582, %v5624
  %v5626 = vpop.f32.mrb[0].mxu0
  %v5627 = vadd.f32 %v4586, %v5626
  %v5628 = vpop.f32.mrb[0].mxu0
  %v5629 = vadd.f32 %v4582, %v5628
  %v5630 = vpop.f32.mrb[0].mxu0
  %v5631 = vadd.f32 %v4586, %v5630
  %5632 = vmatprep.mubr.bf16.mxu0 %v4409
  %5633 = vmatmul.mubr.bf16.gmra.mrb[0].mxu0 %v4408
  %v5634 = vpop.f32.mrb[0].mxu0
  %v5635 = vadd.f32 %v4582, %v5634
  %v5636 = vpop.f32.mrb[0].mxu0
  %v5637 = vadd.f32 %v4586, %v5636
  %v5638 = vpop.f32.mrb[0].mxu0
  %v5639 = vadd.f32 %v4582, %v5638
  %v5640 = vpop.f32.mrb[0].mxu0
  %v5641 = vadd.f32 %v4586, %v5640
  %5642 = vmatprep.mubr.bf16.mxu0 %v4411
  %5643 = vmatmul.mubr.bf16.gmra.mrb[0].mxu0 %v4410
  %v5644 = vpop.f32.mrb[0].mxu0
  %v5645 = vadd.f32 %v4582, %v5644
  %v5646 = vpop.f32.mrb[0].mxu0
  %v5647 = vadd.f32 %v4586, %v5646
  %v5648 = vpop.f32.mrb[0].mxu0
  %v5649 = vadd.f32 %v4582, %v5648
  %v5650 = vpop.f32.mrb[0].mxu0
  %v5651 = vadd.f32 %v4586, %v5650
  %5652 = vmatprep.mubr.bf16.mxu0 %v4413
  %5653 = vmatmul.mubr.bf16.gmra.mrb[0].mxu0 %v4412
  %v5654 = vpop.f32.mrb[0].mxu0
  %v5655 = vadd.f32 %v4582, %v5654
  %v5656 = vpop.f32.mrb[0].mxu0
  %v5657 = vadd.f32 %v4586, %v5656
  %v5658 = vpop.f32.mrb[0].mxu0
  %v5659 = vadd.f32 %v4582, %v5658
  %v5660 = vpop.f32.mrb[0].mxu0
  %v5661 = vadd.f32 %v4586, %v5660
  %5662 = vmatprep.mubr.bf16.mxu0 %v4415
  %5663 = vmatmul.mubr.bf16.gmra.mrb[0].mxu0 %v4414
  %v5664 = vpop.f32.mrb[0].mxu0
  %v5665 = vadd.f32 %v4582, %v5664
  %v5666 = vpop.f32.mrb[0].mxu0
  %v5667 = vadd.f32 %v4586, %v5666
  %v5668 = vpop.f32.mrb[0].mxu0
  %v5669 = vadd.f32 %v4582, %v5668
  %v5670 = vpop.f32.mrb[0].mxu0
  %v5671 = vadd.f32 %v4586, %v5670
  %5672 = vmatprep.mubr.bf16.mxu0 %v4417
  %5673 = vmatmul.mubr.bf16.gmra.mrb[0].mxu0 %v4416
  %v5674 = vpop.f32.mrb[0].mxu0
  %v5675 = vadd.f32 %v4582, %v5674
  %v5676 = vpop.f32.mrb[0].mxu0
  %v5677 = vadd.f32 %v4586, %v5676
  %v5678 = vpop.f32.mrb[0].mxu0
  %v5679 = vadd.f32 %v4582, %v5678
  %v5680 = vpop.f32.mrb[0].mxu0
  %v5681 = vadd.f32 %v4586, %v5680
  %5682 = vmatprep.mubr.bf16.mxu0 %v4419
  %5683 = vmatmul.mubr.bf16.gmra.mrb[0].mxu0 %v4418
  %v5684 = vpop.f32.mrb[0].mxu0
  %v5685 = vadd.f32 %v4582, %v5684
  %v5686 = vpop.f32.mrb[0].mxu0
  %v5687 = vadd.f32 %v4586, %v5686
  %v5688 = vpop.f32.mrb[0].mxu0
  %v5689 = vadd.f32 %v4582, %v5688
  %v5690 = vpop.f32.mrb[0].mxu0
  %v5691 = vadd.f32 %v4586, %v5690
  %5692 = vmatprep.mubr.bf16.mxu0 %v4421
  %5693 = vmatmul.mubr.bf16.gmra.mrb[0].mxu0 %v4420
  %v5694 = vpop.f32.mrb[0].mxu0
  %v5695 = vadd.f32 %v4582, %v5694
  %v5696 = vpop.f32.mrb[0].mxu0
  %v5697 = vadd.f32 %v4586, %v5696
  %v5698 = vpop.f32.mrb[0].mxu0
  %v5699 = vadd.f32 %v4582, %v5698
  %v5700 = vpop.f32.mrb[0].mxu0
  %v5701 = vadd.f32 %v4586, %v5700
  %5702 = vmatprep.mubr.bf16.mxu0 %v4423
  %5703 = vmatmul.mubr.bf16.gmra.mrb[0].mxu0 %v4422
  %v5704 = vpop.f32.mrb[0].mxu0
  %v5705 = vadd.f32 %v4582, %v5704
  %v5706 = vpop.f32.mrb[0].mxu0
  %v5707 = vadd.f32 %v4586, %v5706
  %v5708 = vpop.f32.mrb[0].mxu0
  %v5709 = vadd.f32 %v4582, %v5708
  %v5710 = vpop.f32.mrb[0].mxu0
  %v5711 = vadd.f32 %v4586, %v5710
  %5712 = vmatprep.mubr.bf16.mxu0 %v4425
  %5713 = vmatmul.mubr.bf16.gmra.mrb[0].mxu0 %v4424
  %v5714 = vpop.f32.mrb[0].mxu0
  %v5715 = vadd.f32 %v4582, %v5714
  %v5716 = vpop.f32.mrb[0].mxu0
  %v5717 = vadd.f32 %v4586, %v5716
  %v5718 = vpop.f32.mrb[0].mxu0
  %v5719 = vadd.f32 %v4582, %v5718
  %v5720 = vpop.f32.mrb[0].mxu0
  %v5721 = vadd.f32 %v4586, %v5720
  %5722 = vmatprep.mubr.bf16.mxu0 %v4427
  %5723 = vmatmul.mubr.bf16.gmra.mrb[0].mxu0 %v4426
  %v5724 = vpop.f32.mrb[0].mxu0
  %v5725 = vadd.f32 %v4582, %v5724
  %v5726 = vpop.f32.mrb[0].mxu0
  %v5727 = vadd.f32 %v4586, %v5726
  %v5728 = vpop.f32.mrb[0].mxu0
  %v5729 = vadd.f32 %v4582, %v5728
  %v5730 = vpop.f32.mrb[0].mxu0
  %v5731 = vadd.f32 %v4586, %v5730
  %5732 = vmatprep.mubr.bf16.mxu0 %v4429
  %5733 = vmatmul.mubr.bf16.gmra.mrb[0].mxu0 %v4428
  %v5734 = vpop.f32.mrb[0].mxu0
  %v5735 = vadd.f32 %v4582, %v5734
  %v5736 = vpop.f32.mrb[0].mxu0
  %v5737 = vadd.f32 %v4586, %v5736
  %v5738 = vpop.f32.mrb[0].mxu0
  %v5739 = vadd.f32 %v4582, %v5738
  %v5740 = vpop.f32.mrb[0].mxu0
  %v5741 = vadd.f32 %v4586, %v5740
  %5742 = vmatprep.mubr.bf16.mxu0 %v4431
  %5743 = vmatmul.mubr.bf16.gmra.mrb[0].mxu0 %v4430
  %v5744 = vpop.f32.mrb[0].mxu0
  %v5745 = vadd.f32 %v4582, %v5744
  %v5746 = vpop.f32.mrb[0].mxu0
  %v5747 = vadd.f32 %v4586, %v5746
  %v5748 = vpop.f32.mrb[0].mxu0
  %v5749 = vadd.f32 %v4582, %v5748
  %v5750 = vpop.f32.mrb[0].mxu0
  %v5751 = vadd.f32 %v4586, %v5750
  %5752 = vdwg.mxu0
  %5753 = vmatprep.subr.bf16.mxu0 0
  %5754 = vmatpush1.bf16.msra.mxu0 %v4956
  %5755 = vmatprep.subr.bf16.mxu0 0
  %5756 = vmatpush1.bf16.msra.mxu0 %v4963
  %5757 = vmatprep.subr.bf16.mxu0 0
  %5758 = vmatpush1.bf16.msra.mxu0 %v4970
  %5759 = vmatprep.subr.bf16.mxu0 0
  %5760 = vmatpush1.bf16.msra.mxu0 %v4977
  %5761 = vmatprep.subr.bf16.mxu0 0
  %5762 = vmatpush1.bf16.msra.mxu0 %v4984
  %5763 = vmatprep.subr.bf16.mxu0 0
  %5764 = vmatpush1.bf16.msra.mxu0 %v4991
  %5765 = vmatprep.subr.bf16.mxu0 0
  %5766 = vmatpush1.bf16.msra.mxu0 %v4998
  %5767 = vmatprep.subr.bf16.mxu0 0
  %5768 = vmatpush1.bf16.msra.mxu0 %v5005
  %5769 = vmatprep.subr.bf16.mxu0 0
  %5770 = vmatpush1.bf16.msra.mxu0 %v5012
  %5771 = vmatprep.subr.bf16.mxu0 0
  %5772 = vmatpush1.bf16.msra.mxu0 %v5019
  %5773 = vmatprep.subr.bf16.mxu0 0
  %5774 = vmatpush1.bf16.msra.mxu0 %v5026
  %5775 = vmatprep.subr.bf16.mxu0 0
  %5776 = vmatpush1.bf16.msra.mxu0 %v5033
  %5777 = vmatprep.subr.bf16.mxu0 0
  %5778 = vmatpush1.bf16.msra.mxu0 %v5040
  %5779 = vmatprep.subr.bf16.mxu0 0
  %5780 = vmatpush1.bf16.msra.mxu0 %v5047
  %5781 = vmatprep.subr.bf16.mxu0 0
  %5782 = vmatpush1.bf16.msra.mxu0 %v5054
  %5783 = vmatprep.subr.bf16.mxu0 0
  %5784 = vmatpush1.bf16.msra.mxu0 %v5061
  %5785 = vmatprep.mubr.bf16.mxu0 %v4401
  %5786 = vmatmul.mubr.bf16.gmra.mrb[0].mxu0 %v4400
  %v5787 = vpop.f32.mrb[0].mxu0
  %v5788 = vadd.f32 %v4590, %v5787
  %v5789 = vpop.f32.mrb[0].mxu0
  %v5790 = vpop.f32.mrb[0].mxu0
  %v5791 = vadd.f32 %v4590, %v5790
  %v5792 = vpop.f32.mrb[0].mxu0
  %5793 = vmatprep.mubr.bf16.mxu0 %v4403
  %5794 = vmatmul.mubr.bf16.gmra.mrb[0].mxu0 %v4402
  %v5795 = vpop.f32.mrb[0].mxu0
  %v5796 = vadd.f32 %v4590, %v5795
  %v5797 = vpop.f32.mrb[0].mxu0
  %v5798 = vpop.f32.mrb[0].mxu0
  %v5799 = vadd.f32 %v4590, %v5798
  %v5800 = vpop.f32.mrb[0].mxu0
  %5801 = vmatprep.mubr.bf16.mxu0 %v4405
  %5802 = vmatmul.mubr.bf16.gmra.mrb[0].mxu0 %v4404
  %v5803 = vpop.f32.mrb[0].mxu0
  %v5804 = vadd.f32 %v4590, %v5803
  %v5805 = vpop.f32.mrb[0].mxu0
  %v5806 = vpop.f32.mrb[0].mxu0
  %v5807 = vadd.f32 %v4590, %v5806
  %v5808 = vpop.f32.mrb[0].mxu0
  %5809 = vmatprep.mubr.bf16.mxu0 %v4407
  %5810 = vmatmul.mubr.bf16.gmra.mrb[0].mxu0 %v4406
  %v5811 = vpop.f32.mrb[0].mxu0
  %v5812 = vadd.f32 %v4590, %v5811
  %v5813 = vpop.f32.mrb[0].mxu0
  %v5814 = vpop.f32.mrb[0].mxu0
  %v5815 = vadd.f32 %v4590, %v5814
  %v5816 = vpop.f32.mrb[0].mxu0
  %5817 = vmatprep.mubr.bf16.mxu0 %v4409
  %5818 = vmatmul.mubr.bf16.gmra.mrb[0].mxu0 %v4408
  %v5819 = vpop.f32.mrb[0].mxu0
  %v5820 = vadd.f32 %v4590, %v5819
  %v5821 = vpop.f32.mrb[0].mxu0
  %v5822 = vpop.f32.mrb[0].mxu0
  %v5823 = vadd.f32 %v4590, %v5822
  %v5824 = vpop.f32.mrb[0].mxu0
  %5825 = vmatprep.mubr.bf16.mxu0 %v4411
  %5826 = vmatmul.mubr.bf16.gmra.mrb[0].mxu0 %v4410
  %v5827 = vpop.f32.mrb[0].mxu0
  %v5828 = vadd.f32 %v4590, %v5827
  %v5829 = vpop.f32.mrb[0].mxu0
  %v5830 = vpop.f32.mrb[0].mxu0
  %v5831 = vadd.f32 %v4590, %v5830
  %v5832 = vpop.f32.mrb[0].mxu0
  %5833 = vmatprep.mubr.bf16.mxu0 %v4413
  %5834 = vmatmul.mubr.bf16.gmra.mrb[0].mxu0 %v4412
  %v5835 = vpop.f32.mrb[0].mxu0
  %v5836 = vadd.f32 %v4590, %v5835
  %v5837 = vpop.f32.mrb[0].mxu0
  %v5838 = vpop.f32.mrb[0].mxu0
  %v5839 = vadd.f32 %v4590, %v5838
  %v5840 = vpop.f32.mrb[0].mxu0
  %5841 = vmatprep.mubr.bf16.mxu0 %v4415
  %5842 = vmatmul.mubr.bf16.gmra.mrb[0].mxu0 %v4414
  %v5843 = vpop.f32.mrb[0].mxu0
  %v5844 = vadd.f32 %v4590, %v5843
  %v5845 = vpop.f32.mrb[0].mxu0
  %v5846 = vpop.f32.mrb[0].mxu0
  %v5847 = vadd.f32 %v4590, %v5846
  %v5848 = vpop.f32.mrb[0].mxu0
  %5849 = vmatprep.mubr.bf16.mxu0 %v4417
  %5850 = vmatmul.mubr.bf16.gmra.mrb[0].mxu0 %v4416
  %v5851 = vpop.f32.mrb[0].mxu0
  %v5852 = vadd.f32 %v4590, %v5851
  %v5853 = vpop.f32.mrb[0].mxu0
  %v5854 = vpop.f32.mrb[0].mxu0
  %v5855 = vadd.f32 %v4590, %v5854
  %v5856 = vpop.f32.mrb[0].mxu0
  %5857 = vmatprep.mubr.bf16.mxu0 %v4419
  %5858 = vmatmul.mubr.bf16.gmra.mrb[0].mxu0 %v4418
  %v5859 = vpop.f32.mrb[0].mxu0
  %v5860 = vadd.f32 %v4590, %v5859
  %v5861 = vpop.f32.mrb[0].mxu0
  %v5862 = vpop.f32.mrb[0].mxu0
  %v5863 = vadd.f32 %v4590, %v5862
  %v5864 = vpop.f32.mrb[0].mxu0
  %5865 = vmatprep.mubr.bf16.mxu0 %v4421
  %5866 = vmatmul.mubr.bf16.gmra.mrb[0].mxu0 %v4420
  %v5867 = vpop.f32.mrb[0].mxu0
  %v5868 = vadd.f32 %v4590, %v5867
  %v5869 = vpop.f32.mrb[0].mxu0
  %v5870 = vpop.f32.mrb[0].mxu0
  %v5871 = vadd.f32 %v4590, %v5870
  %v5872 = vpop.f32.mrb[0].mxu0
  %5873 = vmatprep.mubr.bf16.mxu0 %v4423
  %5874 = vmatmul.mubr.bf16.gmra.mrb[0].mxu0 %v4422
  %v5875 = vpop.f32.mrb[0].mxu0
  %v5876 = vadd.f32 %v4590, %v5875
  %v5877 = vpop.f32.mrb[0].mxu0
  %v5878 = vpop.f32.mrb[0].mxu0
  %v5879 = vadd.f32 %v4590, %v5878
  %v5880 = vpop.f32.mrb[0].mxu0
  %5881 = vmatprep.mubr.bf16.mxu0 %v4425
  %5882 = vmatmul.mubr.bf16.gmra.mrb[0].mxu0 %v4424
  %v5883 = vpop.f32.mrb[0].mxu0
  %v5884 = vadd.f32 %v4590, %v5883
  %v5885 = vpop.f32.mrb[0].mxu0
  %v5886 = vpop.f32.mrb[0].mxu0
  %v5887 = vadd.f32 %v4590, %v5886
  %v5888 = vpop.f32.mrb[0].mxu0
  %5889 = vmatprep.mubr.bf16.mxu0 %v4427
  %5890 = vmatmul.mubr.bf16.gmra.mrb[0].mxu0 %v4426
  %v5891 = vpop.f32.mrb[0].mxu0
  %v5892 = vadd.f32 %v4590, %v5891
  %v5893 = vpop.f32.mrb[0].mxu0
  %v5894 = vpop.f32.mrb[0].mxu0
  %v5895 = vadd.f32 %v4590, %v5894
  %v5896 = vpop.f32.mrb[0].mxu0
  %5897 = vmatprep.mubr.bf16.mxu0 %v4429
  %5898 = vmatmul.mubr.bf16.gmra.mrb[0].mxu0 %v4428
  %v5899 = vpop.f32.mrb[0].mxu0
  %v5900 = vadd.f32 %v4590, %v5899
  %v5901 = vpop.f32.mrb[0].mxu0
  %v5902 = vpop.f32.mrb[0].mxu0
  %v5903 = vadd.f32 %v4590, %v5902
  %v5904 = vpop.f32.mrb[0].mxu0
  %5905 = vmatprep.mubr.bf16.mxu0 %v4431
  %5906 = vmatmul.mubr.bf16.gmra.mrb[0].mxu0 %v4430
  %v5907 = vpop.f32.mrb[0].mxu0
  %v5908 = vadd.f32 %v4590, %v5907
  %v5909 = vpop.f32.mrb[0].mxu0
  %v5910 = vpop.f32.mrb[0].mxu0
  %v5911 = vadd.f32 %v4590, %v5910
  %v5912 = vpop.f32.mrb[0].mxu0
  %5913 = vdwg.mxu0
  %v5914 = vxor.u32 %v5209, 2147483648
  %v5915 = vxor.u32 %v5211, 2147483648
  %v5916 = vxor.u32 %v5402, 2147483648
  %v5917 = vxor.u32 %v5404, 2147483648
  %v5918 = vxor.u32 %v5595, 2147483648
  %v5919 = vxor.u32 %v5597, 2147483648
  %v5920 = vxor.u32 %v5788, 2147483648
  %v5921 = vxor.u32 %v5213, 2147483648
  %v5922 = vxor.u32 %v5215, 2147483648
  %v5923 = vxor.u32 %v5406, 2147483648
  %v5924 = vxor.u32 %v5408, 2147483648
  %v5925 = vxor.u32 %v5599, 2147483648
  %v5926 = vxor.u32 %v5601, 2147483648
  %v5927 = vxor.u32 %v5791, 2147483648
  %v5928 = vxor.u32 %v5219, 2147483648
  %v5929 = vxor.u32 %v5221, 2147483648
  %v5930 = vxor.u32 %v5412, 2147483648
  %v5931 = vxor.u32 %v5414, 2147483648
  %v5932 = vxor.u32 %v5605, 2147483648
  %v5933 = vxor.u32 %v5607, 2147483648
  %v5934 = vxor.u32 %v5796, 2147483648
  %v5935 = vxor.u32 %v5223, 2147483648
  %v5936 = vxor.u32 %v5225, 2147483648
  %v5937 = vxor.u32 %v5416, 2147483648
  %v5938 = vxor.u32 %v5418, 2147483648
  %v5939 = vxor.u32 %v5609, 2147483648
  %v5940 = vxor.u32 %v5611, 2147483648
  %v5941 = vxor.u32 %v5799, 2147483648
  %v5942 = vxor.u32 %v5229, 2147483648
  %v5943 = vxor.u32 %v5231, 2147483648
  %v5944 = vxor.u32 %v5422, 2147483648
  %v5945 = vxor.u32 %v5424, 2147483648
  %v5946 = vxor.u32 %v5615, 2147483648
  %v5947 = vxor.u32 %v5617, 2147483648
  %v5948 = vxor.u32 %v5804, 2147483648
  %v5949 = vxor.u32 %v5233, 2147483648
  %v5950 = vxor.u32 %v5235, 2147483648
  %v5951 = vxor.u32 %v5426, 2147483648
  %v5952 = vxor.u32 %v5428, 2147483648
  %v5953 = vxor.u32 %v5619, 2147483648
  %v5954 = vxor.u32 %v5621, 2147483648
  %v5955 = vxor.u32 %v5807, 2147483648
  %v5956 = vxor.u32 %v5239, 2147483648
  %v5957 = vxor.u32 %v5241, 2147483648
  %v5958 = vxor.u32 %v5432, 2147483648
  %v5959 = vxor.u32 %v5434, 2147483648
  %v5960 = vxor.u32 %v5625, 2147483648
  %v5961 = vxor.u32 %v5627, 2147483648
  %v5962 = vxor.u32 %v5812, 2147483648
  %v5963 = vxor.u32 %v5243, 2147483648
  %v5964 = vxor.u32 %v5245, 2147483648
  %v5965 = vxor.u32 %v5436, 2147483648
  %v5966 = vxor.u32 %v5438, 2147483648
  %v5967 = vxor.u32 %v5629, 2147483648
  %v5968 = vxor.u32 %v5631, 2147483648
  %v5969 = vxor.u32 %v5815, 2147483648
  %v5970 = vxor.u32 %v5249, 2147483648
  %v5971 = vxor.u32 %v5251, 2147483648
  %v5972 = vxor.u32 %v5442, 2147483648
  %v5973 = vxor.u32 %v5444, 2147483648
  %v5974 = vxor.u32 %v5635, 2147483648
  %v5975 = vxor.u32 %v5637, 2147483648
  %v5976 = vxor.u32 %v5820, 2147483648
  %v5977 = vxor.u32 %v5253, 2147483648
  %v5978 = vxor.u32 %v5255, 2147483648
  %v5979 = vxor.u32 %v5446, 2147483648
  %v5980 = vxor.u32 %v5448, 2147483648
  %v5981 = vxor.u32 %v5639, 2147483648
  %v5982 = vxor.u32 %v5641, 2147483648
  %v5983 = vxor.u32 %v5823, 2147483648
  %v5984 = vxor.u32 %v5259, 2147483648
  %v5985 = vxor.u32 %v5261, 2147483648
  %v5986 = vxor.u32 %v5452, 2147483648
  %v5987 = vxor.u32 %v5454, 2147483648
  %v5988 = vxor.u32 %v5645, 2147483648
  %v5989 = vxor.u32 %v5647, 2147483648
  %v5990 = vxor.u32 %v5828, 2147483648
  %v5991 = vxor.u32 %v5263, 2147483648
  %v5992 = vxor.u32 %v5265, 2147483648
  %v5993 = vxor.u32 %v5456, 2147483648
  %v5994 = vxor.u32 %v5458, 2147483648
  %v5995 = vxor.u32 %v5649, 2147483648
  %v5996 = vxor.u32 %v5651, 2147483648
  %v5997 = vxor.u32 %v5831, 2147483648
  %v5998 = vxor.u32 %v5269, 2147483648
  %v5999 = vxor.u32 %v5271, 2147483648
  %v6000 = vxor.u32 %v5462, 2147483648
  %v6001 = vxor.u32 %v5464, 2147483648
  %v6002 = vxor.u32 %v5655, 2147483648
  %v6003 = vxor.u32 %v5657, 2147483648
  %v6004 = vxor.u32 %v5836, 2147483648
  %v6005 = vxor.u32 %v5273, 2147483648
  %v6006 = vxor.u32 %v5275, 2147483648
  %v6007 = vxor.u32 %v5466, 2147483648
  %v6008 = vxor.u32 %v5468, 2147483648
  %v6009 = vxor.u32 %v5659, 2147483648
  %v6010 = vxor.u32 %v5661, 2147483648
  %v6011 = vxor.u32 %v5839, 2147483648
  %v6012 = vxor.u32 %v5279, 2147483648
  %v6013 = vxor.u32 %v5281, 2147483648
  %v6014 = vxor.u32 %v5472, 2147483648
  %v6015 = vxor.u32 %v5474, 2147483648
  %v6016 = vxor.u32 %v5665, 2147483648
  %v6017 = vxor.u32 %v5667, 2147483648
  %v6018 = vxor.u32 %v5844, 2147483648
  %v6019 = vxor.u32 %v5283, 2147483648
  %v6020 = vxor.u32 %v5285, 2147483648
  %v6021 = vxor.u32 %v5476, 2147483648
  %v6022 = vxor.u32 %v5478, 2147483648
  %v6023 = vxor.u32 %v5669, 2147483648
  %v6024 = vxor.u32 %v5671, 2147483648
  %v6025 = vxor.u32 %v5847, 2147483648
  %v6026 = vxor.u32 %v5289, 2147483648
  %v6027 = vxor.u32 %v5291, 2147483648
  %v6028 = vxor.u32 %v5482, 2147483648
  %v6029 = vxor.u32 %v5484, 2147483648
  %v6030 = vxor.u32 %v5675, 2147483648
  %v6031 = vxor.u32 %v5677, 2147483648
  %v6032 = vxor.u32 %v5852, 2147483648
  %v6033 = vxor.u32 %v5293, 2147483648
  %v6034 = vxor.u32 %v5295, 2147483648
  %v6035 = vxor.u32 %v5486, 2147483648
  %v6036 = vxor.u32 %v5488, 2147483648
  %v6037 = vxor.u32 %v5679, 2147483648
  %v6038 = vxor.u32 %v5681, 2147483648
  %v6039 = vxor.u32 %v5855, 2147483648
  %v6040 = vxor.u32 %v5299, 2147483648
  %v6041 = vxor.u32 %v5301, 2147483648
  %v6042 = vxor.u32 %v5492, 2147483648
  %v6043 = vxor.u32 %v5494, 2147483648
  %v6044 = vxor.u32 %v5685, 2147483648
  %v6045 = vxor.u32 %v5687, 2147483648
  %v6046 = vxor.u32 %v5860, 2147483648
  %v6047 = vxor.u32 %v5303, 2147483648
  %v6048 = vxor.u32 %v5305, 2147483648
  %v6049 = vxor.u32 %v5496, 2147483648
  %v6050 = vxor.u32 %v5498, 2147483648
  %v6051 = vxor.u32 %v5689, 2147483648
  %v6052 = vxor.u32 %v5691, 2147483648
  %v6053 = vxor.u32 %v5863, 2147483648
  %v6054 = vxor.u32 %v5309, 2147483648
  %v6055 = vxor.u32 %v5311, 2147483648
  %v6056 = vxor.u32 %v5502, 2147483648
  %v6057 = vxor.u32 %v5504, 2147483648
  %v6058 = vxor.u32 %v5695, 2147483648
  %v6059 = vxor.u32 %v5697, 2147483648
  %v6060 = vxor.u32 %v5868, 2147483648
  %v6061 = vxor.u32 %v5313, 2147483648
  %v6062 = vxor.u32 %v5315, 2147483648
  %v6063 = vxor.u32 %v5506, 2147483648
  %v6064 = vxor.u32 %v5508, 2147483648
  %v6065 = vxor.u32 %v5699, 2147483648
  %v6066 = vxor.u32 %v5701, 2147483648
  %v6067 = vxor.u32 %v5871, 2147483648
  %v6068 = vxor.u32 %v5319, 2147483648
  %v6069 = vxor.u32 %v5321, 2147483648
  %v6070 = vxor.u32 %v5512, 2147483648
  %v6071 = vxor.u32 %v5514, 2147483648
  %v6072 = vxor.u32 %v5705, 2147483648
  %v6073 = vxor.u32 %v5707, 2147483648
  %v6074 = vxor.u32 %v5876, 2147483648
  %v6075 = vxor.u32 %v5323, 2147483648
  %v6076 = vxor.u32 %v5325, 2147483648
  %v6077 = vxor.u32 %v5516, 2147483648
  %v6078 = vxor.u32 %v5518, 2147483648
  %v6079 = vxor.u32 %v5709, 2147483648
  %v6080 = vxor.u32 %v5711, 2147483648
  %v6081 = vxor.u32 %v5879, 2147483648
  %v6082 = vxor.u32 %v5329, 2147483648
  %v6083 = vxor.u32 %v5331, 2147483648
  %v6084 = vxor.u32 %v5522, 2147483648
  %v6085 = vxor.u32 %v5524, 2147483648
  %v6086 = vxor.u32 %v5715, 2147483648
  %v6087 = vxor.u32 %v5717, 2147483648
  %v6088 = vxor.u32 %v5884, 2147483648
  %v6089 = vxor.u32 %v5333, 2147483648
  %v6090 = vxor.u32 %v5335, 2147483648
  %v6091 = vxor.u32 %v5526, 2147483648
  %v6092 = vxor.u32 %v5528, 2147483648
  %v6093 = vxor.u32 %v5719, 2147483648
  %v6094 = vxor.u32 %v5721, 2147483648
  %v6095 = vxor.u32 %v5887, 2147483648
  %v6096 = vxor.u32 %v5339, 2147483648
  %v6097 = vxor.u32 %v5341, 2147483648
  %v6098 = vxor.u32 %v5532, 2147483648
  %v6099 = vxor.u32 %v5534, 2147483648
  %v6100 = vxor.u32 %v5725, 2147483648
  %v6101 = vxor.u32 %v5727, 2147483648
  %v6102 = vxor.u32 %v5892, 2147483648
  %v6103 = vxor.u32 %v5343, 2147483648
  %v6104 = vxor.u32 %v5345, 2147483648
  %v6105 = vxor.u32 %v5536, 2147483648
  %v6106 = vxor.u32 %v5538, 2147483648
  %v6107 = vxor.u32 %v5729, 2147483648
  %v6108 = vxor.u32 %v5731, 2147483648
  %v6109 = vxor.u32 %v5895, 2147483648
  %v6110 = vxor.u32 %v5349, 2147483648
  %v6111 = vxor.u32 %v5351, 2147483648
  %v6112 = vxor.u32 %v5542, 2147483648
  %v6113 = vxor.u32 %v5544, 2147483648
  %v6114 = vxor.u32 %v5735, 2147483648
  %v6115 = vxor.u32 %v5737, 2147483648
  %v6116 = vxor.u32 %v5900, 2147483648
  %v6117 = vxor.u32 %v5353, 2147483648
  %v6118 = vxor.u32 %v5355, 2147483648
  %v6119 = vxor.u32 %v5546, 2147483648
  %v6120 = vxor.u32 %v5548, 2147483648
  %v6121 = vxor.u32 %v5739, 2147483648
  %v6122 = vxor.u32 %v5741, 2147483648
  %v6123 = vxor.u32 %v5903, 2147483648
  %v6124 = vxor.u32 %v5359, 2147483648
  %v6125 = vxor.u32 %v5361, 2147483648
  %v6126 = vxor.u32 %v5552, 2147483648
  %v6127 = vxor.u32 %v5554, 2147483648
  %v6128 = vxor.u32 %v5745, 2147483648
  %v6129 = vxor.u32 %v5747, 2147483648
  %v6130 = vxor.u32 %v5908, 2147483648
  %v6131 = vxor.u32 %v5363, 2147483648
  %v6132 = vxor.u32 %v5365, 2147483648
  %v6133 = vxor.u32 %v5556, 2147483648
  %v6134 = vxor.u32 %v5558, 2147483648
  %v6135 = vxor.u32 %v5749, 2147483648
  %v6136 = vxor.u32 %v5751, 2147483648
  %v6137 = vxor.u32 %v5911, 2147483648
  %v6138 = vmul.f32 %v5914, 1.442695
  %v6139 = vpow.pop %v6138
  %v6140 = vmul.f32 %v5915, 1.442695
  %v6141 = vpow.pop %v6140
  %v6142 = vmul.f32 %v5916, 1.442695
  %v6143 = vpow.pop %v6142
  %v6144 = vmul.f32 %v5917, 1.442695
  %v6145 = vpow.pop %v6144
  %v6146 = vmul.f32 %v5918, 1.442695
  %v6147 = vpow.pop %v6146
  %v6148 = vmul.f32 %v5919, 1.442695
  %v6149 = vpow.pop %v6148
  %v6150 = vmul.f32 %v5920, 1.442695
  %v6151 = vpow.pop %v6150
  %v6152 = vmul.f32 %v5921, 1.442695
  %v6153 = vpow.pop %v6152
  %v6154 = vmul.f32 %v5922, 1.442695
  %v6155 = vpow.pop %v6154
  %v6156 = vmul.f32 %v5923, 1.442695
  %v6157 = vpow.pop %v6156
  %v6158 = vmul.f32 %v5924, 1.442695
  %v6159 = vpow.pop %v6158
  %v6160 = vmul.f32 %v5925, 1.442695
  %v6161 = vpow.pop %v6160
  %v6162 = vmul.f32 %v5926, 1.442695
  %v6163 = vpow.pop %v6162
  %v6164 = vmul.f32 %v5927, 1.442695
  %v6165 = vpow.pop %v6164
  %v6166 = vmul.f32 %v5928, 1.442695
  %v6167 = vpow.pop %v6166
  %v6168 = vmul.f32 %v5929, 1.442695
  %v6169 = vpow.pop %v6168
  %v6170 = vmul.f32 %v5930, 1.442695
  %v6171 = vpow.pop %v6170
  %v6172 = vmul.f32 %v5931, 1.442695
  %v6173 = vpow.pop %v6172
  %v6174 = vmul.f32 %v5932, 1.442695
  %v6175 = vpow.pop %v6174
  %v6176 = vmul.f32 %v5933, 1.442695
  %v6177 = vpow.pop %v6176
  %v6178 = vmul.f32 %v5934, 1.442695
  %v6179 = vpow.pop %v6178
  %v6180 = vmul.f32 %v5935, 1.442695
  %v6181 = vpow.pop %v6180
  %v6182 = vmul.f32 %v5936, 1.442695
  %v6183 = vpow.pop %v6182
  %v6184 = vmul.f32 %v5937, 1.442695
  %v6185 = vpow.pop %v6184
  %v6186 = vmul.f32 %v5938, 1.442695
  %v6187 = vpow.pop %v6186
  %v6188 = vmul.f32 %v5939, 1.442695
  %v6189 = vpow.pop %v6188
  %v6190 = vmul.f32 %v5940, 1.442695
  %v6191 = vpow.pop %v6190
  %v6192 = vmul.f32 %v5941, 1.442695
  %v6193 = vpow.pop %v6192
  %v6194 = vmul.f32 %v5942, 1.442695
  %v6195 = vpow.pop %v6194
  %v6196 = vmul.f32 %v5943, 1.442695
  %v6197 = vpow.pop %v6196
  %v6198 = vmul.f32 %v5944, 1.442695
  %v6199 = vpow.pop %v6198
  %v6200 = vmul.f32 %v5945, 1.442695
  %v6201 = vpow.pop %v6200
  %v6202 = vmul.f32 %v5946, 1.442695
  %v6203 = vpow.pop %v6202
  %v6204 = vmul.f32 %v5947, 1.442695
  %v6205 = vpow.pop %v6204
  %v6206 = vmul.f32 %v5948, 1.442695
  %v6207 = vpow.pop %v6206
  %v6208 = vmul.f32 %v5949, 1.442695
  %v6209 = vpow.pop %v6208
  %v6210 = vmul.f32 %v5950, 1.442695
  %v6211 = vpow.pop %v6210
  %v6212 = vmul.f32 %v5951, 1.442695
  %v6213 = vpow.pop %v6212
  %v6214 = vmul.f32 %v5952, 1.442695
  %v6215 = vpow.pop %v6214
  %v6216 = vmul.f32 %v5953, 1.442695
  %v6217 = vpow.pop %v6216
  %v6218 = vmul.f32 %v5954, 1.442695
  %v6219 = vpow.pop %v6218
  %v6220 = vmul.f32 %v5955, 1.442695
  %v6221 = vpow.pop %v6220
  %v6222 = vmul.f32 %v5956, 1.442695
  %v6223 = vpow.pop %v6222
  %v6224 = vmul.f32 %v5957, 1.442695
  %v6225 = vpow.pop %v6224
  %v6226 = vmul.f32 %v5958, 1.442695
  %v6227 = vpow.pop %v6226
  %v6228 = vmul.f32 %v5959, 1.442695
  %v6229 = vpow.pop %v6228
  %v6230 = vmul.f32 %v5960, 1.442695
  %v6231 = vpow.pop %v6230
  %v6232 = vmul.f32 %v5961, 1.442695
  %v6233 = vpow.pop %v6232
  %v6234 = vmul.f32 %v5962, 1.442695
  %v6235 = vpow.pop %v6234
  %v6236 = vmul.f32 %v5963, 1.442695
  %v6237 = vpow.pop %v6236
  %v6238 = vmul.f32 %v5964, 1.442695
  %v6239 = vpow.pop %v6238
  %v6240 = vmul.f32 %v5965, 1.442695
  %v6241 = vpow.pop %v6240
  %v6242 = vmul.f32 %v5966, 1.442695
  %v6243 = vpow.pop %v6242
  %v6244 = vmul.f32 %v5967, 1.442695
  %v6245 = vpow.pop %v6244
  %v6246 = vmul.f32 %v5968, 1.442695
  %v6247 = vpow.pop %v6246
  %v6248 = vmul.f32 %v5969, 1.442695
  %v6249 = vpow.pop %v6248
  %v6250 = vmul.f32 %v5970, 1.442695
  %v6251 = vpow.pop %v6250
  %v6252 = vmul.f32 %v5971, 1.442695
  %v6253 = vpow.pop %v6252
  %v6254 = vmul.f32 %v5972, 1.442695
  %v6255 = vpow.pop %v6254
  %v6256 = vmul.f32 %v5973, 1.442695
  %v6257 = vpow.pop %v6256
  %v6258 = vmul.f32 %v5974, 1.442695
  %v6259 = vpow.pop %v6258
  %v6260 = vmul.f32 %v5975, 1.442695
  %v6261 = vpow.pop %v6260
  %v6262 = vmul.f32 %v5976, 1.442695
  %v6263 = vpow.pop %v6262
  %v6264 = vmul.f32 %v5977, 1.442695
  %v6265 = vpow.pop %v6264
  %v6266 = vmul.f32 %v5978, 1.442695
  %v6267 = vpow.pop %v6266
  %v6268 = vmul.f32 %v5979, 1.442695
  %v6269 = vpow.pop %v6268
  %v6270 = vmul.f32 %v5980, 1.442695
  %v6271 = vpow.pop %v6270
  %v6272 = vmul.f32 %v5981, 1.442695
  %v6273 = vpow.pop %v6272
  %v6274 = vmul.f32 %v5982, 1.442695
  %v6275 = vpow.pop %v6274
  %v6276 = vmul.f32 %v5983, 1.442695
  %v6277 = vpow.pop %v6276
  %v6278 = vmul.f32 %v5984, 1.442695
  %v6279 = vpow.pop %v6278
  %v6280 = vmul.f32 %v5985, 1.442695
  %v6281 = vpow.pop %v6280
  %v6282 = vmul.f32 %v5986, 1.442695
  %v6283 = vpow.pop %v6282
  %v6284 = vmul.f32 %v5987, 1.442695
  %v6285 = vpow.pop %v6284
  %v6286 = vmul.f32 %v5988, 1.442695
  %v6287 = vpow.pop %v6286
  %v6288 = vmul.f32 %v5989, 1.442695
  %v6289 = vpow.pop %v6288
  %v6290 = vmul.f32 %v5990, 1.442695
  %v6291 = vpow.pop %v6290
  %v6292 = vmul.f32 %v5991, 1.442695
  %v6293 = vpow.pop %v6292
  %v6294 = vmul.f32 %v5992, 1.442695
  %v6295 = vpow.pop %v6294
  %v6296 = vmul.f32 %v5993, 1.442695
  %v6297 = vpow.pop %v6296
  %v6298 = vmul.f32 %v5994, 1.442695
  %v6299 = vpow.pop %v6298
  %v6300 = vmul.f32 %v5995, 1.442695
  %v6301 = vpow.pop %v6300
  %v6302 = vmul.f32 %v5996, 1.442695
  %v6303 = vpow.pop %v6302
  %v6304 = vmul.f32 %v5997, 1.442695
  %v6305 = vpow.pop %v6304
  %v6306 = vmul.f32 %v5998, 1.442695
  %v6307 = vpow.pop %v6306
  %v6308 = vmul.f32 %v5999, 1.442695
  %v6309 = vpow.pop %v6308
  %v6310 = vmul.f32 %v6000, 1.442695
  %v6311 = vpow.pop %v6310
  %v6312 = vmul.f32 %v6001, 1.442695
  %v6313 = vpow.pop %v6312
  %v6314 = vmul.f32 %v6002, 1.442695
  %v6315 = vpow.pop %v6314
  %v6316 = vmul.f32 %v6003, 1.442695
  %v6317 = vpow.pop %v6316
  %v6318 = vmul.f32 %v6004, 1.442695
  %v6319 = vpow.pop %v6318
  %v6320 = vmul.f32 %v6005, 1.442695
  %v6321 = vpow.pop %v6320
  %v6322 = vmul.f32 %v6006, 1.442695
  %v6323 = vpow.pop %v6322
  %v6324 = vmul.f32 %v6007, 1.442695
  %v6325 = vpow.pop %v6324
  %v6326 = vmul.f32 %v6008, 1.442695
  %v6327 = vpow.pop %v6326
  %v6328 = vmul.f32 %v6009, 1.442695
  %v6329 = vpow.pop %v6328
  %v6330 = vmul.f32 %v6010, 1.442695
  %v6331 = vpow.pop %v6330
  %v6332 = vmul.f32 %v6011, 1.442695
  %v6333 = vpow.pop %v6332
  %v6334 = vmul.f32 %v6012, 1.442695
  %v6335 = vpow.pop %v6334
  %v6336 = vmul.f32 %v6013, 1.442695
  %v6337 = vpow.pop %v6336
  %v6338 = vmul.f32 %v6014, 1.442695
  %v6339 = vpow.pop %v6338
  %v6340 = vmul.f32 %v6015, 1.442695
  %v6341 = vpow.pop %v6340
  %v6342 = vmul.f32 %v6016, 1.442695
  %v6343 = vpow.pop %v6342
  %v6344 = vmul.f32 %v6017, 1.442695
  %v6345 = vpow.pop %v6344
  %v6346 = vmul.f32 %v6018, 1.442695
  %v6347 = vpow.pop %v6346
  %v6348 = vmul.f32 %v6019, 1.442695
  %v6349 = vpow.pop %v6348
  %v6350 = vmul.f32 %v6020, 1.442695
  %v6351 = vpow.pop %v6350
  %v6352 = vmul.f32 %v6021, 1.442695
  %v6353 = vpow.pop %v6352
  %v6354 = vmul.f32 %v6022, 1.442695
  %v6355 = vpow.pop %v6354
  %v6356 = vmul.f32 %v6023, 1.442695
  %v6357 = vpow.pop %v6356
  %v6358 = vmul.f32 %v6024, 1.442695
  %v6359 = vpow.pop %v6358
  %v6360 = vmul.f32 %v6025, 1.442695
  %v6361 = vpow.pop %v6360
  %v6362 = vmul.f32 %v6026, 1.442695
  %v6363 = vpow.pop %v6362
  %v6364 = vmul.f32 %v6027, 1.442695
  %v6365 = vpow.pop %v6364
  %v6366 = vmul.f32 %v6028, 1.442695
  %v6367 = vpow.pop %v6366
  %v6368 = vmul.f32 %v6029, 1.442695
  %v6369 = vpow.pop %v6368
  %v6370 = vmul.f32 %v6030, 1.442695
  %v6371 = vpow.pop %v6370
  %v6372 = vmul.f32 %v6031, 1.442695
  %v6373 = vpow.pop %v6372
  %v6374 = vmul.f32 %v6032, 1.442695
  %v6375 = vpow.pop %v6374
  %v6376 = vmul.f32 %v6033, 1.442695
  %v6377 = vpow.pop %v6376
  %v6378 = vmul.f32 %v6034, 1.442695
  %v6379 = vpow.pop %v6378
  %v6380 = vmul.f32 %v6035, 1.442695
  %v6381 = vpow.pop %v6380
  %v6382 = vmul.f32 %v6036, 1.442695
  %v6383 = vpow.pop %v6382
  %v6384 = vmul.f32 %v6037, 1.442695
  %v6385 = vpow.pop %v6384
  %v6386 = vmul.f32 %v6038, 1.442695
  %v6387 = vpow.pop %v6386
  %v6388 = vmul.f32 %v6039, 1.442695
  %v6389 = vpow.pop %v6388
  %v6390 = vmul.f32 %v6040, 1.442695
  %v6391 = vpow.pop %v6390
  %v6392 = vmul.f32 %v6041, 1.442695
  %v6393 = vpow.pop %v6392
  %v6394 = vmul.f32 %v6042, 1.442695
  %v6395 = vpow.pop %v6394
  %v6396 = vmul.f32 %v6043, 1.442695
  %v6397 = vpow.pop %v6396
  %v6398 = vmul.f32 %v6044, 1.442695
  %v6399 = vpow.pop %v6398
  %v6400 = vmul.f32 %v6045, 1.442695
  %v6401 = vpow.pop %v6400
  %v6402 = vmul.f32 %v6046, 1.442695
  %v6403 = vpow.pop %v6402
  %v6404 = vmul.f32 %v6047, 1.442695
  %v6405 = vpow.pop %v6404
  %v6406 = vmul.f32 %v6048, 1.442695
  %v6407 = vpow.pop %v6406
  %v6408 = vmul.f32 %v6049, 1.442695
  %v6409 = vpow.pop %v6408
  %v6410 = vmul.f32 %v6050, 1.442695
  %v6411 = vpow.pop %v6410
  %v6412 = vmul.f32 %v6051, 1.442695
  %v6413 = vpow.pop %v6412
  %v6414 = vmul.f32 %v6052, 1.442695
  %v6415 = vpow.pop %v6414
  %v6416 = vmul.f32 %v6053, 1.442695
  %v6417 = vpow.pop %v6416
  %v6418 = vmul.f32 %v6054, 1.442695
  %v6419 = vpow.pop %v6418
  %v6420 = vmul.f32 %v6055, 1.442695
  %v6421 = vpow.pop %v6420
  %v6422 = vmul.f32 %v6056, 1.442695
  %v6423 = vpow.pop %v6422
  %v6424 = vmul.f32 %v6057, 1.442695
  %v6425 = vpow.pop %v6424
  %v6426 = vmul.f32 %v6058, 1.442695
  %v6427 = vpow.pop %v6426
  %v6428 = vmul.f32 %v6059, 1.442695
  %v6429 = vpow.pop %v6428
  %v6430 = vmul.f32 %v6060, 1.442695
  %v6431 = vpow.pop %v6430
  %v6432 = vmul.f32 %v6061, 1.442695
  %v6433 = vpow.pop %v6432
  %v6434 = vmul.f32 %v6062, 1.442695
  %v6435 = vpow.pop %v6434
  %v6436 = vmul.f32 %v6063, 1.442695
  %v6437 = vpow.pop %v6436
  %v6438 = vmul.f32 %v6064, 1.442695
  %v6439 = vpow.pop %v6438
  %v6440 = vmul.f32 %v6065, 1.442695
  %v6441 = vpow.pop %v6440
  %v6442 = vmul.f32 %v6066, 1.442695
  %v6443 = vpow.pop %v6442
  %v6444 = vmul.f32 %v6067, 1.442695
  %v6445 = vpow.pop %v6444
  %v6446 = vmul.f32 %v6068, 1.442695
  %v6447 = vpow.pop %v6446
  %v6448 = vmul.f32 %v6069, 1.442695
  %v6449 = vpow.pop %v6448
  %v6450 = vmul.f32 %v6070, 1.442695
  %v6451 = vpow.pop %v6450
  %v6452 = vmul.f32 %v6071, 1.442695
  %v6453 = vpow.pop %v6452
  %v6454 = vmul.f32 %v6072, 1.442695
  %v6455 = vpow.pop %v6454
  %v6456 = vmul.f32 %v6073, 1.442695
  %v6457 = vpow.pop %v6456
  %v6458 = vmul.f32 %v6074, 1.442695
  %v6459 = vpow.pop %v6458
  %v6460 = vmul.f32 %v6075, 1.442695
  %v6461 = vpow.pop %v6460
  %v6462 = vmul.f32 %v6076, 1.442695
  %v6463 = vpow.pop %v6462
  %v6464 = vmul.f32 %v6077, 1.442695
  %v6465 = vpow.pop %v6464
  %v6466 = vmul.f32 %v6078, 1.442695
  %v6467 = vpow.pop %v6466
  %v6468 = vmul.f32 %v6079, 1.442695
  %v6469 = vpow.pop %v6468
  %v6470 = vmul.f32 %v6080, 1.442695
  %v6471 = vpow.pop %v6470
  %v6472 = vmul.f32 %v6081, 1.442695
  %v6473 = vpow.pop %v6472
  %v6474 = vmul.f32 %v6082, 1.442695
  %v6475 = vpow.pop %v6474
  %v6476 = vmul.f32 %v6083, 1.442695
  %v6477 = vpow.pop %v6476
  %v6478 = vmul.f32 %v6084, 1.442695
  %v6479 = vpow.pop %v6478
  %v6480 = vmul.f32 %v6085, 1.442695
  %v6481 = vpow.pop %v6480
  %v6482 = vmul.f32 %v6086, 1.442695
  %v6483 = vpow.pop %v6482
  %v6484 = vmul.f32 %v6087, 1.442695
  %v6485 = vpow.pop %v6484
  %v6486 = vmul.f32 %v6088, 1.442695
  %v6487 = vpow.pop %v6486
  %v6488 = vmul.f32 %v6089, 1.442695
  %v6489 = vpow.pop %v6488
  %v6490 = vmul.f32 %v6090, 1.442695
  %v6491 = vpow.pop %v6490
  %v6492 = vmul.f32 %v6091, 1.442695
  %v6493 = vpow.pop %v6492
  %v6494 = vmul.f32 %v6092, 1.442695
  %v6495 = vpow.pop %v6494
  %v6496 = vmul.f32 %v6093, 1.442695
  %v6497 = vpow.pop %v6496
  %v6498 = vmul.f32 %v6094, 1.442695
  %v6499 = vpow.pop %v6498
  %v6500 = vmul.f32 %v6095, 1.442695
  %v6501 = vpow.pop %v6500
  %v6502 = vmul.f32 %v6096, 1.442695
  %v6503 = vpow.pop %v6502
  %v6504 = vmul.f32 %v6097, 1.442695
  %v6505 = vpow.pop %v6504
  %v6506 = vmul.f32 %v6098, 1.442695
  %v6507 = vpow.pop %v6506
  %v6508 = vmul.f32 %v6099, 1.442695
  %v6509 = vpow.pop %v6508
  %v6510 = vmul.f32 %v6100, 1.442695
  %v6511 = vpow.pop %v6510
  %v6512 = vmul.f32 %v6101, 1.442695
  %v6513 = vpow.pop %v6512
  %v6514 = vmul.f32 %v6102, 1.442695
  %v6515 = vpow.pop %v6514
  %v6516 = vmul.f32 %v6103, 1.442695
  %v6517 = vpow.pop %v6516
  %v6518 = vmul.f32 %v6104, 1.442695
  %v6519 = vpow.pop %v6518
  %v6520 = vmul.f32 %v6105, 1.442695
  %v6521 = vpow.pop %v6520
  %v6522 = vmul.f32 %v6106, 1.442695
  %v6523 = vpow.pop %v6522
  %v6524 = vmul.f32 %v6107, 1.442695
  %v6525 = vpow.pop %v6524
  %v6526 = vmul.f32 %v6108, 1.442695
  %v6527 = vpow.pop %v6526
  %v6528 = vmul.f32 %v6109, 1.442695
  %v6529 = vpow.pop %v6528
  %v6530 = vmul.f32 %v6110, 1.442695
  %v6531 = vpow.pop %v6530
  %v6532 = vmul.f32 %v6111, 1.442695
  %v6533 = vpow.pop %v6532
  %v6534 = vmul.f32 %v6112, 1.442695
  %v6535 = vpow.pop %v6534
  %v6536 = vmul.f32 %v6113, 1.442695
  %v6537 = vpow.pop %v6536
  %v6538 = vmul.f32 %v6114, 1.442695
  %v6539 = vpow.pop %v6538
  %v6540 = vmul.f32 %v6115, 1.442695
  %v6541 = vpow.pop %v6540
  %v6542 = vmul.f32 %v6116, 1.442695
  %v6543 = vpow.pop %v6542
  %v6544 = vmul.f32 %v6117, 1.442695
  %v6545 = vpow.pop %v6544
  %v6546 = vmul.f32 %v6118, 1.442695
  %v6547 = vpow.pop %v6546
  %v6548 = vmul.f32 %v6119, 1.442695
  %v6549 = vpow.pop %v6548
  %v6550 = vmul.f32 %v6120, 1.442695
  %v6551 = vpow.pop %v6550
  %v6552 = vmul.f32 %v6121, 1.442695
  %v6553 = vpow.pop %v6552
  %v6554 = vmul.f32 %v6122, 1.442695
  %v6555 = vpow.pop %v6554
  %v6556 = vmul.f32 %v6123, 1.442695
  %v6557 = vpow.pop %v6556
  %v6558 = vmul.f32 %v6124, 1.442695
  %v6559 = vpow.pop %v6558
  %v6560 = vmul.f32 %v6125, 1.442695
  %v6561 = vpow.pop %v6560
  %v6562 = vmul.f32 %v6126, 1.442695
  %v6563 = vpow.pop %v6562
  %v6564 = vmul.f32 %v6127, 1.442695
  %v6565 = vpow.pop %v6564
  %v6566 = vmul.f32 %v6128, 1.442695
  %v6567 = vpow.pop %v6566
  %v6568 = vmul.f32 %v6129, 1.442695
  %v6569 = vpow.pop %v6568
  %v6570 = vmul.f32 %v6130, 1.442695
  %v6571 = vpow.pop %v6570
  %v6572 = vmul.f32 %v6131, 1.442695
  %v6573 = vpow.pop %v6572
  %v6574 = vmul.f32 %v6132, 1.442695
  %v6575 = vpow.pop %v6574
  %v6576 = vmul.f32 %v6133, 1.442695
  %v6577 = vpow.pop %v6576
  %v6578 = vmul.f32 %v6134, 1.442695
  %v6579 = vpow.pop %v6578
  %v6580 = vmul.f32 %v6135, 1.442695
  %v6581 = vpow.pop %v6580
  %v6582 = vmul.f32 %v6136, 1.442695
  %v6583 = vpow.pop %v6582
  %v6584 = vmul.f32 %v6137, 1.442695
  %v6585 = vpow.pop %v6584
  %v6586 = vadd.f32 %v6139, 1.0
  %v6587 = vadd.f32 %v6141, 1.0
  %v6588 = vadd.f32 %v6143, 1.0
  %v6589 = vadd.f32 %v6145, 1.0
  %v6590 = vadd.f32 %v6147, 1.0
  %v6591 = vadd.f32 %v6149, 1.0
  %v6592 = vadd.f32 %v6151, 1.0
  %v6593 = vadd.f32 %v6153, 1.0
  %v6594 = vadd.f32 %v6155, 1.0
  %v6595 = vadd.f32 %v6157, 1.0
  %v6596 = vadd.f32 %v6159, 1.0
  %v6597 = vadd.f32 %v6161, 1.0
  %v6598 = vadd.f32 %v6163, 1.0
  %v6599 = vadd.f32 %v6165, 1.0
  %v6600 = vadd.f32 %v6167, 1.0
  %v6601 = vadd.f32 %v6169, 1.0
  %v6602 = vadd.f32 %v6171, 1.0
  %v6603 = vadd.f32 %v6173, 1.0
  %v6604 = vadd.f32 %v6175, 1.0
  %v6605 = vadd.f32 %v6177, 1.0
  %v6606 = vadd.f32 %v6179, 1.0
  %v6607 = vadd.f32 %v6181, 1.0
  %v6608 = vadd.f32 %v6183, 1.0
  %v6609 = vadd.f32 %v6185, 1.0
  %v6610 = vadd.f32 %v6187, 1.0
  %v6611 = vadd.f32 %v6189, 1.0
  %v6612 = vadd.f32 %v6191, 1.0
  %v6613 = vadd.f32 %v6193, 1.0
  %v6614 = vadd.f32 %v6195, 1.0
  %v6615 = vadd.f32 %v6197, 1.0
  %v6616 = vadd.f32 %v6199, 1.0
  %v6617 = vadd.f32 %v6201, 1.0
  %v6618 = vadd.f32 %v6203, 1.0
  %v6619 = vadd.f32 %v6205, 1.0
  %v6620 = vadd.f32 %v6207, 1.0
  %v6621 = vadd.f32 %v6209, 1.0
  %v6622 = vadd.f32 %v6211, 1.0
  %v6623 = vadd.f32 %v6213, 1.0
  %v6624 = vadd.f32 %v6215, 1.0
  %v6625 = vadd.f32 %v6217, 1.0
  %v6626 = vadd.f32 %v6219, 1.0
  %v6627 = vadd.f32 %v6221, 1.0
  %v6628 = vadd.f32 %v6223, 1.0
  %v6629 = vadd.f32 %v6225, 1.0
  %v6630 = vadd.f32 %v6227, 1.0
  %v6631 = vadd.f32 %v6229, 1.0
  %v6632 = vadd.f32 %v6231, 1.0
  %v6633 = vadd.f32 %v6233, 1.0
  %v6634 = vadd.f32 %v6235, 1.0
  %v6635 = vadd.f32 %v6237, 1.0
  %v6636 = vadd.f32 %v6239, 1.0
  %v6637 = vadd.f32 %v6241, 1.0
  %v6638 = vadd.f32 %v6243, 1.0
  %v6639 = vadd.f32 %v6245, 1.0
  %v6640 = vadd.f32 %v6247, 1.0
  %v6641 = vadd.f32 %v6249, 1.0
  %v6642 = vadd.f32 %v6251, 1.0
  %v6643 = vadd.f32 %v6253, 1.0
  %v6644 = vadd.f32 %v6255, 1.0
  %v6645 = vadd.f32 %v6257, 1.0
  %v6646 = vadd.f32 %v6259, 1.0
  %v6647 = vadd.f32 %v6261, 1.0
  %v6648 = vadd.f32 %v6263, 1.0
  %v6649 = vadd.f32 %v6265, 1.0
  %v6650 = vadd.f32 %v6267, 1.0
  %v6651 = vadd.f32 %v6269, 1.0
  %v6652 = vadd.f32 %v6271, 1.0
  %v6653 = vadd.f32 %v6273, 1.0
  %v6654 = vadd.f32 %v6275, 1.0
  %v6655 = vadd.f32 %v6277, 1.0
  %v6656 = vadd.f32 %v6279, 1.0
  %v6657 = vadd.f32 %v6281, 1.0
  %v6658 = vadd.f32 %v6283, 1.0
  %v6659 = vadd.f32 %v6285, 1.0
  %v6660 = vadd.f32 %v6287, 1.0
  %v6661 = vadd.f32 %v6289, 1.0
  %v6662 = vadd.f32 %v6291, 1.0
  %v6663 = vadd.f32 %v6293, 1.0
  %v6664 = vadd.f32 %v6295, 1.0
  %v6665 = vadd.f32 %v6297, 1.0
  %v6666 = vadd.f32 %v6299, 1.0
  %v6667 = vadd.f32 %v6301, 1.0
  %v6668 = vadd.f32 %v6303, 1.0
  %v6669 = vadd.f32 %v6305, 1.0
  %v6670 = vadd.f32 %v6307, 1.0
  %v6671 = vadd.f32 %v6309, 1.0
  %v6672 = vadd.f32 %v6311, 1.0
  %v6673 = vadd.f32 %v6313, 1.0
  %v6674 = vadd.f32 %v6315, 1.0
  %v6675 = vadd.f32 %v6317, 1.0
  %v6676 = vadd.f32 %v6319, 1.0
  %v6677 = vadd.f32 %v6321, 1.0
  %v6678 = vadd.f32 %v6323, 1.0
  %v6679 = vadd.f32 %v6325, 1.0
  %v6680 = vadd.f32 %v6327, 1.0
  %v6681 = vadd.f32 %v6329, 1.0
  %v6682 = vadd.f32 %v6331, 1.0
  %v6683 = vadd.f32 %v6333, 1.0
  %v6684 = vadd.f32 %v6335, 1.0
  %v6685 = vadd.f32 %v6337, 1.0
  %v6686 = vadd.f32 %v6339, 1.0
  %v6687 = vadd.f32 %v6341, 1.0
  %v6688 = vadd.f32 %v6343, 1.0
  %v6689 = vadd.f32 %v6345, 1.0
  %v6690 = vadd.f32 %v6347, 1.0
  %v6691 = vadd.f32 %v6349, 1.0
  %v6692 = vadd.f32 %v6351, 1.0
  %v6693 = vadd.f32 %v6353, 1.0
  %v6694 = vadd.f32 %v6355, 1.0
  %v6695 = vadd.f32 %v6357, 1.0
  %v6696 = vadd.f32 %v6359, 1.0
  %v6697 = vadd.f32 %v6361, 1.0
  %v6698 = vadd.f32 %v6363, 1.0
  %v6699 = vadd.f32 %v6365, 1.0
  %v6700 = vadd.f32 %v6367, 1.0
  %v6701 = vadd.f32 %v6369, 1.0
  %v6702 = vadd.f32 %v6371, 1.0
  %v6703 = vadd.f32 %v6373, 1.0
  %v6704 = vadd.f32 %v6375, 1.0
  %v6705 = vadd.f32 %v6377, 1.0
  %v6706 = vadd.f32 %v6379, 1.0
  %v6707 = vadd.f32 %v6381, 1.0
  %v6708 = vadd.f32 %v6383, 1.0
  %v6709 = vadd.f32 %v6385, 1.0
  %v6710 = vadd.f32 %v6387, 1.0
  %v6711 = vadd.f32 %v6389, 1.0
  %v6712 = vadd.f32 %v6391, 1.0
  %v6713 = vadd.f32 %v6393, 1.0
  %v6714 = vadd.f32 %v6395, 1.0
  %v6715 = vadd.f32 %v6397, 1.0
  %v6716 = vadd.f32 %v6399, 1.0
  %v6717 = vadd.f32 %v6401, 1.0
  %v6718 = vadd.f32 %v6403, 1.0
  %v6719 = vadd.f32 %v6405, 1.0
  %v6720 = vadd.f32 %v6407, 1.0
  %v6721 = vadd.f32 %v6409, 1.0
  %v6722 = vadd.f32 %v6411, 1.0
  %v6723 = vadd.f32 %v6413, 1.0
  %v6724 = vadd.f32 %v6415, 1.0
  %v6725 = vadd.f32 %v6417, 1.0
  %v6726 = vadd.f32 %v6419, 1.0
  %v6727 = vadd.f32 %v6421, 1.0
  %v6728 = vadd.f32 %v6423, 1.0
  %v6729 = vadd.f32 %v6425, 1.0
  %v6730 = vadd.f32 %v6427, 1.0
  %v6731 = vadd.f32 %v6429, 1.0
  %v6732 = vadd.f32 %v6431, 1.0
  %v6733 = vadd.f32 %v6433, 1.0
  %v6734 = vadd.f32 %v6435, 1.0
  %v6735 = vadd.f32 %v6437, 1.0
  %v6736 = vadd.f32 %v6439, 1.0
  %v6737 = vadd.f32 %v6441, 1.0
  %v6738 = vadd.f32 %v6443, 1.0
  %v6739 = vadd.f32 %v6445, 1.0
  %v6740 = vadd.f32 %v6447, 1.0
  %v6741 = vadd.f32 %v6449, 1.0
  %v6742 = vadd.f32 %v6451, 1.0
  %v6743 = vadd.f32 %v6453, 1.0
  %v6744 = vadd.f32 %v6455, 1.0
  %v6745 = vadd.f32 %v6457, 1.0
  %v6746 = vadd.f32 %v6459, 1.0
  %v6747 = vadd.f32 %v6461, 1.0
  %v6748 = vadd.f32 %v6463, 1.0
  %v6749 = vadd.f32 %v6465, 1.0
  %v6750 = vadd.f32 %v6467, 1.0
  %v6751 = vadd.f32 %v6469, 1.0
  %v6752 = vadd.f32 %v6471, 1.0
  %v6753 = vadd.f32 %v6473, 1.0
  %v6754 = vadd.f32 %v6475, 1.0
  %v6755 = vadd.f32 %v6477, 1.0
  %v6756 = vadd.f32 %v6479, 1.0
  %v6757 = vadd.f32 %v6481, 1.0
  %v6758 = vadd.f32 %v6483, 1.0
  %v6759 = vadd.f32 %v6485, 1.0
  %v6760 = vadd.f32 %v6487, 1.0
  %v6761 = vadd.f32 %v6489, 1.0
  %v6762 = vadd.f32 %v6491, 1.0
  %v6763 = vadd.f32 %v6493, 1.0
  %v6764 = vadd.f32 %v6495, 1.0
  %v6765 = vadd.f32 %v6497, 1.0
  %v6766 = vadd.f32 %v6499, 1.0
  %v6767 = vadd.f32 %v6501, 1.0
  %v6768 = vadd.f32 %v6503, 1.0
  %v6769 = vadd.f32 %v6505, 1.0
  %v6770 = vadd.f32 %v6507, 1.0
  %v6771 = vadd.f32 %v6509, 1.0
  %v6772 = vadd.f32 %v6511, 1.0
  %v6773 = vadd.f32 %v6513, 1.0
  %v6774 = vadd.f32 %v6515, 1.0
  %v6775 = vadd.f32 %v6517, 1.0
  %v6776 = vadd.f32 %v6519, 1.0
  %v6777 = vadd.f32 %v6521, 1.0
  %v6778 = vadd.f32 %v6523, 1.0
  %v6779 = vadd.f32 %v6525, 1.0
  %v6780 = vadd.f32 %v6527, 1.0
  %v6781 = vadd.f32 %v6529, 1.0
  %v6782 = vadd.f32 %v6531, 1.0
  %v6783 = vadd.f32 %v6533, 1.0
  %v6784 = vadd.f32 %v6535, 1.0
  %v6785 = vadd.f32 %v6537, 1.0
  %v6786 = vadd.f32 %v6539, 1.0
  %v6787 = vadd.f32 %v6541, 1.0
  %v6788 = vadd.f32 %v6543, 1.0
  %v6789 = vadd.f32 %v6545, 1.0
  %v6790 = vadd.f32 %v6547, 1.0
  %v6791 = vadd.f32 %v6549, 1.0
  %v6792 = vadd.f32 %v6551, 1.0
  %v6793 = vadd.f32 %v6553, 1.0
  %v6794 = vadd.f32 %v6555, 1.0
  %v6795 = vadd.f32 %v6557, 1.0
  %v6796 = vadd.f32 %v6559, 1.0
  %v6797 = vadd.f32 %v6561, 1.0
  %v6798 = vadd.f32 %v6563, 1.0
  %v6799 = vadd.f32 %v6565, 1.0
  %v6800 = vadd.f32 %v6567, 1.0
  %v6801 = vadd.f32 %v6569, 1.0
  %v6802 = vadd.f32 %v6571, 1.0
  %v6803 = vadd.f32 %v6573, 1.0
  %v6804 = vadd.f32 %v6575, 1.0
  %v6805 = vadd.f32 %v6577, 1.0
  %v6806 = vadd.f32 %v6579, 1.0
  %v6807 = vadd.f32 %v6581, 1.0
  %v6808 = vadd.f32 %v6583, 1.0
  %v6809 = vadd.f32 %v6585, 1.0
  %v6810 = vrcp.pop %v6586
  %v6811 = vmul.f32 1.0, %v6810
  %v6812 = vrcp.pop %v6587
  %v6813 = vmul.f32 1.0, %v6812
  %v6814 = vrcp.pop %v6588
  %v6815 = vmul.f32 1.0, %v6814
  %v6816 = vrcp.pop %v6589
  %v6817 = vmul.f32 1.0, %v6816
  %v6818 = vrcp.pop %v6590
  %v6819 = vmul.f32 1.0, %v6818
  %v6820 = vrcp.pop %v6591
  %v6821 = vmul.f32 1.0, %v6820
  %v6822 = vrcp.pop %v6592
  %v6823 = vmul.f32 1.0, %v6822
  %v6824 = vrcp.pop %v6593
  %v6825 = vmul.f32 1.0, %v6824
  %v6826 = vrcp.pop %v6594
  %v6827 = vmul.f32 1.0, %v6826
  %v6828 = vrcp.pop %v6595
  %v6829 = vmul.f32 1.0, %v6828
  %v6830 = vrcp.pop %v6596
  %v6831 = vmul.f32 1.0, %v6830
  %v6832 = vrcp.pop %v6597
  %v6833 = vmul.f32 1.0, %v6832
  %v6834 = vrcp.pop %v6598
  %v6835 = vmul.f32 1.0, %v6834
  %v6836 = vrcp.pop %v6599
  %v6837 = vmul.f32 1.0, %v6836
  %v6838 = vrcp.pop %v6600
  %v6839 = vmul.f32 1.0, %v6838
  %v6840 = vrcp.pop %v6601
  %v6841 = vmul.f32 1.0, %v6840
  %v6842 = vrcp.pop %v6602
  %v6843 = vmul.f32 1.0, %v6842
  %v6844 = vrcp.pop %v6603
  %v6845 = vmul.f32 1.0, %v6844
  %v6846 = vrcp.pop %v6604
  %v6847 = vmul.f32 1.0, %v6846
  %v6848 = vrcp.pop %v6605
  %v6849 = vmul.f32 1.0, %v6848
  %v6850 = vrcp.pop %v6606
  %v6851 = vmul.f32 1.0, %v6850
  %v6852 = vrcp.pop %v6607
  %v6853 = vmul.f32 1.0, %v6852
  %v6854 = vrcp.pop %v6608
  %v6855 = vmul.f32 1.0, %v6854
  %v6856 = vrcp.pop %v6609
  %v6857 = vmul.f32 1.0, %v6856
  %v6858 = vrcp.pop %v6610
  %v6859 = vmul.f32 1.0, %v6858
  %v6860 = vrcp.pop %v6611
  %v6861 = vmul.f32 1.0, %v6860
  %v6862 = vrcp.pop %v6612
  %v6863 = vmul.f32 1.0, %v6862
  %v6864 = vrcp.pop %v6613
  %v6865 = vmul.f32 1.0, %v6864
  %v6866 = vrcp.pop %v6614
  %v6867 = vmul.f32 1.0, %v6866
  %v6868 = vrcp.pop %v6615
  %v6869 = vmul.f32 1.0, %v6868
  %v6870 = vrcp.pop %v6616
  %v6871 = vmul.f32 1.0, %v6870
  %v6872 = vrcp.pop %v6617
  %v6873 = vmul.f32 1.0, %v6872
  %v6874 = vrcp.pop %v6618
  %v6875 = vmul.f32 1.0, %v6874
  %v6876 = vrcp.pop %v6619
  %v6877 = vmul.f32 1.0, %v6876
  %v6878 = vrcp.pop %v6620
  %v6879 = vmul.f32 1.0, %v6878
  %v6880 = vrcp.pop %v6621
  %v6881 = vmul.f32 1.0, %v6880
  %v6882 = vrcp.pop %v6622
  %v6883 = vmul.f32 1.0, %v6882
  %v6884 = vrcp.pop %v6623
  %v6885 = vmul.f32 1.0, %v6884
  %v6886 = vrcp.pop %v6624
  %v6887 = vmul.f32 1.0, %v6886
  %v6888 = vrcp.pop %v6625
  %v6889 = vmul.f32 1.0, %v6888
  %v6890 = vrcp.pop %v6626
  %v6891 = vmul.f32 1.0, %v6890
  %v6892 = vrcp.pop %v6627
  %v6893 = vmul.f32 1.0, %v6892
  %v6894 = vrcp.pop %v6628
  %v6895 = vmul.f32 1.0, %v6894
  %v6896 = vrcp.pop %v6629
  %v6897 = vmul.f32 1.0, %v6896
  %v6898 = vrcp.pop %v6630
  %v6899 = vmul.f32 1.0, %v6898
  %v6900 = vrcp.pop %v6631
  %v6901 = vmul.f32 1.0, %v6900
  %v6902 = vrcp.pop %v6632
  %v6903 = vmul.f32 1.0, %v6902
  %v6904 = vrcp.pop %v6633
  %v6905 = vmul.f32 1.0, %v6904
  %v6906 = vrcp.pop %v6634
  %v6907 = vmul.f32 1.0, %v6906
  %v6908 = vrcp.pop %v6635
  %v6909 = vmul.f32 1.0, %v6908
  %v6910 = vrcp.pop %v6636
  %v6911 = vmul.f32 1.0, %v6910
  %v6912 = vrcp.pop %v6637
  %v6913 = vmul.f32 1.0, %v6912
  %v6914 = vrcp.pop %v6638
  %v6915 = vmul.f32 1.0, %v6914
  %v6916 = vrcp.pop %v6639
  %v6917 = vmul.f32 1.0, %v6916
  %v6918 = vrcp.pop %v6640
  %v6919 = vmul.f32 1.0, %v6918
  %v6920 = vrcp.pop %v6641
  %v6921 = vmul.f32 1.0, %v6920
  %v6922 = vrcp.pop %v6642
  %v6923 = vmul.f32 1.0, %v6922
  %v6924 = vrcp.pop %v6643
  %v6925 = vmul.f32 1.0, %v6924
  %v6926 = vrcp.pop %v6644
  %v6927 = vmul.f32 1.0, %v6926
  %v6928 = vrcp.pop %v6645
  %v6929 = vmul.f32 1.0, %v6928
  %v6930 = vrcp.pop %v6646
  %v6931 = vmul.f32 1.0, %v6930
  %v6932 = vrcp.pop %v6647
  %v6933 = vmul.f32 1.0, %v6932
  %v6934 = vrcp.pop %v6648
  %v6935 = vmul.f32 1.0, %v6934
  %v6936 = vrcp.pop %v6649
  %v6937 = vmul.f32 1.0, %v6936
  %v6938 = vrcp.pop %v6650
  %v6939 = vmul.f32 1.0, %v6938
  %v6940 = vrcp.pop %v6651
  %v6941 = vmul.f32 1.0, %v6940
  %v6942 = vrcp.pop %v6652
  %v6943 = vmul.f32 1.0, %v6942
  %v6944 = vrcp.pop %v6653
  %v6945 = vmul.f32 1.0, %v6944
  %v6946 = vrcp.pop %v6654
  %v6947 = vmul.f32 1.0, %v6946
  %v6948 = vrcp.pop %v6655
  %v6949 = vmul.f32 1.0, %v6948
  %v6950 = vrcp.pop %v6656
  %v6951 = vmul.f32 1.0, %v6950
  %v6952 = vrcp.pop %v6657
  %v6953 = vmul.f32 1.0, %v6952
  %v6954 = vrcp.pop %v6658
  %v6955 = vmul.f32 1.0, %v6954
  %v6956 = vrcp.pop %v6659
  %v6957 = vmul.f32 1.0, %v6956
  %v6958 = vrcp.pop %v6660
  %v6959 = vmul.f32 1.0, %v6958
  %v6960 = vrcp.pop %v6661
  %v6961 = vmul.f32 1.0, %v6960
  %v6962 = vrcp.pop %v6662
  %v6963 = vmul.f32 1.0, %v6962
  %v6964 = vrcp.pop %v6663
  %v6965 = vmul.f32 1.0, %v6964
  %v6966 = vrcp.pop %v6664
  %v6967 = vmul.f32 1.0, %v6966
  %v6968 = vrcp.pop %v6665
  %v6969 = vmul.f32 1.0, %v6968
  %v6970 = vrcp.pop %v6666
  %v6971 = vmul.f32 1.0, %v6970
  %v6972 = vrcp.pop %v6667
  %v6973 = vmul.f32 1.0, %v6972
  %v6974 = vrcp.pop %v6668
  %v6975 = vmul.f32 1.0, %v6974
  %v6976 = vrcp.pop %v6669
  %v6977 = vmul.f32 1.0, %v6976
  %v6978 = vrcp.pop %v6670
  %v6979 = vmul.f32 1.0, %v6978
  %v6980 = vrcp.pop %v6671
  %v6981 = vmul.f32 1.0, %v6980
  %v6982 = vrcp.pop %v6672
  %v6983 = vmul.f32 1.0, %v6982
  %v6984 = vrcp.pop %v6673
  %v6985 = vmul.f32 1.0, %v6984
  %v6986 = vrcp.pop %v6674
  %v6987 = vmul.f32 1.0, %v6986
  %v6988 = vrcp.pop %v6675
  %v6989 = vmul.f32 1.0, %v6988
  %v6990 = vrcp.pop %v6676
  %v6991 = vmul.f32 1.0, %v6990
  %v6992 = vrcp.pop %v6677
  %v6993 = vmul.f32 1.0, %v6992
  %v6994 = vrcp.pop %v6678
  %v6995 = vmul.f32 1.0, %v6994
  %v6996 = vrcp.pop %v6679
  %v6997 = vmul.f32 1.0, %v6996
  %v6998 = vrcp.pop %v6680
  %v6999 = vmul.f32 1.0, %v6998
  %v7000 = vrcp.pop %v6681
  %v7001 = vmul.f32 1.0, %v7000
  %v7002 = vrcp.pop %v6682
  %v7003 = vmul.f32 1.0, %v7002
  %v7004 = vrcp.pop %v6683
  %v7005 = vmul.f32 1.0, %v7004
  %v7006 = vrcp.pop %v6684
  %v7007 = vmul.f32 1.0, %v7006
  %v7008 = vrcp.pop %v6685
  %v7009 = vmul.f32 1.0, %v7008
  %v7010 = vrcp.pop %v6686
  %v7011 = vmul.f32 1.0, %v7010
  %v7012 = vrcp.pop %v6687
  %v7013 = vmul.f32 1.0, %v7012
  %v7014 = vrcp.pop %v6688
  %v7015 = vmul.f32 1.0, %v7014
  %v7016 = vrcp.pop %v6689
  %v7017 = vmul.f32 1.0, %v7016
  %v7018 = vrcp.pop %v6690
  %v7019 = vmul.f32 1.0, %v7018
  %v7020 = vrcp.pop %v6691
  %v7021 = vmul.f32 1.0, %v7020
  %v7022 = vrcp.pop %v6692
  %v7023 = vmul.f32 1.0, %v7022
  %v7024 = vrcp.pop %v6693
  %v7025 = vmul.f32 1.0, %v7024
  %v7026 = vrcp.pop %v6694
  %v7027 = vmul.f32 1.0, %v7026
  %v7028 = vrcp.pop %v6695
  %v7029 = vmul.f32 1.0, %v7028
  %v7030 = vrcp.pop %v6696
  %v7031 = vmul.f32 1.0, %v7030
  %v7032 = vrcp.pop %v6697
  %v7033 = vmul.f32 1.0, %v7032
  %v7034 = vrcp.pop %v6698
  %v7035 = vmul.f32 1.0, %v7034
  %v7036 = vrcp.pop %v6699
  %v7037 = vmul.f32 1.0, %v7036
  %v7038 = vrcp.pop %v6700
  %v7039 = vmul.f32 1.0, %v7038
  %v7040 = vrcp.pop %v6701
  %v7041 = vmul.f32 1.0, %v7040
  %v7042 = vrcp.pop %v6702
  %v7043 = vmul.f32 1.0, %v7042
  %v7044 = vrcp.pop %v6703
  %v7045 = vmul.f32 1.0, %v7044
  %v7046 = vrcp.pop %v6704
  %v7047 = vmul.f32 1.0, %v7046
  %v7048 = vrcp.pop %v6705
  %v7049 = vmul.f32 1.0, %v7048
  %v7050 = vrcp.pop %v6706
  %v7051 = vmul.f32 1.0, %v7050
  %v7052 = vrcp.pop %v6707
  %v7053 = vmul.f32 1.0, %v7052
  %v7054 = vrcp.pop %v6708
  %v7055 = vmul.f32 1.0, %v7054
  %v7056 = vrcp.pop %v6709
  %v7057 = vmul.f32 1.0, %v7056
  %v7058 = vrcp.pop %v6710
  %v7059 = vmul.f32 1.0, %v7058
  %v7060 = vrcp.pop %v6711
  %v7061 = vmul.f32 1.0, %v7060
  %v7062 = vrcp.pop %v6712
  %v7063 = vmul.f32 1.0, %v7062
  %v7064 = vrcp.pop %v6713
  %v7065 = vmul.f32 1.0, %v7064
  %v7066 = vrcp.pop %v6714
  %v7067 = vmul.f32 1.0, %v7066
  %v7068 = vrcp.pop %v6715
  %v7069 = vmul.f32 1.0, %v7068
  %v7070 = vrcp.pop %v6716
  %v7071 = vmul.f32 1.0, %v7070
  %v7072 = vrcp.pop %v6717
  %v7073 = vmul.f32 1.0, %v7072
  %v7074 = vrcp.pop %v6718
  %v7075 = vmul.f32 1.0, %v7074
  %v7076 = vrcp.pop %v6719
  %v7077 = vmul.f32 1.0, %v7076
  %v7078 = vrcp.pop %v6720
  %v7079 = vmul.f32 1.0, %v7078
  %v7080 = vrcp.pop %v6721
  %v7081 = vmul.f32 1.0, %v7080
  %v7082 = vrcp.pop %v6722
  %v7083 = vmul.f32 1.0, %v7082
  %v7084 = vrcp.pop %v6723
  %v7085 = vmul.f32 1.0, %v7084
  %v7086 = vrcp.pop %v6724
  %v7087 = vmul.f32 1.0, %v7086
  %v7088 = vrcp.pop %v6725
  %v7089 = vmul.f32 1.0, %v7088
  %v7090 = vrcp.pop %v6726
  %v7091 = vmul.f32 1.0, %v7090
  %v7092 = vrcp.pop %v6727
  %v7093 = vmul.f32 1.0, %v7092
  %v7094 = vrcp.pop %v6728
  %v7095 = vmul.f32 1.0, %v7094
  %v7096 = vrcp.pop %v6729
  %v7097 = vmul.f32 1.0, %v7096
  %v7098 = vrcp.pop %v6730
  %v7099 = vmul.f32 1.0, %v7098
  %v7100 = vrcp.pop %v6731
  %v7101 = vmul.f32 1.0, %v7100
  %v7102 = vrcp.pop %v6732
  %v7103 = vmul.f32 1.0, %v7102
  %v7104 = vrcp.pop %v6733
  %v7105 = vmul.f32 1.0, %v7104
  %v7106 = vrcp.pop %v6734
  %v7107 = vmul.f32 1.0, %v7106
  %v7108 = vrcp.pop %v6735
  %v7109 = vmul.f32 1.0, %v7108
  %v7110 = vrcp.pop %v6736
  %v7111 = vmul.f32 1.0, %v7110
  %v7112 = vrcp.pop %v6737
  %v7113 = vmul.f32 1.0, %v7112
  %v7114 = vrcp.pop %v6738
  %v7115 = vmul.f32 1.0, %v7114
  %v7116 = vrcp.pop %v6739
  %v7117 = vmul.f32 1.0, %v7116
  %v7118 = vrcp.pop %v6740
  %v7119 = vmul.f32 1.0, %v7118
  %v7120 = vrcp.pop %v6741
  %v7121 = vmul.f32 1.0, %v7120
  %v7122 = vrcp.pop %v6742
  %v7123 = vmul.f32 1.0, %v7122
  %v7124 = vrcp.pop %v6743
  %v7125 = vmul.f32 1.0, %v7124
  %v7126 = vrcp.pop %v6744
  %v7127 = vmul.f32 1.0, %v7126
  %v7128 = vrcp.pop %v6745
  %v7129 = vmul.f32 1.0, %v7128
  %v7130 = vrcp.pop %v6746
  %v7131 = vmul.f32 1.0, %v7130
  %v7132 = vrcp.pop %v6747
  %v7133 = vmul.f32 1.0, %v7132
  %v7134 = vrcp.pop %v6748
  %v7135 = vmul.f32 1.0, %v7134
  %v7136 = vrcp.pop %v6749
  %v7137 = vmul.f32 1.0, %v7136
  %v7138 = vrcp.pop %v6750
  %v7139 = vmul.f32 1.0, %v7138
  %v7140 = vrcp.pop %v6751
  %v7141 = vmul.f32 1.0, %v7140
  %v7142 = vrcp.pop %v6752
  %v7143 = vmul.f32 1.0, %v7142
  %v7144 = vrcp.pop %v6753
  %v7145 = vmul.f32 1.0, %v7144
  %v7146 = vrcp.pop %v6754
  %v7147 = vmul.f32 1.0, %v7146
  %v7148 = vrcp.pop %v6755
  %v7149 = vmul.f32 1.0, %v7148
  %v7150 = vrcp.pop %v6756
  %v7151 = vmul.f32 1.0, %v7150
  %v7152 = vrcp.pop %v6757
  %v7153 = vmul.f32 1.0, %v7152
  %v7154 = vrcp.pop %v6758
  %v7155 = vmul.f32 1.0, %v7154
  %v7156 = vrcp.pop %v6759
  %v7157 = vmul.f32 1.0, %v7156
  %v7158 = vrcp.pop %v6760
  %v7159 = vmul.f32 1.0, %v7158
  %v7160 = vrcp.pop %v6761
  %v7161 = vmul.f32 1.0, %v7160
  %v7162 = vrcp.pop %v6762
  %v7163 = vmul.f32 1.0, %v7162
  %v7164 = vrcp.pop %v6763
  %v7165 = vmul.f32 1.0, %v7164
  %v7166 = vrcp.pop %v6764
  %v7167 = vmul.f32 1.0, %v7166
  %v7168 = vrcp.pop %v6765
  %v7169 = vmul.f32 1.0, %v7168
  %v7170 = vrcp.pop %v6766
  %v7171 = vmul.f32 1.0, %v7170
  %v7172 = vrcp.pop %v6767
  %v7173 = vmul.f32 1.0, %v7172
  %v7174 = vrcp.pop %v6768
  %v7175 = vmul.f32 1.0, %v7174
  %v7176 = vrcp.pop %v6769
  %v7177 = vmul.f32 1.0, %v7176
  %v7178 = vrcp.pop %v6770
  %v7179 = vmul.f32 1.0, %v7178
  %v7180 = vrcp.pop %v6771
  %v7181 = vmul.f32 1.0, %v7180
  %v7182 = vrcp.pop %v6772
  %v7183 = vmul.f32 1.0, %v7182
  %v7184 = vrcp.pop %v6773
  %v7185 = vmul.f32 1.0, %v7184
  %v7186 = vrcp.pop %v6774
  %v7187 = vmul.f32 1.0, %v7186
  %v7188 = vrcp.pop %v6775
  %v7189 = vmul.f32 1.0, %v7188
  %v7190 = vrcp.pop %v6776
  %v7191 = vmul.f32 1.0, %v7190
  %v7192 = vrcp.pop %v6777
  %v7193 = vmul.f32 1.0, %v7192
  %v7194 = vrcp.pop %v6778
  %v7195 = vmul.f32 1.0, %v7194
  %v7196 = vrcp.pop %v6779
  %v7197 = vmul.f32 1.0, %v7196
  %v7198 = vrcp.pop %v6780
  %v7199 = vmul.f32 1.0, %v7198
  %v7200 = vrcp.pop %v6781
  %v7201 = vmul.f32 1.0, %v7200
  %v7202 = vrcp.pop %v6782
  %v7203 = vmul.f32 1.0, %v7202
  %v7204 = vrcp.pop %v6783
  %v7205 = vmul.f32 1.0, %v7204
  %v7206 = vrcp.pop %v6784
  %v7207 = vmul.f32 1.0, %v7206
  %v7208 = vrcp.pop %v6785
  %v7209 = vmul.f32 1.0, %v7208
  %v7210 = vrcp.pop %v6786
  %v7211 = vmul.f32 1.0, %v7210
  %v7212 = vrcp.pop %v6787
  %v7213 = vmul.f32 1.0, %v7212
  %v7214 = vrcp.pop %v6788
  %v7215 = vmul.f32 1.0, %v7214
  %v7216 = vrcp.pop %v6789
  %v7217 = vmul.f32 1.0, %v7216
  %v7218 = vrcp.pop %v6790
  %v7219 = vmul.f32 1.0, %v7218
  %v7220 = vrcp.pop %v6791
  %v7221 = vmul.f32 1.0, %v7220
  %v7222 = vrcp.pop %v6792
  %v7223 = vmul.f32 1.0, %v7222
  %v7224 = vrcp.pop %v6793
  %v7225 = vmul.f32 1.0, %v7224
  %v7226 = vrcp.pop %v6794
  %v7227 = vmul.f32 1.0, %v7226
  %v7228 = vrcp.pop %v6795
  %v7229 = vmul.f32 1.0, %v7228
  %v7230 = vrcp.pop %v6796
  %v7231 = vmul.f32 1.0, %v7230
  %v7232 = vrcp.pop %v6797
  %v7233 = vmul.f32 1.0, %v7232
  %v7234 = vrcp.pop %v6798
  %v7235 = vmul.f32 1.0, %v7234
  %v7236 = vrcp.pop %v6799
  %v7237 = vmul.f32 1.0, %v7236
  %v7238 = vrcp.pop %v6800
  %v7239 = vmul.f32 1.0, %v7238
  %v7240 = vrcp.pop %v6801
  %v7241 = vmul.f32 1.0, %v7240
  %v7242 = vrcp.pop %v6802
  %v7243 = vmul.f32 1.0, %v7242
  %v7244 = vrcp.pop %v6803
  %v7245 = vmul.f32 1.0, %v7244
  %v7246 = vrcp.pop %v6804
  %v7247 = vmul.f32 1.0, %v7246
  %v7248 = vrcp.pop %v6805
  %v7249 = vmul.f32 1.0, %v7248
  %v7250 = vrcp.pop %v6806
  %v7251 = vmul.f32 1.0, %v7250
  %v7252 = vrcp.pop %v6807
  %v7253 = vmul.f32 1.0, %v7252
  %v7254 = vrcp.pop %v6808
  %v7255 = vmul.f32 1.0, %v7254
  %v7256 = vrcp.pop %v6809
  %v7257 = vmul.f32 1.0, %v7256
  %7258 = vst [vmem:[%s7] sm:$0xff] %v6811
  %7259 = vst [vmem:[%s7 + $0x8] sm:$0xff] %v6813
  %7260 = vst [vmem:[%s7 + $0x10] sm:$0xff] %v6815
  %7261 = vst [vmem:[%s7 + $0x18] sm:$0xff] %v6817
  %7262 = vst [vmem:[%s7 + $0x20] sm:$0xff] %v6819
  %7263 = vst [vmem:[%s7 + $0x28] sm:$0xff] %v6821
  %7264 = vst [vmem:[%s7 + $0x30] sm:$0xff] %v6823
  %7265 = vst [vmem:[%s7 + $0x38] sm:$0xff] %v6825
  %7266 = vst [vmem:[%s7 + $0x40] sm:$0xff] %v6827
  %7267 = vst [vmem:[%s7 + $0x48] sm:$0xff] %v6829
  %7268 = vst [vmem:[%s7 + $0x50] sm:$0xff] %v6831
  %7269 = vst [vmem:[%s7 + $0x58] sm:$0xff] %v6833
  %7270 = vst [vmem:[%s7 + $0x60] sm:$0xff] %v6835
  %7271 = vst [vmem:[%s7 + $0x68] sm:$0xff] %v6837
  %7272 = vst [vmem:[%s7 + $0x70] sm:$0xff] %v6839
  %7273 = vst [vmem:[%s7 + $0x78] sm:$0xff] %v6841
  %7274 = vst [vmem:[%s7 + $0x80] sm:$0xff] %v6843
  %7275 = vst [vmem:[%s7 + $0x88] sm:$0xff] %v6845
  %7276 = vst [vmem:[%s7 + $0x90] sm:$0xff] %v6847
  %7277 = vst [vmem:[%s7 + $0x98] sm:$0xff] %v6849
  %7278 = vst [vmem:[%s7 + $0xa0] sm:$0xff] %v6851
  %7279 = vst [vmem:[%s7 + $0xa8] sm:$0xff] %v6853
  %7280 = vst [vmem:[%s7 + $0xb0] sm:$0xff] %v6855
  %7281 = vst [vmem:[%s7 + $0xb8] sm:$0xff] %v6857
  %7282 = vst [vmem:[%s7 + $0xc0] sm:$0xff] %v6859
  %7283 = vst [vmem:[%s7 + $0xc8] sm:$0xff] %v6861
  %7284 = vst [vmem:[%s7 + $0xd0] sm:$0xff] %v6863
  %7285 = vst [vmem:[%s7 + $0xd8] sm:$0xff] %v6865
  %7286 = vst [vmem:[%s7 + $0xe0] sm:$0xff] %v6867
  %7287 = vst [vmem:[%s7 + $0xe8] sm:$0xff] %v6869
  %7288 = vst [vmem:[%s7 + $0xf0] sm:$0xff] %v6871
  %7289 = vst [vmem:[%s7 + $0xf8] sm:$0xff] %v6873
  %7290 = vst [vmem:[%s7 + $0x100] sm:$0xff] %v6875
  %7291 = vst [vmem:[%s7 + $0x108] sm:$0xff] %v6877
  %7292 = vst [vmem:[%s7 + $0x110] sm:$0xff] %v6879
  %7293 = vst [vmem:[%s7 + $0x118] sm:$0xff] %v6881
  %7294 = vst [vmem:[%s7 + $0x120] sm:$0xff] %v6883
  %7295 = vst [vmem:[%s7 + $0x128] sm:$0xff] %v6885
  %7296 = vst [vmem:[%s7 + $0x130] sm:$0xff] %v6887
  %7297 = vst [vmem:[%s7 + $0x138] sm:$0xff] %v6889
  %7298 = vst [vmem:[%s7 + $0x140] sm:$0xff] %v6891
  %7299 = vst [vmem:[%s7 + $0x148] sm:$0xff] %v6893
  %7300 = vst [vmem:[%s7 + $0x150] sm:$0xff] %v6895
  %7301 = vst [vmem:[%s7 + $0x158] sm:$0xff] %v6897
  %7302 = vst [vmem:[%s7 + $0x160] sm:$0xff] %v6899
  %7303 = vst [vmem:[%s7 + $0x168] sm:$0xff] %v6901
  %7304 = vst [vmem:[%s7 + $0x170] sm:$0xff] %v6903
  %7305 = vst [vmem:[%s7 + $0x178] sm:$0xff] %v6905
  %7306 = vst [vmem:[%s7 + $0x180] sm:$0xff] %v6907
  %7307 = vst [vmem:[%s7 + $0x188] sm:$0xff] %v6909
  %7308 = vst [vmem:[%s7 + $0x190] sm:$0xff] %v6911
  %7309 = vst [vmem:[%s7 + $0x198] sm:$0xff] %v6913
  %7310 = vst [vmem:[%s7 + $0x1a0] sm:$0xff] %v6915
  %7311 = vst [vmem:[%s7 + $0x1a8] sm:$0xff] %v6917
  %7312 = vst [vmem:[%s7 + $0x1b0] sm:$0xff] %v6919
  %7313 = vst [vmem:[%s7 + $0x1b8] sm:$0xff] %v6921
  %7314 = vst [vmem:[%s7 + $0x1c0] sm:$0xff] %v6923
  %7315 = vst [vmem:[%s7 + $0x1c8] sm:$0xff] %v6925
  %7316 = vst [vmem:[%s7 + $0x1d0] sm:$0xff] %v6927
  %7317 = vst [vmem:[%s7 + $0x1d8] sm:$0xff] %v6929
  %7318 = vst [vmem:[%s7 + $0x1e0] sm:$0xff] %v6931
  %7319 = vst [vmem:[%s7 + $0x1e8] sm:$0xff] %v6933
  %7320 = vst [vmem:[%s7 + $0x1f0] sm:$0xff] %v6935
  %7321 = vst [vmem:[%s7 + $0x1f8] sm:$0xff] %v6937
  %7322 = vst [vmem:[%s7 + $0x200] sm:$0xff] %v6939
  %7323 = vst [vmem:[%s7 + $0x208] sm:$0xff] %v6941
  %7324 = vst [vmem:[%s7 + $0x210] sm:$0xff] %v6943
  %7325 = vst [vmem:[%s7 + $0x218] sm:$0xff] %v6945
  %7326 = vst [vmem:[%s7 + $0x220] sm:$0xff] %v6947
  %7327 = vst [vmem:[%s7 + $0x228] sm:$0xff] %v6949
  %7328 = vst [vmem:[%s7 + $0x230] sm:$0xff] %v6951
  %7329 = vst [vmem:[%s7 + $0x238] sm:$0xff] %v6953
  %7330 = vst [vmem:[%s7 + $0x240] sm:$0xff] %v6955
  %7331 = vst [vmem:[%s7 + $0x248] sm:$0xff] %v6957
  %7332 = vst [vmem:[%s7 + $0x250] sm:$0xff] %v6959
  %7333 = vst [vmem:[%s7 + $0x258] sm:$0xff] %v6961
  %7334 = vst [vmem:[%s7 + $0x260] sm:$0xff] %v6963
  %7335 = vst [vmem:[%s7 + $0x268] sm:$0xff] %v6965
  %7336 = vst [vmem:[%s7 + $0x270] sm:$0xff] %v6967
  %7337 = vst [vmem:[%s7 + $0x278] sm:$0xff] %v6969
  %7338 = vst [vmem:[%s7 + $0x280] sm:$0xff] %v6971
  %7339 = vst [vmem:[%s7 + $0x288] sm:$0xff] %v6973
  %7340 = vst [vmem:[%s7 + $0x290] sm:$0xff] %v6975
  %7341 = vst [vmem:[%s7 + $0x298] sm:$0xff] %v6977
  %7342 = vst [vmem:[%s7 + $0x2a0] sm:$0xff] %v6979
  %7343 = vst [vmem:[%s7 + $0x2a8] sm:$0xff] %v6981
  %7344 = vst [vmem:[%s7 + $0x2b0] sm:$0xff] %v6983
  %7345 = vst [vmem:[%s7 + $0x2b8] sm:$0xff] %v6985
  %7346 = vst [vmem:[%s7 + $0x2c0] sm:$0xff] %v6987
  %7347 = vst [vmem:[%s7 + $0x2c8] sm:$0xff] %v6989
  %7348 = vst [vmem:[%s7 + $0x2d0] sm:$0xff] %v6991
  %7349 = vst [vmem:[%s7 + $0x2d8] sm:$0xff] %v6993
  %7350 = vst [vmem:[%s7 + $0x2e0] sm:$0xff] %v6995
  %7351 = vst [vmem:[%s7 + $0x2e8] sm:$0xff] %v6997
  %7352 = vst [vmem:[%s7 + $0x2f0] sm:$0xff] %v6999
  %7353 = vst [vmem:[%s7 + $0x2f8] sm:$0xff] %v7001
  %7354 = vst [vmem:[%s7 + $0x300] sm:$0xff] %v7003
  %7355 = vst [vmem:[%s7 + $0x308] sm:$0xff] %v7005
  %7356 = vst [vmem:[%s7 + $0x310] sm:$0xff] %v7007
  %7357 = vst [vmem:[%s7 + $0x318] sm:$0xff] %v7009
  %7358 = vst [vmem:[%s7 + $0x320] sm:$0xff] %v7011
  %7359 = vst [vmem:[%s7 + $0x328] sm:$0xff] %v7013
  %7360 = vst [vmem:[%s7 + $0x330] sm:$0xff] %v7015
  %7361 = vst [vmem:[%s7 + $0x338] sm:$0xff] %v7017
  %7362 = vst [vmem:[%s7 + $0x340] sm:$0xff] %v7019
  %7363 = vst [vmem:[%s7 + $0x348] sm:$0xff] %v7021
  %7364 = vst [vmem:[%s7 + $0x350] sm:$0xff] %v7023
  %7365 = vst [vmem:[%s7 + $0x358] sm:$0xff] %v7025
  %7366 = vst [vmem:[%s7 + $0x360] sm:$0xff] %v7027
  %7367 = vst [vmem:[%s7 + $0x368] sm:$0xff] %v7029
  %7368 = vst [vmem:[%s7 + $0x370] sm:$0xff] %v7031
  %7369 = vst [vmem:[%s7 + $0x378] sm:$0xff] %v7033
  %7370 = vst [vmem:[%s7 + $0x380] sm:$0xff] %v7035
  %7371 = vst [vmem:[%s7 + $0x388] sm:$0xff] %v7037
  %7372 = vst [vmem:[%s7 + $0x390] sm:$0xff] %v7039
  %7373 = vst [vmem:[%s7 + $0x398] sm:$0xff] %v7041
  %7374 = vst [vmem:[%s7 + $0x3a0] sm:$0xff] %v7043
  %7375 = vst [vmem:[%s7 + $0x3a8] sm:$0xff] %v7045
  %7376 = vst [vmem:[%s7 + $0x3b0] sm:$0xff] %v7047
  %7377 = vst [vmem:[%s7 + $0x3b8] sm:$0xff] %v7049
  %7378 = vst [vmem:[%s7 + $0x3c0] sm:$0xff] %v7051
  %7379 = vst [vmem:[%s7 + $0x3c8] sm:$0xff] %v7053
  %7380 = vst [vmem:[%s7 + $0x3d0] sm:$0xff] %v7055
  %7381 = vst [vmem:[%s7 + $0x3d8] sm:$0xff] %v7057
  %7382 = vst [vmem:[%s7 + $0x3e0] sm:$0xff] %v7059
  %7383 = vst [vmem:[%s7 + $0x3e8] sm:$0xff] %v7061
  %7384 = vst [vmem:[%s7 + $0x3f0] sm:$0xff] %v7063
  %7385 = vst [vmem:[%s7 + $0x3f8] sm:$0xff] %v7065
  %7386 = vst [vmem:[%s7 + $0x400] sm:$0xff] %v7067
  %7387 = vst [vmem:[%s7 + $0x408] sm:$0xff] %v7069
  %7388 = vst [vmem:[%s7 + $0x410] sm:$0xff] %v7071
  %7389 = vst [vmem:[%s7 + $0x418] sm:$0xff] %v7073
  %7390 = vst [vmem:[%s7 + $0x420] sm:$0xff] %v7075
  %7391 = vst [vmem:[%s7 + $0x428] sm:$0xff] %v7077
  %7392 = vst [vmem:[%s7 + $0x430] sm:$0xff] %v7079
  %7393 = vst [vmem:[%s7 + $0x438] sm:$0xff] %v7081
  %7394 = vst [vmem:[%s7 + $0x440] sm:$0xff] %v7083
  %7395 = vst [vmem:[%s7 + $0x448] sm:$0xff] %v7085
  %7396 = vst [vmem:[%s7 + $0x450] sm:$0xff] %v7087
  %7397 = vst [vmem:[%s7 + $0x458] sm:$0xff] %v7089
  %7398 = vst [vmem:[%s7 + $0x460] sm:$0xff] %v7091
  %7399 = vst [vmem:[%s7 + $0x468] sm:$0xff] %v7093
  %7400 = vst [vmem:[%s7 + $0x470] sm:$0xff] %v7095
  %7401 = vst [vmem:[%s7 + $0x478] sm:$0xff] %v7097
  %7402 = vst [vmem:[%s7 + $0x480] sm:$0xff] %v7099
  %7403 = vst [vmem:[%s7 + $0x488] sm:$0xff] %v7101
  %7404 = vst [vmem:[%s7 + $0x490] sm:$0xff] %v7103
  %7405 = vst [vmem:[%s7 + $0x498] sm:$0xff] %v7105
  %7406 = vst [vmem:[%s7 + $0x4a0] sm:$0xff] %v7107
  %7407 = vst [vmem:[%s7 + $0x4a8] sm:$0xff] %v7109
  %7408 = vst [vmem:[%s7 + $0x4b0] sm:$0xff] %v7111
  %7409 = vst [vmem:[%s7 + $0x4b8] sm:$0xff] %v7113
  %7410 = vst [vmem:[%s7 + $0x4c0] sm:$0xff] %v7115
  %7411 = vst [vmem:[%s7 + $0x4c8] sm:$0xff] %v7117
  %7412 = vst [vmem:[%s7 + $0x4d0] sm:$0xff] %v7119
  %7413 = vst [vmem:[%s7 + $0x4d8] sm:$0xff] %v7121
  %7414 = vst [vmem:[%s7 + $0x4e0] sm:$0xff] %v7123
  %7415 = vst [vmem:[%s7 + $0x4e8] sm:$0xff] %v7125
  %7416 = vst [vmem:[%s7 + $0x4f0] sm:$0xff] %v7127
  %7417 = vst [vmem:[%s7 + $0x4f8] sm:$0xff] %v7129
  %7418 = vst [vmem:[%s7 + $0x500] sm:$0xff] %v7131
  %7419 = vst [vmem:[%s7 + $0x508] sm:$0xff] %v7133
  %7420 = vst [vmem:[%s7 + $0x510] sm:$0xff] %v7135
  %7421 = vst [vmem:[%s7 + $0x518] sm:$0xff] %v7137
  %7422 = vst [vmem:[%s7 + $0x520] sm:$0xff] %v7139
  %7423 = vst [vmem:[%s7 + $0x528] sm:$0xff] %v7141
  %7424 = vst [vmem:[%s7 + $0x530] sm:$0xff] %v7143
  %7425 = vst [vmem:[%s7 + $0x538] sm:$0xff] %v7145
  %7426 = vst [vmem:[%s7 + $0x540] sm:$0xff] %v7147
  %7427 = vst [vmem:[%s7 + $0x548] sm:$0xff] %v7149
  %7428 = vst [vmem:[%s7 + $0x550] sm:$0xff] %v7151
  %7429 = vst [vmem:[%s7 + $0x558] sm:$0xff] %v7153
  %7430 = vst [vmem:[%s7 + $0x560] sm:$0xff] %v7155
  %7431 = vst [vmem:[%s7 + $0x568] sm:$0xff] %v7157
  %7432 = vst [vmem:[%s7 + $0x570] sm:$0xff] %v7159
  %7433 = vst [vmem:[%s7 + $0x578] sm:$0xff] %v7161
  %7434 = vst [vmem:[%s7 + $0x580] sm:$0xff] %v7163
  %7435 = vst [vmem:[%s7 + $0x588] sm:$0xff] %v7165
  %7436 = vst [vmem:[%s7 + $0x590] sm:$0xff] %v7167
  %7437 = vst [vmem:[%s7 + $0x598] sm:$0xff] %v7169
  %7438 = vst [vmem:[%s7 + $0x5a0] sm:$0xff] %v7171
  %7439 = vst [vmem:[%s7 + $0x5a8] sm:$0xff] %v7173
  %7440 = vst [vmem:[%s7 + $0x5b0] sm:$0xff] %v7175
  %7441 = vst [vmem:[%s7 + $0x5b8] sm:$0xff] %v7177
  %7442 = vst [vmem:[%s7 + $0x5c0] sm:$0xff] %v7179
  %7443 = vst [vmem:[%s7 + $0x5c8] sm:$0xff] %v7181
  %7444 = vst [vmem:[%s7 + $0x5d0] sm:$0xff] %v7183
  %7445 = vst [vmem:[%s7 + $0x5d8] sm:$0xff] %v7185
  %7446 = vst [vmem:[%s7 + $0x5e0] sm:$0xff] %v7187
  %7447 = vst [vmem:[%s7 + $0x5e8] sm:$0xff] %v7189
  %7448 = vst [vmem:[%s7 + $0x5f0] sm:$0xff] %v7191
  %7449 = vst [vmem:[%s7 + $0x5f8] sm:$0xff] %v7193
  %7450 = vst [vmem:[%s7 + $0x600] sm:$0xff] %v7195
  %7451 = vst [vmem:[%s7 + $0x608] sm:$0xff] %v7197
  %7452 = vst [vmem:[%s7 + $0x610] sm:$0xff] %v7199
  %7453 = vst [vmem:[%s7 + $0x618] sm:$0xff] %v7201
  %7454 = vst [vmem:[%s7 + $0x620] sm:$0xff] %v7203
  %7455 = vst [vmem:[%s7 + $0x628] sm:$0xff] %v7205
  %7456 = vst [vmem:[%s7 + $0x630] sm:$0xff] %v7207
  %7457 = vst [vmem:[%s7 + $0x638] sm:$0xff] %v7209
  %7458 = vst [vmem:[%s7 + $0x640] sm:$0xff] %v7211
  %7459 = vst [vmem:[%s7 + $0x648] sm:$0xff] %v7213
  %7460 = vst [vmem:[%s7 + $0x650] sm:$0xff] %v7215
  %7461 = vst [vmem:[%s7 + $0x658] sm:$0xff] %v7217
  %7462 = vst [vmem:[%s7 + $0x660] sm:$0xff] %v7219
  %7463 = vst [vmem:[%s7 + $0x668] sm:$0xff] %v7221
  %7464 = vst [vmem:[%s7 + $0x670] sm:$0xff] %v7223
  %7465 = vst [vmem:[%s7 + $0x678] sm:$0xff] %v7225
  %7466 = vst [vmem:[%s7 + $0x680] sm:$0xff] %v7227
  %7467 = vst [vmem:[%s7 + $0x688] sm:$0xff] %v7229
  %7468 = vst [vmem:[%s7 + $0x690] sm:$0xff] %v7231
  %7469 = vst [vmem:[%s7 + $0x698] sm:$0xff] %v7233
  %7470 = vst [vmem:[%s7 + $0x6a0] sm:$0xff] %v7235
  %7471 = vst [vmem:[%s7 + $0x6a8] sm:$0xff] %v7237
  %7472 = vst [vmem:[%s7 + $0x6b0] sm:$0xff] %v7239
  %7473 = vst [vmem:[%s7 + $0x6b8] sm:$0xff] %v7241
  %7474 = vst [vmem:[%s7 + $0x6c0] sm:$0xff] %v7243
  %7475 = vst [vmem:[%s7 + $0x6c8] sm:$0xff] %v7245
  %7476 = vst [vmem:[%s7 + $0x6d0] sm:$0xff] %v7247
  %7477 = vst [vmem:[%s7 + $0x6d8] sm:$0xff] %v7249
  %7478 = vst [vmem:[%s7 + $0x6e0] sm:$0xff] %v7251
  %7479 = vst [vmem:[%s7 + $0x6e8] sm:$0xff] %v7253
  %7480 = vst [vmem:[%s7 + $0x6f0] sm:$0xff] %v7255
  %7481 = vst [vmem:[%s7 + $0x6f8] sm:$0xff] %v7257
  // Predicated region
  $region30: #{linear_generator_forward.1} parent=0 // pred_check
    _
  $region31: #{linear_generator_forward.1} parent=0 // pred_check_branch
    %7483 = sbr.rel (0) target = $region33
  $region32: #{linear_generator_forward.1} parent=0 // pred_region
    _
  $region33: #{linear_generator_forward.1} parent=0 // pred_fallthru
    _
  // Predicated region
  $region34: #{linear_generator_forward.1} parent=0 // pred_check
    _
  $region35: #{linear_generator_forward.1} parent=0 // pred_check_branch
    %7485 = sbr.rel (0) target = $region37
  $region36: #{linear_generator_forward.1} parent=0 // pred_region
    _
  $region37: #{linear_generator_forward.1} parent=0 // pred_fallthru
    _

</llo_original>
